<compile_context>
chip_gen: v6e
topology: v6e:2x2x1
jax: 0.10.0
libtpu: 0.0.40
codegen_flags: <defaults>
</compile_context>

<pallas_src>
import jax
import jax.numpy as jnp
from jax import lax
from jax.experimental import pallas as pl
from jax.experimental.pallas import tpu as pltpu

PAD_L = 8    # left W-pad: sublane-aligned interior writes into the pool scratch
LANE = 128


def _round_up(x, m):
    return (x + m - 1) // m * m


def _pad_r_for(w):
    """Right W-pad: >=2 (window overhang) and chosen so Wp = W+PAD_L+PAD_R % 8 == 0."""
    pad_r = (-(w + PAD_L)) % 8
    if pad_r < 2:
        pad_r += 8
    return pad_r


def sppf_kernel(x_ref, w1_ref, b1_ref, w2_ref, b2_ref, o_ref, pad_ref):
    H, W, Cin = x_ref.shape            # batch dim squeezed via BlockSpec
    Cmid = w1_ref.shape[1]
    Hp, Wp, _ = pad_ref.shape
    assert Hp == H + 4                 # 2-row halo on each side for the H pass

    # ---- cv1: 1x1 conv (BN folded) + ReLU -> t: [H*W, Cmid] f32, all >= 0 -------
    # bf16 operands, f32 accumulation (MXU); bias/ReLU in f32.
    x2 = x_ref[...].reshape(H * W, Cin).astype(jnp.bfloat16)
    t = jnp.dot(x2, w1_ref[...], preferred_element_type=jnp.float32) + b1_ref[...]
    t = jnp.maximum(t, 0.0)

    # ---- zero only the scratch border frame (the pools rewrite the interior).
    # Zero padding is exact here because every pool input is post-ReLU (>= 0);
    # if cv1's activation ever changes, -inf padding must be restored.
    zrow = jnp.zeros((2, Wp, Cmid), jnp.float32)
    pad_ref[0:2, :, :] = zrow                                   # top halo rows
    pad_ref[2 + H:2 + H + 2, :, :] = zrow                       # bottom halo rows
    pad_ref[2:2 + H, 0:PAD_L, :] = jnp.zeros((H, PAD_L, Cmid), jnp.float32)
    pad_ref[2:2 + H, PAD_L + W:Wp, :] = jnp.zeros((H, Wp - PAD_L - W, Cmid),
                                                  jnp.float32)

    def maxpool5(a_hwc):
        """5x5 / stride 1 / pad 2 max pool of a (H, W, Cmid) tile of values >= 0."""
        # store the tile into the scratch interior (sublane offset PAD_L is 8-aligned)
        pad_ref[2:2 + H, PAD_L:PAD_L + W, :] = a_hwc
        p = pad_ref[...]                                        # [H+4, Wp, C]
        # 5x1 pass along H: tree max over leading-dim slices
        h01 = jnp.maximum(p[0:H], p[1:1 + H])
        h23 = jnp.maximum(p[2:2 + H], p[3:3 + H])
        hm = jnp.maximum(jnp.maximum(h01, h23), p[4:4 + H])     # [H, Wp, C]
        # 1x5 pass along W via XLU rolls:  r3[:, c] = max(hm[:, c:c+5])
        # (wraparound columns are never selected as long as PAD_L>=2 and PAD_R>=2,
        #  asserted in the wrapper)
        r1 = jnp.maximum(hm, pltpu.roll(hm, shift=Wp - 1, axis=1))
        r2 = jnp.maximum(r1, pltpu.roll(r1, shift=Wp - 2, axis=1))
        r3 = jnp.maximum(r2, pltpu.roll(hm, shift=Wp - 4, axis=1))
        # output column j sits at r3[:, j + (PAD_L - 2)]; bring it to column j
        r4 = pltpu.roll(r3, shift=Wp - (PAD_L - 2), axis=1)
        return r4[:, 0:W, :]                                    # [H, W, C]

    def part_dot(a_hw_c, slab):
        """cv2 partial matmul: bf16 operand, f32 accumulation on the MXU."""
        return jnp.dot(a_hw_c.reshape(H * W, Cmid).astype(jnp.bfloat16),
                       w2_ref[slab], preferred_element_type=jnp.float32)

    # ---- cv2 partial matmuls are interleaved with the pools so MXU pushes
    # overlap the pool's VPU maxes / XLU rolls and each slab dies right after use.
    # TODO(synk): for W % 8 != 0 (e.g. YOLO 20x20) these reshapes become sublane
    # relayout copies; keep activations 3-D / pad W inside the block in that case.
    acc = part_dot(t, 0)
    t_hwc = t.reshape(H, W, Cmid)
    y1 = maxpool5(t_hwc)
    acc = acc + part_dot(y1, 1)
    y2 = maxpool5(y1)
    acc = acc + part_dot(y2, 2)
    y3 = maxpool5(y2)
    acc = acc + part_dot(y3, 3)

    out = jnp.maximum(acc + b2_ref[...], 0.0)
    o_ref[...] = out.reshape(H, W, -1).astype(o_ref.dtype)      # lane-dense store


def simplified_sppf(x_nhwc, w1p, b1p, w2p, b2p, out_channels):
    """x_nhwc: [N,H,W,Cin]; padded folded params; returns [N,H,W,out_channels]."""
    N, H, W, Cin = x_nhwc.shape
    Cmid_p = w1p.shape[1]
    Cout_p = w2p.shape[2]

    pad_r = _pad_r_for(W)
    # >=2 columns of zero border on each side are required so the circular roll
    # wraparound columns are never selected (see maxpool5).
    assert PAD_L >= 2 and pad_r >= 2
    Wp = W + PAD_L + pad_r
    assert Wp % 8 == 0

    # explicit VMEM budget: double-buffered in/out blocks + (single-buffered) bf16
    # weights + pool scratch + live f32 intermediates, with 2x headroom, capped at
    # the per-generation VMEM capacity (128 MiB v5e/v6e, 64 MiB v7x).
    xb = x_nhwc.dtype.itemsize
    wb = w1p.dtype.itemsize
    est = (2 * H * W * Cin * xb
           + 3 * H * W * Cout_p * 4
           + (H + 4) * Wp * Cmid_p * 4
           + 8 * H * W * Cmid_p * 4
           + 2 * (Cin * Cmid_p + 4 * Cmid_p * Cout_p) * wb
           + 2 * (Cmid_p + Cout_p) * 4)
    try:
        vmem_cap = int(pltpu.get_tpu_info().vmem_capacity_bytes)
    except Exception:
        vmem_cap = 64 * 1024 * 1024
    vmem_limit = int(min(max(2 * est, 16 * 1024 * 1024), vmem_cap))

    # TODO(synk): for v7x (2 TCs/chip) at N=1 or very large H*W, add an H-strip grid
    # axis (grid=(N, ceil(H/TH))) with a 6-row halo per strip (3 chained 5x5 pools =
    # 13x13 receptive field) fetched via manual make_async_copy, so both cores get
    # work and the per-step working set stays under the 64 MiB scoped limit; for
    # tiny feature maps the opposite (blocking several batch items per step to
    # amortize the ~0.35us/step overhead) applies instead.
    def build(single_buffer_weights):
        wkw = {"pipeline_mode": pl.Buffered(1)} if single_buffer_weights else {}
        return pl.pallas_call(
            sppf_kernel,
            out_shape=jax.ShapeDtypeStruct((N, H, W, Cout_p), x_nhwc.dtype),
            grid_spec=pltpu.PrefetchScalarGridSpec(
                num_scalar_prefetch=0,
                grid=(N,),
                in_specs=[
                    pl.BlockSpec((None, H, W, Cin), lambda n: (n, 0, 0, 0)),
                    pl.BlockSpec(w1p.shape, lambda n: (0, 0), **wkw),
                    pl.BlockSpec(b1p.shape, lambda n: (0, 0), **wkw),
                    pl.BlockSpec(w2p.shape, lambda n: (0, 0, 0), **wkw),
                    pl.BlockSpec(b2p.shape, lambda n: (0, 0), **wkw),
                ],
                out_specs=pl.BlockSpec((None, H, W, Cout_p), lambda n: (n, 0, 0, 0)),
                scratch_shapes=[pltpu.VMEM((H + 4, Wp, Cmid_p), jnp.float32)],
            ),
            compiler_params=pltpu.CompilerParams(
                dimension_semantics=("parallel",),
                vmem_limit_bytes=vmem_limit,
            ),
        )

    try:
        # single-buffered constant operands (weights are never re-fetched)
        out_p = jax.block_until_ready(build(True)(x_nhwc, w1p, b1p, w2p, b2p))
    except Exception:
        # fallback if this jax version rejects pipeline_mode=pl.Buffered(1)
        out_p = build(False)(x_nhwc, w1p, b1p, w2p, b2p)
    # padded output channels are exactly zero; drop them outside the kernel.
    return out_p[..., :out_channels]


def init_folded_params(key, in_channels, out_channels):
    """Deterministic conv + BN params; BN (eval mode) folded into conv (f32)."""
    c_ = in_channels // 2
    eps = 1e-5
    k = jax.random.split(key, 6)

    # conv1: PyTorch weight [c_, in, 1, 1] -> stored as [in, c_]
    w1 = 0.1 * jax.random.normal(k[0], (in_channels, c_), jnp.float32)
    g1 = 1.0 + 0.1 * jax.random.normal(k[1], (c_,), jnp.float32)
    beta1 = 0.05 * jax.random.normal(k[2], (c_,), jnp.float32)
    mean1 = 0.02 * jnp.arange(c_, dtype=jnp.float32)
    var1 = 1.0 + 0.01 * jnp.arange(c_, dtype=jnp.float32)
    s1 = g1 / jnp.sqrt(var1 + eps)
    w1f = w1 * s1[None, :]
    b1f = (beta1 - mean1 * s1)[None, :]                    # [1, c_]

    # conv2: PyTorch weight [out, 4*c_, 1, 1] -> stored as [4*c_, out]
    w2 = 0.1 * jax.random.normal(k[3], (4 * c_, out_channels), jnp.float32)
    g2 = 1.0 + 0.1 * jax.random.normal(k[4], (out_channels,), jnp.float32)
    beta2 = 0.05 * jax.random.normal(k[5], (out_channels,), jnp.float32)
    mean2 = 0.03 * jnp.arange(out_channels, dtype=jnp.float32)
    var2 = 1.0 + 0.02 * jnp.arange(out_channels, dtype=jnp.float32)
    s2 = g2 / jnp.sqrt(var2 + eps)
    w2f = w2 * s2[None, :]
    b2f = (beta2 - mean2 * s2)[None, :]                    # [1, out]
    return w1f, b1f, w2f, b2f


def pad_folded_params(w1, b1, w2, b2):
    """Zero-pad Cmid/Cout to multiples of 128, cast weights to bf16, split w2 slabs.

    Padded channels carry exact zeros end-to-end (zero weight + zero bias + ReLU),
    so the kernel output restricted to the first Cout channels is unchanged.
    Biases stay f32 (added to the f32 accumulator).
    """
    Cin, Cmid = w1.shape
    Cout = w2.shape[1]
    Cmid_p = _round_up(Cmid, LANE)
    Cout_p = _round_up(Cout, LANE)
    w1p = (jnp.zeros((Cin, Cmid_p), jnp.bfloat16)
           .at[:, :Cmid].set(w1.astype(jnp.bfloat16)))
    b1p = jnp.zeros((1, Cmid_p), jnp.float32).at[:, :Cmid].set(b1)
    w2r = w2.reshape(4, Cmid, Cout)                        # slabs for [x, y1, y2, y3]
    w2p = (jnp.zeros((4, Cmid_p, Cout_p), jnp.bfloat16)
           .at[:, :Cmid, :Cout].set(w2r.astype(jnp.bfloat16)))
    b2p = jnp.zeros((1, Cout_p), jnp.float32).at[:, :Cout].set(b2)
    return w1p, b1p, w2p, b2p


def ref_forward(x_nhwc, w1, b1, w2, b2, matmul_dtype=jnp.float32):
    """Plain-JAX reference.  matmul_dtype=bf16 mirrors the kernel's MXU numerics
    (bf16 operands, f32 accumulation); f32 gives the exact module semantics."""
    t = jnp.einsum("nhwc,cd->nhwd",
                   x_nhwc.astype(matmul_dtype), w1.astype(matmul_dtype),
                   preferred_element_type=jnp.float32) + b1[0]
    t = jnp.maximum(t, 0.0)

    def mp(a):
        return lax.reduce_window(
            a, -jnp.inf, lax.max, (1, 5, 5, 1), (1, 1, 1, 1),
            [(0, 0), (2, 2), (2, 2), (0, 0)])

    y1 = mp(t); y2 = mp(y1); y3 = mp(y2)
    cat = jnp.concatenate([t, y1, y2, y3], axis=-1)
    out = jnp.einsum("nhwc,cd->nhwd",
                     cat.astype(matmul_dtype), w2.astype(matmul_dtype),
                     preferred_element_type=jnp.float32) + b2[0]
    return jnp.maximum(out, 0.0)


if __name__ == "__main__":
    N, Cin, H, W = 2, 4, 16, 16
    Cout = 8

    key = jax.random.PRNGKey(0)
    kx, kp = jax.random.split(key)

    x_nchw = jax.random.normal(kx, (N, Cin, H, W), jnp.float32)   # PyTorch layout
    x_nhwc = jnp.transpose(x_nchw, (0, 2, 3, 1))                  # kernel layout

    w1, b1, w2, b2 = init_folded_params(kp, Cin, Cout)
    w1p, b1p, w2p, b2p = pad_folded_params(w1, b1, w2, b2)

    out = simplified_sppf(x_nhwc, w1p, b1p, w2p, b2p, Cout)
    out = jax.block_until_ready(out)

    assert out.shape == (N, H, W, Cout)
    # tight check vs a reference that mirrors the kernel's bf16-operand / f32-acc math
    ref_bf16 = ref_forward(x_nhwc, w1, b1, w2, b2, matmul_dtype=jnp.bfloat16)
    assert jnp.allclose(out, ref_bf16, atol=2e-3, rtol=2e-3), "mismatch vs bf16 reference"
    # loose check vs the exact f32 module semantics (bf16 rounding only)
    ref_f32 = ref_forward(x_nhwc, w1, b1, w2, b2, matmul_dtype=jnp.float32)
    assert jnp.allclose(out, ref_f32, atol=5e-2, rtol=5e-2), "mismatch vs f32 reference"

    print("KERNEL_OK")
</pallas_src>

<mosaic_0001>
module attributes {stable_mosaic.version = 11 : i64} {
  func.func @sppf_kernel(%arg0: i32, %arg1: memref<1x16x16x4xf32, #tpu.memory_space<vmem>>, %arg2: memref<4x128xbf16, #tpu.memory_space<vmem>>, %arg3: memref<1x128xf32, #tpu.memory_space<vmem>>, %arg4: memref<4x128x128xbf16, #tpu.memory_space<vmem>>, %arg5: memref<1x128xf32, #tpu.memory_space<vmem>>, %arg6: memref<1x16x16x128xf32, #tpu.memory_space<vmem>>, %arg7: memref<20x32x128xf32, #tpu.memory_space<vmem>>) attributes {dimension_semantics = [#tpu.dimension_semantics<parallel>], iteration_bounds = array<i64: 2>, scalar_prefetch = 0 : i64, scratch_operands = 1 : i64, tpu.core_type = #tpu.core_type<tc>, window_params = [{transform_indices = @transform_0, window_bounds = array<i64: 1, 16, 16, 4>}, {pipeline_mode = #tpu.pipeline_mode<synchronous>, transform_indices = @transform_1, window_bounds = array<i64: 4, 128>}, {pipeline_mode = #tpu.pipeline_mode<synchronous>, transform_indices = @transform_2, window_bounds = array<i64: 1, 128>}, {pipeline_mode = #tpu.pipeline_mode<synchronous>, transform_indices = @transform_3, window_bounds = array<i64: 4, 128, 128>}, {pipeline_mode = #tpu.pipeline_mode<synchronous>, transform_indices = @transform_4, window_bounds = array<i64: 1, 128>}, {transform_indices = @transform_5, window_bounds = array<i64: 1, 16, 16, 128>}]} {
    %c0 = arith.constant 0 : index
    %c0_0 = arith.constant 0 : index
    %c0_1 = arith.constant 0 : index
    %c0_2 = arith.constant 0 : index
    %0 = vector.load %arg1[%c0, %c0_0, %c0_1, %c0_2] : memref<1x16x16x4xf32, #tpu.memory_space<vmem>>, vector<1x16x16x4xf32>
    %1 = vector.shape_cast %0 : vector<1x16x16x4xf32> to vector<16x16x4xf32>
    %2 = vector.shape_cast %1 : vector<16x16x4xf32> to vector<256x4xf32>
    %3 = arith.truncf %2 : vector<256x4xf32> to vector<256x4xbf16>
    %c0_3 = arith.constant 0 : index
    %c0_4 = arith.constant 0 : index
    %4 = vector.load %arg2[%c0_3, %c0_4] : memref<4x128xbf16, #tpu.memory_space<vmem>>, vector<4x128xbf16>
    %cst = arith.constant dense<0.000000e+00> : vector<256x128xf32>
    %5 = tpu.matmul %3, %4, %cst {dimension_numbers = #tpu.dot_dimension_numbers<[1], [0], [0], [1], [0, 0, 1, 1], [], []>} : vector<256x4xbf16>, vector<4x128xbf16>, vector<256x128xf32> -> vector<256x128xf32>
    %c0_5 = arith.constant 0 : index
    %c0_6 = arith.constant 0 : index
    %6 = vector.load %arg3[%c0_5, %c0_6] : memref<1x128xf32, #tpu.memory_space<vmem>>, vector<1x128xf32>
    %7 = vector.broadcast %6 : vector<1x128xf32> to vector<256x128xf32>
    %8 = arith.addf %5, %7 : vector<256x128xf32>
    %cst_7 = arith.constant 0.000000e+00 : f32
    %9 = vector.broadcast %cst_7 : f32 to vector<256x128xf32>
    %10 = arith.maximumf %8, %9 : vector<256x128xf32>
    %cst_8 = arith.constant 0.000000e+00 : f32
    %11 = vector.broadcast %cst_8 : f32 to vector<2x32x128xf32>
    %c0_9 = arith.constant 0 : index
    %c0_10 = arith.constant 0 : index
    %c0_11 = arith.constant 0 : index
    %12 = vector.load %arg7[%c0_9, %c0_10, %c0_11] : memref<20x32x128xf32, #tpu.memory_space<vmem>>, vector<2x32x128xf32>
    tpu.vector_store %arg7[%c0_9, %c0_10, %c0_11], %11 {strides = array<i32>} : memref<20x32x128xf32, #tpu.memory_space<vmem>>, vector<2x32x128xf32>,
    %c18 = arith.constant 18 : index
    %c0_12 = arith.constant 0 : index
    %c0_13 = arith.constant 0 : index
    %13 = vector.load %arg7[%c18, %c0_12, %c0_13] : memref<20x32x128xf32, #tpu.memory_space<vmem>>, vector<2x32x128xf32>
    tpu.vector_store %arg7[%c18, %c0_12, %c0_13], %11 {strides = array<i32>} : memref<20x32x128xf32, #tpu.memory_space<vmem>>, vector<2x32x128xf32>,
    %cst_14 = arith.constant 0.000000e+00 : f32
    %14 = vector.broadcast %cst_14 : f32 to vector<16x8x128xf32>
    %c2 = arith.constant 2 : index
    %c0_15 = arith.constant 0 : index
    %c0_16 = arith.constant 0 : index
    %15 = vector.load %arg7[%c2, %c0_15, %c0_16] : memref<20x32x128xf32, #tpu.memory_space<vmem>>, vector<16x8x128xf32>
    tpu.vector_store %arg7[%c2, %c0_15, %c0_16], %14 {strides = array<i32>} : memref<20x32x128xf32, #tpu.memory_space<vmem>>, vector<16x8x128xf32>,
    %cst_17 = arith.constant 0.000000e+00 : f32
    %16 = vector.broadcast %cst_17 : f32 to vector<16x8x128xf32>
    %c2_18 = arith.constant 2 : index
    %c24 = arith.constant 24 : index
    %c0_19 = arith.constant 0 : index
    %17 = vector.load %arg7[%c2_18, %c24, %c0_19] : memref<20x32x128xf32, #tpu.memory_space<vmem>>, vector<16x8x128xf32>
    tpu.vector_store %arg7[%c2_18, %c24, %c0_19], %16 {strides = array<i32>} : memref<20x32x128xf32, #tpu.memory_space<vmem>>, vector<16x8x128xf32>,
    %18 = arith.truncf %10 : vector<256x128xf32> to vector<256x128xbf16>
    %c0_20 = arith.constant 0 : index
    %c0_21 = arith.constant 0 : index
    %c0_22 = arith.constant 0 : index
    %19 = vector.load %arg4[%c0_20, %c0_21, %c0_22] : memref<4x128x128xbf16, #tpu.memory_space<vmem>>, vector<1x128x128xbf16>
    %20 = vector.shape_cast %19 : vector<1x128x128xbf16> to vector<128x128xbf16>
    %cst_23 = arith.constant dense<0.000000e+00> : vector<256x128xf32>
    %21 = tpu.matmul %18, %20, %cst_23 {dimension_numbers = #tpu.dot_dimension_numbers<[1], [0], [0], [1], [0, 0, 1, 1], [], []>} : vector<256x128xbf16>, vector<128x128xbf16>, vector<256x128xf32> -> vector<256x128xf32>
    %22 = vector.shape_cast %10 : vector<256x128xf32> to vector<16x16x128xf32>
    %c2_24 = arith.constant 2 : index
    %c8 = arith.constant 8 : index
    %c0_25 = arith.constant 0 : index
    %23 = vector.load %arg7[%c2_24, %c8, %c0_25] : memref<20x32x128xf32, #tpu.memory_space<vmem>>, vector<16x16x128xf32>
    tpu.vector_store %arg7[%c2_24, %c8, %c0_25], %22 {strides = array<i32>} : memref<20x32x128xf32, #tpu.memory_space<vmem>>, vector<16x16x128xf32>,
    %c0_26 = arith.constant 0 : index
    %c0_27 = arith.constant 0 : index
    %c0_28 = arith.constant 0 : index
    %24 = vector.load %arg7[%c0_26, %c0_27, %c0_28] : memref<20x32x128xf32, #tpu.memory_space<vmem>>, vector<20x32x128xf32>
    %25 = vector.extract_strided_slice %24 {offsets = [0, 0, 0], sizes = [16, 32, 128], strides = [1, 1, 1]} : vector<20x32x128xf32> to vector<16x32x128xf32>
    %26 = vector.extract_strided_slice %24 {offsets = [1, 0, 0], sizes = [16, 32, 128], strides = [1, 1, 1]} : vector<20x32x128xf32> to vector<16x32x128xf32>
    %27 = arith.maximumf %25, %26 : vector<16x32x128xf32>
    %28 = vector.extract_strided_slice %24 {offsets = [2, 0, 0], sizes = [16, 32, 128], strides = [1, 1, 1]} : vector<20x32x128xf32> to vector<16x32x128xf32>
    %29 = vector.extract_strided_slice %24 {offsets = [3, 0, 0], sizes = [16, 32, 128], strides = [1, 1, 1]} : vector<20x32x128xf32> to vector<16x32x128xf32>
    %30 = arith.maximumf %28, %29 : vector<16x32x128xf32>
    %31 = arith.maximumf %27, %30 : vector<16x32x128xf32>
    %32 = vector.extract_strided_slice %24 {offsets = [4, 0, 0], sizes = [16, 32, 128], strides = [1, 1, 1]} : vector<20x32x128xf32> to vector<16x32x128xf32>
    %33 = arith.maximumf %31, %32 : vector<16x32x128xf32>
    %c31_i32 = arith.constant 31 : i32
    %34 = tpu.dynamic_rotate %33 by %c31_i32 dim 1 : vector<16x32x128xf32>, i32 -> vector<16x32x128xf32>
    %35 = arith.maximumf %33, %34 : vector<16x32x128xf32>
    %c30_i32 = arith.constant 30 : i32
    %36 = tpu.dynamic_rotate %35 by %c30_i32 dim 1 : vector<16x32x128xf32>, i32 -> vector<16x32x128xf32>
    %37 = arith.maximumf %35, %36 : vector<16x32x128xf32>
    %c28_i32 = arith.constant 28 : i32
    %38 = tpu.dynamic_rotate %33 by %c28_i32 dim 1 : vector<16x32x128xf32>, i32 -> vector<16x32x128xf32>
    %39 = arith.maximumf %37, %38 : vector<16x32x128xf32>
    %c26_i32 = arith.constant 26 : i32
    %40 = tpu.dynamic_rotate %39 by %c26_i32 dim 1 : vector<16x32x128xf32>, i32 -> vector<16x32x128xf32>
    %41 = vector.extract_strided_slice %40 {offsets = [0, 0, 0], sizes = [16, 16, 128], strides = [1, 1, 1]} : vector<16x32x128xf32> to vector<16x16x128xf32>
    %42 = vector.shape_cast %41 : vector<16x16x128xf32> to vector<256x128xf32>
    %43 = arith.truncf %42 : vector<256x128xf32> to vector<256x128xbf16>
    %c1 = arith.constant 1 : index
    %c0_29 = arith.constant 0 : index
    %c0_30 = arith.constant 0 : index
    %44 = vector.load %arg4[%c1, %c0_29, %c0_30] : memref<4x128x128xbf16, #tpu.memory_space<vmem>>, vector<1x128x128xbf16>
    %45 = vector.shape_cast %44 : vector<1x128x128xbf16> to vector<128x128xbf16>
    %cst_31 = arith.constant dense<0.000000e+00> : vector<256x128xf32>
    %46 = tpu.matmul %43, %45, %cst_31 {dimension_numbers = #tpu.dot_dimension_numbers<[1], [0], [0], [1], [0, 0, 1, 1], [], []>} : vector<256x128xbf16>, vector<128x128xbf16>, vector<256x128xf32> -> vector<256x128xf32>
    %47 = arith.addf %21, %46 : vector<256x128xf32>
    %c2_32 = arith.constant 2 : index
    %c8_33 = arith.constant 8 : index
    %c0_34 = arith.constant 0 : index
    %48 = vector.load %arg7[%c2_32, %c8_33, %c0_34] : memref<20x32x128xf32, #tpu.memory_space<vmem>>, vector<16x16x128xf32>
    tpu.vector_store %arg7[%c2_32, %c8_33, %c0_34], %41 {strides = array<i32>} : memref<20x32x128xf32, #tpu.memory_space<vmem>>, vector<16x16x128xf32>,
    %c0_35 = arith.constant 0 : index
    %c0_36 = arith.constant 0 : index
    %c0_37 = arith.constant 0 : index
    %49 = vector.load %arg7[%c0_35, %c0_36, %c0_37] : memref<20x32x128xf32, #tpu.memory_space<vmem>>, vector<20x32x128xf32>
    %50 = vector.extract_strided_slice %49 {offsets = [0, 0, 0], sizes = [16, 32, 128], strides = [1, 1, 1]} : vector<20x32x128xf32> to vector<16x32x128xf32>
    %51 = vector.extract_strided_slice %49 {offsets = [1, 0, 0], sizes = [16, 32, 128], strides = [1, 1, 1]} : vector<20x32x128xf32> to vector<16x32x128xf32>
    %52 = arith.maximumf %50, %51 : vector<16x32x128xf32>
    %53 = vector.extract_strided_slice %49 {offsets = [2, 0, 0], sizes = [16, 32, 128], strides = [1, 1, 1]} : vector<20x32x128xf32> to vector<16x32x128xf32>
    %54 = vector.extract_strided_slice %49 {offsets = [3, 0, 0], sizes = [16, 32, 128], strides = [1, 1, 1]} : vector<20x32x128xf32> to vector<16x32x128xf32>
    %55 = arith.maximumf %53, %54 : vector<16x32x128xf32>
    %56 = arith.maximumf %52, %55 : vector<16x32x128xf32>
    %57 = vector.extract_strided_slice %49 {offsets = [4, 0, 0], sizes = [16, 32, 128], strides = [1, 1, 1]} : vector<20x32x128xf32> to vector<16x32x128xf32>
    %58 = arith.maximumf %56, %57 : vector<16x32x128xf32>
    %c31_i32_38 = arith.constant 31 : i32
    %59 = tpu.dynamic_rotate %58 by %c31_i32_38 dim 1 : vector<16x32x128xf32>, i32 -> vector<16x32x128xf32>
    %60 = arith.maximumf %58, %59 : vector<16x32x128xf32>
    %c30_i32_39 = arith.constant 30 : i32
    %61 = tpu.dynamic_rotate %60 by %c30_i32_39 dim 1 : vector<16x32x128xf32>, i32 -> vector<16x32x128xf32>
    %62 = arith.maximumf %60, %61 : vector<16x32x128xf32>
    %c28_i32_40 = arith.constant 28 : i32
    %63 = tpu.dynamic_rotate %58 by %c28_i32_40 dim 1 : vector<16x32x128xf32>, i32 -> vector<16x32x128xf32>
    %64 = arith.maximumf %62, %63 : vector<16x32x128xf32>
    %c26_i32_41 = arith.constant 26 : i32
    %65 = tpu.dynamic_rotate %64 by %c26_i32_41 dim 1 : vector<16x32x128xf32>, i32 -> vector<16x32x128xf32>
    %66 = vector.extract_strided_slice %65 {offsets = [0, 0, 0], sizes = [16, 16, 128], strides = [1, 1, 1]} : vector<16x32x128xf32> to vector<16x16x128xf32>
    %67 = vector.shape_cast %66 : vector<16x16x128xf32> to vector<256x128xf32>
    %68 = arith.truncf %67 : vector<256x128xf32> to vector<256x128xbf16>
    %c2_42 = arith.constant 2 : index
    %c0_43 = arith.constant 0 : index
    %c0_44 = arith.constant 0 : index
    %69 = vector.load %arg4[%c2_42, %c0_43, %c0_44] : memref<4x128x128xbf16, #tpu.memory_space<vmem>>, vector<1x128x128xbf16>
    %70 = vector.shape_cast %69 : vector<1x128x128xbf16> to vector<128x128xbf16>
    %cst_45 = arith.constant dense<0.000000e+00> : vector<256x128xf32>
    %71 = tpu.matmul %68, %70, %cst_45 {dimension_numbers = #tpu.dot_dimension_numbers<[1], [0], [0], [1], [0, 0, 1, 1], [], []>} : vector<256x128xbf16>, vector<128x128xbf16>, vector<256x128xf32> -> vector<256x128xf32>
    %72 = arith.addf %47, %71 : vector<256x128xf32>
    %c2_46 = arith.constant 2 : index
    %c8_47 = arith.constant 8 : index
    %c0_48 = arith.constant 0 : index
    %73 = vector.load %arg7[%c2_46, %c8_47, %c0_48] : memref<20x32x128xf32, #tpu.memory_space<vmem>>, vector<16x16x128xf32>
    tpu.vector_store %arg7[%c2_46, %c8_47, %c0_48], %66 {strides = array<i32>} : memref<20x32x128xf32, #tpu.memory_space<vmem>>, vector<16x16x128xf32>,
    %c0_49 = arith.constant 0 : index
    %c0_50 = arith.constant 0 : index
    %c0_51 = arith.constant 0 : index
    %74 = vector.load %arg7[%c0_49, %c0_50, %c0_51] : memref<20x32x128xf32, #tpu.memory_space<vmem>>, vector<20x32x128xf32>
    %75 = vector.extract_strided_slice %74 {offsets = [0, 0, 0], sizes = [16, 32, 128], strides = [1, 1, 1]} : vector<20x32x128xf32> to vector<16x32x128xf32>
    %76 = vector.extract_strided_slice %74 {offsets = [1, 0, 0], sizes = [16, 32, 128], strides = [1, 1, 1]} : vector<20x32x128xf32> to vector<16x32x128xf32>
    %77 = arith.maximumf %75, %76 : vector<16x32x128xf32>
    %78 = vector.extract_strided_slice %74 {offsets = [2, 0, 0], sizes = [16, 32, 128], strides = [1, 1, 1]} : vector<20x32x128xf32> to vector<16x32x128xf32>
    %79 = vector.extract_strided_slice %74 {offsets = [3, 0, 0], sizes = [16, 32, 128], strides = [1, 1, 1]} : vector<20x32x128xf32> to vector<16x32x128xf32>
    %80 = arith.maximumf %78, %79 : vector<16x32x128xf32>
    %81 = arith.maximumf %77, %80 : vector<16x32x128xf32>
    %82 = vector.extract_strided_slice %74 {offsets = [4, 0, 0], sizes = [16, 32, 128], strides = [1, 1, 1]} : vector<20x32x128xf32> to vector<16x32x128xf32>
    %83 = arith.maximumf %81, %82 : vector<16x32x128xf32>
    %c31_i32_52 = arith.constant 31 : i32
    %84 = tpu.dynamic_rotate %83 by %c31_i32_52 dim 1 : vector<16x32x128xf32>, i32 -> vector<16x32x128xf32>
    %85 = arith.maximumf %83, %84 : vector<16x32x128xf32>
    %c30_i32_53 = arith.constant 30 : i32
    %86 = tpu.dynamic_rotate %85 by %c30_i32_53 dim 1 : vector<16x32x128xf32>, i32 -> vector<16x32x128xf32>
    %87 = arith.maximumf %85, %86 : vector<16x32x128xf32>
    %c28_i32_54 = arith.constant 28 : i32
    %88 = tpu.dynamic_rotate %83 by %c28_i32_54 dim 1 : vector<16x32x128xf32>, i32 -> vector<16x32x128xf32>
    %89 = arith.maximumf %87, %88 : vector<16x32x128xf32>
    %c26_i32_55 = arith.constant 26 : i32
    %90 = tpu.dynamic_rotate %89 by %c26_i32_55 dim 1 : vector<16x32x128xf32>, i32 -> vector<16x32x128xf32>
    %91 = vector.extract_strided_slice %90 {offsets = [0, 0, 0], sizes = [16, 16, 128], strides = [1, 1, 1]} : vector<16x32x128xf32> to vector<16x16x128xf32>
    %92 = vector.shape_cast %91 : vector<16x16x128xf32> to vector<256x128xf32>
    %93 = arith.truncf %92 : vector<256x128xf32> to vector<256x128xbf16>
    %c3 = arith.constant 3 : index
    %c0_56 = arith.constant 0 : index
    %c0_57 = arith.constant 0 : index
    %94 = vector.load %arg4[%c3, %c0_56, %c0_57] : memref<4x128x128xbf16, #tpu.memory_space<vmem>>, vector<1x128x128xbf16>
    %95 = vector.shape_cast %94 : vector<1x128x128xbf16> to vector<128x128xbf16>
    %cst_58 = arith.constant dense<0.000000e+00> : vector<256x128xf32>
    %96 = tpu.matmul %93, %95, %cst_58 {dimension_numbers = #tpu.dot_dimension_numbers<[1], [0], [0], [1], [0, 0, 1, 1], [], []>} : vector<256x128xbf16>, vector<128x128xbf16>, vector<256x128xf32> -> vector<256x128xf32>
    %97 = arith.addf %72, %96 : vector<256x128xf32>
    %c0_59 = arith.constant 0 : index
    %c0_60 = arith.constant 0 : index
    %98 = vector.load %arg5[%c0_59, %c0_60] : memref<1x128xf32, #tpu.memory_space<vmem>>, vector<1x128xf32>
    %99 = vector.broadcast %98 : vector<1x128xf32> to vector<256x128xf32>
    %100 = arith.addf %97, %99 : vector<256x128xf32>
    %cst_61 = arith.constant 0.000000e+00 : f32
    %101 = vector.broadcast %cst_61 : f32 to vector<256x128xf32>
    %102 = arith.maximumf %100, %101 : vector<256x128xf32>
    %103 = vector.shape_cast %102 : vector<256x128xf32> to vector<16x16x128xf32>
    %c0_62 = arith.constant 0 : index
    %c0_63 = arith.constant 0 : index
    %c0_64 = arith.constant 0 : index
    %c0_65 = arith.constant 0 : index
    %104 = vector.load %arg6[%c0_62, %c0_63, %c0_64, %c0_65] : memref<1x16x16x128xf32, #tpu.memory_space<vmem>>, vector<1x16x16x128xf32>
    %105 = vector.shape_cast %104 : vector<1x16x16x128xf32> to vector<16x16x128xf32>
    %106 = vector.shape_cast %103 : vector<16x16x128xf32> to vector<1x16x16x128xf32>
    tpu.vector_store %arg6[%c0_62, %c0_63, %c0_64, %c0_65], %106 {strides = array<i32>} : memref<1x16x16x128xf32, #tpu.memory_space<vmem>>, vector<1x16x16x128xf32>,
    return
  }
  func.func @transform_0(%arg0: i32) -> (i32, i32, i32, i32) {
    %c0_i32 = arith.constant 0 : i32
    %c0_i32_0 = arith.constant 0 : i32
    %c0_i32_1 = arith.constant 0 : i32
    %c0_i32_2 = arith.constant 0 : i32
    return %arg0, %c0_i32, %c0_i32_0, %c0_i32_1 : i32, i32, i32, i32
  }
  func.func @transform_1(%arg0: i32) -> (i32, i32) {
    %c0_i32 = arith.constant 0 : i32
    %c0_i32_0 = arith.constant 0 : i32
    %c0_i32_1 = arith.constant 0 : i32
    return %c0_i32, %c0_i32_0 : i32, i32
  }
  func.func @transform_2(%arg0: i32) -> (i32, i32) {
    %c0_i32 = arith.constant 0 : i32
    %c0_i32_0 = arith.constant 0 : i32
    %c0_i32_1 = arith.constant 0 : i32
    return %c0_i32, %c0_i32_0 : i32, i32
  }
  func.func @transform_3(%arg0: i32) -> (i32, i32, i32) {
    %c0_i32 = arith.constant 0 : i32
    %c0_i32_0 = arith.constant 0 : i32
    %c0_i32_1 = arith.constant 0 : i32
    %c0_i32_2 = arith.constant 0 : i32
    return %c0_i32, %c0_i32_0, %c0_i32_1 : i32, i32, i32
  }
  func.func @transform_4(%arg0: i32) -> (i32, i32) {
    %c0_i32 = arith.constant 0 : i32
    %c0_i32_0 = arith.constant 0 : i32
    %c0_i32_1 = arith.constant 0 : i32
    return %c0_i32, %c0_i32_0 : i32, i32
  }
  func.func @transform_5(%arg0: i32) -> (i32, i32, i32, i32) {
    %c0_i32 = arith.constant 0 : i32
    %c0_i32_0 = arith.constant 0 : i32
    %c0_i32_1 = arith.constant 0 : i32
    %c0_i32_2 = arith.constant 0 : i32
    return %arg0, %c0_i32, %c0_i32_0, %c0_i32_1 : i32, i32, i32, i32
  }
}

module attributes {stable_mosaic.version = 11 : i64} {
  func.func @sppf_kernel(%arg0: i32, %arg1: memref<1x16x16x4xf32, #tpu.memory_space<vmem>>, %arg2: memref<4x128xbf16, #tpu.memory_space<vmem>>, %arg3: memref<1x128xf32, #tpu.memory_space<vmem>>, %arg4: memref<4x128x128xbf16, #tpu.memory_space<vmem>>, %arg5: memref<1x128xf32, #tpu.memory_space<vmem>>, %arg6: memref<1x16x16x128xf32, #tpu.memory_space<vmem>>, %arg7: memref<20x32x128xf32, #tpu.memory_space<vmem>>) attributes {dimension_semantics = [#tpu.dimension_semantics<parallel>], iteration_bounds = array<i64: 2>, scalar_prefetch = 0 : i64, scratch_operands = 1 : i64, tpu.core_type = #tpu.core_type<tc>, window_params = [{transform_indices = @transform_0, window_bounds = array<i64: 1, 16, 16, 4>}, {pipeline_mode = #tpu.pipeline_mode<synchronous>, transform_indices = @transform_1, window_bounds = array<i64: 4, 128>}, {pipeline_mode = #tpu.pipeline_mode<synchronous>, transform_indices = @transform_2, window_bounds = array<i64: 1, 128>}, {pipeline_mode = #tpu.pipeline_mode<synchronous>, transform_indices = @transform_3, window_bounds = array<i64: 4, 128, 128>}, {pipeline_mode = #tpu.pipeline_mode<synchronous>, transform_indices = @transform_4, window_bounds = array<i64: 1, 128>}, {transform_indices = @transform_5, window_bounds = array<i64: 1, 16, 16, 128>}]} {
    %c0 = arith.constant 0 : index
    %c0_0 = arith.constant 0 : index
    %c0_1 = arith.constant 0 : index
    %c0_2 = arith.constant 0 : index
    %0 = vector.load %arg1[%c0, %c0_0, %c0_1, %c0_2] : memref<1x16x16x4xf32, #tpu.memory_space<vmem>>, vector<1x16x16x4xf32>
    %1 = vector.shape_cast %0 : vector<1x16x16x4xf32> to vector<16x16x4xf32>
    %2 = vector.shape_cast %1 : vector<16x16x4xf32> to vector<256x4xf32>
    %3 = arith.truncf %2 : vector<256x4xf32> to vector<256x4xbf16>
    %c0_3 = arith.constant 0 : index
    %c0_4 = arith.constant 0 : index
    %4 = vector.load %arg2[%c0_3, %c0_4] : memref<4x128xbf16, #tpu.memory_space<vmem>>, vector<4x128xbf16>
    %cst = arith.constant dense<0.000000e+00> : vector<256x128xf32>
    %5 = tpu.matmul %3, %4, %cst {dimension_numbers = #tpu.dot_dimension_numbers<[1], [0], [0], [1], [0, 0, 1, 1], [], []>} : vector<256x4xbf16>, vector<4x128xbf16>, vector<256x128xf32> -> vector<256x128xf32>
    %c0_5 = arith.constant 0 : index
    %c0_6 = arith.constant 0 : index
    %6 = vector.load %arg3[%c0_5, %c0_6] : memref<1x128xf32, #tpu.memory_space<vmem>>, vector<1x128xf32>
    %7 = vector.broadcast %6 : vector<1x128xf32> to vector<256x128xf32>
    %8 = arith.addf %5, %7 : vector<256x128xf32>
    %cst_7 = arith.constant 0.000000e+00 : f32
    %9 = vector.broadcast %cst_7 : f32 to vector<256x128xf32>
    %10 = arith.maximumf %8, %9 : vector<256x128xf32>
    %cst_8 = arith.constant 0.000000e+00 : f32
    %11 = vector.broadcast %cst_8 : f32 to vector<2x32x128xf32>
    %c0_9 = arith.constant 0 : index
    %c0_10 = arith.constant 0 : index
    %c0_11 = arith.constant 0 : index
    %12 = vector.load %arg7[%c0_9, %c0_10, %c0_11] : memref<20x32x128xf32, #tpu.memory_space<vmem>>, vector<2x32x128xf32>
    tpu.vector_store %arg7[%c0_9, %c0_10, %c0_11], %11 {strides = array<i32>} : memref<20x32x128xf32, #tpu.memory_space<vmem>>, vector<2x32x128xf32>,
    %c18 = arith.constant 18 : index
    %c0_12 = arith.constant 0 : index
    %c0_13 = arith.constant 0 : index
    %13 = vector.load %arg7[%c18, %c0_12, %c0_13] : memref<20x32x128xf32, #tpu.memory_space<vmem>>, vector<2x32x128xf32>
    tpu.vector_store %arg7[%c18, %c0_12, %c0_13], %11 {strides = array<i32>} : memref<20x32x128xf32, #tpu.memory_space<vmem>>, vector<2x32x128xf32>,
    %cst_14 = arith.constant 0.000000e+00 : f32
    %14 = vector.broadcast %cst_14 : f32 to vector<16x8x128xf32>
    %c2 = arith.constant 2 : index
    %c0_15 = arith.constant 0 : index
    %c0_16 = arith.constant 0 : index
    %15 = vector.load %arg7[%c2, %c0_15, %c0_16] : memref<20x32x128xf32, #tpu.memory_space<vmem>>, vector<16x8x128xf32>
    tpu.vector_store %arg7[%c2, %c0_15, %c0_16], %14 {strides = array<i32>} : memref<20x32x128xf32, #tpu.memory_space<vmem>>, vector<16x8x128xf32>,
    %cst_17 = arith.constant 0.000000e+00 : f32
    %16 = vector.broadcast %cst_17 : f32 to vector<16x8x128xf32>
    %c2_18 = arith.constant 2 : index
    %c24 = arith.constant 24 : index
    %c0_19 = arith.constant 0 : index
    %17 = vector.load %arg7[%c2_18, %c24, %c0_19] : memref<20x32x128xf32, #tpu.memory_space<vmem>>, vector<16x8x128xf32>
    tpu.vector_store %arg7[%c2_18, %c24, %c0_19], %16 {strides = array<i32>} : memref<20x32x128xf32, #tpu.memory_space<vmem>>, vector<16x8x128xf32>,
    %18 = arith.truncf %10 : vector<256x128xf32> to vector<256x128xbf16>
    %c0_20 = arith.constant 0 : index
    %c0_21 = arith.constant 0 : index
    %c0_22 = arith.constant 0 : index
    %19 = vector.load %arg4[%c0_20, %c0_21, %c0_22] : memref<4x128x128xbf16, #tpu.memory_space<vmem>>, vector<1x128x128xbf16>
    %20 = vector.shape_cast %19 : vector<1x128x128xbf16> to vector<128x128xbf16>
    %cst_23 = arith.constant dense<0.000000e+00> : vector<256x128xf32>
    %21 = tpu.matmul %18, %20, %cst_23 {dimension_numbers = #tpu.dot_dimension_numbers<[1], [0], [0], [1], [0, 0, 1, 1], [], []>} : vector<256x128xbf16>, vector<128x128xbf16>, vector<256x128xf32> -> vector<256x128xf32>
    %22 = vector.shape_cast %10 : vector<256x128xf32> to vector<16x16x128xf32>
    %c2_24 = arith.constant 2 : index
    %c8 = arith.constant 8 : index
    %c0_25 = arith.constant 0 : index
    %23 = vector.load %arg7[%c2_24, %c8, %c0_25] : memref<20x32x128xf32, #tpu.memory_space<vmem>>, vector<16x16x128xf32>
    tpu.vector_store %arg7[%c2_24, %c8, %c0_25], %22 {strides = array<i32>} : memref<20x32x128xf32, #tpu.memory_space<vmem>>, vector<16x16x128xf32>,
    %c0_26 = arith.constant 0 : index
    %c0_27 = arith.constant 0 : index
    %c0_28 = arith.constant 0 : index
    %24 = vector.load %arg7[%c0_26, %c0_27, %c0_28] : memref<20x32x128xf32, #tpu.memory_space<vmem>>, vector<20x32x128xf32>
    %25 = vector.extract_strided_slice %24 {offsets = [0, 0, 0], sizes = [16, 32, 128], strides = [1, 1, 1]} : vector<20x32x128xf32> to vector<16x32x128xf32>
    %26 = vector.extract_strided_slice %24 {offsets = [1, 0, 0], sizes = [16, 32, 128], strides = [1, 1, 1]} : vector<20x32x128xf32> to vector<16x32x128xf32>
    %27 = arith.maximumf %25, %26 : vector<16x32x128xf32>
    %28 = vector.extract_strided_slice %24 {offsets = [2, 0, 0], sizes = [16, 32, 128], strides = [1, 1, 1]} : vector<20x32x128xf32> to vector<16x32x128xf32>
    %29 = vector.extract_strided_slice %24 {offsets = [3, 0, 0], sizes = [16, 32, 128], strides = [1, 1, 1]} : vector<20x32x128xf32> to vector<16x32x128xf32>
    %30 = arith.maximumf %28, %29 : vector<16x32x128xf32>
    %31 = arith.maximumf %27, %30 : vector<16x32x128xf32>
    %32 = vector.extract_strided_slice %24 {offsets = [4, 0, 0], sizes = [16, 32, 128], strides = [1, 1, 1]} : vector<20x32x128xf32> to vector<16x32x128xf32>
    %33 = arith.maximumf %31, %32 : vector<16x32x128xf32>
    %c31_i32 = arith.constant 31 : i32
    %34 = tpu.dynamic_rotate %33 by %c31_i32 dim 1 : vector<16x32x128xf32>, i32 -> vector<16x32x128xf32>
    %35 = arith.maximumf %33, %34 : vector<16x32x128xf32>
    %c30_i32 = arith.constant 30 : i32
    %36 = tpu.dynamic_rotate %35 by %c30_i32 dim 1 : vector<16x32x128xf32>, i32 -> vector<16x32x128xf32>
    %37 = arith.maximumf %35, %36 : vector<16x32x128xf32>
    %c28_i32 = arith.constant 28 : i32
    %38 = tpu.dynamic_rotate %33 by %c28_i32 dim 1 : vector<16x32x128xf32>, i32 -> vector<16x32x128xf32>
    %39 = arith.maximumf %37, %38 : vector<16x32x128xf32>
    %c26_i32 = arith.constant 26 : i32
    %40 = tpu.dynamic_rotate %39 by %c26_i32 dim 1 : vector<16x32x128xf32>, i32 -> vector<16x32x128xf32>
    %41 = vector.extract_strided_slice %40 {offsets = [0, 0, 0], sizes = [16, 16, 128], strides = [1, 1, 1]} : vector<16x32x128xf32> to vector<16x16x128xf32>
    %42 = vector.shape_cast %41 : vector<16x16x128xf32> to vector<256x128xf32>
    %43 = arith.truncf %42 : vector<256x128xf32> to vector<256x128xbf16>
    %c1 = arith.constant 1 : index
    %c0_29 = arith.constant 0 : index
    %c0_30 = arith.constant 0 : index
    %44 = vector.load %arg4[%c1, %c0_29, %c0_30] : memref<4x128x128xbf16, #tpu.memory_space<vmem>>, vector<1x128x128xbf16>
    %45 = vector.shape_cast %44 : vector<1x128x128xbf16> to vector<128x128xbf16>
    %cst_31 = arith.constant dense<0.000000e+00> : vector<256x128xf32>
    %46 = tpu.matmul %43, %45, %cst_31 {dimension_numbers = #tpu.dot_dimension_numbers<[1], [0], [0], [1], [0, 0, 1, 1], [], []>} : vector<256x128xbf16>, vector<128x128xbf16>, vector<256x128xf32> -> vector<256x128xf32>
    %47 = arith.addf %21, %46 : vector<256x128xf32>
    %c2_32 = arith.constant 2 : index
    %c8_33 = arith.constant 8 : index
    %c0_34 = arith.constant 0 : index
    %48 = vector.load %arg7[%c2_32, %c8_33, %c0_34] : memref<20x32x128xf32, #tpu.memory_space<vmem>>, vector<16x16x128xf32>
    tpu.vector_store %arg7[%c2_32, %c8_33, %c0_34], %41 {strides = array<i32>} : memref<20x32x128xf32, #tpu.memory_space<vmem>>, vector<16x16x128xf32>,
    %c0_35 = arith.constant 0 : index
    %c0_36 = arith.constant 0 : index
    %c0_37 = arith.constant 0 : index
    %49 = vector.load %arg7[%c0_35, %c0_36, %c0_37] : memref<20x32x128xf32, #tpu.memory_space<vmem>>, vector<20x32x128xf32>
    %50 = vector.extract_strided_slice %49 {offsets = [0, 0, 0], sizes = [16, 32, 128], strides = [1, 1, 1]} : vector<20x32x128xf32> to vector<16x32x128xf32>
    %51 = vector.extract_strided_slice %49 {offsets = [1, 0, 0], sizes = [16, 32, 128], strides = [1, 1, 1]} : vector<20x32x128xf32> to vector<16x32x128xf32>
    %52 = arith.maximumf %50, %51 : vector<16x32x128xf32>
    %53 = vector.extract_strided_slice %49 {offsets = [2, 0, 0], sizes = [16, 32, 128], strides = [1, 1, 1]} : vector<20x32x128xf32> to vector<16x32x128xf32>
    %54 = vector.extract_strided_slice %49 {offsets = [3, 0, 0], sizes = [16, 32, 128], strides = [1, 1, 1]} : vector<20x32x128xf32> to vector<16x32x128xf32>
    %55 = arith.maximumf %53, %54 : vector<16x32x128xf32>
    %56 = arith.maximumf %52, %55 : vector<16x32x128xf32>
    %57 = vector.extract_strided_slice %49 {offsets = [4, 0, 0], sizes = [16, 32, 128], strides = [1, 1, 1]} : vector<20x32x128xf32> to vector<16x32x128xf32>
    %58 = arith.maximumf %56, %57 : vector<16x32x128xf32>
    %c31_i32_38 = arith.constant 31 : i32
    %59 = tpu.dynamic_rotate %58 by %c31_i32_38 dim 1 : vector<16x32x128xf32>, i32 -> vector<16x32x128xf32>
    %60 = arith.maximumf %58, %59 : vector<16x32x128xf32>
    %c30_i32_39 = arith.constant 30 : i32
    %61 = tpu.dynamic_rotate %60 by %c30_i32_39 dim 1 : vector<16x32x128xf32>, i32 -> vector<16x32x128xf32>
    %62 = arith.maximumf %60, %61 : vector<16x32x128xf32>
    %c28_i32_40 = arith.constant 28 : i32
    %63 = tpu.dynamic_rotate %58 by %c28_i32_40 dim 1 : vector<16x32x128xf32>, i32 -> vector<16x32x128xf32>
    %64 = arith.maximumf %62, %63 : vector<16x32x128xf32>
    %c26_i32_41 = arith.constant 26 : i32
    %65 = tpu.dynamic_rotate %64 by %c26_i32_41 dim 1 : vector<16x32x128xf32>, i32 -> vector<16x32x128xf32>
    %66 = vector.extract_strided_slice %65 {offsets = [0, 0, 0], sizes = [16, 16, 128], strides = [1, 1, 1]} : vector<16x32x128xf32> to vector<16x16x128xf32>
    %67 = vector.shape_cast %66 : vector<16x16x128xf32> to vector<256x128xf32>
    %68 = arith.truncf %67 : vector<256x128xf32> to vector<256x128xbf16>
    %c2_42 = arith.constant 2 : index
    %c0_43 = arith.constant 0 : index
    %c0_44 = arith.constant 0 : index
    %69 = vector.load %arg4[%c2_42, %c0_43, %c0_44] : memref<4x128x128xbf16, #tpu.memory_space<vmem>>, vector<1x128x128xbf16>
    %70 = vector.shape_cast %69 : vector<1x128x128xbf16> to vector<128x128xbf16>
    %cst_45 = arith.constant dense<0.000000e+00> : vector<256x128xf32>
    %71 = tpu.matmul %68, %70, %cst_45 {dimension_numbers = #tpu.dot_dimension_numbers<[1], [0], [0], [1], [0, 0, 1, 1], [], []>} : vector<256x128xbf16>, vector<128x128xbf16>, vector<256x128xf32> -> vector<256x128xf32>
    %72 = arith.addf %47, %71 : vector<256x128xf32>
    %c2_46 = arith.constant 2 : index
    %c8_47 = arith.constant 8 : index
    %c0_48 = arith.constant 0 : index
    %73 = vector.load %arg7[%c2_46, %c8_47, %c0_48] : memref<20x32x128xf32, #tpu.memory_space<vmem>>, vector<16x16x128xf32>
    tpu.vector_store %arg7[%c2_46, %c8_47, %c0_48], %66 {strides = array<i32>} : memref<20x32x128xf32, #tpu.memory_space<vmem>>, vector<16x16x128xf32>,
    %c0_49 = arith.constant 0 : index
    %c0_50 = arith.constant 0 : index
    %c0_51 = arith.constant 0 : index
    %74 = vector.load %arg7[%c0_49, %c0_50, %c0_51] : memref<20x32x128xf32, #tpu.memory_space<vmem>>, vector<20x32x128xf32>
    %75 = vector.extract_strided_slice %74 {offsets = [0, 0, 0], sizes = [16, 32, 128], strides = [1, 1, 1]} : vector<20x32x128xf32> to vector<16x32x128xf32>
    %76 = vector.extract_strided_slice %74 {offsets = [1, 0, 0], sizes = [16, 32, 128], strides = [1, 1, 1]} : vector<20x32x128xf32> to vector<16x32x128xf32>
    %77 = arith.maximumf %75, %76 : vector<16x32x128xf32>
    %78 = vector.extract_strided_slice %74 {offsets = [2, 0, 0], sizes = [16, 32, 128], strides = [1, 1, 1]} : vector<20x32x128xf32> to vector<16x32x128xf32>
    %79 = vector.extract_strided_slice %74 {offsets = [3, 0, 0], sizes = [16, 32, 128], strides = [1, 1, 1]} : vector<20x32x128xf32> to vector<16x32x128xf32>
    %80 = arith.maximumf %78, %79 : vector<16x32x128xf32>
    %81 = arith.maximumf %77, %80 : vector<16x32x128xf32>
    %82 = vector.extract_strided_slice %74 {offsets = [4, 0, 0], sizes = [16, 32, 128], strides = [1, 1, 1]} : vector<20x32x128xf32> to vector<16x32x128xf32>
    %83 = arith.maximumf %81, %82 : vector<16x32x128xf32>
    %c31_i32_52 = arith.constant 31 : i32
    %84 = tpu.dynamic_rotate %83 by %c31_i32_52 dim 1 : vector<16x32x128xf32>, i32 -> vector<16x32x128xf32>
    %85 = arith.maximumf %83, %84 : vector<16x32x128xf32>
    %c30_i32_53 = arith.constant 30 : i32
    %86 = tpu.dynamic_rotate %85 by %c30_i32_53 dim 1 : vector<16x32x128xf32>, i32 -> vector<16x32x128xf32>
    %87 = arith.maximumf %85, %86 : vector<16x32x128xf32>
    %c28_i32_54 = arith.constant 28 : i32
    %88 = tpu.dynamic_rotate %83 by %c28_i32_54 dim 1 : vector<16x32x128xf32>, i32 -> vector<16x32x128xf32>
    %89 = arith.maximumf %87, %88 : vector<16x32x128xf32>
    %c26_i32_55 = arith.constant 26 : i32
    %90 = tpu.dynamic_rotate %89 by %c26_i32_55 dim 1 : vector<16x32x128xf32>, i32 -> vector<16x32x128xf32>
    %91 = vector.extract_strided_slice %90 {offsets = [0, 0, 0], sizes = [16, 16, 128], strides = [1, 1, 1]} : vector<16x32x128xf32> to vector<16x16x128xf32>
    %92 = vector.shape_cast %91 : vector<16x16x128xf32> to vector<256x128xf32>
    %93 = arith.truncf %92 : vector<256x128xf32> to vector<256x128xbf16>
    %c3 = arith.constant 3 : index
    %c0_56 = arith.constant 0 : index
    %c0_57 = arith.constant 0 : index
    %94 = vector.load %arg4[%c3, %c0_56, %c0_57] : memref<4x128x128xbf16, #tpu.memory_space<vmem>>, vector<1x128x128xbf16>
    %95 = vector.shape_cast %94 : vector<1x128x128xbf16> to vector<128x128xbf16>
    %cst_58 = arith.constant dense<0.000000e+00> : vector<256x128xf32>
    %96 = tpu.matmul %93, %95, %cst_58 {dimension_numbers = #tpu.dot_dimension_numbers<[1], [0], [0], [1], [0, 0, 1, 1], [], []>} : vector<256x128xbf16>, vector<128x128xbf16>, vector<256x128xf32> -> vector<256x128xf32>
    %97 = arith.addf %72, %96 : vector<256x128xf32>
    %c0_59 = arith.constant 0 : index
    %c0_60 = arith.constant 0 : index
    %98 = vector.load %arg5[%c0_59, %c0_60] : memref<1x128xf32, #tpu.memory_space<vmem>>, vector<1x128xf32>
    %99 = vector.broadcast %98 : vector<1x128xf32> to vector<256x128xf32>
    %100 = arith.addf %97, %99 : vector<256x128xf32>
    %cst_61 = arith.constant 0.000000e+00 : f32
    %101 = vector.broadcast %cst_61 : f32 to vector<256x128xf32>
    %102 = arith.maximumf %100, %101 : vector<256x128xf32>
    %103 = vector.shape_cast %102 : vector<256x128xf32> to vector<16x16x128xf32>
    %c0_62 = arith.constant 0 : index
    %c0_63 = arith.constant 0 : index
    %c0_64 = arith.constant 0 : index
    %c0_65 = arith.constant 0 : index
    %104 = vector.load %arg6[%c0_62, %c0_63, %c0_64, %c0_65] : memref<1x16x16x128xf32, #tpu.memory_space<vmem>>, vector<1x16x16x128xf32>
    %105 = vector.shape_cast %104 : vector<1x16x16x128xf32> to vector<16x16x128xf32>
    %106 = vector.shape_cast %103 : vector<16x16x128xf32> to vector<1x16x16x128xf32>
    tpu.vector_store %arg6[%c0_62, %c0_63, %c0_64, %c0_65], %106 {strides = array<i32>} : memref<1x16x16x128xf32, #tpu.memory_space<vmem>>, vector<1x16x16x128xf32>,
    return
  }
  func.func @transform_0(%arg0: i32) -> (i32, i32, i32, i32) {
    %c0_i32 = arith.constant 0 : i32
    %c0_i32_0 = arith.constant 0 : i32
    %c0_i32_1 = arith.constant 0 : i32
    %c0_i32_2 = arith.constant 0 : i32
    return %arg0, %c0_i32, %c0_i32_0, %c0_i32_1 : i32, i32, i32, i32
  }
  func.func @transform_1(%arg0: i32) -> (i32, i32) {
    %c0_i32 = arith.constant 0 : i32
    %c0_i32_0 = arith.constant 0 : i32
    %c0_i32_1 = arith.constant 0 : i32
    return %c0_i32, %c0_i32_0 : i32, i32
  }
  func.func @transform_2(%arg0: i32) -> (i32, i32) {
    %c0_i32 = arith.constant 0 : i32
    %c0_i32_0 = arith.constant 0 : i32
    %c0_i32_1 = arith.constant 0 : i32
    return %c0_i32, %c0_i32_0 : i32, i32
  }
  func.func @transform_3(%arg0: i32) -> (i32, i32, i32) {
    %c0_i32 = arith.constant 0 : i32
    %c0_i32_0 = arith.constant 0 : i32
    %c0_i32_1 = arith.constant 0 : i32
    %c0_i32_2 = arith.constant 0 : i32
    return %c0_i32, %c0_i32_0, %c0_i32_1 : i32, i32, i32
  }
  func.func @transform_4(%arg0: i32) -> (i32, i32) {
    %c0_i32 = arith.constant 0 : i32
    %c0_i32_0 = arith.constant 0 : i32
    %c0_i32_1 = arith.constant 0 : i32
    return %c0_i32, %c0_i32_0 : i32, i32
  }
  func.func @transform_5(%arg0: i32) -> (i32, i32, i32, i32) {
    %c0_i32 = arith.constant 0 : i32
    %c0_i32_0 = arith.constant 0 : i32
    %c0_i32_1 = arith.constant 0 : i32
    %c0_i32_2 = arith.constant 0 : i32
    return %arg0, %c0_i32, %c0_i32_0, %c0_i32_1 : i32, i32, i32, i32
  }
}

</mosaic_0001>

<llo_original>
// kernel: tpu_custom_call.1
$region0: #{tpu_custom_call.1}
  #allocation0 [shape = 'u32[]', space=smem, size = 0x4, offset = 0x4, fixed_abs, tag = 'smem constant byte address 0x4 - core index']
  #allocation1 [shape = 'u32[144,128]{1,0:T(1,128)}', space=vmem, size = 0x12000, scoped, tag = 'internal scratch']
  #allocation2 [shape = 'f32[20,32,128]{2,1,0:T(8,128)}', space=vmem, size = 0x50000, scoped, tag = 'scratch operand']
  %s0 = inlined_call_operand.vmem [shape: f32[2,16,16,4], index: 0, kind: input, shape index: {}]
  %s1 = inlined_call_operand.vmem [shape: bf16[4,128], index: 1, kind: input, shape index: {}]
  %s2 = inlined_call_operand.vmem [shape: f32[1,128], index: 2, kind: input, shape index: {}]
  %s3 = inlined_call_operand.vmem [shape: bf16[4,128,128], index: 3, kind: input, shape index: {}]
  %s4 = inlined_call_operand.vmem [shape: f32[1,128], index: 4, kind: input, shape index: {}]
  %s5 = inlined_call_operand.hbm [shape: f32[2,16,16,128], index: 5, kind: output, shape index: {}]
  %s6 = sld [smem:[#allocation0]]
  $region53: #{tpu_custom_call.1} parent=0
    _
  %s8 = ssub.s32 1, %s6
  %s9 = scalar_select 0, %s8, %s6
  $region1: #{tpu_custom_call.1} parent=0
    #allocation3 [shape = 'u8[262144]{0}', space=vmem, size = 0x40000, scoped, tag = 'output window, operand 0']
    #allocation4 [shape = 's32[2]{0}', space=sflag, size = 0x8, scoped, tag = 'scoped memory for tpu_custom_call.1']
    %10 = vsyncpa [#allocation4], 0
    %s11 = scalar_lea.sflag [#allocation4], 1
    %12 = vsyncpa %s11, 0
    loop: start=0, step=1, limit=4
    $region2: #{tpu_custom_call.1} parent=1 // loop_pre_header
      _
    $region3: #{tpu_custom_call.1} parent=1 // loop_header
      %s14 = sphi 0, %s18
      %p15 = scmp.ge.s32.totalorder %s14, 4
      %s24 = sphi 0, %s26
      %s27 = sphi 0, %s24
      %s28 = sphi 0, %s27
      %s44 = sphi 0, %s28
      %s48 = sphi 0, %s48
      %s50 = sphi 0, %s48
      %s51 = sphi 0, %s50
      %s65 = sphi 0, %s51
      %s69 = sphi 0, %s69
      %s71 = sphi 0, %s69
      %s72 = sphi 0, %s71
      %s86 = sphi 0, %s72
      %s90 = sphi 0, %s90
      %s92 = sphi 0, %s90
      %s93 = sphi 0, %s92
      %s107 = sphi 0, %s93
      %s111 = sphi 0, %s111
      %s113 = sphi 0, %s111
      %s114 = sphi 0, %s113
      %s128 = sphi 0, %s114
      %s134 = sphi 0, %s136
      %s137 = sphi 0, %s134
      %s138 = sphi 0, %s137
      %s154 = sphi 0, %s138
    $region4: #{tpu_custom_call.1} parent=1 // loop_header_branch
      %17 = sbr.rel (%p15) target = $region8
    $region5: #{tpu_custom_call.1} parent=1 // loop_body
      %s19 = ssub.s32 %s14, 1
      %s20 = ssub.s32 %s14, 2
      %s21 = sadd.s32 %s14, 1
      %s22 = ssub.s32 %s14, %s21
      %p23 = scmp.eq.s32.totalorder %s22, 0
      %s25 = sadd.s32 %s24, 1
      %s26 = scalar_select %p23, %s24, %s25
      %p29 = pneg %p23
      %p30 = scmp.eq.s32.totalorder %s14, 1
      %p31 = por %p29, %p30
      %p32 = scmp.ne.s32.totalorder %s24, %s27
      %p33 = scmp.eq.s32.totalorder %s14, 0
      %p34 = por %p32, %p33
      %p35 = scmp.ne.s32.totalorder %s24, %s27
      %p36 = scmp.eq.s32.totalorder %s19, 1
      %p37 = por %p35, %p36
      %p38 = scmp.ne.s32.totalorder %s27, %s28
      %p39 = scmp.eq.s32.totalorder %s19, 0
      %p40 = por %p38, %p39
      %p41 = scmp.ne.s32.totalorder %s27, %s28
      %p42 = scmp.eq.s32.totalorder %s20, 1
      %p43 = por %p41, %p42
      %p45 = scmp.ne.s32.totalorder %s28, %s44
      %p46 = scmp.eq.s32.totalorder %s20, 0
      %p47 = por %p45, %p46
      %s49 = sadd.s32 %s48, 1
      %p52 = scmp.eq.s32.totalorder %s14, 1
      %p53 = scmp.ne.s32.totalorder %s48, %s50
      %p54 = scmp.eq.s32.totalorder %s14, 0
      %p55 = por %p53, %p54
      %p56 = scmp.ne.s32.totalorder %s48, %s50
      %p57 = scmp.eq.s32.totalorder %s19, 1
      %p58 = por %p56, %p57
      %p59 = scmp.ne.s32.totalorder %s50, %s51
      %p60 = scmp.eq.s32.totalorder %s19, 0
      %p61 = por %p59, %p60
      %p62 = scmp.ne.s32.totalorder %s50, %s51
      %p63 = scmp.eq.s32.totalorder %s20, 1
      %p64 = por %p62, %p63
      %p66 = scmp.ne.s32.totalorder %s51, %s65
      %p67 = scmp.eq.s32.totalorder %s20, 0
      %p68 = por %p66, %p67
      %s70 = sadd.s32 %s69, 1
      %p73 = scmp.eq.s32.totalorder %s14, 1
      %p74 = scmp.ne.s32.totalorder %s69, %s71
      %p75 = scmp.eq.s32.totalorder %s14, 0
      %p76 = por %p74, %p75
      %p77 = scmp.ne.s32.totalorder %s69, %s71
      %p78 = scmp.eq.s32.totalorder %s19, 1
      %p79 = por %p77, %p78
      %p80 = scmp.ne.s32.totalorder %s71, %s72
      %p81 = scmp.eq.s32.totalorder %s19, 0
      %p82 = por %p80, %p81
      %p83 = scmp.ne.s32.totalorder %s71, %s72
      %p84 = scmp.eq.s32.totalorder %s20, 1
      %p85 = por %p83, %p84
      %p87 = scmp.ne.s32.totalorder %s72, %s86
      %p88 = scmp.eq.s32.totalorder %s20, 0
      %p89 = por %p87, %p88
      %s91 = sadd.s32 %s90, 1
      %p94 = scmp.eq.s32.totalorder %s14, 1
      %p95 = scmp.ne.s32.totalorder %s90, %s92
      %p96 = scmp.eq.s32.totalorder %s14, 0
      %p97 = por %p95, %p96
      %p98 = scmp.ne.s32.totalorder %s90, %s92
      %p99 = scmp.eq.s32.totalorder %s19, 1
      %p100 = por %p98, %p99
      %p101 = scmp.ne.s32.totalorder %s92, %s93
      %p102 = scmp.eq.s32.totalorder %s19, 0
      %p103 = por %p101, %p102
      %p104 = scmp.ne.s32.totalorder %s92, %s93
      %p105 = scmp.eq.s32.totalorder %s20, 1
      %p106 = por %p104, %p105
      %p108 = scmp.ne.s32.totalorder %s93, %s107
      %p109 = scmp.eq.s32.totalorder %s20, 0
      %p110 = por %p108, %p109
      %s112 = sadd.s32 %s111, 1
      %p115 = scmp.eq.s32.totalorder %s14, 1
      %p116 = scmp.ne.s32.totalorder %s111, %s113
      %p117 = scmp.eq.s32.totalorder %s14, 0
      %p118 = por %p116, %p117
      %p119 = scmp.ne.s32.totalorder %s111, %s113
      %p120 = scmp.eq.s32.totalorder %s19, 1
      %p121 = por %p119, %p120
      %p122 = scmp.ne.s32.totalorder %s113, %s114
      %p123 = scmp.eq.s32.totalorder %s19, 0
      %p124 = por %p122, %p123
      %p125 = scmp.ne.s32.totalorder %s113, %s114
      %p126 = scmp.eq.s32.totalorder %s20, 1
      %p127 = por %p125, %p126
      %p129 = scmp.ne.s32.totalorder %s114, %s128
      %p130 = scmp.eq.s32.totalorder %s20, 0
      %p131 = por %p129, %p130
      %s132 = ssub.s32 %s14, %s21
      %p133 = scmp.eq.s32.totalorder %s132, 0
      %s135 = sadd.s32 %s134, 1
      %s136 = scalar_select %p133, %s134, %s135
      %p139 = pneg %p133
      %p140 = scmp.eq.s32.totalorder %s14, 1
      %p141 = por %p139, %p140
      %p142 = scmp.ne.s32.totalorder %s134, %s137
      %p143 = scmp.eq.s32.totalorder %s14, 0
      %p144 = por %p142, %p143
      %p145 = scmp.ne.s32.totalorder %s134, %s137
      %p146 = scmp.eq.s32.totalorder %s19, 1
      %p147 = por %p145, %p146
      %p148 = scmp.ne.s32.totalorder %s137, %s138
      %p149 = scmp.eq.s32.totalorder %s19, 0
      %p150 = por %p148, %p149
      %p151 = scmp.ne.s32.totalorder %s137, %s138
      %p152 = scmp.eq.s32.totalorder %s20, 1
      %p153 = por %p151, %p152
      %p155 = scmp.ne.s32.totalorder %s138, %s154
      %p156 = scmp.eq.s32.totalorder %s20, 0
      %p157 = por %p155, %p156
      %p158 = scmp.le.s32.totalorder 1, %s14
      %p159 = scmp.lt.s32.totalorder %s14, 3
      %p160 = pnand %p158, %p159
      %p161 = pneg %p160
      // Predicated region
      $region9: #{tpu_custom_call.1} parent=5 // pred_check
        _
      $region10: #{tpu_custom_call.1} parent=5 // pred_check_branch
        %163 = sbr.rel (%p160) target = $region12
      $region11: #{tpu_custom_call.1} parent=5 // pred_region
        %s164 = ssub.s32 %s14, 1
        // Predicated region
        $region13: #{tpu_custom_call.1} parent=11 // pred_check
          %p165 = pneg %p61
        $region14: #{tpu_custom_call.1} parent=11 // pred_check_branch
          %167 = sbr.rel (%p165) target = $region16
        $region15: #{tpu_custom_call.1} parent=11 // pred_region
          _
        $region16: #{tpu_custom_call.1} parent=11 // pred_fallthru
          _
        // Predicated region
        $region17: #{tpu_custom_call.1} parent=11 // pred_check
          %p168 = pneg %p82
        $region18: #{tpu_custom_call.1} parent=11 // pred_check_branch
          %170 = sbr.rel (%p168) target = $region20
        $region19: #{tpu_custom_call.1} parent=11 // pred_region
          _
        $region20: #{tpu_custom_call.1} parent=11 // pred_fallthru
          _
        // Predicated region
        $region21: #{tpu_custom_call.1} parent=11 // pred_check
          %p171 = pneg %p103
        $region22: #{tpu_custom_call.1} parent=11 // pred_check_branch
          %173 = sbr.rel (%p171) target = $region24
        $region23: #{tpu_custom_call.1} parent=11 // pred_region
          _
        $region24: #{tpu_custom_call.1} parent=11 // pred_fallthru
          _
        // Predicated region
        $region25: #{tpu_custom_call.1} parent=11 // pred_check
          %p174 = pneg %p124
        $region26: #{tpu_custom_call.1} parent=11 // pred_check_branch
          %176 = sbr.rel (%p174) target = $region28
        $region27: #{tpu_custom_call.1} parent=11 // pred_region
          _
        $region28: #{tpu_custom_call.1} parent=11 // pred_fallthru
          _
      $region12: #{tpu_custom_call.1} parent=5 // pred_fallthru
        _
      %p177 = scmp.lt.s32.totalorder %s14, 2
      // Predicated region
      $region29: #{tpu_custom_call.1} parent=5 // pred_check
        %p178 = pneg %p177
      $region30: #{tpu_custom_call.1} parent=5 // pred_check_branch
        %180 = sbr.rel (%p178) target = $region32
      $region31: #{tpu_custom_call.1} parent=5 // pred_region
        // Predicated region
        $region33: #{tpu_custom_call.1} parent=31 // pred_check
          %p181 = pneg %p34
        $region34: #{tpu_custom_call.1} parent=31 // pred_check_branch
          %183 = sbr.rel (%p181) target = $region36
        $region35: #{tpu_custom_call.1} parent=31 // pred_region
          %p184 = scmp.lt.s32.totalorder %s14, 1
          %s185 = scalar_select %p184, %s14, 1
          %s186 = smul.addr %s185, 32
          %s187 = smul.addr %s186, 8
          %s188 = scalar_lea.vmem %s0, %s187
        $region36: #{tpu_custom_call.1} parent=31 // pred_fallthru
          _
      $region32: #{tpu_custom_call.1} parent=5 // pred_fallthru
        _
      %p189 = scmp.le.s32.totalorder 1, %s14
      %p190 = scmp.lt.s32.totalorder %s14, 3
      %p191 = pnand %p189, %p190
      %p192 = pneg %p191
      // Predicated region
      $region37: #{tpu_custom_call.1} parent=5 // pred_check
        _
      $region38: #{tpu_custom_call.1} parent=5 // pred_check_branch
        %194 = sbr.rel (%p191) target = $region40
      $region39: #{tpu_custom_call.1} parent=5 // pred_region
        %s195 = ssub.s32 %s14, 1
        %p196 = scmp.lt.s32.totalorder %s19, 1
        %s197 = scalar_select %p196, %s19, 1
        %s198 = smul.addr %s197, 32
        %s199 = smul.addr %s198, 8
        %s200 = scalar_lea.vmem %s0, %s199
        %p201 = pneg %p40
        %p202 = pneg %p37
        %p203 = pneg %p61
        %p204 = pneg %p58
        %p205 = pneg %p82
        %p206 = pneg %p79
        %p207 = pneg %p103
        %p208 = pneg %p100
        %p209 = pneg %p124
        %p210 = pneg %p121
        %p211 = pneg %p150
        %p212 = pneg %p147
        %s213 = sand.u32 %s137, 1
        %s214 = scalar_lea.sflag [#allocation4], %s213
        %s215 = sand.u32 %s137, 1
        %s216 = smul.addr %s215, 256
        %s217 = scalar_lea.vmem [#allocation3], %s216
        %p218 = scmp.lt.s32.totalorder %s19, 1
        %s219 = scalar_select %p218, %s19, 1
        %s220 = smul.addr %s219, 32
        %s221 = smul.addr %s220, 8
        %s222 = scalar_lea.vmem %s0, %s221
        %v224 = vld [vmem:[%s222] sm:$0xff]
        %v225 = vld [vmem:[%s222 + $0x8] sm:$0xff]
        %v226 = vld [vmem:[%s222 + $0x10] sm:$0xff]
        %v227 = vld [vmem:[%s222 + $0x18] sm:$0xff]
        %v228 = vld [vmem:[%s222 + $0x20] sm:$0xff]
        %v229 = vld [vmem:[%s222 + $0x28] sm:$0xff]
        %v230 = vld [vmem:[%s222 + $0x30] sm:$0xff]
        %v231 = vld [vmem:[%s222 + $0x38] sm:$0xff]
        %v232 = vld [vmem:[%s222 + $0x40] sm:$0xff]
        %v233 = vld [vmem:[%s222 + $0x48] sm:$0xff]
        %v234 = vld [vmem:[%s222 + $0x50] sm:$0xff]
        %v235 = vld [vmem:[%s222 + $0x58] sm:$0xff]
        %v236 = vld [vmem:[%s222 + $0x60] sm:$0xff]
        %v237 = vld [vmem:[%s222 + $0x68] sm:$0xff]
        %v238 = vld [vmem:[%s222 + $0x70] sm:$0xff]
        %v239 = vld [vmem:[%s222 + $0x78] sm:$0xff]
        %v240 = vld [vmem:[%s222 + $0x80] sm:$0xff]
        %v241 = vld [vmem:[%s222 + $0x88] sm:$0xff]
        %v242 = vld [vmem:[%s222 + $0x90] sm:$0xff]
        %v243 = vld [vmem:[%s222 + $0x98] sm:$0xff]
        %v244 = vld [vmem:[%s222 + $0xa0] sm:$0xff]
        %v245 = vld [vmem:[%s222 + $0xa8] sm:$0xff]
        %v246 = vld [vmem:[%s222 + $0xb0] sm:$0xff]
        %v247 = vld [vmem:[%s222 + $0xb8] sm:$0xff]
        %v248 = vld [vmem:[%s222 + $0xc0] sm:$0xff]
        %v249 = vld [vmem:[%s222 + $0xc8] sm:$0xff]
        %v250 = vld [vmem:[%s222 + $0xd0] sm:$0xff]
        %v251 = vld [vmem:[%s222 + $0xd8] sm:$0xff]
        %v252 = vld [vmem:[%s222 + $0xe0] sm:$0xff]
        %v253 = vld [vmem:[%s222 + $0xe8] sm:$0xff]
        %v254 = vld [vmem:[%s222 + $0xf0] sm:$0xff]
        %v255 = vld [vmem:[%s222 + $0xf8] sm:$0xff]
        %v256 = vpack.c.bf16 %v225, %v224
        %v257 = vpack.c.bf16 %v227, %v226
        %v258 = vpack.c.bf16 %v229, %v228
        %v259 = vpack.c.bf16 %v231, %v230
        %v260 = vpack.c.bf16 %v233, %v232
        %v261 = vpack.c.bf16 %v235, %v234
        %v262 = vpack.c.bf16 %v237, %v236
        %v263 = vpack.c.bf16 %v239, %v238
        %v264 = vpack.c.bf16 %v241, %v240
        %v265 = vpack.c.bf16 %v243, %v242
        %v266 = vpack.c.bf16 %v245, %v244
        %v267 = vpack.c.bf16 %v247, %v246
        %v268 = vpack.c.bf16 %v249, %v248
        %v269 = vpack.c.bf16 %v251, %v250
        %v270 = vpack.c.bf16 %v253, %v252
        %v271 = vpack.c.bf16 %v255, %v254
        %v272 = vld [vmem:[%s1] sm:$0x3]
        %v273 = vld [vmem:[%s2] sm:$0x1]
        %v275 = vlaneseq
        %v276 = vshrl.u32 %v275, 7
        %v277 = vsub.s32 0, %v276
        %v278 = vrot.slane %v273, %v277
        %vm280 = vcmask 31744
        %v282 = vsel %vm280, %v256, 0
        %v285 = vsel %vm280, %v257, 0
        %v288 = vsel %vm280, %v258, 0
        %v291 = vsel %vm280, %v259, 0
        %v294 = vsel %vm280, %v260, 0
        %v297 = vsel %vm280, %v261, 0
        %v300 = vsel %vm280, %v262, 0
        %v303 = vsel %vm280, %v263, 0
        %v306 = vsel %vm280, %v264, 0
        %v309 = vsel %vm280, %v265, 0
        %v312 = vsel %vm280, %v266, 0
        %v315 = vsel %vm280, %v267, 0
        %v318 = vsel %vm280, %v268, 0
        %v321 = vsel %vm280, %v269, 0
        %v324 = vsel %vm280, %v270, 0
        %v327 = vsel %vm280, %v271, 0
        %vm329 = vcmask 1041408
        %v331 = vsel %vm329, %v272, 0
        %333 = vmatprep.subr.bf16.mxu0 0
        %334 = vmatpush1.bf16.msra.mxu0 0
        %335 = vmatprep.subr.bf16.mxu0 0
        %336 = vmatpush1.bf16.msra.mxu0 0
        %337 = vmatprep.subr.bf16.mxu0 0
        %338 = vmatpush1.bf16.msra.mxu0 0
        %339 = vmatprep.subr.bf16.mxu0 0
        %340 = vmatpush1.bf16.msra.mxu0 0
        %341 = vmatprep.subr.bf16.mxu0 0
        %342 = vmatpush1.bf16.msra.mxu0 0
        %343 = vmatprep.subr.bf16.mxu0 0
        %344 = vmatpush1.bf16.msra.mxu0 0
        %345 = vmatprep.subr.bf16.mxu0 0
        %346 = vmatpush1.bf16.msra.mxu0 0
        %347 = vmatprep.subr.bf16.mxu0 0
        %348 = vmatpush1.bf16.msra.mxu0 %v331
        %349 = vmatprep.subr.bf16.mxu0 0
        %350 = vmatpush2.bf16.msra.mxu0 0
        %351 = vmatprep.subr.bf16.mxu0 0
        %352 = vmatpush2.bf16.msra.mxu0 0
        %353 = vmatprep.subr.bf16.mxu0 0
        %354 = vmatpush2.bf16.msra.mxu0 0
        %355 = vmatprep.subr.bf16.mxu0 0
        %356 = vmatpush2.bf16.msra.mxu0 0
        %357 = vmatprep.subr.bf16.mxu0 0
        %358 = vmatpush2.bf16.msra.mxu0 0
        %359 = vmatprep.subr.bf16.mxu0 0
        %360 = vmatpush2.bf16.msra.mxu0 0
        %361 = vmatprep.subr.bf16.mxu0 0
        %362 = vmatpush2.bf16.msra.mxu0 0
        %363 = vmatprep.subr.bf16.mxu0 0
        %364 = vmatpush2.bf16.msra.mxu0 0
        %365 = vmatprep.mubr.bf16.mxu0 0
        %366 = vmatmul.mubr.bf16.gmra.mxu0 %v282
        %v367 = vpop.f32.mrf.mxu0
        %v368 = vadd.f32 %v278, %v367
        %v369 = vpop.f32.mrf.mxu0
        %v370 = vpop.f32.mrf.mxu0
        %v371 = vadd.f32 %v278, %v370
        %v372 = vpop.f32.mrf.mxu0
        %373 = vmatprep.mubr.bf16.mxu0 0
        %374 = vmatmul.mubr.bf16.gmra.mxu0 %v285
        %v375 = vpop.f32.mrf.mxu0
        %v376 = vadd.f32 %v278, %v375
        %v377 = vpop.f32.mrf.mxu0
        %v378 = vpop.f32.mrf.mxu0
        %v379 = vadd.f32 %v278, %v378
        %v380 = vpop.f32.mrf.mxu0
        %381 = vmatprep.mubr.bf16.mxu0 0
        %382 = vmatmul.mubr.bf16.gmra.mxu0 %v288
        %v383 = vpop.f32.mrf.mxu0
        %v384 = vadd.f32 %v278, %v383
        %v385 = vpop.f32.mrf.mxu0
        %v386 = vpop.f32.mrf.mxu0
        %v387 = vadd.f32 %v278, %v386
        %v388 = vpop.f32.mrf.mxu0
        %389 = vmatprep.mubr.bf16.mxu0 0
        %390 = vmatmul.mubr.bf16.gmra.mxu0 %v291
        %v391 = vpop.f32.mrf.mxu0
        %v392 = vadd.f32 %v278, %v391
        %v393 = vpop.f32.mrf.mxu0
        %v394 = vpop.f32.mrf.mxu0
        %v395 = vadd.f32 %v278, %v394
        %v396 = vpop.f32.mrf.mxu0
        %397 = vmatprep.mubr.bf16.mxu0 0
        %398 = vmatmul.mubr.bf16.gmra.mxu0 %v294
        %v399 = vpop.f32.mrf.mxu0
        %v400 = vadd.f32 %v278, %v399
        %v401 = vpop.f32.mrf.mxu0
        %v402 = vpop.f32.mrf.mxu0
        %v403 = vadd.f32 %v278, %v402
        %v404 = vpop.f32.mrf.mxu0
        %405 = vmatprep.mubr.bf16.mxu0 0
        %406 = vmatmul.mubr.bf16.gmra.mxu0 %v297
        %v407 = vpop.f32.mrf.mxu0
        %v408 = vadd.f32 %v278, %v407
        %v409 = vpop.f32.mrf.mxu0
        %v410 = vpop.f32.mrf.mxu0
        %v411 = vadd.f32 %v278, %v410
        %v412 = vpop.f32.mrf.mxu0
        %413 = vmatprep.mubr.bf16.mxu0 0
        %414 = vmatmul.mubr.bf16.gmra.mxu0 %v300
        %v415 = vpop.f32.mrf.mxu0
        %v416 = vadd.f32 %v278, %v415
        %v417 = vpop.f32.mrf.mxu0
        %v418 = vpop.f32.mrf.mxu0
        %v419 = vadd.f32 %v278, %v418
        %v420 = vpop.f32.mrf.mxu0
        %421 = vmatprep.mubr.bf16.mxu0 0
        %422 = vmatmul.mubr.bf16.gmra.mxu0 %v303
        %v423 = vpop.f32.mrf.mxu0
        %v424 = vadd.f32 %v278, %v423
        %v425 = vpop.f32.mrf.mxu0
        %v426 = vpop.f32.mrf.mxu0
        %v427 = vadd.f32 %v278, %v426
        %v428 = vpop.f32.mrf.mxu0
        %429 = vmatprep.mubr.bf16.mxu0 0
        %430 = vmatmul.mubr.bf16.gmra.mxu0 %v306
        %v431 = vpop.f32.mrf.mxu0
        %v432 = vadd.f32 %v278, %v431
        %v433 = vpop.f32.mrf.mxu0
        %v434 = vpop.f32.mrf.mxu0
        %v435 = vadd.f32 %v278, %v434
        %v436 = vpop.f32.mrf.mxu0
        %437 = vmatprep.mubr.bf16.mxu0 0
        %438 = vmatmul.mubr.bf16.gmra.mxu0 %v309
        %v439 = vpop.f32.mrf.mxu0
        %v440 = vadd.f32 %v278, %v439
        %v441 = vpop.f32.mrf.mxu0
        %v442 = vpop.f32.mrf.mxu0
        %v443 = vadd.f32 %v278, %v442
        %v444 = vpop.f32.mrf.mxu0
        %445 = vmatprep.mubr.bf16.mxu0 0
        %446 = vmatmul.mubr.bf16.gmra.mxu0 %v312
        %v447 = vpop.f32.mrf.mxu0
        %v448 = vadd.f32 %v278, %v447
        %v449 = vpop.f32.mrf.mxu0
        %v450 = vpop.f32.mrf.mxu0
        %v451 = vadd.f32 %v278, %v450
        %v452 = vpop.f32.mrf.mxu0
        %453 = vmatprep.mubr.bf16.mxu0 0
        %454 = vmatmul.mubr.bf16.gmra.mxu0 %v315
        %v455 = vpop.f32.mrf.mxu0
        %v456 = vadd.f32 %v278, %v455
        %v457 = vpop.f32.mrf.mxu0
        %v458 = vpop.f32.mrf.mxu0
        %v459 = vadd.f32 %v278, %v458
        %v460 = vpop.f32.mrf.mxu0
        %461 = vmatprep.mubr.bf16.mxu0 0
        %462 = vmatmul.mubr.bf16.gmra.mxu0 %v318
        %v463 = vpop.f32.mrf.mxu0
        %v464 = vadd.f32 %v278, %v463
        %v465 = vpop.f32.mrf.mxu0
        %v466 = vpop.f32.mrf.mxu0
        %v467 = vadd.f32 %v278, %v466
        %v468 = vpop.f32.mrf.mxu0
        %469 = vmatprep.mubr.bf16.mxu0 0
        %470 = vmatmul.mubr.bf16.gmra.mxu0 %v321
        %v471 = vpop.f32.mrf.mxu0
        %v472 = vadd.f32 %v278, %v471
        %v473 = vpop.f32.mrf.mxu0
        %v474 = vpop.f32.mrf.mxu0
        %v475 = vadd.f32 %v278, %v474
        %v476 = vpop.f32.mrf.mxu0
        %477 = vmatprep.mubr.bf16.mxu0 0
        %478 = vmatmul.mubr.bf16.gmra.mxu0 %v324
        %v479 = vpop.f32.mrf.mxu0
        %v480 = vadd.f32 %v278, %v479
        %v481 = vpop.f32.mrf.mxu0
        %v482 = vpop.f32.mrf.mxu0
        %v483 = vadd.f32 %v278, %v482
        %v484 = vpop.f32.mrf.mxu0
        %485 = vmatprep.mubr.bf16.mxu0 0
        %486 = vmatmul.mubr.bf16.gmra.mxu0 %v327
        %v487 = vpop.f32.mrf.mxu0
        %v488 = vadd.f32 %v278, %v487
        %v489 = vpop.f32.mrf.mxu0
        %v490 = vpop.f32.mrf.mxu0
        %v491 = vadd.f32 %v278, %v490
        %v492 = vpop.f32.mrf.mxu0
        %493 = vdwg.mxu0
        %v494 = vmax.f32 %v368, 0.0
        %v495 = vmax.f32 %v371, 0.0
        %v496 = vmax.f32 %v376, 0.0
        %v497 = vmax.f32 %v379, 0.0
        %v498 = vmax.f32 %v384, 0.0
        %v499 = vmax.f32 %v387, 0.0
        %v500 = vmax.f32 %v392, 0.0
        %v501 = vmax.f32 %v395, 0.0
        %v502 = vmax.f32 %v400, 0.0
        %v503 = vmax.f32 %v403, 0.0
        %v504 = vmax.f32 %v408, 0.0
        %v505 = vmax.f32 %v411, 0.0
        %v506 = vmax.f32 %v416, 0.0
        %v507 = vmax.f32 %v419, 0.0
        %v508 = vmax.f32 %v424, 0.0
        %v509 = vmax.f32 %v427, 0.0
        %v510 = vmax.f32 %v432, 0.0
        %v511 = vmax.f32 %v435, 0.0
        %v512 = vmax.f32 %v440, 0.0
        %v513 = vmax.f32 %v443, 0.0
        %v514 = vmax.f32 %v448, 0.0
        %v515 = vmax.f32 %v451, 0.0
        %v516 = vmax.f32 %v456, 0.0
        %v517 = vmax.f32 %v459, 0.0
        %v518 = vmax.f32 %v464, 0.0
        %v519 = vmax.f32 %v467, 0.0
        %v520 = vmax.f32 %v472, 0.0
        %v521 = vmax.f32 %v475, 0.0
        %v522 = vmax.f32 %v480, 0.0
        %v523 = vmax.f32 %v483, 0.0
        %v524 = vmax.f32 %v488, 0.0
        %v525 = vmax.f32 %v491, 0.0
        %526 = vst [vmem:[#allocation2] sm:$0xff] 0.0
        %527 = vst [vmem:[#allocation2 + $0x8] sm:$0xff] 0.0
        %528 = vst [vmem:[#allocation2 + $0x10] sm:$0xff] 0.0
        %529 = vst [vmem:[#allocation2 + $0x18] sm:$0xff] 0.0
        %530 = vst [vmem:[#allocation2 + $0x20] sm:$0xff] 0.0
        %531 = vst [vmem:[#allocation2 + $0x28] sm:$0xff] 0.0
        %532 = vst [vmem:[#allocation2 + $0x30] sm:$0xff] 0.0
        %533 = vst [vmem:[#allocation2 + $0x38] sm:$0xff] 0.0
        %s534 = scalar_lea.vmem [#allocation2], 576
        %535 = vst [vmem:[%s534] sm:$0xff] 0.0
        %536 = vst [vmem:[%s534 + $0x8] sm:$0xff] 0.0
        %537 = vst [vmem:[%s534 + $0x10] sm:$0xff] 0.0
        %538 = vst [vmem:[%s534 + $0x18] sm:$0xff] 0.0
        %539 = vst [vmem:[%s534 + $0x20] sm:$0xff] 0.0
        %540 = vst [vmem:[%s534 + $0x28] sm:$0xff] 0.0
        %541 = vst [vmem:[%s534 + $0x30] sm:$0xff] 0.0
        %542 = vst [vmem:[%s534 + $0x38] sm:$0xff] 0.0
        %s543 = scalar_lea.vmem [#allocation2], 64
        %544 = vst [vmem:[%s543] sm:$0xff] 0.0
        %545 = vst [vmem:[%s543 + $0x20] sm:$0xff] 0.0
        %546 = vst [vmem:[%s543 + $0x40] sm:$0xff] 0.0
        %547 = vst [vmem:[%s543 + $0x60] sm:$0xff] 0.0
        %548 = vst [vmem:[%s543 + $0x80] sm:$0xff] 0.0
        %549 = vst [vmem:[%s543 + $0xa0] sm:$0xff] 0.0
        %550 = vst [vmem:[%s543 + $0xc0] sm:$0xff] 0.0
        %551 = vst [vmem:[%s543 + $0xe0] sm:$0xff] 0.0
        %552 = vst [vmem:[%s543 + $0x100] sm:$0xff] 0.0
        %553 = vst [vmem:[%s543 + $0x120] sm:$0xff] 0.0
        %554 = vst [vmem:[%s543 + $0x140] sm:$0xff] 0.0
        %555 = vst [vmem:[%s543 + $0x160] sm:$0xff] 0.0
        %556 = vst [vmem:[%s543 + $0x180] sm:$0xff] 0.0
        %557 = vst [vmem:[%s543 + $0x1a0] sm:$0xff] 0.0
        %558 = vst [vmem:[%s543 + $0x1c0] sm:$0xff] 0.0
        %559 = vst [vmem:[%s543 + $0x1e0] sm:$0xff] 0.0
        %560 = vst [vmem:[%s543 + $0x18] sm:$0xff] 0.0
        %561 = vst [vmem:[%s543 + $0x38] sm:$0xff] 0.0
        %562 = vst [vmem:[%s543 + $0x58] sm:$0xff] 0.0
        %563 = vst [vmem:[%s543 + $0x78] sm:$0xff] 0.0
        %564 = vst [vmem:[%s543 + $0x98] sm:$0xff] 0.0
        %565 = vst [vmem:[%s543 + $0xb8] sm:$0xff] 0.0
        %566 = vst [vmem:[%s543 + $0xd8] sm:$0xff] 0.0
        %567 = vst [vmem:[%s543 + $0xf8] sm:$0xff] 0.0
        %568 = vst [vmem:[%s543 + $0x118] sm:$0xff] 0.0
        %569 = vst [vmem:[%s543 + $0x138] sm:$0xff] 0.0
        %570 = vst [vmem:[%s543 + $0x158] sm:$0xff] 0.0
        %571 = vst [vmem:[%s543 + $0x178] sm:$0xff] 0.0
        %572 = vst [vmem:[%s543 + $0x198] sm:$0xff] 0.0
        %573 = vst [vmem:[%s543 + $0x1b8] sm:$0xff] 0.0
        %574 = vst [vmem:[%s543 + $0x1d8] sm:$0xff] 0.0
        %575 = vst [vmem:[%s543 + $0x1f8] sm:$0xff] 0.0
        %v576 = vpack.c.bf16 %v495, %v494
        %v577 = vpack.c.bf16 %v497, %v496
        %v578 = vpack.c.bf16 %v499, %v498
        %v579 = vpack.c.bf16 %v501, %v500
        %v580 = vpack.c.bf16 %v503, %v502
        %v581 = vpack.c.bf16 %v505, %v504
        %v582 = vpack.c.bf16 %v507, %v506
        %v583 = vpack.c.bf16 %v509, %v508
        %v584 = vpack.c.bf16 %v511, %v510
        %v585 = vpack.c.bf16 %v513, %v512
        %v586 = vpack.c.bf16 %v515, %v514
        %v587 = vpack.c.bf16 %v517, %v516
        %v588 = vpack.c.bf16 %v519, %v518
        %v589 = vpack.c.bf16 %v521, %v520
        %v590 = vpack.c.bf16 %v523, %v522
        %v591 = vpack.c.bf16 %v525, %v524
        %v592 = vld [vmem:[%s3] sm:$0xf]
        %v593 = vld [vmem:[%s3 + $0x4] sm:$0xf]
        %v594 = vld [vmem:[%s3 + $0x8] sm:$0xf]
        %v595 = vld [vmem:[%s3 + $0xc] sm:$0xf]
        %v596 = vld [vmem:[%s3 + $0x10] sm:$0xf]
        %v597 = vld [vmem:[%s3 + $0x14] sm:$0xf]
        %v598 = vld [vmem:[%s3 + $0x18] sm:$0xf]
        %v599 = vld [vmem:[%s3 + $0x1c] sm:$0xf]
        %v600 = vld [vmem:[%s3 + $0x20] sm:$0xf]
        %v601 = vld [vmem:[%s3 + $0x24] sm:$0xf]
        %v602 = vld [vmem:[%s3 + $0x28] sm:$0xf]
        %v603 = vld [vmem:[%s3 + $0x2c] sm:$0xf]
        %v604 = vld [vmem:[%s3 + $0x30] sm:$0xf]
        %v605 = vld [vmem:[%s3 + $0x34] sm:$0xf]
        %v606 = vld [vmem:[%s3 + $0x38] sm:$0xf]
        %v607 = vld [vmem:[%s3 + $0x3c] sm:$0xf]
        %608 = vst [vmem:[%s543 + $0x8] sm:$0xff] %v494
        %609 = vst [vmem:[%s543 + $0x10] sm:$0xff] %v495
        %610 = vst [vmem:[%s543 + $0x28] sm:$0xff] %v496
        %611 = vst [vmem:[%s543 + $0x30] sm:$0xff] %v497
        %612 = vst [vmem:[%s543 + $0x48] sm:$0xff] %v498
        %613 = vst [vmem:[%s543 + $0x50] sm:$0xff] %v499
        %614 = vst [vmem:[%s543 + $0x68] sm:$0xff] %v500
        %615 = vst [vmem:[%s543 + $0x70] sm:$0xff] %v501
        %616 = vst [vmem:[%s543 + $0x88] sm:$0xff] %v502
        %617 = vst [vmem:[%s543 + $0x90] sm:$0xff] %v503
        %618 = vst [vmem:[%s543 + $0xa8] sm:$0xff] %v504
        %619 = vst [vmem:[%s543 + $0xb0] sm:$0xff] %v505
        %620 = vst [vmem:[%s543 + $0xc8] sm:$0xff] %v506
        %621 = vst [vmem:[%s543 + $0xd0] sm:$0xff] %v507
        %622 = vst [vmem:[%s543 + $0xe8] sm:$0xff] %v508
        %623 = vst [vmem:[%s543 + $0xf0] sm:$0xff] %v509
        %624 = vst [vmem:[%s543 + $0x108] sm:$0xff] %v510
        %625 = vst [vmem:[%s543 + $0x110] sm:$0xff] %v511
        %626 = vst [vmem:[%s543 + $0x128] sm:$0xff] %v512
        %627 = vst [vmem:[%s543 + $0x130] sm:$0xff] %v513
        %628 = vst [vmem:[%s543 + $0x148] sm:$0xff] %v514
        %629 = vst [vmem:[%s543 + $0x150] sm:$0xff] %v515
        %630 = vst [vmem:[%s543 + $0x168] sm:$0xff] %v516
        %631 = vst [vmem:[%s543 + $0x170] sm:$0xff] %v517
        %632 = vst [vmem:[%s543 + $0x188] sm:$0xff] %v518
        %633 = vst [vmem:[%s543 + $0x190] sm:$0xff] %v519
        %634 = vst [vmem:[%s543 + $0x1a8] sm:$0xff] %v520
        %635 = vst [vmem:[%s543 + $0x1b0] sm:$0xff] %v521
        %636 = vst [vmem:[%s543 + $0x1c8] sm:$0xff] %v522
        %637 = vst [vmem:[%s543 + $0x1d0] sm:$0xff] %v523
        %638 = vst [vmem:[%s543 + $0x1e8] sm:$0xff] %v524
        %639 = vst [vmem:[%s543 + $0x1f0] sm:$0xff] %v525
        %v640 = vld [vmem:[#allocation2] sm:$0xff]
        %v641 = vld [vmem:[#allocation2 + $0x8] sm:$0xff]
        %v642 = vld [vmem:[#allocation2 + $0x10] sm:$0xff]
        %v643 = vld [vmem:[#allocation2 + $0x18] sm:$0xff]
        %v644 = vld [vmem:[#allocation2 + $0x20] sm:$0xff]
        %v645 = vld [vmem:[#allocation2 + $0x28] sm:$0xff]
        %v646 = vld [vmem:[#allocation2 + $0x30] sm:$0xff]
        %v647 = vld [vmem:[#allocation2 + $0x38] sm:$0xff]
        %v648 = vld [vmem:[#allocation2 + $0x40] sm:$0xff]
        %v649 = vld [vmem:[#allocation2 + $0x48] sm:$0xff]
        %v650 = vld [vmem:[#allocation2 + $0x50] sm:$0xff]
        %v651 = vld [vmem:[#allocation2 + $0x58] sm:$0xff]
        %v652 = vld [vmem:[#allocation2 + $0x60] sm:$0xff]
        %v653 = vld [vmem:[#allocation2 + $0x68] sm:$0xff]
        %v654 = vld [vmem:[#allocation2 + $0x70] sm:$0xff]
        %v655 = vld [vmem:[#allocation2 + $0x78] sm:$0xff]
        %v656 = vld [vmem:[#allocation2 + $0x80] sm:$0xff]
        %v657 = vld [vmem:[#allocation2 + $0x88] sm:$0xff]
        %v658 = vld [vmem:[#allocation2 + $0x90] sm:$0xff]
        %v659 = vld [vmem:[#allocation2 + $0x98] sm:$0xff]
        %v660 = vld [vmem:[#allocation2 + $0xa0] sm:$0xff]
        %v661 = vld [vmem:[#allocation2 + $0xa8] sm:$0xff]
        %v662 = vld [vmem:[#allocation2 + $0xb0] sm:$0xff]
        %v663 = vld [vmem:[#allocation2 + $0xb8] sm:$0xff]
        %v664 = vld [vmem:[#allocation2 + $0xc0] sm:$0xff]
        %v665 = vld [vmem:[#allocation2 + $0xc8] sm:$0xff]
        %v666 = vld [vmem:[#allocation2 + $0xd0] sm:$0xff]
        %v667 = vld [vmem:[#allocation2 + $0xd8] sm:$0xff]
        %v668 = vld [vmem:[#allocation2 + $0xe0] sm:$0xff]
        %v669 = vld [vmem:[#allocation2 + $0xe8] sm:$0xff]
        %v670 = vld [vmem:[#allocation2 + $0xf0] sm:$0xff]
        %v671 = vld [vmem:[#allocation2 + $0xf8] sm:$0xff]
        %v672 = vld [vmem:[#allocation2 + $0x100] sm:$0xff]
        %v673 = vld [vmem:[#allocation2 + $0x108] sm:$0xff]
        %v674 = vld [vmem:[#allocation2 + $0x110] sm:$0xff]
        %v675 = vld [vmem:[#allocation2 + $0x118] sm:$0xff]
        %v676 = vld [vmem:[#allocation2 + $0x120] sm:$0xff]
        %v677 = vld [vmem:[#allocation2 + $0x128] sm:$0xff]
        %v678 = vld [vmem:[#allocation2 + $0x130] sm:$0xff]
        %v679 = vld [vmem:[#allocation2 + $0x138] sm:$0xff]
        %v680 = vld [vmem:[#allocation2 + $0x140] sm:$0xff]
        %v681 = vld [vmem:[#allocation2 + $0x148] sm:$0xff]
        %v682 = vld [vmem:[#allocation2 + $0x150] sm:$0xff]
        %v683 = vld [vmem:[#allocation2 + $0x158] sm:$0xff]
        %v684 = vld [vmem:[#allocation2 + $0x160] sm:$0xff]
        %v685 = vld [vmem:[#allocation2 + $0x168] sm:$0xff]
        %v686 = vld [vmem:[#allocation2 + $0x170] sm:$0xff]
        %v687 = vld [vmem:[#allocation2 + $0x178] sm:$0xff]
        %v688 = vld [vmem:[#allocation2 + $0x180] sm:$0xff]
        %v689 = vld [vmem:[#allocation2 + $0x188] sm:$0xff]
        %v690 = vld [vmem:[#allocation2 + $0x190] sm:$0xff]
        %v691 = vld [vmem:[#allocation2 + $0x198] sm:$0xff]
        %v692 = vld [vmem:[#allocation2 + $0x1a0] sm:$0xff]
        %v693 = vld [vmem:[#allocation2 + $0x1a8] sm:$0xff]
        %v694 = vld [vmem:[#allocation2 + $0x1b0] sm:$0xff]
        %v695 = vld [vmem:[#allocation2 + $0x1b8] sm:$0xff]
        %v696 = vld [vmem:[#allocation2 + $0x1c0] sm:$0xff]
        %v697 = vld [vmem:[#allocation2 + $0x1c8] sm:$0xff]
        %v698 = vld [vmem:[#allocation2 + $0x1d0] sm:$0xff]
        %v699 = vld [vmem:[#allocation2 + $0x1d8] sm:$0xff]
        %v700 = vld [vmem:[#allocation2 + $0x1e0] sm:$0xff]
        %v701 = vld [vmem:[#allocation2 + $0x1e8] sm:$0xff]
        %v702 = vld [vmem:[#allocation2 + $0x1f0] sm:$0xff]
        %v703 = vld [vmem:[#allocation2 + $0x1f8] sm:$0xff]
        %v704 = vld [vmem:[#allocation2 + $0x200] sm:$0xff]
        %v705 = vld [vmem:[#allocation2 + $0x208] sm:$0xff]
        %v706 = vld [vmem:[#allocation2 + $0x210] sm:$0xff]
        %v707 = vld [vmem:[#allocation2 + $0x218] sm:$0xff]
        %v708 = vld [vmem:[#allocation2 + $0x220] sm:$0xff]
        %v709 = vld [vmem:[#allocation2 + $0x228] sm:$0xff]
        %v710 = vld [vmem:[#allocation2 + $0x230] sm:$0xff]
        %v711 = vld [vmem:[#allocation2 + $0x238] sm:$0xff]
        %v712 = vld [vmem:[#allocation2 + $0x240] sm:$0xff]
        %v713 = vld [vmem:[#allocation2 + $0x248] sm:$0xff]
        %v714 = vld [vmem:[#allocation2 + $0x250] sm:$0xff]
        %v715 = vld [vmem:[#allocation2 + $0x258] sm:$0xff]
        %v716 = vld [vmem:[#allocation2 + $0x260] sm:$0xff]
        %v717 = vld [vmem:[#allocation2 + $0x268] sm:$0xff]
        %v718 = vld [vmem:[#allocation2 + $0x270] sm:$0xff]
        %v719 = vld [vmem:[#allocation2 + $0x278] sm:$0xff]
        %v720 = vmax.f32 %v640, %v644
        %v721 = vmax.f32 %v641, %v645
        %v722 = vmax.f32 %v642, %v646
        %v723 = vmax.f32 %v643, %v647
        %v724 = vmax.f32 %v644, %v648
        %v725 = vmax.f32 %v645, %v649
        %v726 = vmax.f32 %v646, %v650
        %v727 = vmax.f32 %v647, %v651
        %v728 = vmax.f32 %v648, %v652
        %v729 = vmax.f32 %v649, %v653
        %v730 = vmax.f32 %v650, %v654
        %v731 = vmax.f32 %v651, %v655
        %v732 = vmax.f32 %v652, %v656
        %v733 = vmax.f32 %v653, %v657
        %v734 = vmax.f32 %v654, %v658
        %v735 = vmax.f32 %v655, %v659
        %v736 = vmax.f32 %v656, %v660
        %v737 = vmax.f32 %v657, %v661
        %v738 = vmax.f32 %v658, %v662
        %v739 = vmax.f32 %v659, %v663
        %v740 = vmax.f32 %v660, %v664
        %v741 = vmax.f32 %v661, %v665
        %v742 = vmax.f32 %v662, %v666
        %v743 = vmax.f32 %v663, %v667
        %v744 = vmax.f32 %v664, %v668
        %v745 = vmax.f32 %v665, %v669
        %v746 = vmax.f32 %v666, %v670
        %v747 = vmax.f32 %v667, %v671
        %v748 = vmax.f32 %v668, %v672
        %v749 = vmax.f32 %v669, %v673
        %v750 = vmax.f32 %v670, %v674
        %v751 = vmax.f32 %v671, %v675
        %v752 = vmax.f32 %v672, %v676
        %v753 = vmax.f32 %v673, %v677
        %v754 = vmax.f32 %v674, %v678
        %v755 = vmax.f32 %v675, %v679
        %v756 = vmax.f32 %v676, %v680
        %v757 = vmax.f32 %v677, %v681
        %v758 = vmax.f32 %v678, %v682
        %v759 = vmax.f32 %v679, %v683
        %v760 = vmax.f32 %v680, %v684
        %v761 = vmax.f32 %v681, %v685
        %v762 = vmax.f32 %v682, %v686
        %v763 = vmax.f32 %v683, %v687
        %v764 = vmax.f32 %v684, %v688
        %v765 = vmax.f32 %v685, %v689
        %v766 = vmax.f32 %v686, %v690
        %v767 = vmax.f32 %v687, %v691
        %v768 = vmax.f32 %v688, %v692
        %v769 = vmax.f32 %v689, %v693
        %v770 = vmax.f32 %v690, %v694
        %v771 = vmax.f32 %v691, %v695
        %v772 = vmax.f32 %v692, %v696
        %v773 = vmax.f32 %v693, %v697
        %v774 = vmax.f32 %v694, %v698
        %v775 = vmax.f32 %v695, %v699
        %v776 = vmax.f32 %v696, %v700
        %v777 = vmax.f32 %v697, %v701
        %v778 = vmax.f32 %v698, %v702
        %v779 = vmax.f32 %v699, %v703
        %v780 = vmax.f32 %v700, %v704
        %v781 = vmax.f32 %v701, %v705
        %v782 = vmax.f32 %v702, %v706
        %v783 = vmax.f32 %v703, %v707
        %v784 = vmax.f32 %v704, %v708
        %v785 = vmax.f32 %v705, %v709
        %v786 = vmax.f32 %v706, %v710
        %v787 = vmax.f32 %v707, %v711
        %v788 = vmax.f32 %v708, %v712
        %v789 = vmax.f32 %v709, %v713
        %v790 = vmax.f32 %v710, %v714
        %v791 = vmax.f32 %v711, %v715
        %v792 = vmax.f32 %v720, %v728
        %v793 = vmax.f32 %v721, %v729
        %v794 = vmax.f32 %v722, %v730
        %v795 = vmax.f32 %v723, %v731
        %v796 = vmax.f32 %v724, %v732
        %v797 = vmax.f32 %v725, %v733
        %v798 = vmax.f32 %v726, %v734
        %v799 = vmax.f32 %v727, %v735
        %v800 = vmax.f32 %v728, %v736
        %v801 = vmax.f32 %v729, %v737
        %v802 = vmax.f32 %v730, %v738
        %v803 = vmax.f32 %v731, %v739
        %v804 = vmax.f32 %v732, %v740
        %v805 = vmax.f32 %v733, %v741
        %v806 = vmax.f32 %v734, %v742
        %v807 = vmax.f32 %v735, %v743
        %v808 = vmax.f32 %v736, %v744
        %v809 = vmax.f32 %v737, %v745
        %v810 = vmax.f32 %v738, %v746
        %v811 = vmax.f32 %v739, %v747
        %v812 = vmax.f32 %v740, %v748
        %v813 = vmax.f32 %v741, %v749
        %v814 = vmax.f32 %v742, %v750
        %v815 = vmax.f32 %v743, %v751
        %v816 = vmax.f32 %v744, %v752
        %v817 = vmax.f32 %v745, %v753
        %v818 = vmax.f32 %v746, %v754
        %v819 = vmax.f32 %v747, %v755
        %v820 = vmax.f32 %v748, %v756
        %v821 = vmax.f32 %v749, %v757
        %v822 = vmax.f32 %v750, %v758
        %v823 = vmax.f32 %v751, %v759
        %v824 = vmax.f32 %v752, %v760
        %v825 = vmax.f32 %v753, %v761
        %v826 = vmax.f32 %v754, %v762
        %v827 = vmax.f32 %v755, %v763
        %v828 = vmax.f32 %v756, %v764
        %v829 = vmax.f32 %v757, %v765
        %v830 = vmax.f32 %v758, %v766
        %v831 = vmax.f32 %v759, %v767
        %v832 = vmax.f32 %v760, %v768
        %v833 = vmax.f32 %v761, %v769
        %v834 = vmax.f32 %v762, %v770
        %v835 = vmax.f32 %v763, %v771
        %v836 = vmax.f32 %v764, %v772
        %v837 = vmax.f32 %v765, %v773
        %v838 = vmax.f32 %v766, %v774
        %v839 = vmax.f32 %v767, %v775
        %v840 = vmax.f32 %v768, %v776
        %v841 = vmax.f32 %v769, %v777
        %v842 = vmax.f32 %v770, %v778
        %v843 = vmax.f32 %v771, %v779
        %v844 = vmax.f32 %v772, %v780
        %v845 = vmax.f32 %v773, %v781
        %v846 = vmax.f32 %v774, %v782
        %v847 = vmax.f32 %v775, %v783
        %v848 = vmax.f32 %v776, %v784
        %v849 = vmax.f32 %v777, %v785
        %v850 = vmax.f32 %v778, %v786
        %v851 = vmax.f32 %v779, %v787
        %v852 = vmax.f32 %v780, %v788
        %v853 = vmax.f32 %v781, %v789
        %v854 = vmax.f32 %v782, %v790
        %v855 = vmax.f32 %v783, %v791
        %v856 = vmax.f32 %v792, %v656
        %v857 = vmax.f32 %v793, %v657
        %v858 = vmax.f32 %v794, %v658
        %v859 = vmax.f32 %v795, %v659
        %v860 = vmax.f32 %v796, %v660
        %v861 = vmax.f32 %v797, %v661
        %v862 = vmax.f32 %v798, %v662
        %v863 = vmax.f32 %v799, %v663
        %v864 = vmax.f32 %v800, %v664
        %v865 = vmax.f32 %v801, %v665
        %v866 = vmax.f32 %v802, %v666
        %v867 = vmax.f32 %v803, %v667
        %v868 = vmax.f32 %v804, %v668
        %v869 = vmax.f32 %v805, %v669
        %v870 = vmax.f32 %v806, %v670
        %v871 = vmax.f32 %v807, %v671
        %v872 = vmax.f32 %v808, %v672
        %v873 = vmax.f32 %v809, %v673
        %v874 = vmax.f32 %v810, %v674
        %v875 = vmax.f32 %v811, %v675
        %v876 = vmax.f32 %v812, %v676
        %v877 = vmax.f32 %v813, %v677
        %v878 = vmax.f32 %v814, %v678
        %v879 = vmax.f32 %v815, %v679
        %v880 = vmax.f32 %v816, %v680
        %v881 = vmax.f32 %v817, %v681
        %v882 = vmax.f32 %v818, %v682
        %v883 = vmax.f32 %v819, %v683
        %v884 = vmax.f32 %v820, %v684
        %v885 = vmax.f32 %v821, %v685
        %v886 = vmax.f32 %v822, %v686
        %v887 = vmax.f32 %v823, %v687
        %v888 = vmax.f32 %v824, %v688
        %v889 = vmax.f32 %v825, %v689
        %v890 = vmax.f32 %v826, %v690
        %v891 = vmax.f32 %v827, %v691
        %v892 = vmax.f32 %v828, %v692
        %v893 = vmax.f32 %v829, %v693
        %v894 = vmax.f32 %v830, %v694
        %v895 = vmax.f32 %v831, %v695
        %v896 = vmax.f32 %v832, %v696
        %v897 = vmax.f32 %v833, %v697
        %v898 = vmax.f32 %v834, %v698
        %v899 = vmax.f32 %v835, %v699
        %v900 = vmax.f32 %v836, %v700
        %v901 = vmax.f32 %v837, %v701
        %v902 = vmax.f32 %v838, %v702
        %v903 = vmax.f32 %v839, %v703
        %v904 = vmax.f32 %v840, %v704
        %v905 = vmax.f32 %v841, %v705
        %v906 = vmax.f32 %v842, %v706
        %v907 = vmax.f32 %v843, %v707
        %v908 = vmax.f32 %v844, %v708
        %v909 = vmax.f32 %v845, %v709
        %v910 = vmax.f32 %v846, %v710
        %v911 = vmax.f32 %v847, %v711
        %v912 = vmax.f32 %v848, %v712
        %v913 = vmax.f32 %v849, %v713
        %v914 = vmax.f32 %v850, %v714
        %v915 = vmax.f32 %v851, %v715
        %v916 = vmax.f32 %v852, %v716
        %v917 = vmax.f32 %v853, %v717
        %v918 = vmax.f32 %v854, %v718
        %v919 = vmax.f32 %v855, %v719
        %v920 = vrot.slane %v856, 1
        %v921 = vrot.slane %v860, 1
        %v922 = vrot.slane %v864, 1
        %v923 = vrot.slane %v868, 1
        %v924 = vrot.slane %v872, 1
        %v925 = vrot.slane %v876, 1
        %v926 = vrot.slane %v880, 1
        %v927 = vrot.slane %v884, 1
        %v928 = vrot.slane %v888, 1
        %v929 = vrot.slane %v892, 1
        %v930 = vrot.slane %v896, 1
        %v931 = vrot.slane %v900, 1
        %v932 = vrot.slane %v904, 1
        %v933 = vrot.slane %v908, 1
        %v934 = vrot.slane %v912, 1
        %v935 = vrot.slane %v916, 1
        %v936 = vrot.slane %v857, 1
        %v937 = vrot.slane %v861, 1
        %v938 = vrot.slane %v865, 1
        %v939 = vrot.slane %v869, 1
        %v940 = vrot.slane %v873, 1
        %v941 = vrot.slane %v877, 1
        %v942 = vrot.slane %v881, 1
        %v943 = vrot.slane %v885, 1
        %v944 = vrot.slane %v889, 1
        %v945 = vrot.slane %v893, 1
        %v946 = vrot.slane %v897, 1
        %v947 = vrot.slane %v901, 1
        %v948 = vrot.slane %v905, 1
        %v949 = vrot.slane %v909, 1
        %v950 = vrot.slane %v913, 1
        %v951 = vrot.slane %v917, 1
        %v952 = vrot.slane %v858, 1
        %v953 = vrot.slane %v862, 1
        %v954 = vrot.slane %v866, 1
        %v955 = vrot.slane %v870, 1
        %v956 = vrot.slane %v874, 1
        %v957 = vrot.slane %v878, 1
        %v958 = vrot.slane %v882, 1
        %v959 = vrot.slane %v886, 1
        %v960 = vrot.slane %v890, 1
        %v961 = vrot.slane %v894, 1
        %v962 = vrot.slane %v898, 1
        %v963 = vrot.slane %v902, 1
        %v964 = vrot.slane %v906, 1
        %v965 = vrot.slane %v910, 1
        %v966 = vrot.slane %v914, 1
        %v967 = vrot.slane %v918, 1
        %v968 = vrot.slane %v859, 1
        %v969 = vrot.slane %v863, 1
        %v970 = vrot.slane %v867, 1
        %v971 = vrot.slane %v871, 1
        %v972 = vrot.slane %v875, 1
        %v973 = vrot.slane %v879, 1
        %v974 = vrot.slane %v883, 1
        %v975 = vrot.slane %v887, 1
        %v976 = vrot.slane %v891, 1
        %v977 = vrot.slane %v895, 1
        %v978 = vrot.slane %v899, 1
        %v979 = vrot.slane %v903, 1
        %v980 = vrot.slane %v907, 1
        %v981 = vrot.slane %v911, 1
        %v982 = vrot.slane %v915, 1
        %v983 = vrot.slane %v919, 1
        %v984 = vlaneseq
        %v985 = vshrl.u32 %v984, 7
        %vm986 = vcmp.lt.s32.totalorder %v985, 7
        %v987 = vsel %vm986, %v952, %v968
        %v988 = vsel %vm986, %v953, %v969
        %v989 = vsel %vm986, %v954, %v970
        %v990 = vsel %vm986, %v955, %v971
        %v991 = vsel %vm986, %v956, %v972
        %v992 = vsel %vm986, %v957, %v973
        %v993 = vsel %vm986, %v958, %v974
        %v994 = vsel %vm986, %v959, %v975
        %v995 = vsel %vm986, %v960, %v976
        %v996 = vsel %vm986, %v961, %v977
        %v997 = vsel %vm986, %v962, %v978
        %v998 = vsel %vm986, %v963, %v979
        %v999 = vsel %vm986, %v964, %v980
        %v1000 = vsel %vm986, %v965, %v981
        %v1001 = vsel %vm986, %v966, %v982
        %v1002 = vsel %vm986, %v967, %v983
        %v1003 = vsel %vm986, %v936, %v952
        %v1004 = vsel %vm986, %v937, %v953
        %v1005 = vsel %vm986, %v938, %v954
        %v1006 = vsel %vm986, %v939, %v955
        %v1007 = vsel %vm986, %v940, %v956
        %v1008 = vsel %vm986, %v941, %v957
        %v1009 = vsel %vm986, %v942, %v958
        %v1010 = vsel %vm986, %v943, %v959
        %v1011 = vsel %vm986, %v944, %v960
        %v1012 = vsel %vm986, %v945, %v961
        %v1013 = vsel %vm986, %v946, %v962
        %v1014 = vsel %vm986, %v947, %v963
        %v1015 = vsel %vm986, %v948, %v964
        %v1016 = vsel %vm986, %v949, %v965
        %v1017 = vsel %vm986, %v950, %v966
        %v1018 = vsel %vm986, %v951, %v967
        %v1019 = vsel %vm986, %v920, %v936
        %v1020 = vsel %vm986, %v921, %v937
        %v1021 = vsel %vm986, %v922, %v938
        %v1022 = vsel %vm986, %v923, %v939
        %v1023 = vsel %vm986, %v924, %v940
        %v1024 = vsel %vm986, %v925, %v941
        %v1025 = vsel %vm986, %v926, %v942
        %v1026 = vsel %vm986, %v927, %v943
        %v1027 = vsel %vm986, %v928, %v944
        %v1028 = vsel %vm986, %v929, %v945
        %v1029 = vsel %vm986, %v930, %v946
        %v1030 = vsel %vm986, %v931, %v947
        %v1031 = vsel %vm986, %v932, %v948
        %v1032 = vsel %vm986, %v933, %v949
        %v1033 = vsel %vm986, %v934, %v950
        %v1034 = vsel %vm986, %v935, %v951
        %v1035 = vsel %vm986, %v968, %v920
        %v1036 = vsel %vm986, %v969, %v921
        %v1037 = vsel %vm986, %v970, %v922
        %v1038 = vsel %vm986, %v971, %v923
        %v1039 = vsel %vm986, %v972, %v924
        %v1040 = vsel %vm986, %v973, %v925
        %v1041 = vsel %vm986, %v974, %v926
        %v1042 = vsel %vm986, %v975, %v927
        %v1043 = vsel %vm986, %v976, %v928
        %v1044 = vsel %vm986, %v977, %v929
        %v1045 = vsel %vm986, %v978, %v930
        %v1046 = vsel %vm986, %v979, %v931
        %v1047 = vsel %vm986, %v980, %v932
        %v1048 = vsel %vm986, %v981, %v933
        %v1049 = vsel %vm986, %v982, %v934
        %v1050 = vsel %vm986, %v983, %v935
        %v1051 = vmax.f32 %v856, %v1019
        %v1052 = vmax.f32 %v857, %v1003
        %v1053 = vmax.f32 %v858, %v987
        %v1054 = vmax.f32 %v859, %v1035
        %v1055 = vmax.f32 %v860, %v1020
        %v1056 = vmax.f32 %v861, %v1004
        %v1057 = vmax.f32 %v862, %v988
        %v1058 = vmax.f32 %v863, %v1036
        %v1059 = vmax.f32 %v864, %v1021
        %v1060 = vmax.f32 %v865, %v1005
        %v1061 = vmax.f32 %v866, %v989
        %v1062 = vmax.f32 %v867, %v1037
        %v1063 = vmax.f32 %v868, %v1022
        %v1064 = vmax.f32 %v869, %v1006
        %v1065 = vmax.f32 %v870, %v990
        %v1066 = vmax.f32 %v871, %v1038
        %v1067 = vmax.f32 %v872, %v1023
        %v1068 = vmax.f32 %v873, %v1007
        %v1069 = vmax.f32 %v874, %v991
        %v1070 = vmax.f32 %v875, %v1039
        %v1071 = vmax.f32 %v876, %v1024
        %v1072 = vmax.f32 %v877, %v1008
        %v1073 = vmax.f32 %v878, %v992
        %v1074 = vmax.f32 %v879, %v1040
        %v1075 = vmax.f32 %v880, %v1025
        %v1076 = vmax.f32 %v881, %v1009
        %v1077 = vmax.f32 %v882, %v993
        %v1078 = vmax.f32 %v883, %v1041
        %v1079 = vmax.f32 %v884, %v1026
        %v1080 = vmax.f32 %v885, %v1010
        %v1081 = vmax.f32 %v886, %v994
        %v1082 = vmax.f32 %v887, %v1042
        %v1083 = vmax.f32 %v888, %v1027
        %v1084 = vmax.f32 %v889, %v1011
        %v1085 = vmax.f32 %v890, %v995
        %v1086 = vmax.f32 %v891, %v1043
        %v1087 = vmax.f32 %v892, %v1028
        %v1088 = vmax.f32 %v893, %v1012
        %v1089 = vmax.f32 %v894, %v996
        %v1090 = vmax.f32 %v895, %v1044
        %v1091 = vmax.f32 %v896, %v1029
        %v1092 = vmax.f32 %v897, %v1013
        %v1093 = vmax.f32 %v898, %v997
        %v1094 = vmax.f32 %v899, %v1045
        %v1095 = vmax.f32 %v900, %v1030
        %v1096 = vmax.f32 %v901, %v1014
        %v1097 = vmax.f32 %v902, %v998
        %v1098 = vmax.f32 %v903, %v1046
        %v1099 = vmax.f32 %v904, %v1031
        %v1100 = vmax.f32 %v905, %v1015
        %v1101 = vmax.f32 %v906, %v999
        %v1102 = vmax.f32 %v907, %v1047
        %v1103 = vmax.f32 %v908, %v1032
        %v1104 = vmax.f32 %v909, %v1016
        %v1105 = vmax.f32 %v910, %v1000
        %v1106 = vmax.f32 %v911, %v1048
        %v1107 = vmax.f32 %v912, %v1033
        %v1108 = vmax.f32 %v913, %v1017
        %v1109 = vmax.f32 %v914, %v1001
        %v1110 = vmax.f32 %v915, %v1049
        %v1111 = vmax.f32 %v916, %v1034
        %v1112 = vmax.f32 %v917, %v1018
        %v1113 = vmax.f32 %v918, %v1002
        %v1114 = vmax.f32 %v919, %v1050
        %v1115 = vrot.slane %v1051, 2
        %v1116 = vrot.slane %v1055, 2
        %v1117 = vrot.slane %v1059, 2
        %v1118 = vrot.slane %v1063, 2
        %v1119 = vrot.slane %v1067, 2
        %v1120 = vrot.slane %v1071, 2
        %v1121 = vrot.slane %v1075, 2
        %v1122 = vrot.slane %v1079, 2
        %v1123 = vrot.slane %v1083, 2
        %v1124 = vrot.slane %v1087, 2
        %v1125 = vrot.slane %v1091, 2
        %v1126 = vrot.slane %v1095, 2
        %v1127 = vrot.slane %v1099, 2
        %v1128 = vrot.slane %v1103, 2
        %v1129 = vrot.slane %v1107, 2
        %v1130 = vrot.slane %v1111, 2
        %v1131 = vrot.slane %v1052, 2
        %v1132 = vrot.slane %v1056, 2
        %v1133 = vrot.slane %v1060, 2
        %v1134 = vrot.slane %v1064, 2
        %v1135 = vrot.slane %v1068, 2
        %v1136 = vrot.slane %v1072, 2
        %v1137 = vrot.slane %v1076, 2
        %v1138 = vrot.slane %v1080, 2
        %v1139 = vrot.slane %v1084, 2
        %v1140 = vrot.slane %v1088, 2
        %v1141 = vrot.slane %v1092, 2
        %v1142 = vrot.slane %v1096, 2
        %v1143 = vrot.slane %v1100, 2
        %v1144 = vrot.slane %v1104, 2
        %v1145 = vrot.slane %v1108, 2
        %v1146 = vrot.slane %v1112, 2
        %v1147 = vrot.slane %v1053, 2
        %v1148 = vrot.slane %v1057, 2
        %v1149 = vrot.slane %v1061, 2
        %v1150 = vrot.slane %v1065, 2
        %v1151 = vrot.slane %v1069, 2
        %v1152 = vrot.slane %v1073, 2
        %v1153 = vrot.slane %v1077, 2
        %v1154 = vrot.slane %v1081, 2
        %v1155 = vrot.slane %v1085, 2
        %v1156 = vrot.slane %v1089, 2
        %v1157 = vrot.slane %v1093, 2
        %v1158 = vrot.slane %v1097, 2
        %v1159 = vrot.slane %v1101, 2
        %v1160 = vrot.slane %v1105, 2
        %v1161 = vrot.slane %v1109, 2
        %v1162 = vrot.slane %v1113, 2
        %v1163 = vrot.slane %v1054, 2
        %v1164 = vrot.slane %v1058, 2
        %v1165 = vrot.slane %v1062, 2
        %v1166 = vrot.slane %v1066, 2
        %v1167 = vrot.slane %v1070, 2
        %v1168 = vrot.slane %v1074, 2
        %v1169 = vrot.slane %v1078, 2
        %v1170 = vrot.slane %v1082, 2
        %v1171 = vrot.slane %v1086, 2
        %v1172 = vrot.slane %v1090, 2
        %v1173 = vrot.slane %v1094, 2
        %v1174 = vrot.slane %v1098, 2
        %v1175 = vrot.slane %v1102, 2
        %v1176 = vrot.slane %v1106, 2
        %v1177 = vrot.slane %v1110, 2
        %v1178 = vrot.slane %v1114, 2
        %vm1179 = vcmp.lt.s32.totalorder %v985, 6
        %v1180 = vsel %vm1179, %v1147, %v1163
        %v1181 = vsel %vm1179, %v1148, %v1164
        %v1182 = vsel %vm1179, %v1149, %v1165
        %v1183 = vsel %vm1179, %v1150, %v1166
        %v1184 = vsel %vm1179, %v1151, %v1167
        %v1185 = vsel %vm1179, %v1152, %v1168
        %v1186 = vsel %vm1179, %v1153, %v1169
        %v1187 = vsel %vm1179, %v1154, %v1170
        %v1188 = vsel %vm1179, %v1155, %v1171
        %v1189 = vsel %vm1179, %v1156, %v1172
        %v1190 = vsel %vm1179, %v1157, %v1173
        %v1191 = vsel %vm1179, %v1158, %v1174
        %v1192 = vsel %vm1179, %v1159, %v1175
        %v1193 = vsel %vm1179, %v1160, %v1176
        %v1194 = vsel %vm1179, %v1161, %v1177
        %v1195 = vsel %vm1179, %v1162, %v1178
        %v1196 = vsel %vm1179, %v1131, %v1147
        %v1197 = vsel %vm1179, %v1132, %v1148
        %v1198 = vsel %vm1179, %v1133, %v1149
        %v1199 = vsel %vm1179, %v1134, %v1150
        %v1200 = vsel %vm1179, %v1135, %v1151
        %v1201 = vsel %vm1179, %v1136, %v1152
        %v1202 = vsel %vm1179, %v1137, %v1153
        %v1203 = vsel %vm1179, %v1138, %v1154
        %v1204 = vsel %vm1179, %v1139, %v1155
        %v1205 = vsel %vm1179, %v1140, %v1156
        %v1206 = vsel %vm1179, %v1141, %v1157
        %v1207 = vsel %vm1179, %v1142, %v1158
        %v1208 = vsel %vm1179, %v1143, %v1159
        %v1209 = vsel %vm1179, %v1144, %v1160
        %v1210 = vsel %vm1179, %v1145, %v1161
        %v1211 = vsel %vm1179, %v1146, %v1162
        %v1212 = vsel %vm1179, %v1115, %v1131
        %v1213 = vsel %vm1179, %v1116, %v1132
        %v1214 = vsel %vm1179, %v1117, %v1133
        %v1215 = vsel %vm1179, %v1118, %v1134
        %v1216 = vsel %vm1179, %v1119, %v1135
        %v1217 = vsel %vm1179, %v1120, %v1136
        %v1218 = vsel %vm1179, %v1121, %v1137
        %v1219 = vsel %vm1179, %v1122, %v1138
        %v1220 = vsel %vm1179, %v1123, %v1139
        %v1221 = vsel %vm1179, %v1124, %v1140
        %v1222 = vsel %vm1179, %v1125, %v1141
        %v1223 = vsel %vm1179, %v1126, %v1142
        %v1224 = vsel %vm1179, %v1127, %v1143
        %v1225 = vsel %vm1179, %v1128, %v1144
        %v1226 = vsel %vm1179, %v1129, %v1145
        %v1227 = vsel %vm1179, %v1130, %v1146
        %v1228 = vmax.f32 %v1051, %v1212
        %v1229 = vmax.f32 %v1052, %v1196
        %v1230 = vmax.f32 %v1053, %v1180
        %v1231 = vmax.f32 %v1055, %v1213
        %v1232 = vmax.f32 %v1056, %v1197
        %v1233 = vmax.f32 %v1057, %v1181
        %v1234 = vmax.f32 %v1059, %v1214
        %v1235 = vmax.f32 %v1060, %v1198
        %v1236 = vmax.f32 %v1061, %v1182
        %v1237 = vmax.f32 %v1063, %v1215
        %v1238 = vmax.f32 %v1064, %v1199
        %v1239 = vmax.f32 %v1065, %v1183
        %v1240 = vmax.f32 %v1067, %v1216
        %v1241 = vmax.f32 %v1068, %v1200
        %v1242 = vmax.f32 %v1069, %v1184
        %v1243 = vmax.f32 %v1071, %v1217
        %v1244 = vmax.f32 %v1072, %v1201
        %v1245 = vmax.f32 %v1073, %v1185
        %v1246 = vmax.f32 %v1075, %v1218
        %v1247 = vmax.f32 %v1076, %v1202
        %v1248 = vmax.f32 %v1077, %v1186
        %v1249 = vmax.f32 %v1079, %v1219
        %v1250 = vmax.f32 %v1080, %v1203
        %v1251 = vmax.f32 %v1081, %v1187
        %v1252 = vmax.f32 %v1083, %v1220
        %v1253 = vmax.f32 %v1084, %v1204
        %v1254 = vmax.f32 %v1085, %v1188
        %v1255 = vmax.f32 %v1087, %v1221
        %v1256 = vmax.f32 %v1088, %v1205
        %v1257 = vmax.f32 %v1089, %v1189
        %v1258 = vmax.f32 %v1091, %v1222
        %v1259 = vmax.f32 %v1092, %v1206
        %v1260 = vmax.f32 %v1093, %v1190
        %v1261 = vmax.f32 %v1095, %v1223
        %v1262 = vmax.f32 %v1096, %v1207
        %v1263 = vmax.f32 %v1097, %v1191
        %v1264 = vmax.f32 %v1099, %v1224
        %v1265 = vmax.f32 %v1100, %v1208
        %v1266 = vmax.f32 %v1101, %v1192
        %v1267 = vmax.f32 %v1103, %v1225
        %v1268 = vmax.f32 %v1104, %v1209
        %v1269 = vmax.f32 %v1105, %v1193
        %v1270 = vmax.f32 %v1107, %v1226
        %v1271 = vmax.f32 %v1108, %v1210
        %v1272 = vmax.f32 %v1109, %v1194
        %v1273 = vmax.f32 %v1111, %v1227
        %v1274 = vmax.f32 %v1112, %v1211
        %v1275 = vmax.f32 %v1113, %v1195
        %v1276 = vrot.slane %v856, 4
        %v1277 = vrot.slane %v860, 4
        %v1278 = vrot.slane %v864, 4
        %v1279 = vrot.slane %v868, 4
        %v1280 = vrot.slane %v872, 4
        %v1281 = vrot.slane %v876, 4
        %v1282 = vrot.slane %v880, 4
        %v1283 = vrot.slane %v884, 4
        %v1284 = vrot.slane %v888, 4
        %v1285 = vrot.slane %v892, 4
        %v1286 = vrot.slane %v896, 4
        %v1287 = vrot.slane %v900, 4
        %v1288 = vrot.slane %v904, 4
        %v1289 = vrot.slane %v908, 4
        %v1290 = vrot.slane %v912, 4
        %v1291 = vrot.slane %v916, 4
        %v1292 = vrot.slane %v857, 4
        %v1293 = vrot.slane %v861, 4
        %v1294 = vrot.slane %v865, 4
        %v1295 = vrot.slane %v869, 4
        %v1296 = vrot.slane %v873, 4
        %v1297 = vrot.slane %v877, 4
        %v1298 = vrot.slane %v881, 4
        %v1299 = vrot.slane %v885, 4
        %v1300 = vrot.slane %v889, 4
        %v1301 = vrot.slane %v893, 4
        %v1302 = vrot.slane %v897, 4
        %v1303 = vrot.slane %v901, 4
        %v1304 = vrot.slane %v905, 4
        %v1305 = vrot.slane %v909, 4
        %v1306 = vrot.slane %v913, 4
        %v1307 = vrot.slane %v917, 4
        %v1308 = vrot.slane %v858, 4
        %v1309 = vrot.slane %v862, 4
        %v1310 = vrot.slane %v866, 4
        %v1311 = vrot.slane %v870, 4
        %v1312 = vrot.slane %v874, 4
        %v1313 = vrot.slane %v878, 4
        %v1314 = vrot.slane %v882, 4
        %v1315 = vrot.slane %v886, 4
        %v1316 = vrot.slane %v890, 4
        %v1317 = vrot.slane %v894, 4
        %v1318 = vrot.slane %v898, 4
        %v1319 = vrot.slane %v902, 4
        %v1320 = vrot.slane %v906, 4
        %v1321 = vrot.slane %v910, 4
        %v1322 = vrot.slane %v914, 4
        %v1323 = vrot.slane %v918, 4
        %v1324 = vrot.slane %v859, 4
        %v1325 = vrot.slane %v863, 4
        %v1326 = vrot.slane %v867, 4
        %v1327 = vrot.slane %v871, 4
        %v1328 = vrot.slane %v875, 4
        %v1329 = vrot.slane %v879, 4
        %v1330 = vrot.slane %v883, 4
        %v1331 = vrot.slane %v887, 4
        %v1332 = vrot.slane %v891, 4
        %v1333 = vrot.slane %v895, 4
        %v1334 = vrot.slane %v899, 4
        %v1335 = vrot.slane %v903, 4
        %v1336 = vrot.slane %v907, 4
        %v1337 = vrot.slane %v911, 4
        %v1338 = vrot.slane %v915, 4
        %v1339 = vrot.slane %v919, 4
        %vm1340 = vcmp.lt.s32.totalorder %v985, 4
        %v1341 = vsel %vm1340, %v1308, %v1324
        %v1342 = vsel %vm1340, %v1309, %v1325
        %v1343 = vsel %vm1340, %v1310, %v1326
        %v1344 = vsel %vm1340, %v1311, %v1327
        %v1345 = vsel %vm1340, %v1312, %v1328
        %v1346 = vsel %vm1340, %v1313, %v1329
        %v1347 = vsel %vm1340, %v1314, %v1330
        %v1348 = vsel %vm1340, %v1315, %v1331
        %v1349 = vsel %vm1340, %v1316, %v1332
        %v1350 = vsel %vm1340, %v1317, %v1333
        %v1351 = vsel %vm1340, %v1318, %v1334
        %v1352 = vsel %vm1340, %v1319, %v1335
        %v1353 = vsel %vm1340, %v1320, %v1336
        %v1354 = vsel %vm1340, %v1321, %v1337
        %v1355 = vsel %vm1340, %v1322, %v1338
        %v1356 = vsel %vm1340, %v1323, %v1339
        %v1357 = vsel %vm1340, %v1292, %v1308
        %v1358 = vsel %vm1340, %v1293, %v1309
        %v1359 = vsel %vm1340, %v1294, %v1310
        %v1360 = vsel %vm1340, %v1295, %v1311
        %v1361 = vsel %vm1340, %v1296, %v1312
        %v1362 = vsel %vm1340, %v1297, %v1313
        %v1363 = vsel %vm1340, %v1298, %v1314
        %v1364 = vsel %vm1340, %v1299, %v1315
        %v1365 = vsel %vm1340, %v1300, %v1316
        %v1366 = vsel %vm1340, %v1301, %v1317
        %v1367 = vsel %vm1340, %v1302, %v1318
        %v1368 = vsel %vm1340, %v1303, %v1319
        %v1369 = vsel %vm1340, %v1304, %v1320
        %v1370 = vsel %vm1340, %v1305, %v1321
        %v1371 = vsel %vm1340, %v1306, %v1322
        %v1372 = vsel %vm1340, %v1307, %v1323
        %v1373 = vsel %vm1340, %v1276, %v1292
        %v1374 = vsel %vm1340, %v1277, %v1293
        %v1375 = vsel %vm1340, %v1278, %v1294
        %v1376 = vsel %vm1340, %v1279, %v1295
        %v1377 = vsel %vm1340, %v1280, %v1296
        %v1378 = vsel %vm1340, %v1281, %v1297
        %v1379 = vsel %vm1340, %v1282, %v1298
        %v1380 = vsel %vm1340, %v1283, %v1299
        %v1381 = vsel %vm1340, %v1284, %v1300
        %v1382 = vsel %vm1340, %v1285, %v1301
        %v1383 = vsel %vm1340, %v1286, %v1302
        %v1384 = vsel %vm1340, %v1287, %v1303
        %v1385 = vsel %vm1340, %v1288, %v1304
        %v1386 = vsel %vm1340, %v1289, %v1305
        %v1387 = vsel %vm1340, %v1290, %v1306
        %v1388 = vsel %vm1340, %v1291, %v1307
        %v1389 = vmax.f32 %v1228, %v1373
        %v1390 = vmax.f32 %v1229, %v1357
        %v1391 = vmax.f32 %v1230, %v1341
        %v1392 = vmax.f32 %v1231, %v1374
        %v1393 = vmax.f32 %v1232, %v1358
        %v1394 = vmax.f32 %v1233, %v1342
        %v1395 = vmax.f32 %v1234, %v1375
        %v1396 = vmax.f32 %v1235, %v1359
        %v1397 = vmax.f32 %v1236, %v1343
        %v1398 = vmax.f32 %v1237, %v1376
        %v1399 = vmax.f32 %v1238, %v1360
        %v1400 = vmax.f32 %v1239, %v1344
        %v1401 = vmax.f32 %v1240, %v1377
        %v1402 = vmax.f32 %v1241, %v1361
        %v1403 = vmax.f32 %v1242, %v1345
        %v1404 = vmax.f32 %v1243, %v1378
        %v1405 = vmax.f32 %v1244, %v1362
        %v1406 = vmax.f32 %v1245, %v1346
        %v1407 = vmax.f32 %v1246, %v1379
        %v1408 = vmax.f32 %v1247, %v1363
        %v1409 = vmax.f32 %v1248, %v1347
        %v1410 = vmax.f32 %v1249, %v1380
        %v1411 = vmax.f32 %v1250, %v1364
        %v1412 = vmax.f32 %v1251, %v1348
        %v1413 = vmax.f32 %v1252, %v1381
        %v1414 = vmax.f32 %v1253, %v1365
        %v1415 = vmax.f32 %v1254, %v1349
        %v1416 = vmax.f32 %v1255, %v1382
        %v1417 = vmax.f32 %v1256, %v1366
        %v1418 = vmax.f32 %v1257, %v1350
        %v1419 = vmax.f32 %v1258, %v1383
        %v1420 = vmax.f32 %v1259, %v1367
        %v1421 = vmax.f32 %v1260, %v1351
        %v1422 = vmax.f32 %v1261, %v1384
        %v1423 = vmax.f32 %v1262, %v1368
        %v1424 = vmax.f32 %v1263, %v1352
        %v1425 = vmax.f32 %v1264, %v1385
        %v1426 = vmax.f32 %v1265, %v1369
        %v1427 = vmax.f32 %v1266, %v1353
        %v1428 = vmax.f32 %v1267, %v1386
        %v1429 = vmax.f32 %v1268, %v1370
        %v1430 = vmax.f32 %v1269, %v1354
        %v1431 = vmax.f32 %v1270, %v1387
        %v1432 = vmax.f32 %v1271, %v1371
        %v1433 = vmax.f32 %v1272, %v1355
        %v1434 = vmax.f32 %v1273, %v1388
        %v1435 = vmax.f32 %v1274, %v1372
        %v1436 = vmax.f32 %v1275, %v1356
        %v1437 = vrot.slane %v1389, 6
        %v1438 = vrot.slane %v1392, 6
        %v1439 = vrot.slane %v1395, 6
        %v1440 = vrot.slane %v1398, 6
        %v1441 = vrot.slane %v1401, 6
        %v1442 = vrot.slane %v1404, 6
        %v1443 = vrot.slane %v1407, 6
        %v1444 = vrot.slane %v1410, 6
        %v1445 = vrot.slane %v1413, 6
        %v1446 = vrot.slane %v1416, 6
        %v1447 = vrot.slane %v1419, 6
        %v1448 = vrot.slane %v1422, 6
        %v1449 = vrot.slane %v1425, 6
        %v1450 = vrot.slane %v1428, 6
        %v1451 = vrot.slane %v1431, 6
        %v1452 = vrot.slane %v1434, 6
        %v1453 = vrot.slane %v1390, 6
        %v1454 = vrot.slane %v1393, 6
        %v1455 = vrot.slane %v1396, 6
        %v1456 = vrot.slane %v1399, 6
        %v1457 = vrot.slane %v1402, 6
        %v1458 = vrot.slane %v1405, 6
        %v1459 = vrot.slane %v1408, 6
        %v1460 = vrot.slane %v1411, 6
        %v1461 = vrot.slane %v1414, 6
        %v1462 = vrot.slane %v1417, 6
        %v1463 = vrot.slane %v1420, 6
        %v1464 = vrot.slane %v1423, 6
        %v1465 = vrot.slane %v1426, 6
        %v1466 = vrot.slane %v1429, 6
        %v1467 = vrot.slane %v1432, 6
        %v1468 = vrot.slane %v1435, 6
        %v1469 = vrot.slane %v1391, 6
        %v1470 = vrot.slane %v1394, 6
        %v1471 = vrot.slane %v1397, 6
        %v1472 = vrot.slane %v1400, 6
        %v1473 = vrot.slane %v1403, 6
        %v1474 = vrot.slane %v1406, 6
        %v1475 = vrot.slane %v1409, 6
        %v1476 = vrot.slane %v1412, 6
        %v1477 = vrot.slane %v1415, 6
        %v1478 = vrot.slane %v1418, 6
        %v1479 = vrot.slane %v1421, 6
        %v1480 = vrot.slane %v1424, 6
        %v1481 = vrot.slane %v1427, 6
        %v1482 = vrot.slane %v1430, 6
        %v1483 = vrot.slane %v1433, 6
        %v1484 = vrot.slane %v1436, 6
        %vm1485 = vcmp.lt.s32.totalorder %v985, 2
        %v1486 = vsel %vm1485, %v1453, %v1469
        %v1487 = vsel %vm1485, %v1454, %v1470
        %v1488 = vsel %vm1485, %v1455, %v1471
        %v1489 = vsel %vm1485, %v1456, %v1472
        %v1490 = vsel %vm1485, %v1457, %v1473
        %v1491 = vsel %vm1485, %v1458, %v1474
        %v1492 = vsel %vm1485, %v1459, %v1475
        %v1493 = vsel %vm1485, %v1460, %v1476
        %v1494 = vsel %vm1485, %v1461, %v1477
        %v1495 = vsel %vm1485, %v1462, %v1478
        %v1496 = vsel %vm1485, %v1463, %v1479
        %v1497 = vsel %vm1485, %v1464, %v1480
        %v1498 = vsel %vm1485, %v1465, %v1481
        %v1499 = vsel %vm1485, %v1466, %v1482
        %v1500 = vsel %vm1485, %v1467, %v1483
        %v1501 = vsel %vm1485, %v1468, %v1484
        %v1502 = vsel %vm1485, %v1437, %v1453
        %v1503 = vsel %vm1485, %v1438, %v1454
        %v1504 = vsel %vm1485, %v1439, %v1455
        %v1505 = vsel %vm1485, %v1440, %v1456
        %v1506 = vsel %vm1485, %v1441, %v1457
        %v1507 = vsel %vm1485, %v1442, %v1458
        %v1508 = vsel %vm1485, %v1443, %v1459
        %v1509 = vsel %vm1485, %v1444, %v1460
        %v1510 = vsel %vm1485, %v1445, %v1461
        %v1511 = vsel %vm1485, %v1446, %v1462
        %v1512 = vsel %vm1485, %v1447, %v1463
        %v1513 = vsel %vm1485, %v1448, %v1464
        %v1514 = vsel %vm1485, %v1449, %v1465
        %v1515 = vsel %vm1485, %v1450, %v1466
        %v1516 = vsel %vm1485, %v1451, %v1467
        %v1517 = vsel %vm1485, %v1452, %v1468
        %v1518 = vpack.c.bf16 %v1486, %v1502
        %v1519 = vpack.c.bf16 %v1487, %v1503
        %v1520 = vpack.c.bf16 %v1488, %v1504
        %v1521 = vpack.c.bf16 %v1489, %v1505
        %v1522 = vpack.c.bf16 %v1490, %v1506
        %v1523 = vpack.c.bf16 %v1491, %v1507
        %v1524 = vpack.c.bf16 %v1492, %v1508
        %v1525 = vpack.c.bf16 %v1493, %v1509
        %v1526 = vpack.c.bf16 %v1494, %v1510
        %v1527 = vpack.c.bf16 %v1495, %v1511
        %v1528 = vpack.c.bf16 %v1496, %v1512
        %v1529 = vpack.c.bf16 %v1497, %v1513
        %v1530 = vpack.c.bf16 %v1498, %v1514
        %v1531 = vpack.c.bf16 %v1499, %v1515
        %v1532 = vpack.c.bf16 %v1500, %v1516
        %v1533 = vpack.c.bf16 %v1501, %v1517
        %s1534 = scalar_lea.vmem %s3, 64
        %v1535 = vld [vmem:[%s1534] sm:$0xf]
        %v1536 = vld [vmem:[%s1534 + $0x4] sm:$0xf]
        %v1537 = vld [vmem:[%s1534 + $0x8] sm:$0xf]
        %v1538 = vld [vmem:[%s1534 + $0xc] sm:$0xf]
        %v1539 = vld [vmem:[%s1534 + $0x10] sm:$0xf]
        %v1540 = vld [vmem:[%s1534 + $0x14] sm:$0xf]
        %v1541 = vld [vmem:[%s1534 + $0x18] sm:$0xf]
        %v1542 = vld [vmem:[%s1534 + $0x1c] sm:$0xf]
        %v1543 = vld [vmem:[%s1534 + $0x20] sm:$0xf]
        %v1544 = vld [vmem:[%s1534 + $0x24] sm:$0xf]
        %v1545 = vld [vmem:[%s1534 + $0x28] sm:$0xf]
        %v1546 = vld [vmem:[%s1534 + $0x2c] sm:$0xf]
        %v1547 = vld [vmem:[%s1534 + $0x30] sm:$0xf]
        %v1548 = vld [vmem:[%s1534 + $0x34] sm:$0xf]
        %v1549 = vld [vmem:[%s1534 + $0x38] sm:$0xf]
        %v1550 = vld [vmem:[%s1534 + $0x3c] sm:$0xf]
        %v1567 = vunpack.c.l.b16 %v1535
        %v1568 = vunpack.c.l.b16 %v1536
        %v1569 = vunpack.c.l.b16 %v1537
        %v1570 = vunpack.c.l.b16 %v1538
        %v1571 = vunpack.c.l.b16 %v1539
        %v1572 = vunpack.c.l.b16 %v1540
        %v1573 = vunpack.c.l.b16 %v1541
        %v1574 = vunpack.c.l.b16 %v1542
        %v1575 = vunpack.c.l.b16 %v1543
        %v1576 = vunpack.c.l.b16 %v1544
        %v1577 = vunpack.c.l.b16 %v1545
        %v1578 = vunpack.c.l.b16 %v1546
        %v1579 = vunpack.c.l.b16 %v1547
        %v1580 = vunpack.c.l.b16 %v1548
        %v1581 = vunpack.c.l.b16 %v1549
        %v1582 = vunpack.c.l.b16 %v1550
        %v1583 = vpack.c.b16 %v1568, %v1567
        %v1584 = vpack.c.b16 %v1570, %v1569
        %v1585 = vpack.c.b16 %v1572, %v1571
        %v1586 = vpack.c.b16 %v1574, %v1573
        %v1587 = vpack.c.b16 %v1576, %v1575
        %v1588 = vpack.c.b16 %v1578, %v1577
        %v1589 = vpack.c.b16 %v1580, %v1579
        %v1590 = vpack.c.b16 %v1582, %v1581
        %1599 = vmatprep.subr.bf16.mxu0 0
        %1600 = vmatpush1.bf16.msra.mxu0 %v1590
        %1601 = vmatprep.subr.bf16.mxu0 0
        %1602 = vmatpush1.bf16.msra.mxu0 %v1589
        %1603 = vmatprep.subr.bf16.mxu0 0
        %1604 = vmatpush1.bf16.msra.mxu0 %v1588
        %1605 = vmatprep.subr.bf16.mxu0 0
        %1606 = vmatpush1.bf16.msra.mxu0 %v1587
        %1607 = vmatprep.subr.bf16.mxu0 0
        %1608 = vmatpush1.bf16.msra.mxu0 %v1586
        %1609 = vmatprep.subr.bf16.mxu0 0
        %1610 = vmatpush1.bf16.msra.mxu0 %v1585
        %1611 = vmatprep.subr.bf16.mxu0 0
        %1612 = vmatpush1.bf16.msra.mxu0 %v1584
        %1613 = vmatprep.subr.bf16.mxu0 0
        %1614 = vmatpush1.bf16.msra.mxu0 %v1583
        %1615 = vmatprep.subr.bf16.mxu0 0
        %1616 = vmatpush2.bf16.msra.mxu0 0
        %1617 = vmatprep.subr.bf16.mxu0 0
        %1618 = vmatpush2.bf16.msra.mxu0 0
        %1619 = vmatprep.subr.bf16.mxu0 0
        %1620 = vmatpush2.bf16.msra.mxu0 0
        %1621 = vmatprep.subr.bf16.mxu0 0
        %1622 = vmatpush2.bf16.msra.mxu0 0
        %1623 = vmatprep.subr.bf16.mxu0 0
        %1624 = vmatpush2.bf16.msra.mxu0 0
        %1625 = vmatprep.subr.bf16.mxu0 0
        %1626 = vmatpush2.bf16.msra.mxu0 0
        %1627 = vmatprep.subr.bf16.mxu0 0
        %1628 = vmatpush2.bf16.msra.mxu0 0
        %1629 = vmatprep.subr.bf16.mxu0 0
        %1630 = vmatpush2.bf16.msra.mxu0 0
        %1631 = vmatprep.mubr.bf16.mxu0 0
        %1632 = vmatmul.mubr.bf16.gmra.mxu0 %v1518
        %v1633 = vpop.f32.mrf.mxu0
        %v1634 = vadd.f32 0.0, %v1633
        %v1635 = vpop.f32.mrf.mxu0
        %v1636 = vpop.f32.mrf.mxu0
        %v1637 = vadd.f32 0.0, %v1636
        %v1638 = vpop.f32.mrf.mxu0
        %1639 = vmatprep.mubr.bf16.mxu0 0
        %1640 = vmatmul.mubr.bf16.gmra.mxu0 %v1519
        %v1641 = vpop.f32.mrf.mxu0
        %v1642 = vadd.f32 0.0, %v1641
        %v1643 = vpop.f32.mrf.mxu0
        %v1644 = vpop.f32.mrf.mxu0
        %v1645 = vadd.f32 0.0, %v1644
        %v1646 = vpop.f32.mrf.mxu0
        %1647 = vmatprep.mubr.bf16.mxu0 0
        %1648 = vmatmul.mubr.bf16.gmra.mxu0 %v1520
        %v1649 = vpop.f32.mrf.mxu0
        %v1650 = vadd.f32 0.0, %v1649
        %v1651 = vpop.f32.mrf.mxu0
        %v1652 = vpop.f32.mrf.mxu0
        %v1653 = vadd.f32 0.0, %v1652
        %v1654 = vpop.f32.mrf.mxu0
        %1655 = vmatprep.mubr.bf16.mxu0 0
        %1656 = vmatmul.mubr.bf16.gmra.mxu0 %v1521
        %v1657 = vpop.f32.mrf.mxu0
        %v1658 = vadd.f32 0.0, %v1657
        %v1659 = vpop.f32.mrf.mxu0
        %v1660 = vpop.f32.mrf.mxu0
        %v1661 = vadd.f32 0.0, %v1660
        %v1662 = vpop.f32.mrf.mxu0
        %1663 = vmatprep.mubr.bf16.mxu0 0
        %1664 = vmatmul.mubr.bf16.gmra.mxu0 %v1522
        %v1665 = vpop.f32.mrf.mxu0
        %v1666 = vadd.f32 0.0, %v1665
        %v1667 = vpop.f32.mrf.mxu0
        %v1668 = vpop.f32.mrf.mxu0
        %v1669 = vadd.f32 0.0, %v1668
        %v1670 = vpop.f32.mrf.mxu0
        %1671 = vmatprep.mubr.bf16.mxu0 0
        %1672 = vmatmul.mubr.bf16.gmra.mxu0 %v1523
        %v1673 = vpop.f32.mrf.mxu0
        %v1674 = vadd.f32 0.0, %v1673
        %v1675 = vpop.f32.mrf.mxu0
        %v1676 = vpop.f32.mrf.mxu0
        %v1677 = vadd.f32 0.0, %v1676
        %v1678 = vpop.f32.mrf.mxu0
        %1679 = vmatprep.mubr.bf16.mxu0 0
        %1680 = vmatmul.mubr.bf16.gmra.mxu0 %v1524
        %v1681 = vpop.f32.mrf.mxu0
        %v1682 = vadd.f32 0.0, %v1681
        %v1683 = vpop.f32.mrf.mxu0
        %v1684 = vpop.f32.mrf.mxu0
        %v1685 = vadd.f32 0.0, %v1684
        %v1686 = vpop.f32.mrf.mxu0
        %1687 = vmatprep.mubr.bf16.mxu0 0
        %1688 = vmatmul.mubr.bf16.gmra.mxu0 %v1525
        %v1689 = vpop.f32.mrf.mxu0
        %v1690 = vadd.f32 0.0, %v1689
        %v1691 = vpop.f32.mrf.mxu0
        %v1692 = vpop.f32.mrf.mxu0
        %v1693 = vadd.f32 0.0, %v1692
        %v1694 = vpop.f32.mrf.mxu0
        %1695 = vmatprep.mubr.bf16.mxu0 0
        %1696 = vmatmul.mubr.bf16.gmra.mxu0 %v1526
        %v1697 = vpop.f32.mrf.mxu0
        %v1698 = vadd.f32 0.0, %v1697
        %v1699 = vpop.f32.mrf.mxu0
        %v1700 = vpop.f32.mrf.mxu0
        %v1701 = vadd.f32 0.0, %v1700
        %v1702 = vpop.f32.mrf.mxu0
        %1703 = vmatprep.mubr.bf16.mxu0 0
        %1704 = vmatmul.mubr.bf16.gmra.mxu0 %v1527
        %v1705 = vpop.f32.mrf.mxu0
        %v1706 = vadd.f32 0.0, %v1705
        %v1707 = vpop.f32.mrf.mxu0
        %v1708 = vpop.f32.mrf.mxu0
        %v1709 = vadd.f32 0.0, %v1708
        %v1710 = vpop.f32.mrf.mxu0
        %1711 = vmatprep.mubr.bf16.mxu0 0
        %1712 = vmatmul.mubr.bf16.gmra.mxu0 %v1528
        %v1713 = vpop.f32.mrf.mxu0
        %v1714 = vadd.f32 0.0, %v1713
        %v1715 = vpop.f32.mrf.mxu0
        %v1716 = vpop.f32.mrf.mxu0
        %v1717 = vadd.f32 0.0, %v1716
        %v1718 = vpop.f32.mrf.mxu0
        %1719 = vmatprep.mubr.bf16.mxu0 0
        %1720 = vmatmul.mubr.bf16.gmra.mxu0 %v1529
        %v1721 = vpop.f32.mrf.mxu0
        %v1722 = vadd.f32 0.0, %v1721
        %v1723 = vpop.f32.mrf.mxu0
        %v1724 = vpop.f32.mrf.mxu0
        %v1725 = vadd.f32 0.0, %v1724
        %v1726 = vpop.f32.mrf.mxu0
        %1727 = vmatprep.mubr.bf16.mxu0 0
        %1728 = vmatmul.mubr.bf16.gmra.mxu0 %v1530
        %v1729 = vpop.f32.mrf.mxu0
        %v1730 = vadd.f32 0.0, %v1729
        %v1731 = vpop.f32.mrf.mxu0
        %v1732 = vpop.f32.mrf.mxu0
        %v1733 = vadd.f32 0.0, %v1732
        %v1734 = vpop.f32.mrf.mxu0
        %1735 = vmatprep.mubr.bf16.mxu0 0
        %1736 = vmatmul.mubr.bf16.gmra.mxu0 %v1531
        %v1737 = vpop.f32.mrf.mxu0
        %v1738 = vadd.f32 0.0, %v1737
        %v1739 = vpop.f32.mrf.mxu0
        %v1740 = vpop.f32.mrf.mxu0
        %v1741 = vadd.f32 0.0, %v1740
        %v1742 = vpop.f32.mrf.mxu0
        %1743 = vmatprep.mubr.bf16.mxu0 0
        %1744 = vmatmul.mubr.bf16.gmra.mxu0 %v1532
        %v1745 = vpop.f32.mrf.mxu0
        %v1746 = vadd.f32 0.0, %v1745
        %v1747 = vpop.f32.mrf.mxu0
        %v1748 = vpop.f32.mrf.mxu0
        %v1749 = vadd.f32 0.0, %v1748
        %v1750 = vpop.f32.mrf.mxu0
        %1751 = vmatprep.mubr.bf16.mxu0 0
        %1752 = vmatmul.mubr.bf16.gmra.mxu0 %v1533
        %v1753 = vpop.f32.mrf.mxu0
        %v1754 = vadd.f32 0.0, %v1753
        %v1755 = vpop.f32.mrf.mxu0
        %v1756 = vpop.f32.mrf.mxu0
        %v1757 = vadd.f32 0.0, %v1756
        %v1758 = vpop.f32.mrf.mxu0
        %1759 = vdwg.mxu0
        %v1776 = vunpack.c.l.b16 %v592
        %v1777 = vunpack.c.l.b16 %v593
        %v1778 = vunpack.c.l.b16 %v594
        %v1779 = vunpack.c.l.b16 %v595
        %v1780 = vunpack.c.l.b16 %v596
        %v1781 = vunpack.c.l.b16 %v597
        %v1782 = vunpack.c.l.b16 %v598
        %v1783 = vunpack.c.l.b16 %v599
        %v1784 = vunpack.c.l.b16 %v600
        %v1785 = vunpack.c.l.b16 %v601
        %v1786 = vunpack.c.l.b16 %v602
        %v1787 = vunpack.c.l.b16 %v603
        %v1788 = vunpack.c.l.b16 %v604
        %v1789 = vunpack.c.l.b16 %v605
        %v1790 = vunpack.c.l.b16 %v606
        %v1791 = vunpack.c.l.b16 %v607
        %v1792 = vpack.c.b16 %v1777, %v1776
        %v1793 = vpack.c.b16 %v1779, %v1778
        %v1794 = vpack.c.b16 %v1781, %v1780
        %v1795 = vpack.c.b16 %v1783, %v1782
        %v1796 = vpack.c.b16 %v1785, %v1784
        %v1797 = vpack.c.b16 %v1787, %v1786
        %v1798 = vpack.c.b16 %v1789, %v1788
        %v1799 = vpack.c.b16 %v1791, %v1790
        %1808 = vmatprep.subr.bf16.mxu0 0
        %1809 = vmatpush1.bf16.msra.mxu0 %v1799
        %1810 = vmatprep.subr.bf16.mxu0 0
        %1811 = vmatpush1.bf16.msra.mxu0 %v1798
        %1812 = vmatprep.subr.bf16.mxu0 0
        %1813 = vmatpush1.bf16.msra.mxu0 %v1797
        %1814 = vmatprep.subr.bf16.mxu0 0
        %1815 = vmatpush1.bf16.msra.mxu0 %v1796
        %1816 = vmatprep.subr.bf16.mxu0 0
        %1817 = vmatpush1.bf16.msra.mxu0 %v1795
        %1818 = vmatprep.subr.bf16.mxu0 0
        %1819 = vmatpush1.bf16.msra.mxu0 %v1794
        %1820 = vmatprep.subr.bf16.mxu0 0
        %1821 = vmatpush1.bf16.msra.mxu0 %v1793
        %1822 = vmatprep.subr.bf16.mxu0 0
        %1823 = vmatpush1.bf16.msra.mxu0 %v1792
        %1824 = vmatprep.subr.bf16.mxu0 0
        %1825 = vmatpush2.bf16.msra.mxu0 0
        %1826 = vmatprep.subr.bf16.mxu0 0
        %1827 = vmatpush2.bf16.msra.mxu0 0
        %1828 = vmatprep.subr.bf16.mxu0 0
        %1829 = vmatpush2.bf16.msra.mxu0 0
        %1830 = vmatprep.subr.bf16.mxu0 0
        %1831 = vmatpush2.bf16.msra.mxu0 0
        %1832 = vmatprep.subr.bf16.mxu0 0
        %1833 = vmatpush2.bf16.msra.mxu0 0
        %1834 = vmatprep.subr.bf16.mxu0 0
        %1835 = vmatpush2.bf16.msra.mxu0 0
        %1836 = vmatprep.subr.bf16.mxu0 0
        %1837 = vmatpush2.bf16.msra.mxu0 0
        %1838 = vmatprep.subr.bf16.mxu0 0
        %1839 = vmatpush2.bf16.msra.mxu0 0
        %1840 = vmatprep.mubr.bf16.mxu0 0
        %1841 = vmatmul.mubr.bf16.gmra.mxu0 %v576
        %v1842 = vpop.f32.mrf.mxu0
        %v1843 = vadd.f32 %v1634, %v1842
        %v1844 = vpop.f32.mrf.mxu0
        %v1845 = vpop.f32.mrf.mxu0
        %v1846 = vadd.f32 %v1637, %v1845
        %v1847 = vpop.f32.mrf.mxu0
        %1848 = vmatprep.mubr.bf16.mxu0 0
        %1849 = vmatmul.mubr.bf16.gmra.mxu0 %v577
        %v1850 = vpop.f32.mrf.mxu0
        %v1851 = vadd.f32 %v1642, %v1850
        %v1852 = vpop.f32.mrf.mxu0
        %v1853 = vpop.f32.mrf.mxu0
        %v1854 = vadd.f32 %v1645, %v1853
        %v1855 = vpop.f32.mrf.mxu0
        %1856 = vmatprep.mubr.bf16.mxu0 0
        %1857 = vmatmul.mubr.bf16.gmra.mxu0 %v578
        %v1858 = vpop.f32.mrf.mxu0
        %v1859 = vadd.f32 %v1650, %v1858
        %v1860 = vpop.f32.mrf.mxu0
        %v1861 = vpop.f32.mrf.mxu0
        %v1862 = vadd.f32 %v1653, %v1861
        %v1863 = vpop.f32.mrf.mxu0
        %1864 = vmatprep.mubr.bf16.mxu0 0
        %1865 = vmatmul.mubr.bf16.gmra.mxu0 %v579
        %v1866 = vpop.f32.mrf.mxu0
        %v1867 = vadd.f32 %v1658, %v1866
        %v1868 = vpop.f32.mrf.mxu0
        %v1869 = vpop.f32.mrf.mxu0
        %v1870 = vadd.f32 %v1661, %v1869
        %v1871 = vpop.f32.mrf.mxu0
        %1872 = vmatprep.mubr.bf16.mxu0 0
        %1873 = vmatmul.mubr.bf16.gmra.mxu0 %v580
        %v1874 = vpop.f32.mrf.mxu0
        %v1875 = vadd.f32 %v1666, %v1874
        %v1876 = vpop.f32.mrf.mxu0
        %v1877 = vpop.f32.mrf.mxu0
        %v1878 = vadd.f32 %v1669, %v1877
        %v1879 = vpop.f32.mrf.mxu0
        %1880 = vmatprep.mubr.bf16.mxu0 0
        %1881 = vmatmul.mubr.bf16.gmra.mxu0 %v581
        %v1882 = vpop.f32.mrf.mxu0
        %v1883 = vadd.f32 %v1674, %v1882
        %v1884 = vpop.f32.mrf.mxu0
        %v1885 = vpop.f32.mrf.mxu0
        %v1886 = vadd.f32 %v1677, %v1885
        %v1887 = vpop.f32.mrf.mxu0
        %1888 = vmatprep.mubr.bf16.mxu0 0
        %1889 = vmatmul.mubr.bf16.gmra.mxu0 %v582
        %v1890 = vpop.f32.mrf.mxu0
        %v1891 = vadd.f32 %v1682, %v1890
        %v1892 = vpop.f32.mrf.mxu0
        %v1893 = vpop.f32.mrf.mxu0
        %v1894 = vadd.f32 %v1685, %v1893
        %v1895 = vpop.f32.mrf.mxu0
        %1896 = vmatprep.mubr.bf16.mxu0 0
        %1897 = vmatmul.mubr.bf16.gmra.mxu0 %v583
        %v1898 = vpop.f32.mrf.mxu0
        %v1899 = vadd.f32 %v1690, %v1898
        %v1900 = vpop.f32.mrf.mxu0
        %v1901 = vpop.f32.mrf.mxu0
        %v1902 = vadd.f32 %v1693, %v1901
        %v1903 = vpop.f32.mrf.mxu0
        %1904 = vmatprep.mubr.bf16.mxu0 0
        %1905 = vmatmul.mubr.bf16.gmra.mxu0 %v584
        %v1906 = vpop.f32.mrf.mxu0
        %v1907 = vadd.f32 %v1698, %v1906
        %v1908 = vpop.f32.mrf.mxu0
        %v1909 = vpop.f32.mrf.mxu0
        %v1910 = vadd.f32 %v1701, %v1909
        %v1911 = vpop.f32.mrf.mxu0
        %1912 = vmatprep.mubr.bf16.mxu0 0
        %1913 = vmatmul.mubr.bf16.gmra.mxu0 %v585
        %v1914 = vpop.f32.mrf.mxu0
        %v1915 = vadd.f32 %v1706, %v1914
        %v1916 = vpop.f32.mrf.mxu0
        %v1917 = vpop.f32.mrf.mxu0
        %v1918 = vadd.f32 %v1709, %v1917
        %v1919 = vpop.f32.mrf.mxu0
        %1920 = vmatprep.mubr.bf16.mxu0 0
        %1921 = vmatmul.mubr.bf16.gmra.mxu0 %v586
        %v1922 = vpop.f32.mrf.mxu0
        %v1923 = vadd.f32 %v1714, %v1922
        %v1924 = vpop.f32.mrf.mxu0
        %v1925 = vpop.f32.mrf.mxu0
        %v1926 = vadd.f32 %v1717, %v1925
        %v1927 = vpop.f32.mrf.mxu0
        %1928 = vmatprep.mubr.bf16.mxu0 0
        %1929 = vmatmul.mubr.bf16.gmra.mxu0 %v587
        %v1930 = vpop.f32.mrf.mxu0
        %v1931 = vadd.f32 %v1722, %v1930
        %v1932 = vpop.f32.mrf.mxu0
        %v1933 = vpop.f32.mrf.mxu0
        %v1934 = vadd.f32 %v1725, %v1933
        %v1935 = vpop.f32.mrf.mxu0
        %1936 = vmatprep.mubr.bf16.mxu0 0
        %1937 = vmatmul.mubr.bf16.gmra.mxu0 %v588
        %v1938 = vpop.f32.mrf.mxu0
        %v1939 = vadd.f32 %v1730, %v1938
        %v1940 = vpop.f32.mrf.mxu0
        %v1941 = vpop.f32.mrf.mxu0
        %v1942 = vadd.f32 %v1733, %v1941
        %v1943 = vpop.f32.mrf.mxu0
        %1944 = vmatprep.mubr.bf16.mxu0 0
        %1945 = vmatmul.mubr.bf16.gmra.mxu0 %v589
        %v1946 = vpop.f32.mrf.mxu0
        %v1947 = vadd.f32 %v1738, %v1946
        %v1948 = vpop.f32.mrf.mxu0
        %v1949 = vpop.f32.mrf.mxu0
        %v1950 = vadd.f32 %v1741, %v1949
        %v1951 = vpop.f32.mrf.mxu0
        %1952 = vmatprep.mubr.bf16.mxu0 0
        %1953 = vmatmul.mubr.bf16.gmra.mxu0 %v590
        %v1954 = vpop.f32.mrf.mxu0
        %v1955 = vadd.f32 %v1746, %v1954
        %v1956 = vpop.f32.mrf.mxu0
        %v1957 = vpop.f32.mrf.mxu0
        %v1958 = vadd.f32 %v1749, %v1957
        %v1959 = vpop.f32.mrf.mxu0
        %1960 = vmatprep.mubr.bf16.mxu0 0
        %1961 = vmatmul.mubr.bf16.gmra.mxu0 %v591
        %v1962 = vpop.f32.mrf.mxu0
        %v1963 = vadd.f32 %v1754, %v1962
        %v1964 = vpop.f32.mrf.mxu0
        %v1965 = vpop.f32.mrf.mxu0
        %v1966 = vadd.f32 %v1757, %v1965
        %v1967 = vpop.f32.mrf.mxu0
        %1968 = vdwg.mxu0
        %1969 = vst [vmem:[%s543 + $0x8] sm:$0xff] %v1502
        %1970 = vst [vmem:[%s543 + $0x10] sm:$0xff] %v1486
        %1971 = vst [vmem:[%s543 + $0x28] sm:$0xff] %v1503
        %1972 = vst [vmem:[%s543 + $0x30] sm:$0xff] %v1487
        %1973 = vst [vmem:[%s543 + $0x48] sm:$0xff] %v1504
        %1974 = vst [vmem:[%s543 + $0x50] sm:$0xff] %v1488
        %1975 = vst [vmem:[%s543 + $0x68] sm:$0xff] %v1505
        %1976 = vst [vmem:[%s543 + $0x70] sm:$0xff] %v1489
        %1977 = vst [vmem:[%s543 + $0x88] sm:$0xff] %v1506
        %1978 = vst [vmem:[%s543 + $0x90] sm:$0xff] %v1490
        %1979 = vst [vmem:[%s543 + $0xa8] sm:$0xff] %v1507
        %1980 = vst [vmem:[%s543 + $0xb0] sm:$0xff] %v1491
        %1981 = vst [vmem:[%s543 + $0xc8] sm:$0xff] %v1508
        %1982 = vst [vmem:[%s543 + $0xd0] sm:$0xff] %v1492
        %1983 = vst [vmem:[%s543 + $0xe8] sm:$0xff] %v1509
        %1984 = vst [vmem:[%s543 + $0xf0] sm:$0xff] %v1493
        %1985 = vst [vmem:[%s543 + $0x108] sm:$0xff] %v1510
        %1986 = vst [vmem:[%s543 + $0x110] sm:$0xff] %v1494
        %1987 = vst [vmem:[%s543 + $0x128] sm:$0xff] %v1511
        %1988 = vst [vmem:[%s543 + $0x130] sm:$0xff] %v1495
        %1989 = vst [vmem:[%s543 + $0x148] sm:$0xff] %v1512
        %1990 = vst [vmem:[%s543 + $0x150] sm:$0xff] %v1496
        %1991 = vst [vmem:[%s543 + $0x168] sm:$0xff] %v1513
        %1992 = vst [vmem:[%s543 + $0x170] sm:$0xff] %v1497
        %1993 = vst [vmem:[%s543 + $0x188] sm:$0xff] %v1514
        %1994 = vst [vmem:[%s543 + $0x190] sm:$0xff] %v1498
        %1995 = vst [vmem:[%s543 + $0x1a8] sm:$0xff] %v1515
        %1996 = vst [vmem:[%s543 + $0x1b0] sm:$0xff] %v1499
        %1997 = vst [vmem:[%s543 + $0x1c8] sm:$0xff] %v1516
        %1998 = vst [vmem:[%s543 + $0x1d0] sm:$0xff] %v1500
        %1999 = vst [vmem:[%s543 + $0x1e8] sm:$0xff] %v1517
        %2000 = vst [vmem:[%s543 + $0x1f0] sm:$0xff] %v1501
        %v2001 = vld [vmem:[#allocation2] sm:$0xff]
        %v2002 = vld [vmem:[#allocation2 + $0x8] sm:$0xff]
        %v2003 = vld [vmem:[#allocation2 + $0x10] sm:$0xff]
        %v2004 = vld [vmem:[#allocation2 + $0x18] sm:$0xff]
        %v2005 = vld [vmem:[#allocation2 + $0x20] sm:$0xff]
        %v2006 = vld [vmem:[#allocation2 + $0x28] sm:$0xff]
        %v2007 = vld [vmem:[#allocation2 + $0x30] sm:$0xff]
        %v2008 = vld [vmem:[#allocation2 + $0x38] sm:$0xff]
        %v2009 = vld [vmem:[#allocation2 + $0x40] sm:$0xff]
        %v2010 = vld [vmem:[#allocation2 + $0x48] sm:$0xff]
        %v2011 = vld [vmem:[#allocation2 + $0x50] sm:$0xff]
        %v2012 = vld [vmem:[#allocation2 + $0x58] sm:$0xff]
        %v2013 = vld [vmem:[#allocation2 + $0x60] sm:$0xff]
        %v2014 = vld [vmem:[#allocation2 + $0x68] sm:$0xff]
        %v2015 = vld [vmem:[#allocation2 + $0x70] sm:$0xff]
        %v2016 = vld [vmem:[#allocation2 + $0x78] sm:$0xff]
        %v2017 = vld [vmem:[#allocation2 + $0x80] sm:$0xff]
        %v2018 = vld [vmem:[#allocation2 + $0x88] sm:$0xff]
        %v2019 = vld [vmem:[#allocation2 + $0x90] sm:$0xff]
        %v2020 = vld [vmem:[#allocation2 + $0x98] sm:$0xff]
        %v2021 = vld [vmem:[#allocation2 + $0xa0] sm:$0xff]
        %v2022 = vld [vmem:[#allocation2 + $0xa8] sm:$0xff]
        %v2023 = vld [vmem:[#allocation2 + $0xb0] sm:$0xff]
        %v2024 = vld [vmem:[#allocation2 + $0xb8] sm:$0xff]
        %v2025 = vld [vmem:[#allocation2 + $0xc0] sm:$0xff]
        %v2026 = vld [vmem:[#allocation2 + $0xc8] sm:$0xff]
        %v2027 = vld [vmem:[#allocation2 + $0xd0] sm:$0xff]
        %v2028 = vld [vmem:[#allocation2 + $0xd8] sm:$0xff]
        %v2029 = vld [vmem:[#allocation2 + $0xe0] sm:$0xff]
        %v2030 = vld [vmem:[#allocation2 + $0xe8] sm:$0xff]
        %v2031 = vld [vmem:[#allocation2 + $0xf0] sm:$0xff]
        %v2032 = vld [vmem:[#allocation2 + $0xf8] sm:$0xff]
        %v2033 = vld [vmem:[#allocation2 + $0x100] sm:$0xff]
        %v2034 = vld [vmem:[#allocation2 + $0x108] sm:$0xff]
        %v2035 = vld [vmem:[#allocation2 + $0x110] sm:$0xff]
        %v2036 = vld [vmem:[#allocation2 + $0x118] sm:$0xff]
        %v2037 = vld [vmem:[#allocation2 + $0x120] sm:$0xff]
        %v2038 = vld [vmem:[#allocation2 + $0x128] sm:$0xff]
        %v2039 = vld [vmem:[#allocation2 + $0x130] sm:$0xff]
        %v2040 = vld [vmem:[#allocation2 + $0x138] sm:$0xff]
        %v2041 = vld [vmem:[#allocation2 + $0x140] sm:$0xff]
        %v2042 = vld [vmem:[#allocation2 + $0x148] sm:$0xff]
        %v2043 = vld [vmem:[#allocation2 + $0x150] sm:$0xff]
        %v2044 = vld [vmem:[#allocation2 + $0x158] sm:$0xff]
        %v2045 = vld [vmem:[#allocation2 + $0x160] sm:$0xff]
        %v2046 = vld [vmem:[#allocation2 + $0x168] sm:$0xff]
        %v2047 = vld [vmem:[#allocation2 + $0x170] sm:$0xff]
        %v2048 = vld [vmem:[#allocation2 + $0x178] sm:$0xff]
        %v2049 = vld [vmem:[#allocation2 + $0x180] sm:$0xff]
        %v2050 = vld [vmem:[#allocation2 + $0x188] sm:$0xff]
        %v2051 = vld [vmem:[#allocation2 + $0x190] sm:$0xff]
        %v2052 = vld [vmem:[#allocation2 + $0x198] sm:$0xff]
        %v2053 = vld [vmem:[#allocation2 + $0x1a0] sm:$0xff]
        %v2054 = vld [vmem:[#allocation2 + $0x1a8] sm:$0xff]
        %v2055 = vld [vmem:[#allocation2 + $0x1b0] sm:$0xff]
        %v2056 = vld [vmem:[#allocation2 + $0x1b8] sm:$0xff]
        %v2057 = vld [vmem:[#allocation2 + $0x1c0] sm:$0xff]
        %v2058 = vld [vmem:[#allocation2 + $0x1c8] sm:$0xff]
        %v2059 = vld [vmem:[#allocation2 + $0x1d0] sm:$0xff]
        %v2060 = vld [vmem:[#allocation2 + $0x1d8] sm:$0xff]
        %v2061 = vld [vmem:[#allocation2 + $0x1e0] sm:$0xff]
        %v2062 = vld [vmem:[#allocation2 + $0x1e8] sm:$0xff]
        %v2063 = vld [vmem:[#allocation2 + $0x1f0] sm:$0xff]
        %v2064 = vld [vmem:[#allocation2 + $0x1f8] sm:$0xff]
        %v2065 = vld [vmem:[#allocation2 + $0x200] sm:$0xff]
        %v2066 = vld [vmem:[#allocation2 + $0x208] sm:$0xff]
        %v2067 = vld [vmem:[#allocation2 + $0x210] sm:$0xff]
        %v2068 = vld [vmem:[#allocation2 + $0x218] sm:$0xff]
        %v2069 = vld [vmem:[#allocation2 + $0x220] sm:$0xff]
        %v2070 = vld [vmem:[#allocation2 + $0x228] sm:$0xff]
        %v2071 = vld [vmem:[#allocation2 + $0x230] sm:$0xff]
        %v2072 = vld [vmem:[#allocation2 + $0x238] sm:$0xff]
        %v2073 = vld [vmem:[#allocation2 + $0x240] sm:$0xff]
        %v2074 = vld [vmem:[#allocation2 + $0x248] sm:$0xff]
        %v2075 = vld [vmem:[#allocation2 + $0x250] sm:$0xff]
        %v2076 = vld [vmem:[#allocation2 + $0x258] sm:$0xff]
        %v2077 = vld [vmem:[#allocation2 + $0x260] sm:$0xff]
        %v2078 = vld [vmem:[#allocation2 + $0x268] sm:$0xff]
        %v2079 = vld [vmem:[#allocation2 + $0x270] sm:$0xff]
        %v2080 = vld [vmem:[#allocation2 + $0x278] sm:$0xff]
        %v2081 = vmax.f32 %v2001, %v2005
        %v2082 = vmax.f32 %v2002, %v2006
        %v2083 = vmax.f32 %v2003, %v2007
        %v2084 = vmax.f32 %v2004, %v2008
        %v2085 = vmax.f32 %v2005, %v2009
        %v2086 = vmax.f32 %v2006, %v2010
        %v2087 = vmax.f32 %v2007, %v2011
        %v2088 = vmax.f32 %v2008, %v2012
        %v2089 = vmax.f32 %v2009, %v2013
        %v2090 = vmax.f32 %v2010, %v2014
        %v2091 = vmax.f32 %v2011, %v2015
        %v2092 = vmax.f32 %v2012, %v2016
        %v2093 = vmax.f32 %v2013, %v2017
        %v2094 = vmax.f32 %v2014, %v2018
        %v2095 = vmax.f32 %v2015, %v2019
        %v2096 = vmax.f32 %v2016, %v2020
        %v2097 = vmax.f32 %v2017, %v2021
        %v2098 = vmax.f32 %v2018, %v2022
        %v2099 = vmax.f32 %v2019, %v2023
        %v2100 = vmax.f32 %v2020, %v2024
        %v2101 = vmax.f32 %v2021, %v2025
        %v2102 = vmax.f32 %v2022, %v2026
        %v2103 = vmax.f32 %v2023, %v2027
        %v2104 = vmax.f32 %v2024, %v2028
        %v2105 = vmax.f32 %v2025, %v2029
        %v2106 = vmax.f32 %v2026, %v2030
        %v2107 = vmax.f32 %v2027, %v2031
        %v2108 = vmax.f32 %v2028, %v2032
        %v2109 = vmax.f32 %v2029, %v2033
        %v2110 = vmax.f32 %v2030, %v2034
        %v2111 = vmax.f32 %v2031, %v2035
        %v2112 = vmax.f32 %v2032, %v2036
        %v2113 = vmax.f32 %v2033, %v2037
        %v2114 = vmax.f32 %v2034, %v2038
        %v2115 = vmax.f32 %v2035, %v2039
        %v2116 = vmax.f32 %v2036, %v2040
        %v2117 = vmax.f32 %v2037, %v2041
        %v2118 = vmax.f32 %v2038, %v2042
        %v2119 = vmax.f32 %v2039, %v2043
        %v2120 = vmax.f32 %v2040, %v2044
        %v2121 = vmax.f32 %v2041, %v2045
        %v2122 = vmax.f32 %v2042, %v2046
        %v2123 = vmax.f32 %v2043, %v2047
        %v2124 = vmax.f32 %v2044, %v2048
        %v2125 = vmax.f32 %v2045, %v2049
        %v2126 = vmax.f32 %v2046, %v2050
        %v2127 = vmax.f32 %v2047, %v2051
        %v2128 = vmax.f32 %v2048, %v2052
        %v2129 = vmax.f32 %v2049, %v2053
        %v2130 = vmax.f32 %v2050, %v2054
        %v2131 = vmax.f32 %v2051, %v2055
        %v2132 = vmax.f32 %v2052, %v2056
        %v2133 = vmax.f32 %v2053, %v2057
        %v2134 = vmax.f32 %v2054, %v2058
        %v2135 = vmax.f32 %v2055, %v2059
        %v2136 = vmax.f32 %v2056, %v2060
        %v2137 = vmax.f32 %v2057, %v2061
        %v2138 = vmax.f32 %v2058, %v2062
        %v2139 = vmax.f32 %v2059, %v2063
        %v2140 = vmax.f32 %v2060, %v2064
        %v2141 = vmax.f32 %v2061, %v2065
        %v2142 = vmax.f32 %v2062, %v2066
        %v2143 = vmax.f32 %v2063, %v2067
        %v2144 = vmax.f32 %v2064, %v2068
        %v2145 = vmax.f32 %v2065, %v2069
        %v2146 = vmax.f32 %v2066, %v2070
        %v2147 = vmax.f32 %v2067, %v2071
        %v2148 = vmax.f32 %v2068, %v2072
        %v2149 = vmax.f32 %v2069, %v2073
        %v2150 = vmax.f32 %v2070, %v2074
        %v2151 = vmax.f32 %v2071, %v2075
        %v2152 = vmax.f32 %v2072, %v2076
        %v2153 = vmax.f32 %v2081, %v2089
        %v2154 = vmax.f32 %v2082, %v2090
        %v2155 = vmax.f32 %v2083, %v2091
        %v2156 = vmax.f32 %v2084, %v2092
        %v2157 = vmax.f32 %v2085, %v2093
        %v2158 = vmax.f32 %v2086, %v2094
        %v2159 = vmax.f32 %v2087, %v2095
        %v2160 = vmax.f32 %v2088, %v2096
        %v2161 = vmax.f32 %v2089, %v2097
        %v2162 = vmax.f32 %v2090, %v2098
        %v2163 = vmax.f32 %v2091, %v2099
        %v2164 = vmax.f32 %v2092, %v2100
        %v2165 = vmax.f32 %v2093, %v2101
        %v2166 = vmax.f32 %v2094, %v2102
        %v2167 = vmax.f32 %v2095, %v2103
        %v2168 = vmax.f32 %v2096, %v2104
        %v2169 = vmax.f32 %v2097, %v2105
        %v2170 = vmax.f32 %v2098, %v2106
        %v2171 = vmax.f32 %v2099, %v2107
        %v2172 = vmax.f32 %v2100, %v2108
        %v2173 = vmax.f32 %v2101, %v2109
        %v2174 = vmax.f32 %v2102, %v2110
        %v2175 = vmax.f32 %v2103, %v2111
        %v2176 = vmax.f32 %v2104, %v2112
        %v2177 = vmax.f32 %v2105, %v2113
        %v2178 = vmax.f32 %v2106, %v2114
        %v2179 = vmax.f32 %v2107, %v2115
        %v2180 = vmax.f32 %v2108, %v2116
        %v2181 = vmax.f32 %v2109, %v2117
        %v2182 = vmax.f32 %v2110, %v2118
        %v2183 = vmax.f32 %v2111, %v2119
        %v2184 = vmax.f32 %v2112, %v2120
        %v2185 = vmax.f32 %v2113, %v2121
        %v2186 = vmax.f32 %v2114, %v2122
        %v2187 = vmax.f32 %v2115, %v2123
        %v2188 = vmax.f32 %v2116, %v2124
        %v2189 = vmax.f32 %v2117, %v2125
        %v2190 = vmax.f32 %v2118, %v2126
        %v2191 = vmax.f32 %v2119, %v2127
        %v2192 = vmax.f32 %v2120, %v2128
        %v2193 = vmax.f32 %v2121, %v2129
        %v2194 = vmax.f32 %v2122, %v2130
        %v2195 = vmax.f32 %v2123, %v2131
        %v2196 = vmax.f32 %v2124, %v2132
        %v2197 = vmax.f32 %v2125, %v2133
        %v2198 = vmax.f32 %v2126, %v2134
        %v2199 = vmax.f32 %v2127, %v2135
        %v2200 = vmax.f32 %v2128, %v2136
        %v2201 = vmax.f32 %v2129, %v2137
        %v2202 = vmax.f32 %v2130, %v2138
        %v2203 = vmax.f32 %v2131, %v2139
        %v2204 = vmax.f32 %v2132, %v2140
        %v2205 = vmax.f32 %v2133, %v2141
        %v2206 = vmax.f32 %v2134, %v2142
        %v2207 = vmax.f32 %v2135, %v2143
        %v2208 = vmax.f32 %v2136, %v2144
        %v2209 = vmax.f32 %v2137, %v2145
        %v2210 = vmax.f32 %v2138, %v2146
        %v2211 = vmax.f32 %v2139, %v2147
        %v2212 = vmax.f32 %v2140, %v2148
        %v2213 = vmax.f32 %v2141, %v2149
        %v2214 = vmax.f32 %v2142, %v2150
        %v2215 = vmax.f32 %v2143, %v2151
        %v2216 = vmax.f32 %v2144, %v2152
        %v2217 = vmax.f32 %v2153, %v2017
        %v2218 = vmax.f32 %v2154, %v2018
        %v2219 = vmax.f32 %v2155, %v2019
        %v2220 = vmax.f32 %v2156, %v2020
        %v2221 = vmax.f32 %v2157, %v2021
        %v2222 = vmax.f32 %v2158, %v2022
        %v2223 = vmax.f32 %v2159, %v2023
        %v2224 = vmax.f32 %v2160, %v2024
        %v2225 = vmax.f32 %v2161, %v2025
        %v2226 = vmax.f32 %v2162, %v2026
        %v2227 = vmax.f32 %v2163, %v2027
        %v2228 = vmax.f32 %v2164, %v2028
        %v2229 = vmax.f32 %v2165, %v2029
        %v2230 = vmax.f32 %v2166, %v2030
        %v2231 = vmax.f32 %v2167, %v2031
        %v2232 = vmax.f32 %v2168, %v2032
        %v2233 = vmax.f32 %v2169, %v2033
        %v2234 = vmax.f32 %v2170, %v2034
        %v2235 = vmax.f32 %v2171, %v2035
        %v2236 = vmax.f32 %v2172, %v2036
        %v2237 = vmax.f32 %v2173, %v2037
        %v2238 = vmax.f32 %v2174, %v2038
        %v2239 = vmax.f32 %v2175, %v2039
        %v2240 = vmax.f32 %v2176, %v2040
        %v2241 = vmax.f32 %v2177, %v2041
        %v2242 = vmax.f32 %v2178, %v2042
        %v2243 = vmax.f32 %v2179, %v2043
        %v2244 = vmax.f32 %v2180, %v2044
        %v2245 = vmax.f32 %v2181, %v2045
        %v2246 = vmax.f32 %v2182, %v2046
        %v2247 = vmax.f32 %v2183, %v2047
        %v2248 = vmax.f32 %v2184, %v2048
        %v2249 = vmax.f32 %v2185, %v2049
        %v2250 = vmax.f32 %v2186, %v2050
        %v2251 = vmax.f32 %v2187, %v2051
        %v2252 = vmax.f32 %v2188, %v2052
        %v2253 = vmax.f32 %v2189, %v2053
        %v2254 = vmax.f32 %v2190, %v2054
        %v2255 = vmax.f32 %v2191, %v2055
        %v2256 = vmax.f32 %v2192, %v2056
        %v2257 = vmax.f32 %v2193, %v2057
        %v2258 = vmax.f32 %v2194, %v2058
        %v2259 = vmax.f32 %v2195, %v2059
        %v2260 = vmax.f32 %v2196, %v2060
        %v2261 = vmax.f32 %v2197, %v2061
        %v2262 = vmax.f32 %v2198, %v2062
        %v2263 = vmax.f32 %v2199, %v2063
        %v2264 = vmax.f32 %v2200, %v2064
        %v2265 = vmax.f32 %v2201, %v2065
        %v2266 = vmax.f32 %v2202, %v2066
        %v2267 = vmax.f32 %v2203, %v2067
        %v2268 = vmax.f32 %v2204, %v2068
        %v2269 = vmax.f32 %v2205, %v2069
        %v2270 = vmax.f32 %v2206, %v2070
        %v2271 = vmax.f32 %v2207, %v2071
        %v2272 = vmax.f32 %v2208, %v2072
        %v2273 = vmax.f32 %v2209, %v2073
        %v2274 = vmax.f32 %v2210, %v2074
        %v2275 = vmax.f32 %v2211, %v2075
        %v2276 = vmax.f32 %v2212, %v2076
        %v2277 = vmax.f32 %v2213, %v2077
        %v2278 = vmax.f32 %v2214, %v2078
        %v2279 = vmax.f32 %v2215, %v2079
        %v2280 = vmax.f32 %v2216, %v2080
        %v2281 = vrot.slane %v2217, 1
        %v2282 = vrot.slane %v2221, 1
        %v2283 = vrot.slane %v2225, 1
        %v2284 = vrot.slane %v2229, 1
        %v2285 = vrot.slane %v2233, 1
        %v2286 = vrot.slane %v2237, 1
        %v2287 = vrot.slane %v2241, 1
        %v2288 = vrot.slane %v2245, 1
        %v2289 = vrot.slane %v2249, 1
        %v2290 = vrot.slane %v2253, 1
        %v2291 = vrot.slane %v2257, 1
        %v2292 = vrot.slane %v2261, 1
        %v2293 = vrot.slane %v2265, 1
        %v2294 = vrot.slane %v2269, 1
        %v2295 = vrot.slane %v2273, 1
        %v2296 = vrot.slane %v2277, 1
        %v2297 = vrot.slane %v2218, 1
        %v2298 = vrot.slane %v2222, 1
        %v2299 = vrot.slane %v2226, 1
        %v2300 = vrot.slane %v2230, 1
        %v2301 = vrot.slane %v2234, 1
        %v2302 = vrot.slane %v2238, 1
        %v2303 = vrot.slane %v2242, 1
        %v2304 = vrot.slane %v2246, 1
        %v2305 = vrot.slane %v2250, 1
        %v2306 = vrot.slane %v2254, 1
        %v2307 = vrot.slane %v2258, 1
        %v2308 = vrot.slane %v2262, 1
        %v2309 = vrot.slane %v2266, 1
        %v2310 = vrot.slane %v2270, 1
        %v2311 = vrot.slane %v2274, 1
        %v2312 = vrot.slane %v2278, 1
        %v2313 = vrot.slane %v2219, 1
        %v2314 = vrot.slane %v2223, 1
        %v2315 = vrot.slane %v2227, 1
        %v2316 = vrot.slane %v2231, 1
        %v2317 = vrot.slane %v2235, 1
        %v2318 = vrot.slane %v2239, 1
        %v2319 = vrot.slane %v2243, 1
        %v2320 = vrot.slane %v2247, 1
        %v2321 = vrot.slane %v2251, 1
        %v2322 = vrot.slane %v2255, 1
        %v2323 = vrot.slane %v2259, 1
        %v2324 = vrot.slane %v2263, 1
        %v2325 = vrot.slane %v2267, 1
        %v2326 = vrot.slane %v2271, 1
        %v2327 = vrot.slane %v2275, 1
        %v2328 = vrot.slane %v2279, 1
        %v2329 = vrot.slane %v2220, 1
        %v2330 = vrot.slane %v2224, 1
        %v2331 = vrot.slane %v2228, 1
        %v2332 = vrot.slane %v2232, 1
        %v2333 = vrot.slane %v2236, 1
        %v2334 = vrot.slane %v2240, 1
        %v2335 = vrot.slane %v2244, 1
        %v2336 = vrot.slane %v2248, 1
        %v2337 = vrot.slane %v2252, 1
        %v2338 = vrot.slane %v2256, 1
        %v2339 = vrot.slane %v2260, 1
        %v2340 = vrot.slane %v2264, 1
        %v2341 = vrot.slane %v2268, 1
        %v2342 = vrot.slane %v2272, 1
        %v2343 = vrot.slane %v2276, 1
        %v2344 = vrot.slane %v2280, 1
        %v2345 = vsel %vm986, %v2313, %v2329
        %v2346 = vsel %vm986, %v2314, %v2330
        %v2347 = vsel %vm986, %v2315, %v2331
        %v2348 = vsel %vm986, %v2316, %v2332
        %v2349 = vsel %vm986, %v2317, %v2333
        %v2350 = vsel %vm986, %v2318, %v2334
        %v2351 = vsel %vm986, %v2319, %v2335
        %v2352 = vsel %vm986, %v2320, %v2336
        %v2353 = vsel %vm986, %v2321, %v2337
        %v2354 = vsel %vm986, %v2322, %v2338
        %v2355 = vsel %vm986, %v2323, %v2339
        %v2356 = vsel %vm986, %v2324, %v2340
        %v2357 = vsel %vm986, %v2325, %v2341
        %v2358 = vsel %vm986, %v2326, %v2342
        %v2359 = vsel %vm986, %v2327, %v2343
        %v2360 = vsel %vm986, %v2328, %v2344
        %v2361 = vsel %vm986, %v2297, %v2313
        %v2362 = vsel %vm986, %v2298, %v2314
        %v2363 = vsel %vm986, %v2299, %v2315
        %v2364 = vsel %vm986, %v2300, %v2316
        %v2365 = vsel %vm986, %v2301, %v2317
        %v2366 = vsel %vm986, %v2302, %v2318
        %v2367 = vsel %vm986, %v2303, %v2319
        %v2368 = vsel %vm986, %v2304, %v2320
        %v2369 = vsel %vm986, %v2305, %v2321
        %v2370 = vsel %vm986, %v2306, %v2322
        %v2371 = vsel %vm986, %v2307, %v2323
        %v2372 = vsel %vm986, %v2308, %v2324
        %v2373 = vsel %vm986, %v2309, %v2325
        %v2374 = vsel %vm986, %v2310, %v2326
        %v2375 = vsel %vm986, %v2311, %v2327
        %v2376 = vsel %vm986, %v2312, %v2328
        %v2377 = vsel %vm986, %v2281, %v2297
        %v2378 = vsel %vm986, %v2282, %v2298
        %v2379 = vsel %vm986, %v2283, %v2299
        %v2380 = vsel %vm986, %v2284, %v2300
        %v2381 = vsel %vm986, %v2285, %v2301
        %v2382 = vsel %vm986, %v2286, %v2302
        %v2383 = vsel %vm986, %v2287, %v2303
        %v2384 = vsel %vm986, %v2288, %v2304
        %v2385 = vsel %vm986, %v2289, %v2305
        %v2386 = vsel %vm986, %v2290, %v2306
        %v2387 = vsel %vm986, %v2291, %v2307
        %v2388 = vsel %vm986, %v2292, %v2308
        %v2389 = vsel %vm986, %v2293, %v2309
        %v2390 = vsel %vm986, %v2294, %v2310
        %v2391 = vsel %vm986, %v2295, %v2311
        %v2392 = vsel %vm986, %v2296, %v2312
        %v2393 = vsel %vm986, %v2329, %v2281
        %v2394 = vsel %vm986, %v2330, %v2282
        %v2395 = vsel %vm986, %v2331, %v2283
        %v2396 = vsel %vm986, %v2332, %v2284
        %v2397 = vsel %vm986, %v2333, %v2285
        %v2398 = vsel %vm986, %v2334, %v2286
        %v2399 = vsel %vm986, %v2335, %v2287
        %v2400 = vsel %vm986, %v2336, %v2288
        %v2401 = vsel %vm986, %v2337, %v2289
        %v2402 = vsel %vm986, %v2338, %v2290
        %v2403 = vsel %vm986, %v2339, %v2291
        %v2404 = vsel %vm986, %v2340, %v2292
        %v2405 = vsel %vm986, %v2341, %v2293
        %v2406 = vsel %vm986, %v2342, %v2294
        %v2407 = vsel %vm986, %v2343, %v2295
        %v2408 = vsel %vm986, %v2344, %v2296
        %v2409 = vmax.f32 %v2217, %v2377
        %v2410 = vmax.f32 %v2218, %v2361
        %v2411 = vmax.f32 %v2219, %v2345
        %v2412 = vmax.f32 %v2220, %v2393
        %v2413 = vmax.f32 %v2221, %v2378
        %v2414 = vmax.f32 %v2222, %v2362
        %v2415 = vmax.f32 %v2223, %v2346
        %v2416 = vmax.f32 %v2224, %v2394
        %v2417 = vmax.f32 %v2225, %v2379
        %v2418 = vmax.f32 %v2226, %v2363
        %v2419 = vmax.f32 %v2227, %v2347
        %v2420 = vmax.f32 %v2228, %v2395
        %v2421 = vmax.f32 %v2229, %v2380
        %v2422 = vmax.f32 %v2230, %v2364
        %v2423 = vmax.f32 %v2231, %v2348
        %v2424 = vmax.f32 %v2232, %v2396
        %v2425 = vmax.f32 %v2233, %v2381
        %v2426 = vmax.f32 %v2234, %v2365
        %v2427 = vmax.f32 %v2235, %v2349
        %v2428 = vmax.f32 %v2236, %v2397
        %v2429 = vmax.f32 %v2237, %v2382
        %v2430 = vmax.f32 %v2238, %v2366
        %v2431 = vmax.f32 %v2239, %v2350
        %v2432 = vmax.f32 %v2240, %v2398
        %v2433 = vmax.f32 %v2241, %v2383
        %v2434 = vmax.f32 %v2242, %v2367
        %v2435 = vmax.f32 %v2243, %v2351
        %v2436 = vmax.f32 %v2244, %v2399
        %v2437 = vmax.f32 %v2245, %v2384
        %v2438 = vmax.f32 %v2246, %v2368
        %v2439 = vmax.f32 %v2247, %v2352
        %v2440 = vmax.f32 %v2248, %v2400
        %v2441 = vmax.f32 %v2249, %v2385
        %v2442 = vmax.f32 %v2250, %v2369
        %v2443 = vmax.f32 %v2251, %v2353
        %v2444 = vmax.f32 %v2252, %v2401
        %v2445 = vmax.f32 %v2253, %v2386
        %v2446 = vmax.f32 %v2254, %v2370
        %v2447 = vmax.f32 %v2255, %v2354
        %v2448 = vmax.f32 %v2256, %v2402
        %v2449 = vmax.f32 %v2257, %v2387
        %v2450 = vmax.f32 %v2258, %v2371
        %v2451 = vmax.f32 %v2259, %v2355
        %v2452 = vmax.f32 %v2260, %v2403
        %v2453 = vmax.f32 %v2261, %v2388
        %v2454 = vmax.f32 %v2262, %v2372
        %v2455 = vmax.f32 %v2263, %v2356
        %v2456 = vmax.f32 %v2264, %v2404
        %v2457 = vmax.f32 %v2265, %v2389
        %v2458 = vmax.f32 %v2266, %v2373
        %v2459 = vmax.f32 %v2267, %v2357
        %v2460 = vmax.f32 %v2268, %v2405
        %v2461 = vmax.f32 %v2269, %v2390
        %v2462 = vmax.f32 %v2270, %v2374
        %v2463 = vmax.f32 %v2271, %v2358
        %v2464 = vmax.f32 %v2272, %v2406
        %v2465 = vmax.f32 %v2273, %v2391
        %v2466 = vmax.f32 %v2274, %v2375
        %v2467 = vmax.f32 %v2275, %v2359
        %v2468 = vmax.f32 %v2276, %v2407
        %v2469 = vmax.f32 %v2277, %v2392
        %v2470 = vmax.f32 %v2278, %v2376
        %v2471 = vmax.f32 %v2279, %v2360
        %v2472 = vmax.f32 %v2280, %v2408
        %v2473 = vrot.slane %v2409, 2
        %v2474 = vrot.slane %v2413, 2
        %v2475 = vrot.slane %v2417, 2
        %v2476 = vrot.slane %v2421, 2
        %v2477 = vrot.slane %v2425, 2
        %v2478 = vrot.slane %v2429, 2
        %v2479 = vrot.slane %v2433, 2
        %v2480 = vrot.slane %v2437, 2
        %v2481 = vrot.slane %v2441, 2
        %v2482 = vrot.slane %v2445, 2
        %v2483 = vrot.slane %v2449, 2
        %v2484 = vrot.slane %v2453, 2
        %v2485 = vrot.slane %v2457, 2
        %v2486 = vrot.slane %v2461, 2
        %v2487 = vrot.slane %v2465, 2
        %v2488 = vrot.slane %v2469, 2
        %v2489 = vrot.slane %v2410, 2
        %v2490 = vrot.slane %v2414, 2
        %v2491 = vrot.slane %v2418, 2
        %v2492 = vrot.slane %v2422, 2
        %v2493 = vrot.slane %v2426, 2
        %v2494 = vrot.slane %v2430, 2
        %v2495 = vrot.slane %v2434, 2
        %v2496 = vrot.slane %v2438, 2
        %v2497 = vrot.slane %v2442, 2
        %v2498 = vrot.slane %v2446, 2
        %v2499 = vrot.slane %v2450, 2
        %v2500 = vrot.slane %v2454, 2
        %v2501 = vrot.slane %v2458, 2
        %v2502 = vrot.slane %v2462, 2
        %v2503 = vrot.slane %v2466, 2
        %v2504 = vrot.slane %v2470, 2
        %v2505 = vrot.slane %v2411, 2
        %v2506 = vrot.slane %v2415, 2
        %v2507 = vrot.slane %v2419, 2
        %v2508 = vrot.slane %v2423, 2
        %v2509 = vrot.slane %v2427, 2
        %v2510 = vrot.slane %v2431, 2
        %v2511 = vrot.slane %v2435, 2
        %v2512 = vrot.slane %v2439, 2
        %v2513 = vrot.slane %v2443, 2
        %v2514 = vrot.slane %v2447, 2
        %v2515 = vrot.slane %v2451, 2
        %v2516 = vrot.slane %v2455, 2
        %v2517 = vrot.slane %v2459, 2
        %v2518 = vrot.slane %v2463, 2
        %v2519 = vrot.slane %v2467, 2
        %v2520 = vrot.slane %v2471, 2
        %v2521 = vrot.slane %v2412, 2
        %v2522 = vrot.slane %v2416, 2
        %v2523 = vrot.slane %v2420, 2
        %v2524 = vrot.slane %v2424, 2
        %v2525 = vrot.slane %v2428, 2
        %v2526 = vrot.slane %v2432, 2
        %v2527 = vrot.slane %v2436, 2
        %v2528 = vrot.slane %v2440, 2
        %v2529 = vrot.slane %v2444, 2
        %v2530 = vrot.slane %v2448, 2
        %v2531 = vrot.slane %v2452, 2
        %v2532 = vrot.slane %v2456, 2
        %v2533 = vrot.slane %v2460, 2
        %v2534 = vrot.slane %v2464, 2
        %v2535 = vrot.slane %v2468, 2
        %v2536 = vrot.slane %v2472, 2
        %v2537 = vsel %vm1179, %v2505, %v2521
        %v2538 = vsel %vm1179, %v2506, %v2522
        %v2539 = vsel %vm1179, %v2507, %v2523
        %v2540 = vsel %vm1179, %v2508, %v2524
        %v2541 = vsel %vm1179, %v2509, %v2525
        %v2542 = vsel %vm1179, %v2510, %v2526
        %v2543 = vsel %vm1179, %v2511, %v2527
        %v2544 = vsel %vm1179, %v2512, %v2528
        %v2545 = vsel %vm1179, %v2513, %v2529
        %v2546 = vsel %vm1179, %v2514, %v2530
        %v2547 = vsel %vm1179, %v2515, %v2531
        %v2548 = vsel %vm1179, %v2516, %v2532
        %v2549 = vsel %vm1179, %v2517, %v2533
        %v2550 = vsel %vm1179, %v2518, %v2534
        %v2551 = vsel %vm1179, %v2519, %v2535
        %v2552 = vsel %vm1179, %v2520, %v2536
        %v2553 = vsel %vm1179, %v2489, %v2505
        %v2554 = vsel %vm1179, %v2490, %v2506
        %v2555 = vsel %vm1179, %v2491, %v2507
        %v2556 = vsel %vm1179, %v2492, %v2508
        %v2557 = vsel %vm1179, %v2493, %v2509
        %v2558 = vsel %vm1179, %v2494, %v2510
        %v2559 = vsel %vm1179, %v2495, %v2511
        %v2560 = vsel %vm1179, %v2496, %v2512
        %v2561 = vsel %vm1179, %v2497, %v2513
        %v2562 = vsel %vm1179, %v2498, %v2514
        %v2563 = vsel %vm1179, %v2499, %v2515
        %v2564 = vsel %vm1179, %v2500, %v2516
        %v2565 = vsel %vm1179, %v2501, %v2517
        %v2566 = vsel %vm1179, %v2502, %v2518
        %v2567 = vsel %vm1179, %v2503, %v2519
        %v2568 = vsel %vm1179, %v2504, %v2520
        %v2569 = vsel %vm1179, %v2473, %v2489
        %v2570 = vsel %vm1179, %v2474, %v2490
        %v2571 = vsel %vm1179, %v2475, %v2491
        %v2572 = vsel %vm1179, %v2476, %v2492
        %v2573 = vsel %vm1179, %v2477, %v2493
        %v2574 = vsel %vm1179, %v2478, %v2494
        %v2575 = vsel %vm1179, %v2479, %v2495
        %v2576 = vsel %vm1179, %v2480, %v2496
        %v2577 = vsel %vm1179, %v2481, %v2497
        %v2578 = vsel %vm1179, %v2482, %v2498
        %v2579 = vsel %vm1179, %v2483, %v2499
        %v2580 = vsel %vm1179, %v2484, %v2500
        %v2581 = vsel %vm1179, %v2485, %v2501
        %v2582 = vsel %vm1179, %v2486, %v2502
        %v2583 = vsel %vm1179, %v2487, %v2503
        %v2584 = vsel %vm1179, %v2488, %v2504
        %v2585 = vmax.f32 %v2409, %v2569
        %v2586 = vmax.f32 %v2410, %v2553
        %v2587 = vmax.f32 %v2411, %v2537
        %v2588 = vmax.f32 %v2413, %v2570
        %v2589 = vmax.f32 %v2414, %v2554
        %v2590 = vmax.f32 %v2415, %v2538
        %v2591 = vmax.f32 %v2417, %v2571
        %v2592 = vmax.f32 %v2418, %v2555
        %v2593 = vmax.f32 %v2419, %v2539
        %v2594 = vmax.f32 %v2421, %v2572
        %v2595 = vmax.f32 %v2422, %v2556
        %v2596 = vmax.f32 %v2423, %v2540
        %v2597 = vmax.f32 %v2425, %v2573
        %v2598 = vmax.f32 %v2426, %v2557
        %v2599 = vmax.f32 %v2427, %v2541
        %v2600 = vmax.f32 %v2429, %v2574
        %v2601 = vmax.f32 %v2430, %v2558
        %v2602 = vmax.f32 %v2431, %v2542
        %v2603 = vmax.f32 %v2433, %v2575
        %v2604 = vmax.f32 %v2434, %v2559
        %v2605 = vmax.f32 %v2435, %v2543
        %v2606 = vmax.f32 %v2437, %v2576
        %v2607 = vmax.f32 %v2438, %v2560
        %v2608 = vmax.f32 %v2439, %v2544
        %v2609 = vmax.f32 %v2441, %v2577
        %v2610 = vmax.f32 %v2442, %v2561
        %v2611 = vmax.f32 %v2443, %v2545
        %v2612 = vmax.f32 %v2445, %v2578
        %v2613 = vmax.f32 %v2446, %v2562
        %v2614 = vmax.f32 %v2447, %v2546
        %v2615 = vmax.f32 %v2449, %v2579
        %v2616 = vmax.f32 %v2450, %v2563
        %v2617 = vmax.f32 %v2451, %v2547
        %v2618 = vmax.f32 %v2453, %v2580
        %v2619 = vmax.f32 %v2454, %v2564
        %v2620 = vmax.f32 %v2455, %v2548
        %v2621 = vmax.f32 %v2457, %v2581
        %v2622 = vmax.f32 %v2458, %v2565
        %v2623 = vmax.f32 %v2459, %v2549
        %v2624 = vmax.f32 %v2461, %v2582
        %v2625 = vmax.f32 %v2462, %v2566
        %v2626 = vmax.f32 %v2463, %v2550
        %v2627 = vmax.f32 %v2465, %v2583
        %v2628 = vmax.f32 %v2466, %v2567
        %v2629 = vmax.f32 %v2467, %v2551
        %v2630 = vmax.f32 %v2469, %v2584
        %v2631 = vmax.f32 %v2470, %v2568
        %v2632 = vmax.f32 %v2471, %v2552
        %v2633 = vrot.slane %v2217, 4
        %v2634 = vrot.slane %v2221, 4
        %v2635 = vrot.slane %v2225, 4
        %v2636 = vrot.slane %v2229, 4
        %v2637 = vrot.slane %v2233, 4
        %v2638 = vrot.slane %v2237, 4
        %v2639 = vrot.slane %v2241, 4
        %v2640 = vrot.slane %v2245, 4
        %v2641 = vrot.slane %v2249, 4
        %v2642 = vrot.slane %v2253, 4
        %v2643 = vrot.slane %v2257, 4
        %v2644 = vrot.slane %v2261, 4
        %v2645 = vrot.slane %v2265, 4
        %v2646 = vrot.slane %v2269, 4
        %v2647 = vrot.slane %v2273, 4
        %v2648 = vrot.slane %v2277, 4
        %v2649 = vrot.slane %v2218, 4
        %v2650 = vrot.slane %v2222, 4
        %v2651 = vrot.slane %v2226, 4
        %v2652 = vrot.slane %v2230, 4
        %v2653 = vrot.slane %v2234, 4
        %v2654 = vrot.slane %v2238, 4
        %v2655 = vrot.slane %v2242, 4
        %v2656 = vrot.slane %v2246, 4
        %v2657 = vrot.slane %v2250, 4
        %v2658 = vrot.slane %v2254, 4
        %v2659 = vrot.slane %v2258, 4
        %v2660 = vrot.slane %v2262, 4
        %v2661 = vrot.slane %v2266, 4
        %v2662 = vrot.slane %v2270, 4
        %v2663 = vrot.slane %v2274, 4
        %v2664 = vrot.slane %v2278, 4
        %v2665 = vrot.slane %v2219, 4
        %v2666 = vrot.slane %v2223, 4
        %v2667 = vrot.slane %v2227, 4
        %v2668 = vrot.slane %v2231, 4
        %v2669 = vrot.slane %v2235, 4
        %v2670 = vrot.slane %v2239, 4
        %v2671 = vrot.slane %v2243, 4
        %v2672 = vrot.slane %v2247, 4
        %v2673 = vrot.slane %v2251, 4
        %v2674 = vrot.slane %v2255, 4
        %v2675 = vrot.slane %v2259, 4
        %v2676 = vrot.slane %v2263, 4
        %v2677 = vrot.slane %v2267, 4
        %v2678 = vrot.slane %v2271, 4
        %v2679 = vrot.slane %v2275, 4
        %v2680 = vrot.slane %v2279, 4
        %v2681 = vrot.slane %v2220, 4
        %v2682 = vrot.slane %v2224, 4
        %v2683 = vrot.slane %v2228, 4
        %v2684 = vrot.slane %v2232, 4
        %v2685 = vrot.slane %v2236, 4
        %v2686 = vrot.slane %v2240, 4
        %v2687 = vrot.slane %v2244, 4
        %v2688 = vrot.slane %v2248, 4
        %v2689 = vrot.slane %v2252, 4
        %v2690 = vrot.slane %v2256, 4
        %v2691 = vrot.slane %v2260, 4
        %v2692 = vrot.slane %v2264, 4
        %v2693 = vrot.slane %v2268, 4
        %v2694 = vrot.slane %v2272, 4
        %v2695 = vrot.slane %v2276, 4
        %v2696 = vrot.slane %v2280, 4
        %v2697 = vsel %vm1340, %v2665, %v2681
        %v2698 = vsel %vm1340, %v2666, %v2682
        %v2699 = vsel %vm1340, %v2667, %v2683
        %v2700 = vsel %vm1340, %v2668, %v2684
        %v2701 = vsel %vm1340, %v2669, %v2685
        %v2702 = vsel %vm1340, %v2670, %v2686
        %v2703 = vsel %vm1340, %v2671, %v2687
        %v2704 = vsel %vm1340, %v2672, %v2688
        %v2705 = vsel %vm1340, %v2673, %v2689
        %v2706 = vsel %vm1340, %v2674, %v2690
        %v2707 = vsel %vm1340, %v2675, %v2691
        %v2708 = vsel %vm1340, %v2676, %v2692
        %v2709 = vsel %vm1340, %v2677, %v2693
        %v2710 = vsel %vm1340, %v2678, %v2694
        %v2711 = vsel %vm1340, %v2679, %v2695
        %v2712 = vsel %vm1340, %v2680, %v2696
        %v2713 = vsel %vm1340, %v2649, %v2665
        %v2714 = vsel %vm1340, %v2650, %v2666
        %v2715 = vsel %vm1340, %v2651, %v2667
        %v2716 = vsel %vm1340, %v2652, %v2668
        %v2717 = vsel %vm1340, %v2653, %v2669
        %v2718 = vsel %vm1340, %v2654, %v2670
        %v2719 = vsel %vm1340, %v2655, %v2671
        %v2720 = vsel %vm1340, %v2656, %v2672
        %v2721 = vsel %vm1340, %v2657, %v2673
        %v2722 = vsel %vm1340, %v2658, %v2674
        %v2723 = vsel %vm1340, %v2659, %v2675
        %v2724 = vsel %vm1340, %v2660, %v2676
        %v2725 = vsel %vm1340, %v2661, %v2677
        %v2726 = vsel %vm1340, %v2662, %v2678
        %v2727 = vsel %vm1340, %v2663, %v2679
        %v2728 = vsel %vm1340, %v2664, %v2680
        %v2729 = vsel %vm1340, %v2633, %v2649
        %v2730 = vsel %vm1340, %v2634, %v2650
        %v2731 = vsel %vm1340, %v2635, %v2651
        %v2732 = vsel %vm1340, %v2636, %v2652
        %v2733 = vsel %vm1340, %v2637, %v2653
        %v2734 = vsel %vm1340, %v2638, %v2654
        %v2735 = vsel %vm1340, %v2639, %v2655
        %v2736 = vsel %vm1340, %v2640, %v2656
        %v2737 = vsel %vm1340, %v2641, %v2657
        %v2738 = vsel %vm1340, %v2642, %v2658
        %v2739 = vsel %vm1340, %v2643, %v2659
        %v2740 = vsel %vm1340, %v2644, %v2660
        %v2741 = vsel %vm1340, %v2645, %v2661
        %v2742 = vsel %vm1340, %v2646, %v2662
        %v2743 = vsel %vm1340, %v2647, %v2663
        %v2744 = vsel %vm1340, %v2648, %v2664
        %v2745 = vmax.f32 %v2585, %v2729
        %v2746 = vmax.f32 %v2586, %v2713
        %v2747 = vmax.f32 %v2587, %v2697
        %v2748 = vmax.f32 %v2588, %v2730
        %v2749 = vmax.f32 %v2589, %v2714
        %v2750 = vmax.f32 %v2590, %v2698
        %v2751 = vmax.f32 %v2591, %v2731
        %v2752 = vmax.f32 %v2592, %v2715
        %v2753 = vmax.f32 %v2593, %v2699
        %v2754 = vmax.f32 %v2594, %v2732
        %v2755 = vmax.f32 %v2595, %v2716
        %v2756 = vmax.f32 %v2596, %v2700
        %v2757 = vmax.f32 %v2597, %v2733
        %v2758 = vmax.f32 %v2598, %v2717
        %v2759 = vmax.f32 %v2599, %v2701
        %v2760 = vmax.f32 %v2600, %v2734
        %v2761 = vmax.f32 %v2601, %v2718
        %v2762 = vmax.f32 %v2602, %v2702
        %v2763 = vmax.f32 %v2603, %v2735
        %v2764 = vmax.f32 %v2604, %v2719
        %v2765 = vmax.f32 %v2605, %v2703
        %v2766 = vmax.f32 %v2606, %v2736
        %v2767 = vmax.f32 %v2607, %v2720
        %v2768 = vmax.f32 %v2608, %v2704
        %v2769 = vmax.f32 %v2609, %v2737
        %v2770 = vmax.f32 %v2610, %v2721
        %v2771 = vmax.f32 %v2611, %v2705
        %v2772 = vmax.f32 %v2612, %v2738
        %v2773 = vmax.f32 %v2613, %v2722
        %v2774 = vmax.f32 %v2614, %v2706
        %v2775 = vmax.f32 %v2615, %v2739
        %v2776 = vmax.f32 %v2616, %v2723
        %v2777 = vmax.f32 %v2617, %v2707
        %v2778 = vmax.f32 %v2618, %v2740
        %v2779 = vmax.f32 %v2619, %v2724
        %v2780 = vmax.f32 %v2620, %v2708
        %v2781 = vmax.f32 %v2621, %v2741
        %v2782 = vmax.f32 %v2622, %v2725
        %v2783 = vmax.f32 %v2623, %v2709
        %v2784 = vmax.f32 %v2624, %v2742
        %v2785 = vmax.f32 %v2625, %v2726
        %v2786 = vmax.f32 %v2626, %v2710
        %v2787 = vmax.f32 %v2627, %v2743
        %v2788 = vmax.f32 %v2628, %v2727
        %v2789 = vmax.f32 %v2629, %v2711
        %v2790 = vmax.f32 %v2630, %v2744
        %v2791 = vmax.f32 %v2631, %v2728
        %v2792 = vmax.f32 %v2632, %v2712
        %v2793 = vrot.slane %v2745, 6
        %v2794 = vrot.slane %v2748, 6
        %v2795 = vrot.slane %v2751, 6
        %v2796 = vrot.slane %v2754, 6
        %v2797 = vrot.slane %v2757, 6
        %v2798 = vrot.slane %v2760, 6
        %v2799 = vrot.slane %v2763, 6
        %v2800 = vrot.slane %v2766, 6
        %v2801 = vrot.slane %v2769, 6
        %v2802 = vrot.slane %v2772, 6
        %v2803 = vrot.slane %v2775, 6
        %v2804 = vrot.slane %v2778, 6
        %v2805 = vrot.slane %v2781, 6
        %v2806 = vrot.slane %v2784, 6
        %v2807 = vrot.slane %v2787, 6
        %v2808 = vrot.slane %v2790, 6
        %v2809 = vrot.slane %v2746, 6
        %v2810 = vrot.slane %v2749, 6
        %v2811 = vrot.slane %v2752, 6
        %v2812 = vrot.slane %v2755, 6
        %v2813 = vrot.slane %v2758, 6
        %v2814 = vrot.slane %v2761, 6
        %v2815 = vrot.slane %v2764, 6
        %v2816 = vrot.slane %v2767, 6
        %v2817 = vrot.slane %v2770, 6
        %v2818 = vrot.slane %v2773, 6
        %v2819 = vrot.slane %v2776, 6
        %v2820 = vrot.slane %v2779, 6
        %v2821 = vrot.slane %v2782, 6
        %v2822 = vrot.slane %v2785, 6
        %v2823 = vrot.slane %v2788, 6
        %v2824 = vrot.slane %v2791, 6
        %v2825 = vrot.slane %v2747, 6
        %v2826 = vrot.slane %v2750, 6
        %v2827 = vrot.slane %v2753, 6
        %v2828 = vrot.slane %v2756, 6
        %v2829 = vrot.slane %v2759, 6
        %v2830 = vrot.slane %v2762, 6
        %v2831 = vrot.slane %v2765, 6
        %v2832 = vrot.slane %v2768, 6
        %v2833 = vrot.slane %v2771, 6
        %v2834 = vrot.slane %v2774, 6
        %v2835 = vrot.slane %v2777, 6
        %v2836 = vrot.slane %v2780, 6
        %v2837 = vrot.slane %v2783, 6
        %v2838 = vrot.slane %v2786, 6
        %v2839 = vrot.slane %v2789, 6
        %v2840 = vrot.slane %v2792, 6
        %v2841 = vsel %vm1485, %v2809, %v2825
        %v2842 = vsel %vm1485, %v2810, %v2826
        %v2843 = vsel %vm1485, %v2811, %v2827
        %v2844 = vsel %vm1485, %v2812, %v2828
        %v2845 = vsel %vm1485, %v2813, %v2829
        %v2846 = vsel %vm1485, %v2814, %v2830
        %v2847 = vsel %vm1485, %v2815, %v2831
        %v2848 = vsel %vm1485, %v2816, %v2832
        %v2849 = vsel %vm1485, %v2817, %v2833
        %v2850 = vsel %vm1485, %v2818, %v2834
        %v2851 = vsel %vm1485, %v2819, %v2835
        %v2852 = vsel %vm1485, %v2820, %v2836
        %v2853 = vsel %vm1485, %v2821, %v2837
        %v2854 = vsel %vm1485, %v2822, %v2838
        %v2855 = vsel %vm1485, %v2823, %v2839
        %v2856 = vsel %vm1485, %v2824, %v2840
        %v2857 = vsel %vm1485, %v2793, %v2809
        %v2858 = vsel %vm1485, %v2794, %v2810
        %v2859 = vsel %vm1485, %v2795, %v2811
        %v2860 = vsel %vm1485, %v2796, %v2812
        %v2861 = vsel %vm1485, %v2797, %v2813
        %v2862 = vsel %vm1485, %v2798, %v2814
        %v2863 = vsel %vm1485, %v2799, %v2815
        %v2864 = vsel %vm1485, %v2800, %v2816
        %v2865 = vsel %vm1485, %v2801, %v2817
        %v2866 = vsel %vm1485, %v2802, %v2818
        %v2867 = vsel %vm1485, %v2803, %v2819
        %v2868 = vsel %vm1485, %v2804, %v2820
        %v2869 = vsel %vm1485, %v2805, %v2821
        %v2870 = vsel %vm1485, %v2806, %v2822
        %v2871 = vsel %vm1485, %v2807, %v2823
        %v2872 = vsel %vm1485, %v2808, %v2824
        %v2873 = vpack.c.bf16 %v2841, %v2857
        %v2874 = vpack.c.bf16 %v2842, %v2858
        %v2875 = vpack.c.bf16 %v2843, %v2859
        %v2876 = vpack.c.bf16 %v2844, %v2860
        %v2877 = vpack.c.bf16 %v2845, %v2861
        %v2878 = vpack.c.bf16 %v2846, %v2862
        %v2879 = vpack.c.bf16 %v2847, %v2863
        %v2880 = vpack.c.bf16 %v2848, %v2864
        %v2881 = vpack.c.bf16 %v2849, %v2865
        %v2882 = vpack.c.bf16 %v2850, %v2866
        %v2883 = vpack.c.bf16 %v2851, %v2867
        %v2884 = vpack.c.bf16 %v2852, %v2868
        %v2885 = vpack.c.bf16 %v2853, %v2869
        %v2886 = vpack.c.bf16 %v2854, %v2870
        %v2887 = vpack.c.bf16 %v2855, %v2871
        %v2888 = vpack.c.bf16 %v2856, %v2872
        %s2889 = scalar_lea.vmem %s3, 128
        %v2890 = vld [vmem:[%s2889] sm:$0xf]
        %v2891 = vld [vmem:[%s2889 + $0x4] sm:$0xf]
        %v2892 = vld [vmem:[%s2889 + $0x8] sm:$0xf]
        %v2893 = vld [vmem:[%s2889 + $0xc] sm:$0xf]
        %v2894 = vld [vmem:[%s2889 + $0x10] sm:$0xf]
        %v2895 = vld [vmem:[%s2889 + $0x14] sm:$0xf]
        %v2896 = vld [vmem:[%s2889 + $0x18] sm:$0xf]
        %v2897 = vld [vmem:[%s2889 + $0x1c] sm:$0xf]
        %v2898 = vld [vmem:[%s2889 + $0x20] sm:$0xf]
        %v2899 = vld [vmem:[%s2889 + $0x24] sm:$0xf]
        %v2900 = vld [vmem:[%s2889 + $0x28] sm:$0xf]
        %v2901 = vld [vmem:[%s2889 + $0x2c] sm:$0xf]
        %v2902 = vld [vmem:[%s2889 + $0x30] sm:$0xf]
        %v2903 = vld [vmem:[%s2889 + $0x34] sm:$0xf]
        %v2904 = vld [vmem:[%s2889 + $0x38] sm:$0xf]
        %v2905 = vld [vmem:[%s2889 + $0x3c] sm:$0xf]
        %v2922 = vunpack.c.l.b16 %v2890
        %v2923 = vunpack.c.l.b16 %v2891
        %v2924 = vunpack.c.l.b16 %v2892
        %v2925 = vunpack.c.l.b16 %v2893
        %v2926 = vunpack.c.l.b16 %v2894
        %v2927 = vunpack.c.l.b16 %v2895
        %v2928 = vunpack.c.l.b16 %v2896
        %v2929 = vunpack.c.l.b16 %v2897
        %v2930 = vunpack.c.l.b16 %v2898
        %v2931 = vunpack.c.l.b16 %v2899
        %v2932 = vunpack.c.l.b16 %v2900
        %v2933 = vunpack.c.l.b16 %v2901
        %v2934 = vunpack.c.l.b16 %v2902
        %v2935 = vunpack.c.l.b16 %v2903
        %v2936 = vunpack.c.l.b16 %v2904
        %v2937 = vunpack.c.l.b16 %v2905
        %v2938 = vpack.c.b16 %v2923, %v2922
        %v2939 = vpack.c.b16 %v2925, %v2924
        %v2940 = vpack.c.b16 %v2927, %v2926
        %v2941 = vpack.c.b16 %v2929, %v2928
        %v2942 = vpack.c.b16 %v2931, %v2930
        %v2943 = vpack.c.b16 %v2933, %v2932
        %v2944 = vpack.c.b16 %v2935, %v2934
        %v2945 = vpack.c.b16 %v2937, %v2936
        %2954 = vmatprep.subr.bf16.mxu0 0
        %2955 = vmatpush1.bf16.msra.mxu0 %v2945
        %2956 = vmatprep.subr.bf16.mxu0 0
        %2957 = vmatpush1.bf16.msra.mxu0 %v2944
        %2958 = vmatprep.subr.bf16.mxu0 0
        %2959 = vmatpush1.bf16.msra.mxu0 %v2943
        %2960 = vmatprep.subr.bf16.mxu0 0
        %2961 = vmatpush1.bf16.msra.mxu0 %v2942
        %2962 = vmatprep.subr.bf16.mxu0 0
        %2963 = vmatpush1.bf16.msra.mxu0 %v2941
        %2964 = vmatprep.subr.bf16.mxu0 0
        %2965 = vmatpush1.bf16.msra.mxu0 %v2940
        %2966 = vmatprep.subr.bf16.mxu0 0
        %2967 = vmatpush1.bf16.msra.mxu0 %v2939
        %2968 = vmatprep.subr.bf16.mxu0 0
        %2969 = vmatpush1.bf16.msra.mxu0 %v2938
        %2970 = vmatprep.subr.bf16.mxu0 0
        %2971 = vmatpush2.bf16.msra.mxu0 0
        %2972 = vmatprep.subr.bf16.mxu0 0
        %2973 = vmatpush2.bf16.msra.mxu0 0
        %2974 = vmatprep.subr.bf16.mxu0 0
        %2975 = vmatpush2.bf16.msra.mxu0 0
        %2976 = vmatprep.subr.bf16.mxu0 0
        %2977 = vmatpush2.bf16.msra.mxu0 0
        %2978 = vmatprep.subr.bf16.mxu0 0
        %2979 = vmatpush2.bf16.msra.mxu0 0
        %2980 = vmatprep.subr.bf16.mxu0 0
        %2981 = vmatpush2.bf16.msra.mxu0 0
        %2982 = vmatprep.subr.bf16.mxu0 0
        %2983 = vmatpush2.bf16.msra.mxu0 0
        %2984 = vmatprep.subr.bf16.mxu0 0
        %2985 = vmatpush2.bf16.msra.mxu0 0
        %2986 = vmatprep.mubr.bf16.mxu0 0
        %2987 = vmatmul.mubr.bf16.gmra.mxu0 %v2873
        %v2988 = vpop.f32.mrf.mxu0
        %v2989 = vadd.f32 0.0, %v2988
        %v2990 = vpop.f32.mrf.mxu0
        %v2991 = vpop.f32.mrf.mxu0
        %v2992 = vadd.f32 0.0, %v2991
        %v2993 = vpop.f32.mrf.mxu0
        %2994 = vmatprep.mubr.bf16.mxu0 0
        %2995 = vmatmul.mubr.bf16.gmra.mxu0 %v2874
        %v2996 = vpop.f32.mrf.mxu0
        %v2997 = vadd.f32 0.0, %v2996
        %v2998 = vpop.f32.mrf.mxu0
        %v2999 = vpop.f32.mrf.mxu0
        %v3000 = vadd.f32 0.0, %v2999
        %v3001 = vpop.f32.mrf.mxu0
        %3002 = vmatprep.mubr.bf16.mxu0 0
        %3003 = vmatmul.mubr.bf16.gmra.mxu0 %v2875
        %v3004 = vpop.f32.mrf.mxu0
        %v3005 = vadd.f32 0.0, %v3004
        %v3006 = vpop.f32.mrf.mxu0
        %v3007 = vpop.f32.mrf.mxu0
        %v3008 = vadd.f32 0.0, %v3007
        %v3009 = vpop.f32.mrf.mxu0
        %3010 = vmatprep.mubr.bf16.mxu0 0
        %3011 = vmatmul.mubr.bf16.gmra.mxu0 %v2876
        %v3012 = vpop.f32.mrf.mxu0
        %v3013 = vadd.f32 0.0, %v3012
        %v3014 = vpop.f32.mrf.mxu0
        %v3015 = vpop.f32.mrf.mxu0
        %v3016 = vadd.f32 0.0, %v3015
        %v3017 = vpop.f32.mrf.mxu0
        %3018 = vmatprep.mubr.bf16.mxu0 0
        %3019 = vmatmul.mubr.bf16.gmra.mxu0 %v2877
        %v3020 = vpop.f32.mrf.mxu0
        %v3021 = vadd.f32 0.0, %v3020
        %v3022 = vpop.f32.mrf.mxu0
        %v3023 = vpop.f32.mrf.mxu0
        %v3024 = vadd.f32 0.0, %v3023
        %v3025 = vpop.f32.mrf.mxu0
        %3026 = vmatprep.mubr.bf16.mxu0 0
        %3027 = vmatmul.mubr.bf16.gmra.mxu0 %v2878
        %v3028 = vpop.f32.mrf.mxu0
        %v3029 = vadd.f32 0.0, %v3028
        %v3030 = vpop.f32.mrf.mxu0
        %v3031 = vpop.f32.mrf.mxu0
        %v3032 = vadd.f32 0.0, %v3031
        %v3033 = vpop.f32.mrf.mxu0
        %3034 = vmatprep.mubr.bf16.mxu0 0
        %3035 = vmatmul.mubr.bf16.gmra.mxu0 %v2879
        %v3036 = vpop.f32.mrf.mxu0
        %v3037 = vadd.f32 0.0, %v3036
        %v3038 = vpop.f32.mrf.mxu0
        %v3039 = vpop.f32.mrf.mxu0
        %v3040 = vadd.f32 0.0, %v3039
        %v3041 = vpop.f32.mrf.mxu0
        %3042 = vmatprep.mubr.bf16.mxu0 0
        %3043 = vmatmul.mubr.bf16.gmra.mxu0 %v2880
        %v3044 = vpop.f32.mrf.mxu0
        %v3045 = vadd.f32 0.0, %v3044
        %v3046 = vpop.f32.mrf.mxu0
        %v3047 = vpop.f32.mrf.mxu0
        %v3048 = vadd.f32 0.0, %v3047
        %v3049 = vpop.f32.mrf.mxu0
        %3050 = vmatprep.mubr.bf16.mxu0 0
        %3051 = vmatmul.mubr.bf16.gmra.mxu0 %v2881
        %v3052 = vpop.f32.mrf.mxu0
        %v3053 = vadd.f32 0.0, %v3052
        %v3054 = vpop.f32.mrf.mxu0
        %v3055 = vpop.f32.mrf.mxu0
        %v3056 = vadd.f32 0.0, %v3055
        %v3057 = vpop.f32.mrf.mxu0
        %3058 = vmatprep.mubr.bf16.mxu0 0
        %3059 = vmatmul.mubr.bf16.gmra.mxu0 %v2882
        %v3060 = vpop.f32.mrf.mxu0
        %v3061 = vadd.f32 0.0, %v3060
        %v3062 = vpop.f32.mrf.mxu0
        %v3063 = vpop.f32.mrf.mxu0
        %v3064 = vadd.f32 0.0, %v3063
        %v3065 = vpop.f32.mrf.mxu0
        %3066 = vmatprep.mubr.bf16.mxu0 0
        %3067 = vmatmul.mubr.bf16.gmra.mxu0 %v2883
        %v3068 = vpop.f32.mrf.mxu0
        %v3069 = vadd.f32 0.0, %v3068
        %v3070 = vpop.f32.mrf.mxu0
        %v3071 = vpop.f32.mrf.mxu0
        %v3072 = vadd.f32 0.0, %v3071
        %v3073 = vpop.f32.mrf.mxu0
        %3074 = vmatprep.mubr.bf16.mxu0 0
        %3075 = vmatmul.mubr.bf16.gmra.mxu0 %v2884
        %v3076 = vpop.f32.mrf.mxu0
        %v3077 = vadd.f32 0.0, %v3076
        %v3078 = vpop.f32.mrf.mxu0
        %v3079 = vpop.f32.mrf.mxu0
        %v3080 = vadd.f32 0.0, %v3079
        %v3081 = vpop.f32.mrf.mxu0
        %3082 = vmatprep.mubr.bf16.mxu0 0
        %3083 = vmatmul.mubr.bf16.gmra.mxu0 %v2885
        %v3084 = vpop.f32.mrf.mxu0
        %v3085 = vadd.f32 0.0, %v3084
        %v3086 = vpop.f32.mrf.mxu0
        %v3087 = vpop.f32.mrf.mxu0
        %v3088 = vadd.f32 0.0, %v3087
        %v3089 = vpop.f32.mrf.mxu0
        %3090 = vmatprep.mubr.bf16.mxu0 0
        %3091 = vmatmul.mubr.bf16.gmra.mxu0 %v2886
        %v3092 = vpop.f32.mrf.mxu0
        %v3093 = vadd.f32 0.0, %v3092
        %v3094 = vpop.f32.mrf.mxu0
        %v3095 = vpop.f32.mrf.mxu0
        %v3096 = vadd.f32 0.0, %v3095
        %v3097 = vpop.f32.mrf.mxu0
        %3098 = vmatprep.mubr.bf16.mxu0 0
        %3099 = vmatmul.mubr.bf16.gmra.mxu0 %v2887
        %v3100 = vpop.f32.mrf.mxu0
        %v3101 = vadd.f32 0.0, %v3100
        %v3102 = vpop.f32.mrf.mxu0
        %v3103 = vpop.f32.mrf.mxu0
        %v3104 = vadd.f32 0.0, %v3103
        %v3105 = vpop.f32.mrf.mxu0
        %3106 = vmatprep.mubr.bf16.mxu0 0
        %3107 = vmatmul.mubr.bf16.gmra.mxu0 %v2888
        %v3108 = vpop.f32.mrf.mxu0
        %v3109 = vadd.f32 0.0, %v3108
        %v3110 = vpop.f32.mrf.mxu0
        %v3111 = vpop.f32.mrf.mxu0
        %v3112 = vadd.f32 0.0, %v3111
        %v3113 = vpop.f32.mrf.mxu0
        %3114 = vdwg.mxu0
        %v3115 = vadd.f32 %v1843, %v2989
        %v3116 = vadd.f32 %v1846, %v2992
        %v3117 = vadd.f32 %v1851, %v2997
        %v3118 = vadd.f32 %v1854, %v3000
        %v3119 = vadd.f32 %v1859, %v3005
        %v3120 = vadd.f32 %v1862, %v3008
        %v3121 = vadd.f32 %v1867, %v3013
        %v3122 = vadd.f32 %v1870, %v3016
        %v3123 = vadd.f32 %v1875, %v3021
        %v3124 = vadd.f32 %v1878, %v3024
        %v3125 = vadd.f32 %v1883, %v3029
        %v3126 = vadd.f32 %v1886, %v3032
        %v3127 = vadd.f32 %v1891, %v3037
        %v3128 = vadd.f32 %v1894, %v3040
        %v3129 = vadd.f32 %v1899, %v3045
        %v3130 = vadd.f32 %v1902, %v3048
        %v3131 = vadd.f32 %v1907, %v3053
        %v3132 = vadd.f32 %v1910, %v3056
        %v3133 = vadd.f32 %v1915, %v3061
        %v3134 = vadd.f32 %v1918, %v3064
        %v3135 = vadd.f32 %v1923, %v3069
        %v3136 = vadd.f32 %v1926, %v3072
        %v3137 = vadd.f32 %v1931, %v3077
        %v3138 = vadd.f32 %v1934, %v3080
        %v3139 = vadd.f32 %v1939, %v3085
        %v3140 = vadd.f32 %v1942, %v3088
        %v3141 = vadd.f32 %v1947, %v3093
        %v3142 = vadd.f32 %v1950, %v3096
        %v3143 = vadd.f32 %v1955, %v3101
        %v3144 = vadd.f32 %v1958, %v3104
        %v3145 = vadd.f32 %v1963, %v3109
        %v3146 = vadd.f32 %v1966, %v3112
        %3147 = vst [vmem:[%s543 + $0x8] sm:$0xff] %v2857
        %3148 = vst [vmem:[%s543 + $0x10] sm:$0xff] %v2841
        %3149 = vst [vmem:[%s543 + $0x28] sm:$0xff] %v2858
        %3150 = vst [vmem:[%s543 + $0x30] sm:$0xff] %v2842
        %3151 = vst [vmem:[%s543 + $0x48] sm:$0xff] %v2859
        %3152 = vst [vmem:[%s543 + $0x50] sm:$0xff] %v2843
        %3153 = vst [vmem:[%s543 + $0x68] sm:$0xff] %v2860
        %3154 = vst [vmem:[%s543 + $0x70] sm:$0xff] %v2844
        %3155 = vst [vmem:[%s543 + $0x88] sm:$0xff] %v2861
        %3156 = vst [vmem:[%s543 + $0x90] sm:$0xff] %v2845
        %3157 = vst [vmem:[%s543 + $0xa8] sm:$0xff] %v2862
        %3158 = vst [vmem:[%s543 + $0xb0] sm:$0xff] %v2846
        %3159 = vst [vmem:[%s543 + $0xc8] sm:$0xff] %v2863
        %3160 = vst [vmem:[%s543 + $0xd0] sm:$0xff] %v2847
        %3161 = vst [vmem:[%s543 + $0xe8] sm:$0xff] %v2864
        %3162 = vst [vmem:[%s543 + $0xf0] sm:$0xff] %v2848
        %3163 = vst [vmem:[%s543 + $0x108] sm:$0xff] %v2865
        %3164 = vst [vmem:[%s543 + $0x110] sm:$0xff] %v2849
        %3165 = vst [vmem:[%s543 + $0x128] sm:$0xff] %v2866
        %3166 = vst [vmem:[%s543 + $0x130] sm:$0xff] %v2850
        %3167 = vst [vmem:[%s543 + $0x148] sm:$0xff] %v2867
        %3168 = vst [vmem:[%s543 + $0x150] sm:$0xff] %v2851
        %3169 = vst [vmem:[%s543 + $0x168] sm:$0xff] %v2868
        %3170 = vst [vmem:[%s543 + $0x170] sm:$0xff] %v2852
        %3171 = vst [vmem:[%s543 + $0x188] sm:$0xff] %v2869
        %3172 = vst [vmem:[%s543 + $0x190] sm:$0xff] %v2853
        %3173 = vst [vmem:[%s543 + $0x1a8] sm:$0xff] %v2870
        %3174 = vst [vmem:[%s543 + $0x1b0] sm:$0xff] %v2854
        %3175 = vst [vmem:[%s543 + $0x1c8] sm:$0xff] %v2871
        %3176 = vst [vmem:[%s543 + $0x1d0] sm:$0xff] %v2855
        %3177 = vst [vmem:[%s543 + $0x1e8] sm:$0xff] %v2872
        %3178 = vst [vmem:[%s543 + $0x1f0] sm:$0xff] %v2856
        %v3179 = vld [vmem:[#allocation2] sm:$0xff]
        %v3180 = vld [vmem:[#allocation2 + $0x8] sm:$0xff]
        %v3181 = vld [vmem:[#allocation2 + $0x10] sm:$0xff]
        %v3182 = vld [vmem:[#allocation2 + $0x18] sm:$0xff]
        %v3183 = vld [vmem:[#allocation2 + $0x20] sm:$0xff]
        %v3184 = vld [vmem:[#allocation2 + $0x28] sm:$0xff]
        %v3185 = vld [vmem:[#allocation2 + $0x30] sm:$0xff]
        %v3186 = vld [vmem:[#allocation2 + $0x38] sm:$0xff]
        %v3187 = vld [vmem:[#allocation2 + $0x40] sm:$0xff]
        %v3188 = vld [vmem:[#allocation2 + $0x48] sm:$0xff]
        %v3189 = vld [vmem:[#allocation2 + $0x50] sm:$0xff]
        %v3190 = vld [vmem:[#allocation2 + $0x58] sm:$0xff]
        %v3191 = vld [vmem:[#allocation2 + $0x60] sm:$0xff]
        %v3192 = vld [vmem:[#allocation2 + $0x68] sm:$0xff]
        %v3193 = vld [vmem:[#allocation2 + $0x70] sm:$0xff]
        %v3194 = vld [vmem:[#allocation2 + $0x78] sm:$0xff]
        %v3195 = vld [vmem:[#allocation2 + $0x80] sm:$0xff]
        %v3196 = vld [vmem:[#allocation2 + $0x88] sm:$0xff]
        %v3197 = vld [vmem:[#allocation2 + $0x90] sm:$0xff]
        %v3198 = vld [vmem:[#allocation2 + $0x98] sm:$0xff]
        %v3199 = vld [vmem:[#allocation2 + $0xa0] sm:$0xff]
        %v3200 = vld [vmem:[#allocation2 + $0xa8] sm:$0xff]
        %v3201 = vld [vmem:[#allocation2 + $0xb0] sm:$0xff]
        %v3202 = vld [vmem:[#allocation2 + $0xb8] sm:$0xff]
        %v3203 = vld [vmem:[#allocation2 + $0xc0] sm:$0xff]
        %v3204 = vld [vmem:[#allocation2 + $0xc8] sm:$0xff]
        %v3205 = vld [vmem:[#allocation2 + $0xd0] sm:$0xff]
        %v3206 = vld [vmem:[#allocation2 + $0xd8] sm:$0xff]
        %v3207 = vld [vmem:[#allocation2 + $0xe0] sm:$0xff]
        %v3208 = vld [vmem:[#allocation2 + $0xe8] sm:$0xff]
        %v3209 = vld [vmem:[#allocation2 + $0xf0] sm:$0xff]
        %v3210 = vld [vmem:[#allocation2 + $0xf8] sm:$0xff]
        %v3211 = vld [vmem:[#allocation2 + $0x100] sm:$0xff]
        %v3212 = vld [vmem:[#allocation2 + $0x108] sm:$0xff]
        %v3213 = vld [vmem:[#allocation2 + $0x110] sm:$0xff]
        %v3214 = vld [vmem:[#allocation2 + $0x118] sm:$0xff]
        %v3215 = vld [vmem:[#allocation2 + $0x120] sm:$0xff]
        %v3216 = vld [vmem:[#allocation2 + $0x128] sm:$0xff]
        %v3217 = vld [vmem:[#allocation2 + $0x130] sm:$0xff]
        %v3218 = vld [vmem:[#allocation2 + $0x138] sm:$0xff]
        %v3219 = vld [vmem:[#allocation2 + $0x140] sm:$0xff]
        %v3220 = vld [vmem:[#allocation2 + $0x148] sm:$0xff]
        %v3221 = vld [vmem:[#allocation2 + $0x150] sm:$0xff]
        %v3222 = vld [vmem:[#allocation2 + $0x158] sm:$0xff]
        %v3223 = vld [vmem:[#allocation2 + $0x160] sm:$0xff]
        %v3224 = vld [vmem:[#allocation2 + $0x168] sm:$0xff]
        %v3225 = vld [vmem:[#allocation2 + $0x170] sm:$0xff]
        %v3226 = vld [vmem:[#allocation2 + $0x178] sm:$0xff]
        %v3227 = vld [vmem:[#allocation2 + $0x180] sm:$0xff]
        %v3228 = vld [vmem:[#allocation2 + $0x188] sm:$0xff]
        %v3229 = vld [vmem:[#allocation2 + $0x190] sm:$0xff]
        %v3230 = vld [vmem:[#allocation2 + $0x198] sm:$0xff]
        %v3231 = vld [vmem:[#allocation2 + $0x1a0] sm:$0xff]
        %v3232 = vld [vmem:[#allocation2 + $0x1a8] sm:$0xff]
        %v3233 = vld [vmem:[#allocation2 + $0x1b0] sm:$0xff]
        %v3234 = vld [vmem:[#allocation2 + $0x1b8] sm:$0xff]
        %v3235 = vld [vmem:[#allocation2 + $0x1c0] sm:$0xff]
        %v3236 = vld [vmem:[#allocation2 + $0x1c8] sm:$0xff]
        %v3237 = vld [vmem:[#allocation2 + $0x1d0] sm:$0xff]
        %v3238 = vld [vmem:[#allocation2 + $0x1d8] sm:$0xff]
        %v3239 = vld [vmem:[#allocation2 + $0x1e0] sm:$0xff]
        %v3240 = vld [vmem:[#allocation2 + $0x1e8] sm:$0xff]
        %v3241 = vld [vmem:[#allocation2 + $0x1f0] sm:$0xff]
        %v3242 = vld [vmem:[#allocation2 + $0x1f8] sm:$0xff]
        %v3243 = vld [vmem:[#allocation2 + $0x200] sm:$0xff]
        %v3244 = vld [vmem:[#allocation2 + $0x208] sm:$0xff]
        %v3245 = vld [vmem:[#allocation2 + $0x210] sm:$0xff]
        %v3246 = vld [vmem:[#allocation2 + $0x218] sm:$0xff]
        %v3247 = vld [vmem:[#allocation2 + $0x220] sm:$0xff]
        %v3248 = vld [vmem:[#allocation2 + $0x228] sm:$0xff]
        %v3249 = vld [vmem:[#allocation2 + $0x230] sm:$0xff]
        %v3250 = vld [vmem:[#allocation2 + $0x238] sm:$0xff]
        %v3251 = vld [vmem:[#allocation2 + $0x240] sm:$0xff]
        %v3252 = vld [vmem:[#allocation2 + $0x248] sm:$0xff]
        %v3253 = vld [vmem:[#allocation2 + $0x250] sm:$0xff]
        %v3254 = vld [vmem:[#allocation2 + $0x258] sm:$0xff]
        %v3255 = vld [vmem:[#allocation2 + $0x260] sm:$0xff]
        %v3256 = vld [vmem:[#allocation2 + $0x268] sm:$0xff]
        %v3257 = vld [vmem:[#allocation2 + $0x270] sm:$0xff]
        %v3258 = vld [vmem:[#allocation2 + $0x278] sm:$0xff]
        %v3259 = vmax.f32 %v3179, %v3183
        %v3260 = vmax.f32 %v3180, %v3184
        %v3261 = vmax.f32 %v3181, %v3185
        %v3262 = vmax.f32 %v3182, %v3186
        %v3263 = vmax.f32 %v3183, %v3187
        %v3264 = vmax.f32 %v3184, %v3188
        %v3265 = vmax.f32 %v3185, %v3189
        %v3266 = vmax.f32 %v3186, %v3190
        %v3267 = vmax.f32 %v3187, %v3191
        %v3268 = vmax.f32 %v3188, %v3192
        %v3269 = vmax.f32 %v3189, %v3193
        %v3270 = vmax.f32 %v3190, %v3194
        %v3271 = vmax.f32 %v3191, %v3195
        %v3272 = vmax.f32 %v3192, %v3196
        %v3273 = vmax.f32 %v3193, %v3197
        %v3274 = vmax.f32 %v3194, %v3198
        %v3275 = vmax.f32 %v3195, %v3199
        %v3276 = vmax.f32 %v3196, %v3200
        %v3277 = vmax.f32 %v3197, %v3201
        %v3278 = vmax.f32 %v3198, %v3202
        %v3279 = vmax.f32 %v3199, %v3203
        %v3280 = vmax.f32 %v3200, %v3204
        %v3281 = vmax.f32 %v3201, %v3205
        %v3282 = vmax.f32 %v3202, %v3206
        %v3283 = vmax.f32 %v3203, %v3207
        %v3284 = vmax.f32 %v3204, %v3208
        %v3285 = vmax.f32 %v3205, %v3209
        %v3286 = vmax.f32 %v3206, %v3210
        %v3287 = vmax.f32 %v3207, %v3211
        %v3288 = vmax.f32 %v3208, %v3212
        %v3289 = vmax.f32 %v3209, %v3213
        %v3290 = vmax.f32 %v3210, %v3214
        %v3291 = vmax.f32 %v3211, %v3215
        %v3292 = vmax.f32 %v3212, %v3216
        %v3293 = vmax.f32 %v3213, %v3217
        %v3294 = vmax.f32 %v3214, %v3218
        %v3295 = vmax.f32 %v3215, %v3219
        %v3296 = vmax.f32 %v3216, %v3220
        %v3297 = vmax.f32 %v3217, %v3221
        %v3298 = vmax.f32 %v3218, %v3222
        %v3299 = vmax.f32 %v3219, %v3223
        %v3300 = vmax.f32 %v3220, %v3224
        %v3301 = vmax.f32 %v3221, %v3225
        %v3302 = vmax.f32 %v3222, %v3226
        %v3303 = vmax.f32 %v3223, %v3227
        %v3304 = vmax.f32 %v3224, %v3228
        %v3305 = vmax.f32 %v3225, %v3229
        %v3306 = vmax.f32 %v3226, %v3230
        %v3307 = vmax.f32 %v3227, %v3231
        %v3308 = vmax.f32 %v3228, %v3232
        %v3309 = vmax.f32 %v3229, %v3233
        %v3310 = vmax.f32 %v3230, %v3234
        %v3311 = vmax.f32 %v3231, %v3235
        %v3312 = vmax.f32 %v3232, %v3236
        %v3313 = vmax.f32 %v3233, %v3237
        %v3314 = vmax.f32 %v3234, %v3238
        %v3315 = vmax.f32 %v3235, %v3239
        %v3316 = vmax.f32 %v3236, %v3240
        %v3317 = vmax.f32 %v3237, %v3241
        %v3318 = vmax.f32 %v3238, %v3242
        %v3319 = vmax.f32 %v3239, %v3243
        %v3320 = vmax.f32 %v3240, %v3244
        %v3321 = vmax.f32 %v3241, %v3245
        %v3322 = vmax.f32 %v3242, %v3246
        %v3323 = vmax.f32 %v3243, %v3247
        %v3324 = vmax.f32 %v3244, %v3248
        %v3325 = vmax.f32 %v3245, %v3249
        %v3326 = vmax.f32 %v3246, %v3250
        %v3327 = vmax.f32 %v3247, %v3251
        %v3328 = vmax.f32 %v3248, %v3252
        %v3329 = vmax.f32 %v3249, %v3253
        %v3330 = vmax.f32 %v3250, %v3254
        %v3331 = vmax.f32 %v3259, %v3267
        %v3332 = vmax.f32 %v3260, %v3268
        %v3333 = vmax.f32 %v3261, %v3269
        %v3334 = vmax.f32 %v3262, %v3270
        %v3335 = vmax.f32 %v3263, %v3271
        %v3336 = vmax.f32 %v3264, %v3272
        %v3337 = vmax.f32 %v3265, %v3273
        %v3338 = vmax.f32 %v3266, %v3274
        %v3339 = vmax.f32 %v3267, %v3275
        %v3340 = vmax.f32 %v3268, %v3276
        %v3341 = vmax.f32 %v3269, %v3277
        %v3342 = vmax.f32 %v3270, %v3278
        %v3343 = vmax.f32 %v3271, %v3279
        %v3344 = vmax.f32 %v3272, %v3280
        %v3345 = vmax.f32 %v3273, %v3281
        %v3346 = vmax.f32 %v3274, %v3282
        %v3347 = vmax.f32 %v3275, %v3283
        %v3348 = vmax.f32 %v3276, %v3284
        %v3349 = vmax.f32 %v3277, %v3285
        %v3350 = vmax.f32 %v3278, %v3286
        %v3351 = vmax.f32 %v3279, %v3287
        %v3352 = vmax.f32 %v3280, %v3288
        %v3353 = vmax.f32 %v3281, %v3289
        %v3354 = vmax.f32 %v3282, %v3290
        %v3355 = vmax.f32 %v3283, %v3291
        %v3356 = vmax.f32 %v3284, %v3292
        %v3357 = vmax.f32 %v3285, %v3293
        %v3358 = vmax.f32 %v3286, %v3294
        %v3359 = vmax.f32 %v3287, %v3295
        %v3360 = vmax.f32 %v3288, %v3296
        %v3361 = vmax.f32 %v3289, %v3297
        %v3362 = vmax.f32 %v3290, %v3298
        %v3363 = vmax.f32 %v3291, %v3299
        %v3364 = vmax.f32 %v3292, %v3300
        %v3365 = vmax.f32 %v3293, %v3301
        %v3366 = vmax.f32 %v3294, %v3302
        %v3367 = vmax.f32 %v3295, %v3303
        %v3368 = vmax.f32 %v3296, %v3304
        %v3369 = vmax.f32 %v3297, %v3305
        %v3370 = vmax.f32 %v3298, %v3306
        %v3371 = vmax.f32 %v3299, %v3307
        %v3372 = vmax.f32 %v3300, %v3308
        %v3373 = vmax.f32 %v3301, %v3309
        %v3374 = vmax.f32 %v3302, %v3310
        %v3375 = vmax.f32 %v3303, %v3311
        %v3376 = vmax.f32 %v3304, %v3312
        %v3377 = vmax.f32 %v3305, %v3313
        %v3378 = vmax.f32 %v3306, %v3314
        %v3379 = vmax.f32 %v3307, %v3315
        %v3380 = vmax.f32 %v3308, %v3316
        %v3381 = vmax.f32 %v3309, %v3317
        %v3382 = vmax.f32 %v3310, %v3318
        %v3383 = vmax.f32 %v3311, %v3319
        %v3384 = vmax.f32 %v3312, %v3320
        %v3385 = vmax.f32 %v3313, %v3321
        %v3386 = vmax.f32 %v3314, %v3322
        %v3387 = vmax.f32 %v3315, %v3323
        %v3388 = vmax.f32 %v3316, %v3324
        %v3389 = vmax.f32 %v3317, %v3325
        %v3390 = vmax.f32 %v3318, %v3326
        %v3391 = vmax.f32 %v3319, %v3327
        %v3392 = vmax.f32 %v3320, %v3328
        %v3393 = vmax.f32 %v3321, %v3329
        %v3394 = vmax.f32 %v3322, %v3330
        %v3395 = vmax.f32 %v3331, %v3195
        %v3396 = vmax.f32 %v3332, %v3196
        %v3397 = vmax.f32 %v3333, %v3197
        %v3398 = vmax.f32 %v3334, %v3198
        %v3399 = vmax.f32 %v3335, %v3199
        %v3400 = vmax.f32 %v3336, %v3200
        %v3401 = vmax.f32 %v3337, %v3201
        %v3402 = vmax.f32 %v3338, %v3202
        %v3403 = vmax.f32 %v3339, %v3203
        %v3404 = vmax.f32 %v3340, %v3204
        %v3405 = vmax.f32 %v3341, %v3205
        %v3406 = vmax.f32 %v3342, %v3206
        %v3407 = vmax.f32 %v3343, %v3207
        %v3408 = vmax.f32 %v3344, %v3208
        %v3409 = vmax.f32 %v3345, %v3209
        %v3410 = vmax.f32 %v3346, %v3210
        %v3411 = vmax.f32 %v3347, %v3211
        %v3412 = vmax.f32 %v3348, %v3212
        %v3413 = vmax.f32 %v3349, %v3213
        %v3414 = vmax.f32 %v3350, %v3214
        %v3415 = vmax.f32 %v3351, %v3215
        %v3416 = vmax.f32 %v3352, %v3216
        %v3417 = vmax.f32 %v3353, %v3217
        %v3418 = vmax.f32 %v3354, %v3218
        %v3419 = vmax.f32 %v3355, %v3219
        %v3420 = vmax.f32 %v3356, %v3220
        %v3421 = vmax.f32 %v3357, %v3221
        %v3422 = vmax.f32 %v3358, %v3222
        %v3423 = vmax.f32 %v3359, %v3223
        %v3424 = vmax.f32 %v3360, %v3224
        %v3425 = vmax.f32 %v3361, %v3225
        %v3426 = vmax.f32 %v3362, %v3226
        %v3427 = vmax.f32 %v3363, %v3227
        %v3428 = vmax.f32 %v3364, %v3228
        %v3429 = vmax.f32 %v3365, %v3229
        %v3430 = vmax.f32 %v3366, %v3230
        %v3431 = vmax.f32 %v3367, %v3231
        %v3432 = vmax.f32 %v3368, %v3232
        %v3433 = vmax.f32 %v3369, %v3233
        %v3434 = vmax.f32 %v3370, %v3234
        %v3435 = vmax.f32 %v3371, %v3235
        %v3436 = vmax.f32 %v3372, %v3236
        %v3437 = vmax.f32 %v3373, %v3237
        %v3438 = vmax.f32 %v3374, %v3238
        %v3439 = vmax.f32 %v3375, %v3239
        %v3440 = vmax.f32 %v3376, %v3240
        %v3441 = vmax.f32 %v3377, %v3241
        %v3442 = vmax.f32 %v3378, %v3242
        %v3443 = vmax.f32 %v3379, %v3243
        %v3444 = vmax.f32 %v3380, %v3244
        %v3445 = vmax.f32 %v3381, %v3245
        %v3446 = vmax.f32 %v3382, %v3246
        %v3447 = vmax.f32 %v3383, %v3247
        %v3448 = vmax.f32 %v3384, %v3248
        %v3449 = vmax.f32 %v3385, %v3249
        %v3450 = vmax.f32 %v3386, %v3250
        %v3451 = vmax.f32 %v3387, %v3251
        %v3452 = vmax.f32 %v3388, %v3252
        %v3453 = vmax.f32 %v3389, %v3253
        %v3454 = vmax.f32 %v3390, %v3254
        %v3455 = vmax.f32 %v3391, %v3255
        %v3456 = vmax.f32 %v3392, %v3256
        %v3457 = vmax.f32 %v3393, %v3257
        %v3458 = vmax.f32 %v3394, %v3258
        %v3459 = vrot.slane %v3395, 1
        %v3460 = vrot.slane %v3399, 1
        %v3461 = vrot.slane %v3403, 1
        %v3462 = vrot.slane %v3407, 1
        %v3463 = vrot.slane %v3411, 1
        %v3464 = vrot.slane %v3415, 1
        %v3465 = vrot.slane %v3419, 1
        %v3466 = vrot.slane %v3423, 1
        %v3467 = vrot.slane %v3427, 1
        %v3468 = vrot.slane %v3431, 1
        %v3469 = vrot.slane %v3435, 1
        %v3470 = vrot.slane %v3439, 1
        %v3471 = vrot.slane %v3443, 1
        %v3472 = vrot.slane %v3447, 1
        %v3473 = vrot.slane %v3451, 1
        %v3474 = vrot.slane %v3455, 1
        %v3475 = vrot.slane %v3396, 1
        %v3476 = vrot.slane %v3400, 1
        %v3477 = vrot.slane %v3404, 1
        %v3478 = vrot.slane %v3408, 1
        %v3479 = vrot.slane %v3412, 1
        %v3480 = vrot.slane %v3416, 1
        %v3481 = vrot.slane %v3420, 1
        %v3482 = vrot.slane %v3424, 1
        %v3483 = vrot.slane %v3428, 1
        %v3484 = vrot.slane %v3432, 1
        %v3485 = vrot.slane %v3436, 1
        %v3486 = vrot.slane %v3440, 1
        %v3487 = vrot.slane %v3444, 1
        %v3488 = vrot.slane %v3448, 1
        %v3489 = vrot.slane %v3452, 1
        %v3490 = vrot.slane %v3456, 1
        %v3491 = vrot.slane %v3397, 1
        %v3492 = vrot.slane %v3401, 1
        %v3493 = vrot.slane %v3405, 1
        %v3494 = vrot.slane %v3409, 1
        %v3495 = vrot.slane %v3413, 1
        %v3496 = vrot.slane %v3417, 1
        %v3497 = vrot.slane %v3421, 1
        %v3498 = vrot.slane %v3425, 1
        %v3499 = vrot.slane %v3429, 1
        %v3500 = vrot.slane %v3433, 1
        %v3501 = vrot.slane %v3437, 1
        %v3502 = vrot.slane %v3441, 1
        %v3503 = vrot.slane %v3445, 1
        %v3504 = vrot.slane %v3449, 1
        %v3505 = vrot.slane %v3453, 1
        %v3506 = vrot.slane %v3457, 1
        %v3507 = vrot.slane %v3398, 1
        %v3508 = vrot.slane %v3402, 1
        %v3509 = vrot.slane %v3406, 1
        %v3510 = vrot.slane %v3410, 1
        %v3511 = vrot.slane %v3414, 1
        %v3512 = vrot.slane %v3418, 1
        %v3513 = vrot.slane %v3422, 1
        %v3514 = vrot.slane %v3426, 1
        %v3515 = vrot.slane %v3430, 1
        %v3516 = vrot.slane %v3434, 1
        %v3517 = vrot.slane %v3438, 1
        %v3518 = vrot.slane %v3442, 1
        %v3519 = vrot.slane %v3446, 1
        %v3520 = vrot.slane %v3450, 1
        %v3521 = vrot.slane %v3454, 1
        %v3522 = vrot.slane %v3458, 1
        %v3523 = vsel %vm986, %v3491, %v3507
        %v3524 = vsel %vm986, %v3492, %v3508
        %v3525 = vsel %vm986, %v3493, %v3509
        %v3526 = vsel %vm986, %v3494, %v3510
        %v3527 = vsel %vm986, %v3495, %v3511
        %v3528 = vsel %vm986, %v3496, %v3512
        %v3529 = vsel %vm986, %v3497, %v3513
        %v3530 = vsel %vm986, %v3498, %v3514
        %v3531 = vsel %vm986, %v3499, %v3515
        %v3532 = vsel %vm986, %v3500, %v3516
        %v3533 = vsel %vm986, %v3501, %v3517
        %v3534 = vsel %vm986, %v3502, %v3518
        %v3535 = vsel %vm986, %v3503, %v3519
        %v3536 = vsel %vm986, %v3504, %v3520
        %v3537 = vsel %vm986, %v3505, %v3521
        %v3538 = vsel %vm986, %v3506, %v3522
        %v3539 = vsel %vm986, %v3475, %v3491
        %v3540 = vsel %vm986, %v3476, %v3492
        %v3541 = vsel %vm986, %v3477, %v3493
        %v3542 = vsel %vm986, %v3478, %v3494
        %v3543 = vsel %vm986, %v3479, %v3495
        %v3544 = vsel %vm986, %v3480, %v3496
        %v3545 = vsel %vm986, %v3481, %v3497
        %v3546 = vsel %vm986, %v3482, %v3498
        %v3547 = vsel %vm986, %v3483, %v3499
        %v3548 = vsel %vm986, %v3484, %v3500
        %v3549 = vsel %vm986, %v3485, %v3501
        %v3550 = vsel %vm986, %v3486, %v3502
        %v3551 = vsel %vm986, %v3487, %v3503
        %v3552 = vsel %vm986, %v3488, %v3504
        %v3553 = vsel %vm986, %v3489, %v3505
        %v3554 = vsel %vm986, %v3490, %v3506
        %v3555 = vsel %vm986, %v3459, %v3475
        %v3556 = vsel %vm986, %v3460, %v3476
        %v3557 = vsel %vm986, %v3461, %v3477
        %v3558 = vsel %vm986, %v3462, %v3478
        %v3559 = vsel %vm986, %v3463, %v3479
        %v3560 = vsel %vm986, %v3464, %v3480
        %v3561 = vsel %vm986, %v3465, %v3481
        %v3562 = vsel %vm986, %v3466, %v3482
        %v3563 = vsel %vm986, %v3467, %v3483
        %v3564 = vsel %vm986, %v3468, %v3484
        %v3565 = vsel %vm986, %v3469, %v3485
        %v3566 = vsel %vm986, %v3470, %v3486
        %v3567 = vsel %vm986, %v3471, %v3487
        %v3568 = vsel %vm986, %v3472, %v3488
        %v3569 = vsel %vm986, %v3473, %v3489
        %v3570 = vsel %vm986, %v3474, %v3490
        %v3571 = vsel %vm986, %v3507, %v3459
        %v3572 = vsel %vm986, %v3508, %v3460
        %v3573 = vsel %vm986, %v3509, %v3461
        %v3574 = vsel %vm986, %v3510, %v3462
        %v3575 = vsel %vm986, %v3511, %v3463
        %v3576 = vsel %vm986, %v3512, %v3464
        %v3577 = vsel %vm986, %v3513, %v3465
        %v3578 = vsel %vm986, %v3514, %v3466
        %v3579 = vsel %vm986, %v3515, %v3467
        %v3580 = vsel %vm986, %v3516, %v3468
        %v3581 = vsel %vm986, %v3517, %v3469
        %v3582 = vsel %vm986, %v3518, %v3470
        %v3583 = vsel %vm986, %v3519, %v3471
        %v3584 = vsel %vm986, %v3520, %v3472
        %v3585 = vsel %vm986, %v3521, %v3473
        %v3586 = vsel %vm986, %v3522, %v3474
        %v3587 = vmax.f32 %v3395, %v3555
        %v3588 = vmax.f32 %v3396, %v3539
        %v3589 = vmax.f32 %v3397, %v3523
        %v3590 = vmax.f32 %v3398, %v3571
        %v3591 = vmax.f32 %v3399, %v3556
        %v3592 = vmax.f32 %v3400, %v3540
        %v3593 = vmax.f32 %v3401, %v3524
        %v3594 = vmax.f32 %v3402, %v3572
        %v3595 = vmax.f32 %v3403, %v3557
        %v3596 = vmax.f32 %v3404, %v3541
        %v3597 = vmax.f32 %v3405, %v3525
        %v3598 = vmax.f32 %v3406, %v3573
        %v3599 = vmax.f32 %v3407, %v3558
        %v3600 = vmax.f32 %v3408, %v3542
        %v3601 = vmax.f32 %v3409, %v3526
        %v3602 = vmax.f32 %v3410, %v3574
        %v3603 = vmax.f32 %v3411, %v3559
        %v3604 = vmax.f32 %v3412, %v3543
        %v3605 = vmax.f32 %v3413, %v3527
        %v3606 = vmax.f32 %v3414, %v3575
        %v3607 = vmax.f32 %v3415, %v3560
        %v3608 = vmax.f32 %v3416, %v3544
        %v3609 = vmax.f32 %v3417, %v3528
        %v3610 = vmax.f32 %v3418, %v3576
        %v3611 = vmax.f32 %v3419, %v3561
        %v3612 = vmax.f32 %v3420, %v3545
        %v3613 = vmax.f32 %v3421, %v3529
        %v3614 = vmax.f32 %v3422, %v3577
        %v3615 = vmax.f32 %v3423, %v3562
        %v3616 = vmax.f32 %v3424, %v3546
        %v3617 = vmax.f32 %v3425, %v3530
        %v3618 = vmax.f32 %v3426, %v3578
        %v3619 = vmax.f32 %v3427, %v3563
        %v3620 = vmax.f32 %v3428, %v3547
        %v3621 = vmax.f32 %v3429, %v3531
        %v3622 = vmax.f32 %v3430, %v3579
        %v3623 = vmax.f32 %v3431, %v3564
        %v3624 = vmax.f32 %v3432, %v3548
        %v3625 = vmax.f32 %v3433, %v3532
        %v3626 = vmax.f32 %v3434, %v3580
        %v3627 = vmax.f32 %v3435, %v3565
        %v3628 = vmax.f32 %v3436, %v3549
        %v3629 = vmax.f32 %v3437, %v3533
        %v3630 = vmax.f32 %v3438, %v3581
        %v3631 = vmax.f32 %v3439, %v3566
        %v3632 = vmax.f32 %v3440, %v3550
        %v3633 = vmax.f32 %v3441, %v3534
        %v3634 = vmax.f32 %v3442, %v3582
        %v3635 = vmax.f32 %v3443, %v3567
        %v3636 = vmax.f32 %v3444, %v3551
        %v3637 = vmax.f32 %v3445, %v3535
        %v3638 = vmax.f32 %v3446, %v3583
        %v3639 = vmax.f32 %v3447, %v3568
        %v3640 = vmax.f32 %v3448, %v3552
        %v3641 = vmax.f32 %v3449, %v3536
        %v3642 = vmax.f32 %v3450, %v3584
        %v3643 = vmax.f32 %v3451, %v3569
        %v3644 = vmax.f32 %v3452, %v3553
        %v3645 = vmax.f32 %v3453, %v3537
        %v3646 = vmax.f32 %v3454, %v3585
        %v3647 = vmax.f32 %v3455, %v3570
        %v3648 = vmax.f32 %v3456, %v3554
        %v3649 = vmax.f32 %v3457, %v3538
        %v3650 = vmax.f32 %v3458, %v3586
        %v3651 = vrot.slane %v3587, 2
        %v3652 = vrot.slane %v3591, 2
        %v3653 = vrot.slane %v3595, 2
        %v3654 = vrot.slane %v3599, 2
        %v3655 = vrot.slane %v3603, 2
        %v3656 = vrot.slane %v3607, 2
        %v3657 = vrot.slane %v3611, 2
        %v3658 = vrot.slane %v3615, 2
        %v3659 = vrot.slane %v3619, 2
        %v3660 = vrot.slane %v3623, 2
        %v3661 = vrot.slane %v3627, 2
        %v3662 = vrot.slane %v3631, 2
        %v3663 = vrot.slane %v3635, 2
        %v3664 = vrot.slane %v3639, 2
        %v3665 = vrot.slane %v3643, 2
        %v3666 = vrot.slane %v3647, 2
        %v3667 = vrot.slane %v3588, 2
        %v3668 = vrot.slane %v3592, 2
        %v3669 = vrot.slane %v3596, 2
        %v3670 = vrot.slane %v3600, 2
        %v3671 = vrot.slane %v3604, 2
        %v3672 = vrot.slane %v3608, 2
        %v3673 = vrot.slane %v3612, 2
        %v3674 = vrot.slane %v3616, 2
        %v3675 = vrot.slane %v3620, 2
        %v3676 = vrot.slane %v3624, 2
        %v3677 = vrot.slane %v3628, 2
        %v3678 = vrot.slane %v3632, 2
        %v3679 = vrot.slane %v3636, 2
        %v3680 = vrot.slane %v3640, 2
        %v3681 = vrot.slane %v3644, 2
        %v3682 = vrot.slane %v3648, 2
        %v3683 = vrot.slane %v3589, 2
        %v3684 = vrot.slane %v3593, 2
        %v3685 = vrot.slane %v3597, 2
        %v3686 = vrot.slane %v3601, 2
        %v3687 = vrot.slane %v3605, 2
        %v3688 = vrot.slane %v3609, 2
        %v3689 = vrot.slane %v3613, 2
        %v3690 = vrot.slane %v3617, 2
        %v3691 = vrot.slane %v3621, 2
        %v3692 = vrot.slane %v3625, 2
        %v3693 = vrot.slane %v3629, 2
        %v3694 = vrot.slane %v3633, 2
        %v3695 = vrot.slane %v3637, 2
        %v3696 = vrot.slane %v3641, 2
        %v3697 = vrot.slane %v3645, 2
        %v3698 = vrot.slane %v3649, 2
        %v3699 = vrot.slane %v3590, 2
        %v3700 = vrot.slane %v3594, 2
        %v3701 = vrot.slane %v3598, 2
        %v3702 = vrot.slane %v3602, 2
        %v3703 = vrot.slane %v3606, 2
        %v3704 = vrot.slane %v3610, 2
        %v3705 = vrot.slane %v3614, 2
        %v3706 = vrot.slane %v3618, 2
        %v3707 = vrot.slane %v3622, 2
        %v3708 = vrot.slane %v3626, 2
        %v3709 = vrot.slane %v3630, 2
        %v3710 = vrot.slane %v3634, 2
        %v3711 = vrot.slane %v3638, 2
        %v3712 = vrot.slane %v3642, 2
        %v3713 = vrot.slane %v3646, 2
        %v3714 = vrot.slane %v3650, 2
        %v3715 = vsel %vm1179, %v3683, %v3699
        %v3716 = vsel %vm1179, %v3684, %v3700
        %v3717 = vsel %vm1179, %v3685, %v3701
        %v3718 = vsel %vm1179, %v3686, %v3702
        %v3719 = vsel %vm1179, %v3687, %v3703
        %v3720 = vsel %vm1179, %v3688, %v3704
        %v3721 = vsel %vm1179, %v3689, %v3705
        %v3722 = vsel %vm1179, %v3690, %v3706
        %v3723 = vsel %vm1179, %v3691, %v3707
        %v3724 = vsel %vm1179, %v3692, %v3708
        %v3725 = vsel %vm1179, %v3693, %v3709
        %v3726 = vsel %vm1179, %v3694, %v3710
        %v3727 = vsel %vm1179, %v3695, %v3711
        %v3728 = vsel %vm1179, %v3696, %v3712
        %v3729 = vsel %vm1179, %v3697, %v3713
        %v3730 = vsel %vm1179, %v3698, %v3714
        %v3731 = vsel %vm1179, %v3667, %v3683
        %v3732 = vsel %vm1179, %v3668, %v3684
        %v3733 = vsel %vm1179, %v3669, %v3685
        %v3734 = vsel %vm1179, %v3670, %v3686
        %v3735 = vsel %vm1179, %v3671, %v3687
        %v3736 = vsel %vm1179, %v3672, %v3688
        %v3737 = vsel %vm1179, %v3673, %v3689
        %v3738 = vsel %vm1179, %v3674, %v3690
        %v3739 = vsel %vm1179, %v3675, %v3691
        %v3740 = vsel %vm1179, %v3676, %v3692
        %v3741 = vsel %vm1179, %v3677, %v3693
        %v3742 = vsel %vm1179, %v3678, %v3694
        %v3743 = vsel %vm1179, %v3679, %v3695
        %v3744 = vsel %vm1179, %v3680, %v3696
        %v3745 = vsel %vm1179, %v3681, %v3697
        %v3746 = vsel %vm1179, %v3682, %v3698
        %v3747 = vsel %vm1179, %v3651, %v3667
        %v3748 = vsel %vm1179, %v3652, %v3668
        %v3749 = vsel %vm1179, %v3653, %v3669
        %v3750 = vsel %vm1179, %v3654, %v3670
        %v3751 = vsel %vm1179, %v3655, %v3671
        %v3752 = vsel %vm1179, %v3656, %v3672
        %v3753 = vsel %vm1179, %v3657, %v3673
        %v3754 = vsel %vm1179, %v3658, %v3674
        %v3755 = vsel %vm1179, %v3659, %v3675
        %v3756 = vsel %vm1179, %v3660, %v3676
        %v3757 = vsel %vm1179, %v3661, %v3677
        %v3758 = vsel %vm1179, %v3662, %v3678
        %v3759 = vsel %vm1179, %v3663, %v3679
        %v3760 = vsel %vm1179, %v3664, %v3680
        %v3761 = vsel %vm1179, %v3665, %v3681
        %v3762 = vsel %vm1179, %v3666, %v3682
        %v3763 = vmax.f32 %v3587, %v3747
        %v3764 = vmax.f32 %v3588, %v3731
        %v3765 = vmax.f32 %v3589, %v3715
        %v3766 = vmax.f32 %v3591, %v3748
        %v3767 = vmax.f32 %v3592, %v3732
        %v3768 = vmax.f32 %v3593, %v3716
        %v3769 = vmax.f32 %v3595, %v3749
        %v3770 = vmax.f32 %v3596, %v3733
        %v3771 = vmax.f32 %v3597, %v3717
        %v3772 = vmax.f32 %v3599, %v3750
        %v3773 = vmax.f32 %v3600, %v3734
        %v3774 = vmax.f32 %v3601, %v3718
        %v3775 = vmax.f32 %v3603, %v3751
        %v3776 = vmax.f32 %v3604, %v3735
        %v3777 = vmax.f32 %v3605, %v3719
        %v3778 = vmax.f32 %v3607, %v3752
        %v3779 = vmax.f32 %v3608, %v3736
        %v3780 = vmax.f32 %v3609, %v3720
        %v3781 = vmax.f32 %v3611, %v3753
        %v3782 = vmax.f32 %v3612, %v3737
        %v3783 = vmax.f32 %v3613, %v3721
        %v3784 = vmax.f32 %v3615, %v3754
        %v3785 = vmax.f32 %v3616, %v3738
        %v3786 = vmax.f32 %v3617, %v3722
        %v3787 = vmax.f32 %v3619, %v3755
        %v3788 = vmax.f32 %v3620, %v3739
        %v3789 = vmax.f32 %v3621, %v3723
        %v3790 = vmax.f32 %v3623, %v3756
        %v3791 = vmax.f32 %v3624, %v3740
        %v3792 = vmax.f32 %v3625, %v3724
        %v3793 = vmax.f32 %v3627, %v3757
        %v3794 = vmax.f32 %v3628, %v3741
        %v3795 = vmax.f32 %v3629, %v3725
        %v3796 = vmax.f32 %v3631, %v3758
        %v3797 = vmax.f32 %v3632, %v3742
        %v3798 = vmax.f32 %v3633, %v3726
        %v3799 = vmax.f32 %v3635, %v3759
        %v3800 = vmax.f32 %v3636, %v3743
        %v3801 = vmax.f32 %v3637, %v3727
        %v3802 = vmax.f32 %v3639, %v3760
        %v3803 = vmax.f32 %v3640, %v3744
        %v3804 = vmax.f32 %v3641, %v3728
        %v3805 = vmax.f32 %v3643, %v3761
        %v3806 = vmax.f32 %v3644, %v3745
        %v3807 = vmax.f32 %v3645, %v3729
        %v3808 = vmax.f32 %v3647, %v3762
        %v3809 = vmax.f32 %v3648, %v3746
        %v3810 = vmax.f32 %v3649, %v3730
        %v3811 = vrot.slane %v3395, 4
        %v3812 = vrot.slane %v3399, 4
        %v3813 = vrot.slane %v3403, 4
        %v3814 = vrot.slane %v3407, 4
        %v3815 = vrot.slane %v3411, 4
        %v3816 = vrot.slane %v3415, 4
        %v3817 = vrot.slane %v3419, 4
        %v3818 = vrot.slane %v3423, 4
        %v3819 = vrot.slane %v3427, 4
        %v3820 = vrot.slane %v3431, 4
        %v3821 = vrot.slane %v3435, 4
        %v3822 = vrot.slane %v3439, 4
        %v3823 = vrot.slane %v3443, 4
        %v3824 = vrot.slane %v3447, 4
        %v3825 = vrot.slane %v3451, 4
        %v3826 = vrot.slane %v3455, 4
        %v3827 = vrot.slane %v3396, 4
        %v3828 = vrot.slane %v3400, 4
        %v3829 = vrot.slane %v3404, 4
        %v3830 = vrot.slane %v3408, 4
        %v3831 = vrot.slane %v3412, 4
        %v3832 = vrot.slane %v3416, 4
        %v3833 = vrot.slane %v3420, 4
        %v3834 = vrot.slane %v3424, 4
        %v3835 = vrot.slane %v3428, 4
        %v3836 = vrot.slane %v3432, 4
        %v3837 = vrot.slane %v3436, 4
        %v3838 = vrot.slane %v3440, 4
        %v3839 = vrot.slane %v3444, 4
        %v3840 = vrot.slane %v3448, 4
        %v3841 = vrot.slane %v3452, 4
        %v3842 = vrot.slane %v3456, 4
        %v3843 = vrot.slane %v3397, 4
        %v3844 = vrot.slane %v3401, 4
        %v3845 = vrot.slane %v3405, 4
        %v3846 = vrot.slane %v3409, 4
        %v3847 = vrot.slane %v3413, 4
        %v3848 = vrot.slane %v3417, 4
        %v3849 = vrot.slane %v3421, 4
        %v3850 = vrot.slane %v3425, 4
        %v3851 = vrot.slane %v3429, 4
        %v3852 = vrot.slane %v3433, 4
        %v3853 = vrot.slane %v3437, 4
        %v3854 = vrot.slane %v3441, 4
        %v3855 = vrot.slane %v3445, 4
        %v3856 = vrot.slane %v3449, 4
        %v3857 = vrot.slane %v3453, 4
        %v3858 = vrot.slane %v3457, 4
        %v3859 = vrot.slane %v3398, 4
        %v3860 = vrot.slane %v3402, 4
        %v3861 = vrot.slane %v3406, 4
        %v3862 = vrot.slane %v3410, 4
        %v3863 = vrot.slane %v3414, 4
        %v3864 = vrot.slane %v3418, 4
        %v3865 = vrot.slane %v3422, 4
        %v3866 = vrot.slane %v3426, 4
        %v3867 = vrot.slane %v3430, 4
        %v3868 = vrot.slane %v3434, 4
        %v3869 = vrot.slane %v3438, 4
        %v3870 = vrot.slane %v3442, 4
        %v3871 = vrot.slane %v3446, 4
        %v3872 = vrot.slane %v3450, 4
        %v3873 = vrot.slane %v3454, 4
        %v3874 = vrot.slane %v3458, 4
        %v3875 = vsel %vm1340, %v3843, %v3859
        %v3876 = vsel %vm1340, %v3844, %v3860
        %v3877 = vsel %vm1340, %v3845, %v3861
        %v3878 = vsel %vm1340, %v3846, %v3862
        %v3879 = vsel %vm1340, %v3847, %v3863
        %v3880 = vsel %vm1340, %v3848, %v3864
        %v3881 = vsel %vm1340, %v3849, %v3865
        %v3882 = vsel %vm1340, %v3850, %v3866
        %v3883 = vsel %vm1340, %v3851, %v3867
        %v3884 = vsel %vm1340, %v3852, %v3868
        %v3885 = vsel %vm1340, %v3853, %v3869
        %v3886 = vsel %vm1340, %v3854, %v3870
        %v3887 = vsel %vm1340, %v3855, %v3871
        %v3888 = vsel %vm1340, %v3856, %v3872
        %v3889 = vsel %vm1340, %v3857, %v3873
        %v3890 = vsel %vm1340, %v3858, %v3874
        %v3891 = vsel %vm1340, %v3827, %v3843
        %v3892 = vsel %vm1340, %v3828, %v3844
        %v3893 = vsel %vm1340, %v3829, %v3845
        %v3894 = vsel %vm1340, %v3830, %v3846
        %v3895 = vsel %vm1340, %v3831, %v3847
        %v3896 = vsel %vm1340, %v3832, %v3848
        %v3897 = vsel %vm1340, %v3833, %v3849
        %v3898 = vsel %vm1340, %v3834, %v3850
        %v3899 = vsel %vm1340, %v3835, %v3851
        %v3900 = vsel %vm1340, %v3836, %v3852
        %v3901 = vsel %vm1340, %v3837, %v3853
        %v3902 = vsel %vm1340, %v3838, %v3854
        %v3903 = vsel %vm1340, %v3839, %v3855
        %v3904 = vsel %vm1340, %v3840, %v3856
        %v3905 = vsel %vm1340, %v3841, %v3857
        %v3906 = vsel %vm1340, %v3842, %v3858
        %v3907 = vsel %vm1340, %v3811, %v3827
        %v3908 = vsel %vm1340, %v3812, %v3828
        %v3909 = vsel %vm1340, %v3813, %v3829
        %v3910 = vsel %vm1340, %v3814, %v3830
        %v3911 = vsel %vm1340, %v3815, %v3831
        %v3912 = vsel %vm1340, %v3816, %v3832
        %v3913 = vsel %vm1340, %v3817, %v3833
        %v3914 = vsel %vm1340, %v3818, %v3834
        %v3915 = vsel %vm1340, %v3819, %v3835
        %v3916 = vsel %vm1340, %v3820, %v3836
        %v3917 = vsel %vm1340, %v3821, %v3837
        %v3918 = vsel %vm1340, %v3822, %v3838
        %v3919 = vsel %vm1340, %v3823, %v3839
        %v3920 = vsel %vm1340, %v3824, %v3840
        %v3921 = vsel %vm1340, %v3825, %v3841
        %v3922 = vsel %vm1340, %v3826, %v3842
        %v3923 = vmax.f32 %v3763, %v3907
        %v3924 = vmax.f32 %v3764, %v3891
        %v3925 = vmax.f32 %v3765, %v3875
        %v3926 = vmax.f32 %v3766, %v3908
        %v3927 = vmax.f32 %v3767, %v3892
        %v3928 = vmax.f32 %v3768, %v3876
        %v3929 = vmax.f32 %v3769, %v3909
        %v3930 = vmax.f32 %v3770, %v3893
        %v3931 = vmax.f32 %v3771, %v3877
        %v3932 = vmax.f32 %v3772, %v3910
        %v3933 = vmax.f32 %v3773, %v3894
        %v3934 = vmax.f32 %v3774, %v3878
        %v3935 = vmax.f32 %v3775, %v3911
        %v3936 = vmax.f32 %v3776, %v3895
        %v3937 = vmax.f32 %v3777, %v3879
        %v3938 = vmax.f32 %v3778, %v3912
        %v3939 = vmax.f32 %v3779, %v3896
        %v3940 = vmax.f32 %v3780, %v3880
        %v3941 = vmax.f32 %v3781, %v3913
        %v3942 = vmax.f32 %v3782, %v3897
        %v3943 = vmax.f32 %v3783, %v3881
        %v3944 = vmax.f32 %v3784, %v3914
        %v3945 = vmax.f32 %v3785, %v3898
        %v3946 = vmax.f32 %v3786, %v3882
        %v3947 = vmax.f32 %v3787, %v3915
        %v3948 = vmax.f32 %v3788, %v3899
        %v3949 = vmax.f32 %v3789, %v3883
        %v3950 = vmax.f32 %v3790, %v3916
        %v3951 = vmax.f32 %v3791, %v3900
        %v3952 = vmax.f32 %v3792, %v3884
        %v3953 = vmax.f32 %v3793, %v3917
        %v3954 = vmax.f32 %v3794, %v3901
        %v3955 = vmax.f32 %v3795, %v3885
        %v3956 = vmax.f32 %v3796, %v3918
        %v3957 = vmax.f32 %v3797, %v3902
        %v3958 = vmax.f32 %v3798, %v3886
        %v3959 = vmax.f32 %v3799, %v3919
        %v3960 = vmax.f32 %v3800, %v3903
        %v3961 = vmax.f32 %v3801, %v3887
        %v3962 = vmax.f32 %v3802, %v3920
        %v3963 = vmax.f32 %v3803, %v3904
        %v3964 = vmax.f32 %v3804, %v3888
        %v3965 = vmax.f32 %v3805, %v3921
        %v3966 = vmax.f32 %v3806, %v3905
        %v3967 = vmax.f32 %v3807, %v3889
        %v3968 = vmax.f32 %v3808, %v3922
        %v3969 = vmax.f32 %v3809, %v3906
        %v3970 = vmax.f32 %v3810, %v3890
        %v3971 = vrot.slane %v3923, 6
        %v3972 = vrot.slane %v3926, 6
        %v3973 = vrot.slane %v3929, 6
        %v3974 = vrot.slane %v3932, 6
        %v3975 = vrot.slane %v3935, 6
        %v3976 = vrot.slane %v3938, 6
        %v3977 = vrot.slane %v3941, 6
        %v3978 = vrot.slane %v3944, 6
        %v3979 = vrot.slane %v3947, 6
        %v3980 = vrot.slane %v3950, 6
        %v3981 = vrot.slane %v3953, 6
        %v3982 = vrot.slane %v3956, 6
        %v3983 = vrot.slane %v3959, 6
        %v3984 = vrot.slane %v3962, 6
        %v3985 = vrot.slane %v3965, 6
        %v3986 = vrot.slane %v3968, 6
        %v3987 = vrot.slane %v3924, 6
        %v3988 = vrot.slane %v3927, 6
        %v3989 = vrot.slane %v3930, 6
        %v3990 = vrot.slane %v3933, 6
        %v3991 = vrot.slane %v3936, 6
        %v3992 = vrot.slane %v3939, 6
        %v3993 = vrot.slane %v3942, 6
        %v3994 = vrot.slane %v3945, 6
        %v3995 = vrot.slane %v3948, 6
        %v3996 = vrot.slane %v3951, 6
        %v3997 = vrot.slane %v3954, 6
        %v3998 = vrot.slane %v3957, 6
        %v3999 = vrot.slane %v3960, 6
        %v4000 = vrot.slane %v3963, 6
        %v4001 = vrot.slane %v3966, 6
        %v4002 = vrot.slane %v3969, 6
        %v4003 = vrot.slane %v3925, 6
        %v4004 = vrot.slane %v3928, 6
        %v4005 = vrot.slane %v3931, 6
        %v4006 = vrot.slane %v3934, 6
        %v4007 = vrot.slane %v3937, 6
        %v4008 = vrot.slane %v3940, 6
        %v4009 = vrot.slane %v3943, 6
        %v4010 = vrot.slane %v3946, 6
        %v4011 = vrot.slane %v3949, 6
        %v4012 = vrot.slane %v3952, 6
        %v4013 = vrot.slane %v3955, 6
        %v4014 = vrot.slane %v3958, 6
        %v4015 = vrot.slane %v3961, 6
        %v4016 = vrot.slane %v3964, 6
        %v4017 = vrot.slane %v3967, 6
        %v4018 = vrot.slane %v3970, 6
        %v4019 = vsel %vm1485, %v3987, %v4003
        %v4020 = vsel %vm1485, %v3988, %v4004
        %v4021 = vsel %vm1485, %v3989, %v4005
        %v4022 = vsel %vm1485, %v3990, %v4006
        %v4023 = vsel %vm1485, %v3991, %v4007
        %v4024 = vsel %vm1485, %v3992, %v4008
        %v4025 = vsel %vm1485, %v3993, %v4009
        %v4026 = vsel %vm1485, %v3994, %v4010
        %v4027 = vsel %vm1485, %v3995, %v4011
        %v4028 = vsel %vm1485, %v3996, %v4012
        %v4029 = vsel %vm1485, %v3997, %v4013
        %v4030 = vsel %vm1485, %v3998, %v4014
        %v4031 = vsel %vm1485, %v3999, %v4015
        %v4032 = vsel %vm1485, %v4000, %v4016
        %v4033 = vsel %vm1485, %v4001, %v4017
        %v4034 = vsel %vm1485, %v4002, %v4018
        %v4035 = vsel %vm1485, %v3971, %v3987
        %v4036 = vsel %vm1485, %v3972, %v3988
        %v4037 = vsel %vm1485, %v3973, %v3989
        %v4038 = vsel %vm1485, %v3974, %v3990
        %v4039 = vsel %vm1485, %v3975, %v3991
        %v4040 = vsel %vm1485, %v3976, %v3992
        %v4041 = vsel %vm1485, %v3977, %v3993
        %v4042 = vsel %vm1485, %v3978, %v3994
        %v4043 = vsel %vm1485, %v3979, %v3995
        %v4044 = vsel %vm1485, %v3980, %v3996
        %v4045 = vsel %vm1485, %v3981, %v3997
        %v4046 = vsel %vm1485, %v3982, %v3998
        %v4047 = vsel %vm1485, %v3983, %v3999
        %v4048 = vsel %vm1485, %v3984, %v4000
        %v4049 = vsel %vm1485, %v3985, %v4001
        %v4050 = vsel %vm1485, %v3986, %v4002
        %v4051 = vpack.c.bf16 %v4019, %v4035
        %v4052 = vpack.c.bf16 %v4020, %v4036
        %v4053 = vpack.c.bf16 %v4021, %v4037
        %v4054 = vpack.c.bf16 %v4022, %v4038
        %v4055 = vpack.c.bf16 %v4023, %v4039
        %v4056 = vpack.c.bf16 %v4024, %v4040
        %v4057 = vpack.c.bf16 %v4025, %v4041
        %v4058 = vpack.c.bf16 %v4026, %v4042
        %v4059 = vpack.c.bf16 %v4027, %v4043
        %v4060 = vpack.c.bf16 %v4028, %v4044
        %v4061 = vpack.c.bf16 %v4029, %v4045
        %v4062 = vpack.c.bf16 %v4030, %v4046
        %v4063 = vpack.c.bf16 %v4031, %v4047
        %v4064 = vpack.c.bf16 %v4032, %v4048
        %v4065 = vpack.c.bf16 %v4033, %v4049
        %v4066 = vpack.c.bf16 %v4034, %v4050
        %s4067 = scalar_lea.vmem %s3, 192
        %v4068 = vld [vmem:[%s4067] sm:$0xf]
        %v4069 = vld [vmem:[%s4067 + $0x4] sm:$0xf]
        %v4070 = vld [vmem:[%s4067 + $0x8] sm:$0xf]
        %v4071 = vld [vmem:[%s4067 + $0xc] sm:$0xf]
        %v4072 = vld [vmem:[%s4067 + $0x10] sm:$0xf]
        %v4073 = vld [vmem:[%s4067 + $0x14] sm:$0xf]
        %v4074 = vld [vmem:[%s4067 + $0x18] sm:$0xf]
        %v4075 = vld [vmem:[%s4067 + $0x1c] sm:$0xf]
        %v4076 = vld [vmem:[%s4067 + $0x20] sm:$0xf]
        %v4077 = vld [vmem:[%s4067 + $0x24] sm:$0xf]
        %v4078 = vld [vmem:[%s4067 + $0x28] sm:$0xf]
        %v4079 = vld [vmem:[%s4067 + $0x2c] sm:$0xf]
        %v4080 = vld [vmem:[%s4067 + $0x30] sm:$0xf]
        %v4081 = vld [vmem:[%s4067 + $0x34] sm:$0xf]
        %v4082 = vld [vmem:[%s4067 + $0x38] sm:$0xf]
        %v4083 = vld [vmem:[%s4067 + $0x3c] sm:$0xf]
        %v4100 = vunpack.c.l.b16 %v4068
        %v4101 = vunpack.c.l.b16 %v4069
        %v4102 = vunpack.c.l.b16 %v4070
        %v4103 = vunpack.c.l.b16 %v4071
        %v4104 = vunpack.c.l.b16 %v4072
        %v4105 = vunpack.c.l.b16 %v4073
        %v4106 = vunpack.c.l.b16 %v4074
        %v4107 = vunpack.c.l.b16 %v4075
        %v4108 = vunpack.c.l.b16 %v4076
        %v4109 = vunpack.c.l.b16 %v4077
        %v4110 = vunpack.c.l.b16 %v4078
        %v4111 = vunpack.c.l.b16 %v4079
        %v4112 = vunpack.c.l.b16 %v4080
        %v4113 = vunpack.c.l.b16 %v4081
        %v4114 = vunpack.c.l.b16 %v4082
        %v4115 = vunpack.c.l.b16 %v4083
        %v4116 = vpack.c.b16 %v4101, %v4100
        %v4117 = vpack.c.b16 %v4103, %v4102
        %v4118 = vpack.c.b16 %v4105, %v4104
        %v4119 = vpack.c.b16 %v4107, %v4106
        %v4120 = vpack.c.b16 %v4109, %v4108
        %v4121 = vpack.c.b16 %v4111, %v4110
        %v4122 = vpack.c.b16 %v4113, %v4112
        %v4123 = vpack.c.b16 %v4115, %v4114
        %4132 = vmatprep.subr.bf16.mxu0 0
        %4133 = vmatpush1.bf16.msra.mxu0 %v4123
        %4134 = vmatprep.subr.bf16.mxu0 0
        %4135 = vmatpush1.bf16.msra.mxu0 %v4122
        %4136 = vmatprep.subr.bf16.mxu0 0
        %4137 = vmatpush1.bf16.msra.mxu0 %v4121
        %4138 = vmatprep.subr.bf16.mxu0 0
        %4139 = vmatpush1.bf16.msra.mxu0 %v4120
        %4140 = vmatprep.subr.bf16.mxu0 0
        %4141 = vmatpush1.bf16.msra.mxu0 %v4119
        %4142 = vmatprep.subr.bf16.mxu0 0
        %4143 = vmatpush1.bf16.msra.mxu0 %v4118
        %4144 = vmatprep.subr.bf16.mxu0 0
        %4145 = vmatpush1.bf16.msra.mxu0 %v4117
        %4146 = vmatprep.subr.bf16.mxu0 0
        %4147 = vmatpush1.bf16.msra.mxu0 %v4116
        %4148 = vmatprep.subr.bf16.mxu0 0
        %4149 = vmatpush2.bf16.msra.mxu0 0
        %4150 = vmatprep.subr.bf16.mxu0 0
        %4151 = vmatpush2.bf16.msra.mxu0 0
        %4152 = vmatprep.subr.bf16.mxu0 0
        %4153 = vmatpush2.bf16.msra.mxu0 0
        %4154 = vmatprep.subr.bf16.mxu0 0
        %4155 = vmatpush2.bf16.msra.mxu0 0
        %4156 = vmatprep.subr.bf16.mxu0 0
        %4157 = vmatpush2.bf16.msra.mxu0 0
        %4158 = vmatprep.subr.bf16.mxu0 0
        %4159 = vmatpush2.bf16.msra.mxu0 0
        %4160 = vmatprep.subr.bf16.mxu0 0
        %4161 = vmatpush2.bf16.msra.mxu0 0
        %4162 = vmatprep.subr.bf16.mxu0 0
        %4163 = vmatpush2.bf16.msra.mxu0 0
        %4164 = vmatprep.mubr.bf16.mxu0 0
        %4165 = vmatmul.mubr.bf16.gmra.mxu0 %v4051
        %v4166 = vpop.f32.mrf.mxu0
        %v4167 = vadd.f32 0.0, %v4166
        %v4168 = vpop.f32.mrf.mxu0
        %v4169 = vpop.f32.mrf.mxu0
        %v4170 = vadd.f32 0.0, %v4169
        %v4171 = vpop.f32.mrf.mxu0
        %4172 = vmatprep.mubr.bf16.mxu0 0
        %4173 = vmatmul.mubr.bf16.gmra.mxu0 %v4052
        %v4174 = vpop.f32.mrf.mxu0
        %v4175 = vadd.f32 0.0, %v4174
        %v4176 = vpop.f32.mrf.mxu0
        %v4177 = vpop.f32.mrf.mxu0
        %v4178 = vadd.f32 0.0, %v4177
        %v4179 = vpop.f32.mrf.mxu0
        %4180 = vmatprep.mubr.bf16.mxu0 0
        %4181 = vmatmul.mubr.bf16.gmra.mxu0 %v4053
        %v4182 = vpop.f32.mrf.mxu0
        %v4183 = vadd.f32 0.0, %v4182
        %v4184 = vpop.f32.mrf.mxu0
        %v4185 = vpop.f32.mrf.mxu0
        %v4186 = vadd.f32 0.0, %v4185
        %v4187 = vpop.f32.mrf.mxu0
        %4188 = vmatprep.mubr.bf16.mxu0 0
        %4189 = vmatmul.mubr.bf16.gmra.mxu0 %v4054
        %v4190 = vpop.f32.mrf.mxu0
        %v4191 = vadd.f32 0.0, %v4190
        %v4192 = vpop.f32.mrf.mxu0
        %v4193 = vpop.f32.mrf.mxu0
        %v4194 = vadd.f32 0.0, %v4193
        %v4195 = vpop.f32.mrf.mxu0
        %4196 = vmatprep.mubr.bf16.mxu0 0
        %4197 = vmatmul.mubr.bf16.gmra.mxu0 %v4055
        %v4198 = vpop.f32.mrf.mxu0
        %v4199 = vadd.f32 0.0, %v4198
        %v4200 = vpop.f32.mrf.mxu0
        %v4201 = vpop.f32.mrf.mxu0
        %v4202 = vadd.f32 0.0, %v4201
        %v4203 = vpop.f32.mrf.mxu0
        %4204 = vmatprep.mubr.bf16.mxu0 0
        %4205 = vmatmul.mubr.bf16.gmra.mxu0 %v4056
        %v4206 = vpop.f32.mrf.mxu0
        %v4207 = vadd.f32 0.0, %v4206
        %v4208 = vpop.f32.mrf.mxu0
        %v4209 = vpop.f32.mrf.mxu0
        %v4210 = vadd.f32 0.0, %v4209
        %v4211 = vpop.f32.mrf.mxu0
        %4212 = vmatprep.mubr.bf16.mxu0 0
        %4213 = vmatmul.mubr.bf16.gmra.mxu0 %v4057
        %v4214 = vpop.f32.mrf.mxu0
        %v4215 = vadd.f32 0.0, %v4214
        %v4216 = vpop.f32.mrf.mxu0
        %v4217 = vpop.f32.mrf.mxu0
        %v4218 = vadd.f32 0.0, %v4217
        %v4219 = vpop.f32.mrf.mxu0
        %4220 = vmatprep.mubr.bf16.mxu0 0
        %4221 = vmatmul.mubr.bf16.gmra.mxu0 %v4058
        %v4222 = vpop.f32.mrf.mxu0
        %v4223 = vadd.f32 0.0, %v4222
        %v4224 = vpop.f32.mrf.mxu0
        %v4225 = vpop.f32.mrf.mxu0
        %v4226 = vadd.f32 0.0, %v4225
        %v4227 = vpop.f32.mrf.mxu0
        %4228 = vmatprep.mubr.bf16.mxu0 0
        %4229 = vmatmul.mubr.bf16.gmra.mxu0 %v4059
        %v4230 = vpop.f32.mrf.mxu0
        %v4231 = vadd.f32 0.0, %v4230
        %v4232 = vpop.f32.mrf.mxu0
        %v4233 = vpop.f32.mrf.mxu0
        %v4234 = vadd.f32 0.0, %v4233
        %v4235 = vpop.f32.mrf.mxu0
        %4236 = vmatprep.mubr.bf16.mxu0 0
        %4237 = vmatmul.mubr.bf16.gmra.mxu0 %v4060
        %v4238 = vpop.f32.mrf.mxu0
        %v4239 = vadd.f32 0.0, %v4238
        %v4240 = vpop.f32.mrf.mxu0
        %v4241 = vpop.f32.mrf.mxu0
        %v4242 = vadd.f32 0.0, %v4241
        %v4243 = vpop.f32.mrf.mxu0
        %4244 = vmatprep.mubr.bf16.mxu0 0
        %4245 = vmatmul.mubr.bf16.gmra.mxu0 %v4061
        %v4246 = vpop.f32.mrf.mxu0
        %v4247 = vadd.f32 0.0, %v4246
        %v4248 = vpop.f32.mrf.mxu0
        %v4249 = vpop.f32.mrf.mxu0
        %v4250 = vadd.f32 0.0, %v4249
        %v4251 = vpop.f32.mrf.mxu0
        %4252 = vmatprep.mubr.bf16.mxu0 0
        %4253 = vmatmul.mubr.bf16.gmra.mxu0 %v4062
        %v4254 = vpop.f32.mrf.mxu0
        %v4255 = vadd.f32 0.0, %v4254
        %v4256 = vpop.f32.mrf.mxu0
        %v4257 = vpop.f32.mrf.mxu0
        %v4258 = vadd.f32 0.0, %v4257
        %v4259 = vpop.f32.mrf.mxu0
        %4260 = vmatprep.mubr.bf16.mxu0 0
        %4261 = vmatmul.mubr.bf16.gmra.mxu0 %v4063
        %v4262 = vpop.f32.mrf.mxu0
        %v4263 = vadd.f32 0.0, %v4262
        %v4264 = vpop.f32.mrf.mxu0
        %v4265 = vpop.f32.mrf.mxu0
        %v4266 = vadd.f32 0.0, %v4265
        %v4267 = vpop.f32.mrf.mxu0
        %4268 = vmatprep.mubr.bf16.mxu0 0
        %4269 = vmatmul.mubr.bf16.gmra.mxu0 %v4064
        %v4270 = vpop.f32.mrf.mxu0
        %v4271 = vadd.f32 0.0, %v4270
        %v4272 = vpop.f32.mrf.mxu0
        %v4273 = vpop.f32.mrf.mxu0
        %v4274 = vadd.f32 0.0, %v4273
        %v4275 = vpop.f32.mrf.mxu0
        %4276 = vmatprep.mubr.bf16.mxu0 0
        %4277 = vmatmul.mubr.bf16.gmra.mxu0 %v4065
        %v4278 = vpop.f32.mrf.mxu0
        %v4279 = vadd.f32 0.0, %v4278
        %v4280 = vpop.f32.mrf.mxu0
        %v4281 = vpop.f32.mrf.mxu0
        %v4282 = vadd.f32 0.0, %v4281
        %v4283 = vpop.f32.mrf.mxu0
        %4284 = vmatprep.mubr.bf16.mxu0 0
        %4285 = vmatmul.mubr.bf16.gmra.mxu0 %v4066
        %v4286 = vpop.f32.mrf.mxu0
        %v4287 = vadd.f32 0.0, %v4286
        %v4288 = vpop.f32.mrf.mxu0
        %v4289 = vpop.f32.mrf.mxu0
        %v4290 = vadd.f32 0.0, %v4289
        %v4291 = vpop.f32.mrf.mxu0
        %4292 = vdwg.mxu0
        %v4293 = vadd.f32 %v3115, %v4167
        %v4294 = vadd.f32 %v3116, %v4170
        %v4295 = vadd.f32 %v3117, %v4175
        %v4296 = vadd.f32 %v3118, %v4178
        %v4297 = vadd.f32 %v3119, %v4183
        %v4298 = vadd.f32 %v3120, %v4186
        %v4299 = vadd.f32 %v3121, %v4191
        %v4300 = vadd.f32 %v3122, %v4194
        %v4301 = vadd.f32 %v3123, %v4199
        %v4302 = vadd.f32 %v3124, %v4202
        %v4303 = vadd.f32 %v3125, %v4207
        %v4304 = vadd.f32 %v3126, %v4210
        %v4305 = vadd.f32 %v3127, %v4215
        %v4306 = vadd.f32 %v3128, %v4218
        %v4307 = vadd.f32 %v3129, %v4223
        %v4308 = vadd.f32 %v3130, %v4226
        %v4309 = vadd.f32 %v3131, %v4231
        %v4310 = vadd.f32 %v3132, %v4234
        %v4311 = vadd.f32 %v3133, %v4239
        %v4312 = vadd.f32 %v3134, %v4242
        %v4313 = vadd.f32 %v3135, %v4247
        %v4314 = vadd.f32 %v3136, %v4250
        %v4315 = vadd.f32 %v3137, %v4255
        %v4316 = vadd.f32 %v3138, %v4258
        %v4317 = vadd.f32 %v3139, %v4263
        %v4318 = vadd.f32 %v3140, %v4266
        %v4319 = vadd.f32 %v3141, %v4271
        %v4320 = vadd.f32 %v3142, %v4274
        %v4321 = vadd.f32 %v3143, %v4279
        %v4322 = vadd.f32 %v3144, %v4282
        %v4323 = vadd.f32 %v3145, %v4287
        %v4324 = vadd.f32 %v3146, %v4290
        %v4325 = vld [vmem:[%s4] sm:$0x1]
        %v4327 = vlaneseq
        %v4328 = vshrl.u32 %v4327, 7
        %v4329 = vsub.s32 0, %v4328
        %v4330 = vrot.slane %v4325, %v4329
        %v4332 = vadd.f32 %v4293, %v4330
        %v4333 = vadd.f32 %v4294, %v4330
        %v4334 = vadd.f32 %v4295, %v4330
        %v4335 = vadd.f32 %v4296, %v4330
        %v4336 = vadd.f32 %v4297, %v4330
        %v4337 = vadd.f32 %v4298, %v4330
        %v4338 = vadd.f32 %v4299, %v4330
        %v4339 = vadd.f32 %v4300, %v4330
        %v4340 = vadd.f32 %v4301, %v4330
        %v4341 = vadd.f32 %v4302, %v4330
        %v4342 = vadd.f32 %v4303, %v4330
        %v4343 = vadd.f32 %v4304, %v4330
        %v4344 = vadd.f32 %v4305, %v4330
        %v4345 = vadd.f32 %v4306, %v4330
        %v4346 = vadd.f32 %v4307, %v4330
        %v4347 = vadd.f32 %v4308, %v4330
        %v4348 = vadd.f32 %v4309, %v4330
        %v4349 = vadd.f32 %v4310, %v4330
        %v4350 = vadd.f32 %v4311, %v4330
        %v4351 = vadd.f32 %v4312, %v4330
        %v4352 = vadd.f32 %v4313, %v4330
        %v4353 = vadd.f32 %v4314, %v4330
        %v4354 = vadd.f32 %v4315, %v4330
        %v4355 = vadd.f32 %v4316, %v4330
        %v4356 = vadd.f32 %v4317, %v4330
        %v4357 = vadd.f32 %v4318, %v4330
        %v4358 = vadd.f32 %v4319, %v4330
        %v4359 = vadd.f32 %v4320, %v4330
        %v4360 = vadd.f32 %v4321, %v4330
        %v4361 = vadd.f32 %v4322, %v4330
        %v4362 = vadd.f32 %v4323, %v4330
        %v4363 = vadd.f32 %v4324, %v4330
        %v4364 = vmax.f32 %v4332, 0.0
        %v4365 = vmax.f32 %v4333, 0.0
        %v4366 = vmax.f32 %v4334, 0.0
        %v4367 = vmax.f32 %v4335, 0.0
        %v4368 = vmax.f32 %v4336, 0.0
        %v4369 = vmax.f32 %v4337, 0.0
        %v4370 = vmax.f32 %v4338, 0.0
        %v4371 = vmax.f32 %v4339, 0.0
        %v4372 = vmax.f32 %v4340, 0.0
        %v4373 = vmax.f32 %v4341, 0.0
        %v4374 = vmax.f32 %v4342, 0.0
        %v4375 = vmax.f32 %v4343, 0.0
        %v4376 = vmax.f32 %v4344, 0.0
        %v4377 = vmax.f32 %v4345, 0.0
        %v4378 = vmax.f32 %v4346, 0.0
        %v4379 = vmax.f32 %v4347, 0.0
        %v4380 = vmax.f32 %v4348, 0.0
        %v4381 = vmax.f32 %v4349, 0.0
        %v4382 = vmax.f32 %v4350, 0.0
        %v4383 = vmax.f32 %v4351, 0.0
        %v4384 = vmax.f32 %v4352, 0.0
        %v4385 = vmax.f32 %v4353, 0.0
        %v4386 = vmax.f32 %v4354, 0.0
        %v4387 = vmax.f32 %v4355, 0.0
        %v4388 = vmax.f32 %v4356, 0.0
        %v4389 = vmax.f32 %v4357, 0.0
        %v4390 = vmax.f32 %v4358, 0.0
        %v4391 = vmax.f32 %v4359, 0.0
        %v4392 = vmax.f32 %v4360, 0.0
        %v4393 = vmax.f32 %v4361, 0.0
        %v4394 = vmax.f32 %v4362, 0.0
        %v4395 = vmax.f32 %v4363, 0.0
        %4396 = vst [vmem:[%s217] sm:$0xff] %v4364
        %4397 = vst [vmem:[%s217 + $0x8] sm:$0xff] %v4365
        %4398 = vst [vmem:[%s217 + $0x10] sm:$0xff] %v4366
        %4399 = vst [vmem:[%s217 + $0x18] sm:$0xff] %v4367
        %4400 = vst [vmem:[%s217 + $0x20] sm:$0xff] %v4368
        %4401 = vst [vmem:[%s217 + $0x28] sm:$0xff] %v4369
        %4402 = vst [vmem:[%s217 + $0x30] sm:$0xff] %v4370
        %4403 = vst [vmem:[%s217 + $0x38] sm:$0xff] %v4371
        %4404 = vst [vmem:[%s217 + $0x40] sm:$0xff] %v4372
        %4405 = vst [vmem:[%s217 + $0x48] sm:$0xff] %v4373
        %4406 = vst [vmem:[%s217 + $0x50] sm:$0xff] %v4374
        %4407 = vst [vmem:[%s217 + $0x58] sm:$0xff] %v4375
        %4408 = vst [vmem:[%s217 + $0x60] sm:$0xff] %v4376
        %4409 = vst [vmem:[%s217 + $0x68] sm:$0xff] %v4377
        %4410 = vst [vmem:[%s217 + $0x70] sm:$0xff] %v4378
        %4411 = vst [vmem:[%s217 + $0x78] sm:$0xff] %v4379
        %4412 = vst [vmem:[%s217 + $0x80] sm:$0xff] %v4380
        %4413 = vst [vmem:[%s217 + $0x88] sm:$0xff] %v4381
        %4414 = vst [vmem:[%s217 + $0x90] sm:$0xff] %v4382
        %4415 = vst [vmem:[%s217 + $0x98] sm:$0xff] %v4383
        %4416 = vst [vmem:[%s217 + $0xa0] sm:$0xff] %v4384
        %4417 = vst [vmem:[%s217 + $0xa8] sm:$0xff] %v4385
        %4418 = vst [vmem:[%s217 + $0xb0] sm:$0xff] %v4386
        %4419 = vst [vmem:[%s217 + $0xb8] sm:$0xff] %v4387
        %4420 = vst [vmem:[%s217 + $0xc0] sm:$0xff] %v4388
        %4421 = vst [vmem:[%s217 + $0xc8] sm:$0xff] %v4389
        %4422 = vst [vmem:[%s217 + $0xd0] sm:$0xff] %v4390
        %4423 = vst [vmem:[%s217 + $0xd8] sm:$0xff] %v4391
        %4424 = vst [vmem:[%s217 + $0xe0] sm:$0xff] %v4392
        %4425 = vst [vmem:[%s217 + $0xe8] sm:$0xff] %v4393
        %4426 = vst [vmem:[%s217 + $0xf0] sm:$0xff] %v4394
        %4427 = vst [vmem:[%s217 + $0xf8] sm:$0xff] %v4395
        %s4428 = sand.u32 %s137, 1
        %s4429 = scalar_lea.sflag [#allocation4], %s4428
        %s4430 = sand.u32 %s137, 1
        %s4431 = smul.addr %s4430, 256
        %s4432 = scalar_lea.vmem [#allocation3], %s4431
        // Predicated region
        $region41: #{tpu_custom_call.1} parent=39 // pred_check
          %p4433 = pneg %p147
        $region42: #{tpu_custom_call.1} parent=39 // pred_check_branch
          %4435 = sbr.rel (%p4433) target = $region44
        $region43: #{tpu_custom_call.1} parent=39 // pred_region
          %s4437 = ssub.s32 4096, 4096
          %4438 = vsyncadd %s4429, %s4437
          %s4439 = smul.addr %s19, 32
          %s4440 = smul.addr %s4439, 128
          %s4441 = scalar_lea.hbm %s5, %s4440
          %s4442 = sshll.u32 %s4432, 4
          %s4443 = int_to_ptr.vmem [resolvable:$true] %s4442
          %4448 = dma.vmem_to_hbm [thread:$0]  %s4443, 4096, %s4441, %s4429, 128, 128, 8
        $region44: #{tpu_custom_call.1} parent=39 // pred_fallthru
          _
      $region40: #{tpu_custom_call.1} parent=5 // pred_fallthru
        _
      %p4449 = scmp.le.s32.totalorder 2, %s14
      // Predicated region
      $region45: #{tpu_custom_call.1} parent=5 // pred_check
        %p4450 = pneg %p4449
      $region46: #{tpu_custom_call.1} parent=5 // pred_check_branch
        %4452 = sbr.rel (%p4450) target = $region48
      $region47: #{tpu_custom_call.1} parent=5 // pred_region
        %s4453 = ssub.s32 %s14, 2
        // Predicated region
        $region49: #{tpu_custom_call.1} parent=47 // pred_check
          %p4454 = pneg %p153
        $region50: #{tpu_custom_call.1} parent=47 // pred_check_branch
          %4456 = sbr.rel (%p4454) target = $region52
        $region51: #{tpu_custom_call.1} parent=47 // pred_region
          %s4457 = sand.u32 %s138, 1
          %s4458 = scalar_lea.sflag [#allocation4], %s4457
          %s4459 = sand.u32 %s138, 1
          %s4460 = smul.addr %s4459, 256
          %s4461 = scalar_lea.vmem [#allocation3], %s4460
          %4462 = dma.done %s4458, 4096
        $region52: #{tpu_custom_call.1} parent=47 // pred_fallthru
          _
      $region48: #{tpu_custom_call.1} parent=5 // pred_fallthru
        _
    $region6: #{tpu_custom_call.1} parent=1 // loop_footer
      %s18 = sadd.s32 1, %s14
    $region7: #{tpu_custom_call.1} parent=1 // loop_footer_branch
      %13 = sbr.rel target = $region3
    $region8: #{tpu_custom_call.1} parent=1 // loop_exit
      _
    %4463 = vsyncpa [#allocation4], 1
    %s4464 = scalar_lea.sflag [#allocation4], 1
    %4465 = vsyncpa %s4464, 1

// kernel: tpu_custom_call.1
$region0: #{tpu_custom_call.1}
  #allocation0 [shape = 'u32[]', space=smem, size = 0x4, offset = 0x4, fixed_abs, tag = 'smem constant byte address 0x4 - core index']
  #allocation1 [shape = 'u32[144,128]{1,0:T(1,128)}', space=vmem, size = 0x12000, scoped, tag = 'internal scratch']
  #allocation2 [shape = 'f32[20,32,128]{2,1,0:T(8,128)}', space=vmem, size = 0x50000, scoped, tag = 'scratch operand']
  %s0 = inlined_call_operand.vmem [shape: f32[2,16,16,4], index: 0, kind: input, shape index: {}]
  %s1 = inlined_call_operand.vmem [shape: bf16[4,128], index: 1, kind: input, shape index: {}]
  %s2 = inlined_call_operand.vmem [shape: f32[1,128], index: 2, kind: input, shape index: {}]
  %s3 = inlined_call_operand.vmem [shape: bf16[4,128,128], index: 3, kind: input, shape index: {}]
  %s4 = inlined_call_operand.vmem [shape: f32[1,128], index: 4, kind: input, shape index: {}]
  %s5 = inlined_call_operand.hbm [shape: f32[2,16,16,128], index: 5, kind: output, shape index: {}]
  %s6 = sld [smem:[#allocation0]]
  $region53: #{tpu_custom_call.1} parent=0
    _
  %s8 = ssub.s32 1, %s6
  %s9 = scalar_select 0, %s8, %s6
  $region1: #{tpu_custom_call.1} parent=0
    #allocation3 [shape = 'u8[262144]{0}', space=vmem, size = 0x40000, scoped, tag = 'output window, operand 0']
    #allocation4 [shape = 's32[2]{0}', space=sflag, size = 0x8, scoped, tag = 'scoped memory for tpu_custom_call.1']
    %10 = vsyncpa [#allocation4], 0
    %s11 = scalar_lea.sflag [#allocation4], 1
    %12 = vsyncpa %s11, 0
    loop: start=0, step=1, limit=4
    $region2: #{tpu_custom_call.1} parent=1 // loop_pre_header
      _
    $region3: #{tpu_custom_call.1} parent=1 // loop_header
      %s14 = sphi 0, %s18
      %p15 = scmp.ge.s32.totalorder %s14, 4
      %s24 = sphi 0, %s26
      %s27 = sphi 0, %s24
      %s28 = sphi 0, %s27
      %s44 = sphi 0, %s28
      %s48 = sphi 0, %s48
      %s50 = sphi 0, %s48
      %s51 = sphi 0, %s50
      %s65 = sphi 0, %s51
      %s69 = sphi 0, %s69
      %s71 = sphi 0, %s69
      %s72 = sphi 0, %s71
      %s86 = sphi 0, %s72
      %s90 = sphi 0, %s90
      %s92 = sphi 0, %s90
      %s93 = sphi 0, %s92
      %s107 = sphi 0, %s93
      %s111 = sphi 0, %s111
      %s113 = sphi 0, %s111
      %s114 = sphi 0, %s113
      %s128 = sphi 0, %s114
      %s134 = sphi 0, %s136
      %s137 = sphi 0, %s134
      %s138 = sphi 0, %s137
      %s154 = sphi 0, %s138
    $region4: #{tpu_custom_call.1} parent=1 // loop_header_branch
      %17 = sbr.rel (%p15) target = $region8
    $region5: #{tpu_custom_call.1} parent=1 // loop_body
      %s19 = ssub.s32 %s14, 1
      %s20 = ssub.s32 %s14, 2
      %s21 = sadd.s32 %s14, 1
      %s22 = ssub.s32 %s14, %s21
      %p23 = scmp.eq.s32.totalorder %s22, 0
      %s25 = sadd.s32 %s24, 1
      %s26 = scalar_select %p23, %s24, %s25
      %p29 = pneg %p23
      %p30 = scmp.eq.s32.totalorder %s14, 1
      %p31 = por %p29, %p30
      %p32 = scmp.ne.s32.totalorder %s24, %s27
      %p33 = scmp.eq.s32.totalorder %s14, 0
      %p34 = por %p32, %p33
      %p35 = scmp.ne.s32.totalorder %s24, %s27
      %p36 = scmp.eq.s32.totalorder %s19, 1
      %p37 = por %p35, %p36
      %p38 = scmp.ne.s32.totalorder %s27, %s28
      %p39 = scmp.eq.s32.totalorder %s19, 0
      %p40 = por %p38, %p39
      %p41 = scmp.ne.s32.totalorder %s27, %s28
      %p42 = scmp.eq.s32.totalorder %s20, 1
      %p43 = por %p41, %p42
      %p45 = scmp.ne.s32.totalorder %s28, %s44
      %p46 = scmp.eq.s32.totalorder %s20, 0
      %p47 = por %p45, %p46
      %s49 = sadd.s32 %s48, 1
      %p52 = scmp.eq.s32.totalorder %s14, 1
      %p53 = scmp.ne.s32.totalorder %s48, %s50
      %p54 = scmp.eq.s32.totalorder %s14, 0
      %p55 = por %p53, %p54
      %p56 = scmp.ne.s32.totalorder %s48, %s50
      %p57 = scmp.eq.s32.totalorder %s19, 1
      %p58 = por %p56, %p57
      %p59 = scmp.ne.s32.totalorder %s50, %s51
      %p60 = scmp.eq.s32.totalorder %s19, 0
      %p61 = por %p59, %p60
      %p62 = scmp.ne.s32.totalorder %s50, %s51
      %p63 = scmp.eq.s32.totalorder %s20, 1
      %p64 = por %p62, %p63
      %p66 = scmp.ne.s32.totalorder %s51, %s65
      %p67 = scmp.eq.s32.totalorder %s20, 0
      %p68 = por %p66, %p67
      %s70 = sadd.s32 %s69, 1
      %p73 = scmp.eq.s32.totalorder %s14, 1
      %p74 = scmp.ne.s32.totalorder %s69, %s71
      %p75 = scmp.eq.s32.totalorder %s14, 0
      %p76 = por %p74, %p75
      %p77 = scmp.ne.s32.totalorder %s69, %s71
      %p78 = scmp.eq.s32.totalorder %s19, 1
      %p79 = por %p77, %p78
      %p80 = scmp.ne.s32.totalorder %s71, %s72
      %p81 = scmp.eq.s32.totalorder %s19, 0
      %p82 = por %p80, %p81
      %p83 = scmp.ne.s32.totalorder %s71, %s72
      %p84 = scmp.eq.s32.totalorder %s20, 1
      %p85 = por %p83, %p84
      %p87 = scmp.ne.s32.totalorder %s72, %s86
      %p88 = scmp.eq.s32.totalorder %s20, 0
      %p89 = por %p87, %p88
      %s91 = sadd.s32 %s90, 1
      %p94 = scmp.eq.s32.totalorder %s14, 1
      %p95 = scmp.ne.s32.totalorder %s90, %s92
      %p96 = scmp.eq.s32.totalorder %s14, 0
      %p97 = por %p95, %p96
      %p98 = scmp.ne.s32.totalorder %s90, %s92
      %p99 = scmp.eq.s32.totalorder %s19, 1
      %p100 = por %p98, %p99
      %p101 = scmp.ne.s32.totalorder %s92, %s93
      %p102 = scmp.eq.s32.totalorder %s19, 0
      %p103 = por %p101, %p102
      %p104 = scmp.ne.s32.totalorder %s92, %s93
      %p105 = scmp.eq.s32.totalorder %s20, 1
      %p106 = por %p104, %p105
      %p108 = scmp.ne.s32.totalorder %s93, %s107
      %p109 = scmp.eq.s32.totalorder %s20, 0
      %p110 = por %p108, %p109
      %s112 = sadd.s32 %s111, 1
      %p115 = scmp.eq.s32.totalorder %s14, 1
      %p116 = scmp.ne.s32.totalorder %s111, %s113
      %p117 = scmp.eq.s32.totalorder %s14, 0
      %p118 = por %p116, %p117
      %p119 = scmp.ne.s32.totalorder %s111, %s113
      %p120 = scmp.eq.s32.totalorder %s19, 1
      %p121 = por %p119, %p120
      %p122 = scmp.ne.s32.totalorder %s113, %s114
      %p123 = scmp.eq.s32.totalorder %s19, 0
      %p124 = por %p122, %p123
      %p125 = scmp.ne.s32.totalorder %s113, %s114
      %p126 = scmp.eq.s32.totalorder %s20, 1
      %p127 = por %p125, %p126
      %p129 = scmp.ne.s32.totalorder %s114, %s128
      %p130 = scmp.eq.s32.totalorder %s20, 0
      %p131 = por %p129, %p130
      %s132 = ssub.s32 %s14, %s21
      %p133 = scmp.eq.s32.totalorder %s132, 0
      %s135 = sadd.s32 %s134, 1
      %s136 = scalar_select %p133, %s134, %s135
      %p139 = pneg %p133
      %p140 = scmp.eq.s32.totalorder %s14, 1
      %p141 = por %p139, %p140
      %p142 = scmp.ne.s32.totalorder %s134, %s137
      %p143 = scmp.eq.s32.totalorder %s14, 0
      %p144 = por %p142, %p143
      %p145 = scmp.ne.s32.totalorder %s134, %s137
      %p146 = scmp.eq.s32.totalorder %s19, 1
      %p147 = por %p145, %p146
      %p148 = scmp.ne.s32.totalorder %s137, %s138
      %p149 = scmp.eq.s32.totalorder %s19, 0
      %p150 = por %p148, %p149
      %p151 = scmp.ne.s32.totalorder %s137, %s138
      %p152 = scmp.eq.s32.totalorder %s20, 1
      %p153 = por %p151, %p152
      %p155 = scmp.ne.s32.totalorder %s138, %s154
      %p156 = scmp.eq.s32.totalorder %s20, 0
      %p157 = por %p155, %p156
      %p158 = scmp.le.s32.totalorder 1, %s14
      %p159 = scmp.lt.s32.totalorder %s14, 3
      %p160 = pnand %p158, %p159
      %p161 = pneg %p160
      // Predicated region
      $region9: #{tpu_custom_call.1} parent=5 // pred_check
        _
      $region10: #{tpu_custom_call.1} parent=5 // pred_check_branch
        %163 = sbr.rel (%p160) target = $region12
      $region11: #{tpu_custom_call.1} parent=5 // pred_region
        %s164 = ssub.s32 %s14, 1
        // Predicated region
        $region13: #{tpu_custom_call.1} parent=11 // pred_check
          %p165 = pneg %p61
        $region14: #{tpu_custom_call.1} parent=11 // pred_check_branch
          %167 = sbr.rel (%p165) target = $region16
        $region15: #{tpu_custom_call.1} parent=11 // pred_region
          _
        $region16: #{tpu_custom_call.1} parent=11 // pred_fallthru
          _
        // Predicated region
        $region17: #{tpu_custom_call.1} parent=11 // pred_check
          %p168 = pneg %p82
        $region18: #{tpu_custom_call.1} parent=11 // pred_check_branch
          %170 = sbr.rel (%p168) target = $region20
        $region19: #{tpu_custom_call.1} parent=11 // pred_region
          _
        $region20: #{tpu_custom_call.1} parent=11 // pred_fallthru
          _
        // Predicated region
        $region21: #{tpu_custom_call.1} parent=11 // pred_check
          %p171 = pneg %p103
        $region22: #{tpu_custom_call.1} parent=11 // pred_check_branch
          %173 = sbr.rel (%p171) target = $region24
        $region23: #{tpu_custom_call.1} parent=11 // pred_region
          _
        $region24: #{tpu_custom_call.1} parent=11 // pred_fallthru
          _
        // Predicated region
        $region25: #{tpu_custom_call.1} parent=11 // pred_check
          %p174 = pneg %p124
        $region26: #{tpu_custom_call.1} parent=11 // pred_check_branch
          %176 = sbr.rel (%p174) target = $region28
        $region27: #{tpu_custom_call.1} parent=11 // pred_region
          _
        $region28: #{tpu_custom_call.1} parent=11 // pred_fallthru
          _
      $region12: #{tpu_custom_call.1} parent=5 // pred_fallthru
        _
      %p177 = scmp.lt.s32.totalorder %s14, 2
      // Predicated region
      $region29: #{tpu_custom_call.1} parent=5 // pred_check
        %p178 = pneg %p177
      $region30: #{tpu_custom_call.1} parent=5 // pred_check_branch
        %180 = sbr.rel (%p178) target = $region32
      $region31: #{tpu_custom_call.1} parent=5 // pred_region
        // Predicated region
        $region33: #{tpu_custom_call.1} parent=31 // pred_check
          %p181 = pneg %p34
        $region34: #{tpu_custom_call.1} parent=31 // pred_check_branch
          %183 = sbr.rel (%p181) target = $region36
        $region35: #{tpu_custom_call.1} parent=31 // pred_region
          %p184 = scmp.lt.s32.totalorder %s14, 1
          %s185 = scalar_select %p184, %s14, 1
          %s186 = smul.addr %s185, 32
          %s187 = smul.addr %s186, 8
          %s188 = scalar_lea.vmem %s0, %s187
        $region36: #{tpu_custom_call.1} parent=31 // pred_fallthru
          _
      $region32: #{tpu_custom_call.1} parent=5 // pred_fallthru
        _
      %p189 = scmp.le.s32.totalorder 1, %s14
      %p190 = scmp.lt.s32.totalorder %s14, 3
      %p191 = pnand %p189, %p190
      %p192 = pneg %p191
      // Predicated region
      $region37: #{tpu_custom_call.1} parent=5 // pred_check
        _
      $region38: #{tpu_custom_call.1} parent=5 // pred_check_branch
        %194 = sbr.rel (%p191) target = $region40
      $region39: #{tpu_custom_call.1} parent=5 // pred_region
        %s195 = ssub.s32 %s14, 1
        %p196 = scmp.lt.s32.totalorder %s19, 1
        %s197 = scalar_select %p196, %s19, 1
        %s198 = smul.addr %s197, 32
        %s199 = smul.addr %s198, 8
        %s200 = scalar_lea.vmem %s0, %s199
        %p201 = pneg %p40
        %p202 = pneg %p37
        %p203 = pneg %p61
        %p204 = pneg %p58
        %p205 = pneg %p82
        %p206 = pneg %p79
        %p207 = pneg %p103
        %p208 = pneg %p100
        %p209 = pneg %p124
        %p210 = pneg %p121
        %p211 = pneg %p150
        %p212 = pneg %p147
        %s213 = sand.u32 %s137, 1
        %s214 = scalar_lea.sflag [#allocation4], %s213
        %s215 = sand.u32 %s137, 1
        %s216 = smul.addr %s215, 256
        %s217 = scalar_lea.vmem [#allocation3], %s216
        %p218 = scmp.lt.s32.totalorder %s19, 1
        %s219 = scalar_select %p218, %s19, 1
        %s220 = smul.addr %s219, 32
        %s221 = smul.addr %s220, 8
        %s222 = scalar_lea.vmem %s0, %s221
        %v224 = vld [vmem:[%s222] sm:$0xff]
        %v225 = vld [vmem:[%s222 + $0x8] sm:$0xff]
        %v226 = vld [vmem:[%s222 + $0x10] sm:$0xff]
        %v227 = vld [vmem:[%s222 + $0x18] sm:$0xff]
        %v228 = vld [vmem:[%s222 + $0x20] sm:$0xff]
        %v229 = vld [vmem:[%s222 + $0x28] sm:$0xff]
        %v230 = vld [vmem:[%s222 + $0x30] sm:$0xff]
        %v231 = vld [vmem:[%s222 + $0x38] sm:$0xff]
        %v232 = vld [vmem:[%s222 + $0x40] sm:$0xff]
        %v233 = vld [vmem:[%s222 + $0x48] sm:$0xff]
        %v234 = vld [vmem:[%s222 + $0x50] sm:$0xff]
        %v235 = vld [vmem:[%s222 + $0x58] sm:$0xff]
        %v236 = vld [vmem:[%s222 + $0x60] sm:$0xff]
        %v237 = vld [vmem:[%s222 + $0x68] sm:$0xff]
        %v238 = vld [vmem:[%s222 + $0x70] sm:$0xff]
        %v239 = vld [vmem:[%s222 + $0x78] sm:$0xff]
        %v240 = vld [vmem:[%s222 + $0x80] sm:$0xff]
        %v241 = vld [vmem:[%s222 + $0x88] sm:$0xff]
        %v242 = vld [vmem:[%s222 + $0x90] sm:$0xff]
        %v243 = vld [vmem:[%s222 + $0x98] sm:$0xff]
        %v244 = vld [vmem:[%s222 + $0xa0] sm:$0xff]
        %v245 = vld [vmem:[%s222 + $0xa8] sm:$0xff]
        %v246 = vld [vmem:[%s222 + $0xb0] sm:$0xff]
        %v247 = vld [vmem:[%s222 + $0xb8] sm:$0xff]
        %v248 = vld [vmem:[%s222 + $0xc0] sm:$0xff]
        %v249 = vld [vmem:[%s222 + $0xc8] sm:$0xff]
        %v250 = vld [vmem:[%s222 + $0xd0] sm:$0xff]
        %v251 = vld [vmem:[%s222 + $0xd8] sm:$0xff]
        %v252 = vld [vmem:[%s222 + $0xe0] sm:$0xff]
        %v253 = vld [vmem:[%s222 + $0xe8] sm:$0xff]
        %v254 = vld [vmem:[%s222 + $0xf0] sm:$0xff]
        %v255 = vld [vmem:[%s222 + $0xf8] sm:$0xff]
        %v256 = vpack.c.bf16 %v225, %v224
        %v257 = vpack.c.bf16 %v227, %v226
        %v258 = vpack.c.bf16 %v229, %v228
        %v259 = vpack.c.bf16 %v231, %v230
        %v260 = vpack.c.bf16 %v233, %v232
        %v261 = vpack.c.bf16 %v235, %v234
        %v262 = vpack.c.bf16 %v237, %v236
        %v263 = vpack.c.bf16 %v239, %v238
        %v264 = vpack.c.bf16 %v241, %v240
        %v265 = vpack.c.bf16 %v243, %v242
        %v266 = vpack.c.bf16 %v245, %v244
        %v267 = vpack.c.bf16 %v247, %v246
        %v268 = vpack.c.bf16 %v249, %v248
        %v269 = vpack.c.bf16 %v251, %v250
        %v270 = vpack.c.bf16 %v253, %v252
        %v271 = vpack.c.bf16 %v255, %v254
        %v272 = vld [vmem:[%s1] sm:$0x3]
        %v273 = vld [vmem:[%s2] sm:$0x1]
        %v275 = vlaneseq
        %v276 = vshrl.u32 %v275, 7
        %v277 = vsub.s32 0, %v276
        %v278 = vrot.slane %v273, %v277
        %vm280 = vcmask 31744
        %v282 = vsel %vm280, %v256, 0
        %v285 = vsel %vm280, %v257, 0
        %v288 = vsel %vm280, %v258, 0
        %v291 = vsel %vm280, %v259, 0
        %v294 = vsel %vm280, %v260, 0
        %v297 = vsel %vm280, %v261, 0
        %v300 = vsel %vm280, %v262, 0
        %v303 = vsel %vm280, %v263, 0
        %v306 = vsel %vm280, %v264, 0
        %v309 = vsel %vm280, %v265, 0
        %v312 = vsel %vm280, %v266, 0
        %v315 = vsel %vm280, %v267, 0
        %v318 = vsel %vm280, %v268, 0
        %v321 = vsel %vm280, %v269, 0
        %v324 = vsel %vm280, %v270, 0
        %v327 = vsel %vm280, %v271, 0
        %vm329 = vcmask 1041408
        %v331 = vsel %vm329, %v272, 0
        %333 = vmatprep.subr.bf16.mxu0 0
        %334 = vmatpush1.bf16.msra.mxu0 0
        %335 = vmatprep.subr.bf16.mxu0 0
        %336 = vmatpush1.bf16.msra.mxu0 0
        %337 = vmatprep.subr.bf16.mxu0 0
        %338 = vmatpush1.bf16.msra.mxu0 0
        %339 = vmatprep.subr.bf16.mxu0 0
        %340 = vmatpush1.bf16.msra.mxu0 0
        %341 = vmatprep.subr.bf16.mxu0 0
        %342 = vmatpush1.bf16.msra.mxu0 0
        %343 = vmatprep.subr.bf16.mxu0 0
        %344 = vmatpush1.bf16.msra.mxu0 0
        %345 = vmatprep.subr.bf16.mxu0 0
        %346 = vmatpush1.bf16.msra.mxu0 0
        %347 = vmatprep.subr.bf16.mxu0 0
        %348 = vmatpush1.bf16.msra.mxu0 %v331
        %349 = vmatprep.subr.bf16.mxu0 0
        %350 = vmatpush2.bf16.msra.mxu0 0
        %351 = vmatprep.subr.bf16.mxu0 0
        %352 = vmatpush2.bf16.msra.mxu0 0
        %353 = vmatprep.subr.bf16.mxu0 0
        %354 = vmatpush2.bf16.msra.mxu0 0
        %355 = vmatprep.subr.bf16.mxu0 0
        %356 = vmatpush2.bf16.msra.mxu0 0
        %357 = vmatprep.subr.bf16.mxu0 0
        %358 = vmatpush2.bf16.msra.mxu0 0
        %359 = vmatprep.subr.bf16.mxu0 0
        %360 = vmatpush2.bf16.msra.mxu0 0
        %361 = vmatprep.subr.bf16.mxu0 0
        %362 = vmatpush2.bf16.msra.mxu0 0
        %363 = vmatprep.subr.bf16.mxu0 0
        %364 = vmatpush2.bf16.msra.mxu0 0
        %365 = vmatprep.mubr.bf16.mxu0 0
        %366 = vmatmul.mubr.bf16.gmra.mxu0 %v282
        %v367 = vpop.f32.mrf.mxu0
        %v368 = vadd.f32 %v278, %v367
        %v369 = vpop.f32.mrf.mxu0
        %v370 = vpop.f32.mrf.mxu0
        %v371 = vadd.f32 %v278, %v370
        %v372 = vpop.f32.mrf.mxu0
        %373 = vmatprep.mubr.bf16.mxu0 0
        %374 = vmatmul.mubr.bf16.gmra.mxu0 %v285
        %v375 = vpop.f32.mrf.mxu0
        %v376 = vadd.f32 %v278, %v375
        %v377 = vpop.f32.mrf.mxu0
        %v378 = vpop.f32.mrf.mxu0
        %v379 = vadd.f32 %v278, %v378
        %v380 = vpop.f32.mrf.mxu0
        %381 = vmatprep.mubr.bf16.mxu0 0
        %382 = vmatmul.mubr.bf16.gmra.mxu0 %v288
        %v383 = vpop.f32.mrf.mxu0
        %v384 = vadd.f32 %v278, %v383
        %v385 = vpop.f32.mrf.mxu0
        %v386 = vpop.f32.mrf.mxu0
        %v387 = vadd.f32 %v278, %v386
        %v388 = vpop.f32.mrf.mxu0
        %389 = vmatprep.mubr.bf16.mxu0 0
        %390 = vmatmul.mubr.bf16.gmra.mxu0 %v291
        %v391 = vpop.f32.mrf.mxu0
        %v392 = vadd.f32 %v278, %v391
        %v393 = vpop.f32.mrf.mxu0
        %v394 = vpop.f32.mrf.mxu0
        %v395 = vadd.f32 %v278, %v394
        %v396 = vpop.f32.mrf.mxu0
        %397 = vmatprep.mubr.bf16.mxu0 0
        %398 = vmatmul.mubr.bf16.gmra.mxu0 %v294
        %v399 = vpop.f32.mrf.mxu0
        %v400 = vadd.f32 %v278, %v399
        %v401 = vpop.f32.mrf.mxu0
        %v402 = vpop.f32.mrf.mxu0
        %v403 = vadd.f32 %v278, %v402
        %v404 = vpop.f32.mrf.mxu0
        %405 = vmatprep.mubr.bf16.mxu0 0
        %406 = vmatmul.mubr.bf16.gmra.mxu0 %v297
        %v407 = vpop.f32.mrf.mxu0
        %v408 = vadd.f32 %v278, %v407
        %v409 = vpop.f32.mrf.mxu0
        %v410 = vpop.f32.mrf.mxu0
        %v411 = vadd.f32 %v278, %v410
        %v412 = vpop.f32.mrf.mxu0
        %413 = vmatprep.mubr.bf16.mxu0 0
        %414 = vmatmul.mubr.bf16.gmra.mxu0 %v300
        %v415 = vpop.f32.mrf.mxu0
        %v416 = vadd.f32 %v278, %v415
        %v417 = vpop.f32.mrf.mxu0
        %v418 = vpop.f32.mrf.mxu0
        %v419 = vadd.f32 %v278, %v418
        %v420 = vpop.f32.mrf.mxu0
        %421 = vmatprep.mubr.bf16.mxu0 0
        %422 = vmatmul.mubr.bf16.gmra.mxu0 %v303
        %v423 = vpop.f32.mrf.mxu0
        %v424 = vadd.f32 %v278, %v423
        %v425 = vpop.f32.mrf.mxu0
        %v426 = vpop.f32.mrf.mxu0
        %v427 = vadd.f32 %v278, %v426
        %v428 = vpop.f32.mrf.mxu0
        %429 = vmatprep.mubr.bf16.mxu0 0
        %430 = vmatmul.mubr.bf16.gmra.mxu0 %v306
        %v431 = vpop.f32.mrf.mxu0
        %v432 = vadd.f32 %v278, %v431
        %v433 = vpop.f32.mrf.mxu0
        %v434 = vpop.f32.mrf.mxu0
        %v435 = vadd.f32 %v278, %v434
        %v436 = vpop.f32.mrf.mxu0
        %437 = vmatprep.mubr.bf16.mxu0 0
        %438 = vmatmul.mubr.bf16.gmra.mxu0 %v309
        %v439 = vpop.f32.mrf.mxu0
        %v440 = vadd.f32 %v278, %v439
        %v441 = vpop.f32.mrf.mxu0
        %v442 = vpop.f32.mrf.mxu0
        %v443 = vadd.f32 %v278, %v442
        %v444 = vpop.f32.mrf.mxu0
        %445 = vmatprep.mubr.bf16.mxu0 0
        %446 = vmatmul.mubr.bf16.gmra.mxu0 %v312
        %v447 = vpop.f32.mrf.mxu0
        %v448 = vadd.f32 %v278, %v447
        %v449 = vpop.f32.mrf.mxu0
        %v450 = vpop.f32.mrf.mxu0
        %v451 = vadd.f32 %v278, %v450
        %v452 = vpop.f32.mrf.mxu0
        %453 = vmatprep.mubr.bf16.mxu0 0
        %454 = vmatmul.mubr.bf16.gmra.mxu0 %v315
        %v455 = vpop.f32.mrf.mxu0
        %v456 = vadd.f32 %v278, %v455
        %v457 = vpop.f32.mrf.mxu0
        %v458 = vpop.f32.mrf.mxu0
        %v459 = vadd.f32 %v278, %v458
        %v460 = vpop.f32.mrf.mxu0
        %461 = vmatprep.mubr.bf16.mxu0 0
        %462 = vmatmul.mubr.bf16.gmra.mxu0 %v318
        %v463 = vpop.f32.mrf.mxu0
        %v464 = vadd.f32 %v278, %v463
        %v465 = vpop.f32.mrf.mxu0
        %v466 = vpop.f32.mrf.mxu0
        %v467 = vadd.f32 %v278, %v466
        %v468 = vpop.f32.mrf.mxu0
        %469 = vmatprep.mubr.bf16.mxu0 0
        %470 = vmatmul.mubr.bf16.gmra.mxu0 %v321
        %v471 = vpop.f32.mrf.mxu0
        %v472 = vadd.f32 %v278, %v471
        %v473 = vpop.f32.mrf.mxu0
        %v474 = vpop.f32.mrf.mxu0
        %v475 = vadd.f32 %v278, %v474
        %v476 = vpop.f32.mrf.mxu0
        %477 = vmatprep.mubr.bf16.mxu0 0
        %478 = vmatmul.mubr.bf16.gmra.mxu0 %v324
        %v479 = vpop.f32.mrf.mxu0
        %v480 = vadd.f32 %v278, %v479
        %v481 = vpop.f32.mrf.mxu0
        %v482 = vpop.f32.mrf.mxu0
        %v483 = vadd.f32 %v278, %v482
        %v484 = vpop.f32.mrf.mxu0
        %485 = vmatprep.mubr.bf16.mxu0 0
        %486 = vmatmul.mubr.bf16.gmra.mxu0 %v327
        %v487 = vpop.f32.mrf.mxu0
        %v488 = vadd.f32 %v278, %v487
        %v489 = vpop.f32.mrf.mxu0
        %v490 = vpop.f32.mrf.mxu0
        %v491 = vadd.f32 %v278, %v490
        %v492 = vpop.f32.mrf.mxu0
        %493 = vdwg.mxu0
        %v494 = vmax.f32 %v368, 0.0
        %v495 = vmax.f32 %v371, 0.0
        %v496 = vmax.f32 %v376, 0.0
        %v497 = vmax.f32 %v379, 0.0
        %v498 = vmax.f32 %v384, 0.0
        %v499 = vmax.f32 %v387, 0.0
        %v500 = vmax.f32 %v392, 0.0
        %v501 = vmax.f32 %v395, 0.0
        %v502 = vmax.f32 %v400, 0.0
        %v503 = vmax.f32 %v403, 0.0
        %v504 = vmax.f32 %v408, 0.0
        %v505 = vmax.f32 %v411, 0.0
        %v506 = vmax.f32 %v416, 0.0
        %v507 = vmax.f32 %v419, 0.0
        %v508 = vmax.f32 %v424, 0.0
        %v509 = vmax.f32 %v427, 0.0
        %v510 = vmax.f32 %v432, 0.0
        %v511 = vmax.f32 %v435, 0.0
        %v512 = vmax.f32 %v440, 0.0
        %v513 = vmax.f32 %v443, 0.0
        %v514 = vmax.f32 %v448, 0.0
        %v515 = vmax.f32 %v451, 0.0
        %v516 = vmax.f32 %v456, 0.0
        %v517 = vmax.f32 %v459, 0.0
        %v518 = vmax.f32 %v464, 0.0
        %v519 = vmax.f32 %v467, 0.0
        %v520 = vmax.f32 %v472, 0.0
        %v521 = vmax.f32 %v475, 0.0
        %v522 = vmax.f32 %v480, 0.0
        %v523 = vmax.f32 %v483, 0.0
        %v524 = vmax.f32 %v488, 0.0
        %v525 = vmax.f32 %v491, 0.0
        %526 = vst [vmem:[#allocation2] sm:$0xff] 0.0
        %527 = vst [vmem:[#allocation2 + $0x8] sm:$0xff] 0.0
        %528 = vst [vmem:[#allocation2 + $0x10] sm:$0xff] 0.0
        %529 = vst [vmem:[#allocation2 + $0x18] sm:$0xff] 0.0
        %530 = vst [vmem:[#allocation2 + $0x20] sm:$0xff] 0.0
        %531 = vst [vmem:[#allocation2 + $0x28] sm:$0xff] 0.0
        %532 = vst [vmem:[#allocation2 + $0x30] sm:$0xff] 0.0
        %533 = vst [vmem:[#allocation2 + $0x38] sm:$0xff] 0.0
        %s534 = scalar_lea.vmem [#allocation2], 576
        %535 = vst [vmem:[%s534] sm:$0xff] 0.0
        %536 = vst [vmem:[%s534 + $0x8] sm:$0xff] 0.0
        %537 = vst [vmem:[%s534 + $0x10] sm:$0xff] 0.0
        %538 = vst [vmem:[%s534 + $0x18] sm:$0xff] 0.0
        %539 = vst [vmem:[%s534 + $0x20] sm:$0xff] 0.0
        %540 = vst [vmem:[%s534 + $0x28] sm:$0xff] 0.0
        %541 = vst [vmem:[%s534 + $0x30] sm:$0xff] 0.0
        %542 = vst [vmem:[%s534 + $0x38] sm:$0xff] 0.0
        %s543 = scalar_lea.vmem [#allocation2], 64
        %544 = vst [vmem:[%s543] sm:$0xff] 0.0
        %545 = vst [vmem:[%s543 + $0x20] sm:$0xff] 0.0
        %546 = vst [vmem:[%s543 + $0x40] sm:$0xff] 0.0
        %547 = vst [vmem:[%s543 + $0x60] sm:$0xff] 0.0
        %548 = vst [vmem:[%s543 + $0x80] sm:$0xff] 0.0
        %549 = vst [vmem:[%s543 + $0xa0] sm:$0xff] 0.0
        %550 = vst [vmem:[%s543 + $0xc0] sm:$0xff] 0.0
        %551 = vst [vmem:[%s543 + $0xe0] sm:$0xff] 0.0
        %552 = vst [vmem:[%s543 + $0x100] sm:$0xff] 0.0
        %553 = vst [vmem:[%s543 + $0x120] sm:$0xff] 0.0
        %554 = vst [vmem:[%s543 + $0x140] sm:$0xff] 0.0
        %555 = vst [vmem:[%s543 + $0x160] sm:$0xff] 0.0
        %556 = vst [vmem:[%s543 + $0x180] sm:$0xff] 0.0
        %557 = vst [vmem:[%s543 + $0x1a0] sm:$0xff] 0.0
        %558 = vst [vmem:[%s543 + $0x1c0] sm:$0xff] 0.0
        %559 = vst [vmem:[%s543 + $0x1e0] sm:$0xff] 0.0
        %560 = vst [vmem:[%s543 + $0x18] sm:$0xff] 0.0
        %561 = vst [vmem:[%s543 + $0x38] sm:$0xff] 0.0
        %562 = vst [vmem:[%s543 + $0x58] sm:$0xff] 0.0
        %563 = vst [vmem:[%s543 + $0x78] sm:$0xff] 0.0
        %564 = vst [vmem:[%s543 + $0x98] sm:$0xff] 0.0
        %565 = vst [vmem:[%s543 + $0xb8] sm:$0xff] 0.0
        %566 = vst [vmem:[%s543 + $0xd8] sm:$0xff] 0.0
        %567 = vst [vmem:[%s543 + $0xf8] sm:$0xff] 0.0
        %568 = vst [vmem:[%s543 + $0x118] sm:$0xff] 0.0
        %569 = vst [vmem:[%s543 + $0x138] sm:$0xff] 0.0
        %570 = vst [vmem:[%s543 + $0x158] sm:$0xff] 0.0
        %571 = vst [vmem:[%s543 + $0x178] sm:$0xff] 0.0
        %572 = vst [vmem:[%s543 + $0x198] sm:$0xff] 0.0
        %573 = vst [vmem:[%s543 + $0x1b8] sm:$0xff] 0.0
        %574 = vst [vmem:[%s543 + $0x1d8] sm:$0xff] 0.0
        %575 = vst [vmem:[%s543 + $0x1f8] sm:$0xff] 0.0
        %v576 = vpack.c.bf16 %v495, %v494
        %v577 = vpack.c.bf16 %v497, %v496
        %v578 = vpack.c.bf16 %v499, %v498
        %v579 = vpack.c.bf16 %v501, %v500
        %v580 = vpack.c.bf16 %v503, %v502
        %v581 = vpack.c.bf16 %v505, %v504
        %v582 = vpack.c.bf16 %v507, %v506
        %v583 = vpack.c.bf16 %v509, %v508
        %v584 = vpack.c.bf16 %v511, %v510
        %v585 = vpack.c.bf16 %v513, %v512
        %v586 = vpack.c.bf16 %v515, %v514
        %v587 = vpack.c.bf16 %v517, %v516
        %v588 = vpack.c.bf16 %v519, %v518
        %v589 = vpack.c.bf16 %v521, %v520
        %v590 = vpack.c.bf16 %v523, %v522
        %v591 = vpack.c.bf16 %v525, %v524
        %v592 = vld [vmem:[%s3] sm:$0xf]
        %v593 = vld [vmem:[%s3 + $0x4] sm:$0xf]
        %v594 = vld [vmem:[%s3 + $0x8] sm:$0xf]
        %v595 = vld [vmem:[%s3 + $0xc] sm:$0xf]
        %v596 = vld [vmem:[%s3 + $0x10] sm:$0xf]
        %v597 = vld [vmem:[%s3 + $0x14] sm:$0xf]
        %v598 = vld [vmem:[%s3 + $0x18] sm:$0xf]
        %v599 = vld [vmem:[%s3 + $0x1c] sm:$0xf]
        %v600 = vld [vmem:[%s3 + $0x20] sm:$0xf]
        %v601 = vld [vmem:[%s3 + $0x24] sm:$0xf]
        %v602 = vld [vmem:[%s3 + $0x28] sm:$0xf]
        %v603 = vld [vmem:[%s3 + $0x2c] sm:$0xf]
        %v604 = vld [vmem:[%s3 + $0x30] sm:$0xf]
        %v605 = vld [vmem:[%s3 + $0x34] sm:$0xf]
        %v606 = vld [vmem:[%s3 + $0x38] sm:$0xf]
        %v607 = vld [vmem:[%s3 + $0x3c] sm:$0xf]
        %608 = vst [vmem:[%s543 + $0x8] sm:$0xff] %v494
        %609 = vst [vmem:[%s543 + $0x10] sm:$0xff] %v495
        %610 = vst [vmem:[%s543 + $0x28] sm:$0xff] %v496
        %611 = vst [vmem:[%s543 + $0x30] sm:$0xff] %v497
        %612 = vst [vmem:[%s543 + $0x48] sm:$0xff] %v498
        %613 = vst [vmem:[%s543 + $0x50] sm:$0xff] %v499
        %614 = vst [vmem:[%s543 + $0x68] sm:$0xff] %v500
        %615 = vst [vmem:[%s543 + $0x70] sm:$0xff] %v501
        %616 = vst [vmem:[%s543 + $0x88] sm:$0xff] %v502
        %617 = vst [vmem:[%s543 + $0x90] sm:$0xff] %v503
        %618 = vst [vmem:[%s543 + $0xa8] sm:$0xff] %v504
        %619 = vst [vmem:[%s543 + $0xb0] sm:$0xff] %v505
        %620 = vst [vmem:[%s543 + $0xc8] sm:$0xff] %v506
        %621 = vst [vmem:[%s543 + $0xd0] sm:$0xff] %v507
        %622 = vst [vmem:[%s543 + $0xe8] sm:$0xff] %v508
        %623 = vst [vmem:[%s543 + $0xf0] sm:$0xff] %v509
        %624 = vst [vmem:[%s543 + $0x108] sm:$0xff] %v510
        %625 = vst [vmem:[%s543 + $0x110] sm:$0xff] %v511
        %626 = vst [vmem:[%s543 + $0x128] sm:$0xff] %v512
        %627 = vst [vmem:[%s543 + $0x130] sm:$0xff] %v513
        %628 = vst [vmem:[%s543 + $0x148] sm:$0xff] %v514
        %629 = vst [vmem:[%s543 + $0x150] sm:$0xff] %v515
        %630 = vst [vmem:[%s543 + $0x168] sm:$0xff] %v516
        %631 = vst [vmem:[%s543 + $0x170] sm:$0xff] %v517
        %632 = vst [vmem:[%s543 + $0x188] sm:$0xff] %v518
        %633 = vst [vmem:[%s543 + $0x190] sm:$0xff] %v519
        %634 = vst [vmem:[%s543 + $0x1a8] sm:$0xff] %v520
        %635 = vst [vmem:[%s543 + $0x1b0] sm:$0xff] %v521
        %636 = vst [vmem:[%s543 + $0x1c8] sm:$0xff] %v522
        %637 = vst [vmem:[%s543 + $0x1d0] sm:$0xff] %v523
        %638 = vst [vmem:[%s543 + $0x1e8] sm:$0xff] %v524
        %639 = vst [vmem:[%s543 + $0x1f0] sm:$0xff] %v525
        %v640 = vld [vmem:[#allocation2] sm:$0xff]
        %v641 = vld [vmem:[#allocation2 + $0x8] sm:$0xff]
        %v642 = vld [vmem:[#allocation2 + $0x10] sm:$0xff]
        %v643 = vld [vmem:[#allocation2 + $0x18] sm:$0xff]
        %v644 = vld [vmem:[#allocation2 + $0x20] sm:$0xff]
        %v645 = vld [vmem:[#allocation2 + $0x28] sm:$0xff]
        %v646 = vld [vmem:[#allocation2 + $0x30] sm:$0xff]
        %v647 = vld [vmem:[#allocation2 + $0x38] sm:$0xff]
        %v648 = vld [vmem:[#allocation2 + $0x40] sm:$0xff]
        %v649 = vld [vmem:[#allocation2 + $0x48] sm:$0xff]
        %v650 = vld [vmem:[#allocation2 + $0x50] sm:$0xff]
        %v651 = vld [vmem:[#allocation2 + $0x58] sm:$0xff]
        %v652 = vld [vmem:[#allocation2 + $0x60] sm:$0xff]
        %v653 = vld [vmem:[#allocation2 + $0x68] sm:$0xff]
        %v654 = vld [vmem:[#allocation2 + $0x70] sm:$0xff]
        %v655 = vld [vmem:[#allocation2 + $0x78] sm:$0xff]
        %v656 = vld [vmem:[#allocation2 + $0x80] sm:$0xff]
        %v657 = vld [vmem:[#allocation2 + $0x88] sm:$0xff]
        %v658 = vld [vmem:[#allocation2 + $0x90] sm:$0xff]
        %v659 = vld [vmem:[#allocation2 + $0x98] sm:$0xff]
        %v660 = vld [vmem:[#allocation2 + $0xa0] sm:$0xff]
        %v661 = vld [vmem:[#allocation2 + $0xa8] sm:$0xff]
        %v662 = vld [vmem:[#allocation2 + $0xb0] sm:$0xff]
        %v663 = vld [vmem:[#allocation2 + $0xb8] sm:$0xff]
        %v664 = vld [vmem:[#allocation2 + $0xc0] sm:$0xff]
        %v665 = vld [vmem:[#allocation2 + $0xc8] sm:$0xff]
        %v666 = vld [vmem:[#allocation2 + $0xd0] sm:$0xff]
        %v667 = vld [vmem:[#allocation2 + $0xd8] sm:$0xff]
        %v668 = vld [vmem:[#allocation2 + $0xe0] sm:$0xff]
        %v669 = vld [vmem:[#allocation2 + $0xe8] sm:$0xff]
        %v670 = vld [vmem:[#allocation2 + $0xf0] sm:$0xff]
        %v671 = vld [vmem:[#allocation2 + $0xf8] sm:$0xff]
        %v672 = vld [vmem:[#allocation2 + $0x100] sm:$0xff]
        %v673 = vld [vmem:[#allocation2 + $0x108] sm:$0xff]
        %v674 = vld [vmem:[#allocation2 + $0x110] sm:$0xff]
        %v675 = vld [vmem:[#allocation2 + $0x118] sm:$0xff]
        %v676 = vld [vmem:[#allocation2 + $0x120] sm:$0xff]
        %v677 = vld [vmem:[#allocation2 + $0x128] sm:$0xff]
        %v678 = vld [vmem:[#allocation2 + $0x130] sm:$0xff]
        %v679 = vld [vmem:[#allocation2 + $0x138] sm:$0xff]
        %v680 = vld [vmem:[#allocation2 + $0x140] sm:$0xff]
        %v681 = vld [vmem:[#allocation2 + $0x148] sm:$0xff]
        %v682 = vld [vmem:[#allocation2 + $0x150] sm:$0xff]
        %v683 = vld [vmem:[#allocation2 + $0x158] sm:$0xff]
        %v684 = vld [vmem:[#allocation2 + $0x160] sm:$0xff]
        %v685 = vld [vmem:[#allocation2 + $0x168] sm:$0xff]
        %v686 = vld [vmem:[#allocation2 + $0x170] sm:$0xff]
        %v687 = vld [vmem:[#allocation2 + $0x178] sm:$0xff]
        %v688 = vld [vmem:[#allocation2 + $0x180] sm:$0xff]
        %v689 = vld [vmem:[#allocation2 + $0x188] sm:$0xff]
        %v690 = vld [vmem:[#allocation2 + $0x190] sm:$0xff]
        %v691 = vld [vmem:[#allocation2 + $0x198] sm:$0xff]
        %v692 = vld [vmem:[#allocation2 + $0x1a0] sm:$0xff]
        %v693 = vld [vmem:[#allocation2 + $0x1a8] sm:$0xff]
        %v694 = vld [vmem:[#allocation2 + $0x1b0] sm:$0xff]
        %v695 = vld [vmem:[#allocation2 + $0x1b8] sm:$0xff]
        %v696 = vld [vmem:[#allocation2 + $0x1c0] sm:$0xff]
        %v697 = vld [vmem:[#allocation2 + $0x1c8] sm:$0xff]
        %v698 = vld [vmem:[#allocation2 + $0x1d0] sm:$0xff]
        %v699 = vld [vmem:[#allocation2 + $0x1d8] sm:$0xff]
        %v700 = vld [vmem:[#allocation2 + $0x1e0] sm:$0xff]
        %v701 = vld [vmem:[#allocation2 + $0x1e8] sm:$0xff]
        %v702 = vld [vmem:[#allocation2 + $0x1f0] sm:$0xff]
        %v703 = vld [vmem:[#allocation2 + $0x1f8] sm:$0xff]
        %v704 = vld [vmem:[#allocation2 + $0x200] sm:$0xff]
        %v705 = vld [vmem:[#allocation2 + $0x208] sm:$0xff]
        %v706 = vld [vmem:[#allocation2 + $0x210] sm:$0xff]
        %v707 = vld [vmem:[#allocation2 + $0x218] sm:$0xff]
        %v708 = vld [vmem:[#allocation2 + $0x220] sm:$0xff]
        %v709 = vld [vmem:[#allocation2 + $0x228] sm:$0xff]
        %v710 = vld [vmem:[#allocation2 + $0x230] sm:$0xff]
        %v711 = vld [vmem:[#allocation2 + $0x238] sm:$0xff]
        %v712 = vld [vmem:[#allocation2 + $0x240] sm:$0xff]
        %v713 = vld [vmem:[#allocation2 + $0x248] sm:$0xff]
        %v714 = vld [vmem:[#allocation2 + $0x250] sm:$0xff]
        %v715 = vld [vmem:[#allocation2 + $0x258] sm:$0xff]
        %v716 = vld [vmem:[#allocation2 + $0x260] sm:$0xff]
        %v717 = vld [vmem:[#allocation2 + $0x268] sm:$0xff]
        %v718 = vld [vmem:[#allocation2 + $0x270] sm:$0xff]
        %v719 = vld [vmem:[#allocation2 + $0x278] sm:$0xff]
        %v720 = vmax.f32 %v640, %v644
        %v721 = vmax.f32 %v641, %v645
        %v722 = vmax.f32 %v642, %v646
        %v723 = vmax.f32 %v643, %v647
        %v724 = vmax.f32 %v644, %v648
        %v725 = vmax.f32 %v645, %v649
        %v726 = vmax.f32 %v646, %v650
        %v727 = vmax.f32 %v647, %v651
        %v728 = vmax.f32 %v648, %v652
        %v729 = vmax.f32 %v649, %v653
        %v730 = vmax.f32 %v650, %v654
        %v731 = vmax.f32 %v651, %v655
        %v732 = vmax.f32 %v652, %v656
        %v733 = vmax.f32 %v653, %v657
        %v734 = vmax.f32 %v654, %v658
        %v735 = vmax.f32 %v655, %v659
        %v736 = vmax.f32 %v656, %v660
        %v737 = vmax.f32 %v657, %v661
        %v738 = vmax.f32 %v658, %v662
        %v739 = vmax.f32 %v659, %v663
        %v740 = vmax.f32 %v660, %v664
        %v741 = vmax.f32 %v661, %v665
        %v742 = vmax.f32 %v662, %v666
        %v743 = vmax.f32 %v663, %v667
        %v744 = vmax.f32 %v664, %v668
        %v745 = vmax.f32 %v665, %v669
        %v746 = vmax.f32 %v666, %v670
        %v747 = vmax.f32 %v667, %v671
        %v748 = vmax.f32 %v668, %v672
        %v749 = vmax.f32 %v669, %v673
        %v750 = vmax.f32 %v670, %v674
        %v751 = vmax.f32 %v671, %v675
        %v752 = vmax.f32 %v672, %v676
        %v753 = vmax.f32 %v673, %v677
        %v754 = vmax.f32 %v674, %v678
        %v755 = vmax.f32 %v675, %v679
        %v756 = vmax.f32 %v676, %v680
        %v757 = vmax.f32 %v677, %v681
        %v758 = vmax.f32 %v678, %v682
        %v759 = vmax.f32 %v679, %v683
        %v760 = vmax.f32 %v680, %v684
        %v761 = vmax.f32 %v681, %v685
        %v762 = vmax.f32 %v682, %v686
        %v763 = vmax.f32 %v683, %v687
        %v764 = vmax.f32 %v684, %v688
        %v765 = vmax.f32 %v685, %v689
        %v766 = vmax.f32 %v686, %v690
        %v767 = vmax.f32 %v687, %v691
        %v768 = vmax.f32 %v688, %v692
        %v769 = vmax.f32 %v689, %v693
        %v770 = vmax.f32 %v690, %v694
        %v771 = vmax.f32 %v691, %v695
        %v772 = vmax.f32 %v692, %v696
        %v773 = vmax.f32 %v693, %v697
        %v774 = vmax.f32 %v694, %v698
        %v775 = vmax.f32 %v695, %v699
        %v776 = vmax.f32 %v696, %v700
        %v777 = vmax.f32 %v697, %v701
        %v778 = vmax.f32 %v698, %v702
        %v779 = vmax.f32 %v699, %v703
        %v780 = vmax.f32 %v700, %v704
        %v781 = vmax.f32 %v701, %v705
        %v782 = vmax.f32 %v702, %v706
        %v783 = vmax.f32 %v703, %v707
        %v784 = vmax.f32 %v704, %v708
        %v785 = vmax.f32 %v705, %v709
        %v786 = vmax.f32 %v706, %v710
        %v787 = vmax.f32 %v707, %v711
        %v788 = vmax.f32 %v708, %v712
        %v789 = vmax.f32 %v709, %v713
        %v790 = vmax.f32 %v710, %v714
        %v791 = vmax.f32 %v711, %v715
        %v792 = vmax.f32 %v720, %v728
        %v793 = vmax.f32 %v721, %v729
        %v794 = vmax.f32 %v722, %v730
        %v795 = vmax.f32 %v723, %v731
        %v796 = vmax.f32 %v724, %v732
        %v797 = vmax.f32 %v725, %v733
        %v798 = vmax.f32 %v726, %v734
        %v799 = vmax.f32 %v727, %v735
        %v800 = vmax.f32 %v728, %v736
        %v801 = vmax.f32 %v729, %v737
        %v802 = vmax.f32 %v730, %v738
        %v803 = vmax.f32 %v731, %v739
        %v804 = vmax.f32 %v732, %v740
        %v805 = vmax.f32 %v733, %v741
        %v806 = vmax.f32 %v734, %v742
        %v807 = vmax.f32 %v735, %v743
        %v808 = vmax.f32 %v736, %v744
        %v809 = vmax.f32 %v737, %v745
        %v810 = vmax.f32 %v738, %v746
        %v811 = vmax.f32 %v739, %v747
        %v812 = vmax.f32 %v740, %v748
        %v813 = vmax.f32 %v741, %v749
        %v814 = vmax.f32 %v742, %v750
        %v815 = vmax.f32 %v743, %v751
        %v816 = vmax.f32 %v744, %v752
        %v817 = vmax.f32 %v745, %v753
        %v818 = vmax.f32 %v746, %v754
        %v819 = vmax.f32 %v747, %v755
        %v820 = vmax.f32 %v748, %v756
        %v821 = vmax.f32 %v749, %v757
        %v822 = vmax.f32 %v750, %v758
        %v823 = vmax.f32 %v751, %v759
        %v824 = vmax.f32 %v752, %v760
        %v825 = vmax.f32 %v753, %v761
        %v826 = vmax.f32 %v754, %v762
        %v827 = vmax.f32 %v755, %v763
        %v828 = vmax.f32 %v756, %v764
        %v829 = vmax.f32 %v757, %v765
        %v830 = vmax.f32 %v758, %v766
        %v831 = vmax.f32 %v759, %v767
        %v832 = vmax.f32 %v760, %v768
        %v833 = vmax.f32 %v761, %v769
        %v834 = vmax.f32 %v762, %v770
        %v835 = vmax.f32 %v763, %v771
        %v836 = vmax.f32 %v764, %v772
        %v837 = vmax.f32 %v765, %v773
        %v838 = vmax.f32 %v766, %v774
        %v839 = vmax.f32 %v767, %v775
        %v840 = vmax.f32 %v768, %v776
        %v841 = vmax.f32 %v769, %v777
        %v842 = vmax.f32 %v770, %v778
        %v843 = vmax.f32 %v771, %v779
        %v844 = vmax.f32 %v772, %v780
        %v845 = vmax.f32 %v773, %v781
        %v846 = vmax.f32 %v774, %v782
        %v847 = vmax.f32 %v775, %v783
        %v848 = vmax.f32 %v776, %v784
        %v849 = vmax.f32 %v777, %v785
        %v850 = vmax.f32 %v778, %v786
        %v851 = vmax.f32 %v779, %v787
        %v852 = vmax.f32 %v780, %v788
        %v853 = vmax.f32 %v781, %v789
        %v854 = vmax.f32 %v782, %v790
        %v855 = vmax.f32 %v783, %v791
        %v856 = vmax.f32 %v792, %v656
        %v857 = vmax.f32 %v793, %v657
        %v858 = vmax.f32 %v794, %v658
        %v859 = vmax.f32 %v795, %v659
        %v860 = vmax.f32 %v796, %v660
        %v861 = vmax.f32 %v797, %v661
        %v862 = vmax.f32 %v798, %v662
        %v863 = vmax.f32 %v799, %v663
        %v864 = vmax.f32 %v800, %v664
        %v865 = vmax.f32 %v801, %v665
        %v866 = vmax.f32 %v802, %v666
        %v867 = vmax.f32 %v803, %v667
        %v868 = vmax.f32 %v804, %v668
        %v869 = vmax.f32 %v805, %v669
        %v870 = vmax.f32 %v806, %v670
        %v871 = vmax.f32 %v807, %v671
        %v872 = vmax.f32 %v808, %v672
        %v873 = vmax.f32 %v809, %v673
        %v874 = vmax.f32 %v810, %v674
        %v875 = vmax.f32 %v811, %v675
        %v876 = vmax.f32 %v812, %v676
        %v877 = vmax.f32 %v813, %v677
        %v878 = vmax.f32 %v814, %v678
        %v879 = vmax.f32 %v815, %v679
        %v880 = vmax.f32 %v816, %v680
        %v881 = vmax.f32 %v817, %v681
        %v882 = vmax.f32 %v818, %v682
        %v883 = vmax.f32 %v819, %v683
        %v884 = vmax.f32 %v820, %v684
        %v885 = vmax.f32 %v821, %v685
        %v886 = vmax.f32 %v822, %v686
        %v887 = vmax.f32 %v823, %v687
        %v888 = vmax.f32 %v824, %v688
        %v889 = vmax.f32 %v825, %v689
        %v890 = vmax.f32 %v826, %v690
        %v891 = vmax.f32 %v827, %v691
        %v892 = vmax.f32 %v828, %v692
        %v893 = vmax.f32 %v829, %v693
        %v894 = vmax.f32 %v830, %v694
        %v895 = vmax.f32 %v831, %v695
        %v896 = vmax.f32 %v832, %v696
        %v897 = vmax.f32 %v833, %v697
        %v898 = vmax.f32 %v834, %v698
        %v899 = vmax.f32 %v835, %v699
        %v900 = vmax.f32 %v836, %v700
        %v901 = vmax.f32 %v837, %v701
        %v902 = vmax.f32 %v838, %v702
        %v903 = vmax.f32 %v839, %v703
        %v904 = vmax.f32 %v840, %v704
        %v905 = vmax.f32 %v841, %v705
        %v906 = vmax.f32 %v842, %v706
        %v907 = vmax.f32 %v843, %v707
        %v908 = vmax.f32 %v844, %v708
        %v909 = vmax.f32 %v845, %v709
        %v910 = vmax.f32 %v846, %v710
        %v911 = vmax.f32 %v847, %v711
        %v912 = vmax.f32 %v848, %v712
        %v913 = vmax.f32 %v849, %v713
        %v914 = vmax.f32 %v850, %v714
        %v915 = vmax.f32 %v851, %v715
        %v916 = vmax.f32 %v852, %v716
        %v917 = vmax.f32 %v853, %v717
        %v918 = vmax.f32 %v854, %v718
        %v919 = vmax.f32 %v855, %v719
        %v920 = vrot.slane %v856, 1
        %v921 = vrot.slane %v860, 1
        %v922 = vrot.slane %v864, 1
        %v923 = vrot.slane %v868, 1
        %v924 = vrot.slane %v872, 1
        %v925 = vrot.slane %v876, 1
        %v926 = vrot.slane %v880, 1
        %v927 = vrot.slane %v884, 1
        %v928 = vrot.slane %v888, 1
        %v929 = vrot.slane %v892, 1
        %v930 = vrot.slane %v896, 1
        %v931 = vrot.slane %v900, 1
        %v932 = vrot.slane %v904, 1
        %v933 = vrot.slane %v908, 1
        %v934 = vrot.slane %v912, 1
        %v935 = vrot.slane %v916, 1
        %v936 = vrot.slane %v857, 1
        %v937 = vrot.slane %v861, 1
        %v938 = vrot.slane %v865, 1
        %v939 = vrot.slane %v869, 1
        %v940 = vrot.slane %v873, 1
        %v941 = vrot.slane %v877, 1
        %v942 = vrot.slane %v881, 1
        %v943 = vrot.slane %v885, 1
        %v944 = vrot.slane %v889, 1
        %v945 = vrot.slane %v893, 1
        %v946 = vrot.slane %v897, 1
        %v947 = vrot.slane %v901, 1
        %v948 = vrot.slane %v905, 1
        %v949 = vrot.slane %v909, 1
        %v950 = vrot.slane %v913, 1
        %v951 = vrot.slane %v917, 1
        %v952 = vrot.slane %v858, 1
        %v953 = vrot.slane %v862, 1
        %v954 = vrot.slane %v866, 1
        %v955 = vrot.slane %v870, 1
        %v956 = vrot.slane %v874, 1
        %v957 = vrot.slane %v878, 1
        %v958 = vrot.slane %v882, 1
        %v959 = vrot.slane %v886, 1
        %v960 = vrot.slane %v890, 1
        %v961 = vrot.slane %v894, 1
        %v962 = vrot.slane %v898, 1
        %v963 = vrot.slane %v902, 1
        %v964 = vrot.slane %v906, 1
        %v965 = vrot.slane %v910, 1
        %v966 = vrot.slane %v914, 1
        %v967 = vrot.slane %v918, 1
        %v968 = vrot.slane %v859, 1
        %v969 = vrot.slane %v863, 1
        %v970 = vrot.slane %v867, 1
        %v971 = vrot.slane %v871, 1
        %v972 = vrot.slane %v875, 1
        %v973 = vrot.slane %v879, 1
        %v974 = vrot.slane %v883, 1
        %v975 = vrot.slane %v887, 1
        %v976 = vrot.slane %v891, 1
        %v977 = vrot.slane %v895, 1
        %v978 = vrot.slane %v899, 1
        %v979 = vrot.slane %v903, 1
        %v980 = vrot.slane %v907, 1
        %v981 = vrot.slane %v911, 1
        %v982 = vrot.slane %v915, 1
        %v983 = vrot.slane %v919, 1
        %v984 = vlaneseq
        %v985 = vshrl.u32 %v984, 7
        %vm986 = vcmp.lt.s32.totalorder %v985, 7
        %v987 = vsel %vm986, %v952, %v968
        %v988 = vsel %vm986, %v953, %v969
        %v989 = vsel %vm986, %v954, %v970
        %v990 = vsel %vm986, %v955, %v971
        %v991 = vsel %vm986, %v956, %v972
        %v992 = vsel %vm986, %v957, %v973
        %v993 = vsel %vm986, %v958, %v974
        %v994 = vsel %vm986, %v959, %v975
        %v995 = vsel %vm986, %v960, %v976
        %v996 = vsel %vm986, %v961, %v977
        %v997 = vsel %vm986, %v962, %v978
        %v998 = vsel %vm986, %v963, %v979
        %v999 = vsel %vm986, %v964, %v980
        %v1000 = vsel %vm986, %v965, %v981
        %v1001 = vsel %vm986, %v966, %v982
        %v1002 = vsel %vm986, %v967, %v983
        %v1003 = vsel %vm986, %v936, %v952
        %v1004 = vsel %vm986, %v937, %v953
        %v1005 = vsel %vm986, %v938, %v954
        %v1006 = vsel %vm986, %v939, %v955
        %v1007 = vsel %vm986, %v940, %v956
        %v1008 = vsel %vm986, %v941, %v957
        %v1009 = vsel %vm986, %v942, %v958
        %v1010 = vsel %vm986, %v943, %v959
        %v1011 = vsel %vm986, %v944, %v960
        %v1012 = vsel %vm986, %v945, %v961
        %v1013 = vsel %vm986, %v946, %v962
        %v1014 = vsel %vm986, %v947, %v963
        %v1015 = vsel %vm986, %v948, %v964
        %v1016 = vsel %vm986, %v949, %v965
        %v1017 = vsel %vm986, %v950, %v966
        %v1018 = vsel %vm986, %v951, %v967
        %v1019 = vsel %vm986, %v920, %v936
        %v1020 = vsel %vm986, %v921, %v937
        %v1021 = vsel %vm986, %v922, %v938
        %v1022 = vsel %vm986, %v923, %v939
        %v1023 = vsel %vm986, %v924, %v940
        %v1024 = vsel %vm986, %v925, %v941
        %v1025 = vsel %vm986, %v926, %v942
        %v1026 = vsel %vm986, %v927, %v943
        %v1027 = vsel %vm986, %v928, %v944
        %v1028 = vsel %vm986, %v929, %v945
        %v1029 = vsel %vm986, %v930, %v946
        %v1030 = vsel %vm986, %v931, %v947
        %v1031 = vsel %vm986, %v932, %v948
        %v1032 = vsel %vm986, %v933, %v949
        %v1033 = vsel %vm986, %v934, %v950
        %v1034 = vsel %vm986, %v935, %v951
        %v1035 = vsel %vm986, %v968, %v920
        %v1036 = vsel %vm986, %v969, %v921
        %v1037 = vsel %vm986, %v970, %v922
        %v1038 = vsel %vm986, %v971, %v923
        %v1039 = vsel %vm986, %v972, %v924
        %v1040 = vsel %vm986, %v973, %v925
        %v1041 = vsel %vm986, %v974, %v926
        %v1042 = vsel %vm986, %v975, %v927
        %v1043 = vsel %vm986, %v976, %v928
        %v1044 = vsel %vm986, %v977, %v929
        %v1045 = vsel %vm986, %v978, %v930
        %v1046 = vsel %vm986, %v979, %v931
        %v1047 = vsel %vm986, %v980, %v932
        %v1048 = vsel %vm986, %v981, %v933
        %v1049 = vsel %vm986, %v982, %v934
        %v1050 = vsel %vm986, %v983, %v935
        %v1051 = vmax.f32 %v856, %v1019
        %v1052 = vmax.f32 %v857, %v1003
        %v1053 = vmax.f32 %v858, %v987
        %v1054 = vmax.f32 %v859, %v1035
        %v1055 = vmax.f32 %v860, %v1020
        %v1056 = vmax.f32 %v861, %v1004
        %v1057 = vmax.f32 %v862, %v988
        %v1058 = vmax.f32 %v863, %v1036
        %v1059 = vmax.f32 %v864, %v1021
        %v1060 = vmax.f32 %v865, %v1005
        %v1061 = vmax.f32 %v866, %v989
        %v1062 = vmax.f32 %v867, %v1037
        %v1063 = vmax.f32 %v868, %v1022
        %v1064 = vmax.f32 %v869, %v1006
        %v1065 = vmax.f32 %v870, %v990
        %v1066 = vmax.f32 %v871, %v1038
        %v1067 = vmax.f32 %v872, %v1023
        %v1068 = vmax.f32 %v873, %v1007
        %v1069 = vmax.f32 %v874, %v991
        %v1070 = vmax.f32 %v875, %v1039
        %v1071 = vmax.f32 %v876, %v1024
        %v1072 = vmax.f32 %v877, %v1008
        %v1073 = vmax.f32 %v878, %v992
        %v1074 = vmax.f32 %v879, %v1040
        %v1075 = vmax.f32 %v880, %v1025
        %v1076 = vmax.f32 %v881, %v1009
        %v1077 = vmax.f32 %v882, %v993
        %v1078 = vmax.f32 %v883, %v1041
        %v1079 = vmax.f32 %v884, %v1026
        %v1080 = vmax.f32 %v885, %v1010
        %v1081 = vmax.f32 %v886, %v994
        %v1082 = vmax.f32 %v887, %v1042
        %v1083 = vmax.f32 %v888, %v1027
        %v1084 = vmax.f32 %v889, %v1011
        %v1085 = vmax.f32 %v890, %v995
        %v1086 = vmax.f32 %v891, %v1043
        %v1087 = vmax.f32 %v892, %v1028
        %v1088 = vmax.f32 %v893, %v1012
        %v1089 = vmax.f32 %v894, %v996
        %v1090 = vmax.f32 %v895, %v1044
        %v1091 = vmax.f32 %v896, %v1029
        %v1092 = vmax.f32 %v897, %v1013
        %v1093 = vmax.f32 %v898, %v997
        %v1094 = vmax.f32 %v899, %v1045
        %v1095 = vmax.f32 %v900, %v1030
        %v1096 = vmax.f32 %v901, %v1014
        %v1097 = vmax.f32 %v902, %v998
        %v1098 = vmax.f32 %v903, %v1046
        %v1099 = vmax.f32 %v904, %v1031
        %v1100 = vmax.f32 %v905, %v1015
        %v1101 = vmax.f32 %v906, %v999
        %v1102 = vmax.f32 %v907, %v1047
        %v1103 = vmax.f32 %v908, %v1032
        %v1104 = vmax.f32 %v909, %v1016
        %v1105 = vmax.f32 %v910, %v1000
        %v1106 = vmax.f32 %v911, %v1048
        %v1107 = vmax.f32 %v912, %v1033
        %v1108 = vmax.f32 %v913, %v1017
        %v1109 = vmax.f32 %v914, %v1001
        %v1110 = vmax.f32 %v915, %v1049
        %v1111 = vmax.f32 %v916, %v1034
        %v1112 = vmax.f32 %v917, %v1018
        %v1113 = vmax.f32 %v918, %v1002
        %v1114 = vmax.f32 %v919, %v1050
        %v1115 = vrot.slane %v1051, 2
        %v1116 = vrot.slane %v1055, 2
        %v1117 = vrot.slane %v1059, 2
        %v1118 = vrot.slane %v1063, 2
        %v1119 = vrot.slane %v1067, 2
        %v1120 = vrot.slane %v1071, 2
        %v1121 = vrot.slane %v1075, 2
        %v1122 = vrot.slane %v1079, 2
        %v1123 = vrot.slane %v1083, 2
        %v1124 = vrot.slane %v1087, 2
        %v1125 = vrot.slane %v1091, 2
        %v1126 = vrot.slane %v1095, 2
        %v1127 = vrot.slane %v1099, 2
        %v1128 = vrot.slane %v1103, 2
        %v1129 = vrot.slane %v1107, 2
        %v1130 = vrot.slane %v1111, 2
        %v1131 = vrot.slane %v1052, 2
        %v1132 = vrot.slane %v1056, 2
        %v1133 = vrot.slane %v1060, 2
        %v1134 = vrot.slane %v1064, 2
        %v1135 = vrot.slane %v1068, 2
        %v1136 = vrot.slane %v1072, 2
        %v1137 = vrot.slane %v1076, 2
        %v1138 = vrot.slane %v1080, 2
        %v1139 = vrot.slane %v1084, 2
        %v1140 = vrot.slane %v1088, 2
        %v1141 = vrot.slane %v1092, 2
        %v1142 = vrot.slane %v1096, 2
        %v1143 = vrot.slane %v1100, 2
        %v1144 = vrot.slane %v1104, 2
        %v1145 = vrot.slane %v1108, 2
        %v1146 = vrot.slane %v1112, 2
        %v1147 = vrot.slane %v1053, 2
        %v1148 = vrot.slane %v1057, 2
        %v1149 = vrot.slane %v1061, 2
        %v1150 = vrot.slane %v1065, 2
        %v1151 = vrot.slane %v1069, 2
        %v1152 = vrot.slane %v1073, 2
        %v1153 = vrot.slane %v1077, 2
        %v1154 = vrot.slane %v1081, 2
        %v1155 = vrot.slane %v1085, 2
        %v1156 = vrot.slane %v1089, 2
        %v1157 = vrot.slane %v1093, 2
        %v1158 = vrot.slane %v1097, 2
        %v1159 = vrot.slane %v1101, 2
        %v1160 = vrot.slane %v1105, 2
        %v1161 = vrot.slane %v1109, 2
        %v1162 = vrot.slane %v1113, 2
        %v1163 = vrot.slane %v1054, 2
        %v1164 = vrot.slane %v1058, 2
        %v1165 = vrot.slane %v1062, 2
        %v1166 = vrot.slane %v1066, 2
        %v1167 = vrot.slane %v1070, 2
        %v1168 = vrot.slane %v1074, 2
        %v1169 = vrot.slane %v1078, 2
        %v1170 = vrot.slane %v1082, 2
        %v1171 = vrot.slane %v1086, 2
        %v1172 = vrot.slane %v1090, 2
        %v1173 = vrot.slane %v1094, 2
        %v1174 = vrot.slane %v1098, 2
        %v1175 = vrot.slane %v1102, 2
        %v1176 = vrot.slane %v1106, 2
        %v1177 = vrot.slane %v1110, 2
        %v1178 = vrot.slane %v1114, 2
        %vm1179 = vcmp.lt.s32.totalorder %v985, 6
        %v1180 = vsel %vm1179, %v1147, %v1163
        %v1181 = vsel %vm1179, %v1148, %v1164
        %v1182 = vsel %vm1179, %v1149, %v1165
        %v1183 = vsel %vm1179, %v1150, %v1166
        %v1184 = vsel %vm1179, %v1151, %v1167
        %v1185 = vsel %vm1179, %v1152, %v1168
        %v1186 = vsel %vm1179, %v1153, %v1169
        %v1187 = vsel %vm1179, %v1154, %v1170
        %v1188 = vsel %vm1179, %v1155, %v1171
        %v1189 = vsel %vm1179, %v1156, %v1172
        %v1190 = vsel %vm1179, %v1157, %v1173
        %v1191 = vsel %vm1179, %v1158, %v1174
        %v1192 = vsel %vm1179, %v1159, %v1175
        %v1193 = vsel %vm1179, %v1160, %v1176
        %v1194 = vsel %vm1179, %v1161, %v1177
        %v1195 = vsel %vm1179, %v1162, %v1178
        %v1196 = vsel %vm1179, %v1131, %v1147
        %v1197 = vsel %vm1179, %v1132, %v1148
        %v1198 = vsel %vm1179, %v1133, %v1149
        %v1199 = vsel %vm1179, %v1134, %v1150
        %v1200 = vsel %vm1179, %v1135, %v1151
        %v1201 = vsel %vm1179, %v1136, %v1152
        %v1202 = vsel %vm1179, %v1137, %v1153
        %v1203 = vsel %vm1179, %v1138, %v1154
        %v1204 = vsel %vm1179, %v1139, %v1155
        %v1205 = vsel %vm1179, %v1140, %v1156
        %v1206 = vsel %vm1179, %v1141, %v1157
        %v1207 = vsel %vm1179, %v1142, %v1158
        %v1208 = vsel %vm1179, %v1143, %v1159
        %v1209 = vsel %vm1179, %v1144, %v1160
        %v1210 = vsel %vm1179, %v1145, %v1161
        %v1211 = vsel %vm1179, %v1146, %v1162
        %v1212 = vsel %vm1179, %v1115, %v1131
        %v1213 = vsel %vm1179, %v1116, %v1132
        %v1214 = vsel %vm1179, %v1117, %v1133
        %v1215 = vsel %vm1179, %v1118, %v1134
        %v1216 = vsel %vm1179, %v1119, %v1135
        %v1217 = vsel %vm1179, %v1120, %v1136
        %v1218 = vsel %vm1179, %v1121, %v1137
        %v1219 = vsel %vm1179, %v1122, %v1138
        %v1220 = vsel %vm1179, %v1123, %v1139
        %v1221 = vsel %vm1179, %v1124, %v1140
        %v1222 = vsel %vm1179, %v1125, %v1141
        %v1223 = vsel %vm1179, %v1126, %v1142
        %v1224 = vsel %vm1179, %v1127, %v1143
        %v1225 = vsel %vm1179, %v1128, %v1144
        %v1226 = vsel %vm1179, %v1129, %v1145
        %v1227 = vsel %vm1179, %v1130, %v1146
        %v1228 = vmax.f32 %v1051, %v1212
        %v1229 = vmax.f32 %v1052, %v1196
        %v1230 = vmax.f32 %v1053, %v1180
        %v1231 = vmax.f32 %v1055, %v1213
        %v1232 = vmax.f32 %v1056, %v1197
        %v1233 = vmax.f32 %v1057, %v1181
        %v1234 = vmax.f32 %v1059, %v1214
        %v1235 = vmax.f32 %v1060, %v1198
        %v1236 = vmax.f32 %v1061, %v1182
        %v1237 = vmax.f32 %v1063, %v1215
        %v1238 = vmax.f32 %v1064, %v1199
        %v1239 = vmax.f32 %v1065, %v1183
        %v1240 = vmax.f32 %v1067, %v1216
        %v1241 = vmax.f32 %v1068, %v1200
        %v1242 = vmax.f32 %v1069, %v1184
        %v1243 = vmax.f32 %v1071, %v1217
        %v1244 = vmax.f32 %v1072, %v1201
        %v1245 = vmax.f32 %v1073, %v1185
        %v1246 = vmax.f32 %v1075, %v1218
        %v1247 = vmax.f32 %v1076, %v1202
        %v1248 = vmax.f32 %v1077, %v1186
        %v1249 = vmax.f32 %v1079, %v1219
        %v1250 = vmax.f32 %v1080, %v1203
        %v1251 = vmax.f32 %v1081, %v1187
        %v1252 = vmax.f32 %v1083, %v1220
        %v1253 = vmax.f32 %v1084, %v1204
        %v1254 = vmax.f32 %v1085, %v1188
        %v1255 = vmax.f32 %v1087, %v1221
        %v1256 = vmax.f32 %v1088, %v1205
        %v1257 = vmax.f32 %v1089, %v1189
        %v1258 = vmax.f32 %v1091, %v1222
        %v1259 = vmax.f32 %v1092, %v1206
        %v1260 = vmax.f32 %v1093, %v1190
        %v1261 = vmax.f32 %v1095, %v1223
        %v1262 = vmax.f32 %v1096, %v1207
        %v1263 = vmax.f32 %v1097, %v1191
        %v1264 = vmax.f32 %v1099, %v1224
        %v1265 = vmax.f32 %v1100, %v1208
        %v1266 = vmax.f32 %v1101, %v1192
        %v1267 = vmax.f32 %v1103, %v1225
        %v1268 = vmax.f32 %v1104, %v1209
        %v1269 = vmax.f32 %v1105, %v1193
        %v1270 = vmax.f32 %v1107, %v1226
        %v1271 = vmax.f32 %v1108, %v1210
        %v1272 = vmax.f32 %v1109, %v1194
        %v1273 = vmax.f32 %v1111, %v1227
        %v1274 = vmax.f32 %v1112, %v1211
        %v1275 = vmax.f32 %v1113, %v1195
        %v1276 = vrot.slane %v856, 4
        %v1277 = vrot.slane %v860, 4
        %v1278 = vrot.slane %v864, 4
        %v1279 = vrot.slane %v868, 4
        %v1280 = vrot.slane %v872, 4
        %v1281 = vrot.slane %v876, 4
        %v1282 = vrot.slane %v880, 4
        %v1283 = vrot.slane %v884, 4
        %v1284 = vrot.slane %v888, 4
        %v1285 = vrot.slane %v892, 4
        %v1286 = vrot.slane %v896, 4
        %v1287 = vrot.slane %v900, 4
        %v1288 = vrot.slane %v904, 4
        %v1289 = vrot.slane %v908, 4
        %v1290 = vrot.slane %v912, 4
        %v1291 = vrot.slane %v916, 4
        %v1292 = vrot.slane %v857, 4
        %v1293 = vrot.slane %v861, 4
        %v1294 = vrot.slane %v865, 4
        %v1295 = vrot.slane %v869, 4
        %v1296 = vrot.slane %v873, 4
        %v1297 = vrot.slane %v877, 4
        %v1298 = vrot.slane %v881, 4
        %v1299 = vrot.slane %v885, 4
        %v1300 = vrot.slane %v889, 4
        %v1301 = vrot.slane %v893, 4
        %v1302 = vrot.slane %v897, 4
        %v1303 = vrot.slane %v901, 4
        %v1304 = vrot.slane %v905, 4
        %v1305 = vrot.slane %v909, 4
        %v1306 = vrot.slane %v913, 4
        %v1307 = vrot.slane %v917, 4
        %v1308 = vrot.slane %v858, 4
        %v1309 = vrot.slane %v862, 4
        %v1310 = vrot.slane %v866, 4
        %v1311 = vrot.slane %v870, 4
        %v1312 = vrot.slane %v874, 4
        %v1313 = vrot.slane %v878, 4
        %v1314 = vrot.slane %v882, 4
        %v1315 = vrot.slane %v886, 4
        %v1316 = vrot.slane %v890, 4
        %v1317 = vrot.slane %v894, 4
        %v1318 = vrot.slane %v898, 4
        %v1319 = vrot.slane %v902, 4
        %v1320 = vrot.slane %v906, 4
        %v1321 = vrot.slane %v910, 4
        %v1322 = vrot.slane %v914, 4
        %v1323 = vrot.slane %v918, 4
        %v1324 = vrot.slane %v859, 4
        %v1325 = vrot.slane %v863, 4
        %v1326 = vrot.slane %v867, 4
        %v1327 = vrot.slane %v871, 4
        %v1328 = vrot.slane %v875, 4
        %v1329 = vrot.slane %v879, 4
        %v1330 = vrot.slane %v883, 4
        %v1331 = vrot.slane %v887, 4
        %v1332 = vrot.slane %v891, 4
        %v1333 = vrot.slane %v895, 4
        %v1334 = vrot.slane %v899, 4
        %v1335 = vrot.slane %v903, 4
        %v1336 = vrot.slane %v907, 4
        %v1337 = vrot.slane %v911, 4
        %v1338 = vrot.slane %v915, 4
        %v1339 = vrot.slane %v919, 4
        %vm1340 = vcmp.lt.s32.totalorder %v985, 4
        %v1341 = vsel %vm1340, %v1308, %v1324
        %v1342 = vsel %vm1340, %v1309, %v1325
        %v1343 = vsel %vm1340, %v1310, %v1326
        %v1344 = vsel %vm1340, %v1311, %v1327
        %v1345 = vsel %vm1340, %v1312, %v1328
        %v1346 = vsel %vm1340, %v1313, %v1329
        %v1347 = vsel %vm1340, %v1314, %v1330
        %v1348 = vsel %vm1340, %v1315, %v1331
        %v1349 = vsel %vm1340, %v1316, %v1332
        %v1350 = vsel %vm1340, %v1317, %v1333
        %v1351 = vsel %vm1340, %v1318, %v1334
        %v1352 = vsel %vm1340, %v1319, %v1335
        %v1353 = vsel %vm1340, %v1320, %v1336
        %v1354 = vsel %vm1340, %v1321, %v1337
        %v1355 = vsel %vm1340, %v1322, %v1338
        %v1356 = vsel %vm1340, %v1323, %v1339
        %v1357 = vsel %vm1340, %v1292, %v1308
        %v1358 = vsel %vm1340, %v1293, %v1309
        %v1359 = vsel %vm1340, %v1294, %v1310
        %v1360 = vsel %vm1340, %v1295, %v1311
        %v1361 = vsel %vm1340, %v1296, %v1312
        %v1362 = vsel %vm1340, %v1297, %v1313
        %v1363 = vsel %vm1340, %v1298, %v1314
        %v1364 = vsel %vm1340, %v1299, %v1315
        %v1365 = vsel %vm1340, %v1300, %v1316
        %v1366 = vsel %vm1340, %v1301, %v1317
        %v1367 = vsel %vm1340, %v1302, %v1318
        %v1368 = vsel %vm1340, %v1303, %v1319
        %v1369 = vsel %vm1340, %v1304, %v1320
        %v1370 = vsel %vm1340, %v1305, %v1321
        %v1371 = vsel %vm1340, %v1306, %v1322
        %v1372 = vsel %vm1340, %v1307, %v1323
        %v1373 = vsel %vm1340, %v1276, %v1292
        %v1374 = vsel %vm1340, %v1277, %v1293
        %v1375 = vsel %vm1340, %v1278, %v1294
        %v1376 = vsel %vm1340, %v1279, %v1295
        %v1377 = vsel %vm1340, %v1280, %v1296
        %v1378 = vsel %vm1340, %v1281, %v1297
        %v1379 = vsel %vm1340, %v1282, %v1298
        %v1380 = vsel %vm1340, %v1283, %v1299
        %v1381 = vsel %vm1340, %v1284, %v1300
        %v1382 = vsel %vm1340, %v1285, %v1301
        %v1383 = vsel %vm1340, %v1286, %v1302
        %v1384 = vsel %vm1340, %v1287, %v1303
        %v1385 = vsel %vm1340, %v1288, %v1304
        %v1386 = vsel %vm1340, %v1289, %v1305
        %v1387 = vsel %vm1340, %v1290, %v1306
        %v1388 = vsel %vm1340, %v1291, %v1307
        %v1389 = vmax.f32 %v1228, %v1373
        %v1390 = vmax.f32 %v1229, %v1357
        %v1391 = vmax.f32 %v1230, %v1341
        %v1392 = vmax.f32 %v1231, %v1374
        %v1393 = vmax.f32 %v1232, %v1358
        %v1394 = vmax.f32 %v1233, %v1342
        %v1395 = vmax.f32 %v1234, %v1375
        %v1396 = vmax.f32 %v1235, %v1359
        %v1397 = vmax.f32 %v1236, %v1343
        %v1398 = vmax.f32 %v1237, %v1376
        %v1399 = vmax.f32 %v1238, %v1360
        %v1400 = vmax.f32 %v1239, %v1344
        %v1401 = vmax.f32 %v1240, %v1377
        %v1402 = vmax.f32 %v1241, %v1361
        %v1403 = vmax.f32 %v1242, %v1345
        %v1404 = vmax.f32 %v1243, %v1378
        %v1405 = vmax.f32 %v1244, %v1362
        %v1406 = vmax.f32 %v1245, %v1346
        %v1407 = vmax.f32 %v1246, %v1379
        %v1408 = vmax.f32 %v1247, %v1363
        %v1409 = vmax.f32 %v1248, %v1347
        %v1410 = vmax.f32 %v1249, %v1380
        %v1411 = vmax.f32 %v1250, %v1364
        %v1412 = vmax.f32 %v1251, %v1348
        %v1413 = vmax.f32 %v1252, %v1381
        %v1414 = vmax.f32 %v1253, %v1365
        %v1415 = vmax.f32 %v1254, %v1349
        %v1416 = vmax.f32 %v1255, %v1382
        %v1417 = vmax.f32 %v1256, %v1366
        %v1418 = vmax.f32 %v1257, %v1350
        %v1419 = vmax.f32 %v1258, %v1383
        %v1420 = vmax.f32 %v1259, %v1367
        %v1421 = vmax.f32 %v1260, %v1351
        %v1422 = vmax.f32 %v1261, %v1384
        %v1423 = vmax.f32 %v1262, %v1368
        %v1424 = vmax.f32 %v1263, %v1352
        %v1425 = vmax.f32 %v1264, %v1385
        %v1426 = vmax.f32 %v1265, %v1369
        %v1427 = vmax.f32 %v1266, %v1353
        %v1428 = vmax.f32 %v1267, %v1386
        %v1429 = vmax.f32 %v1268, %v1370
        %v1430 = vmax.f32 %v1269, %v1354
        %v1431 = vmax.f32 %v1270, %v1387
        %v1432 = vmax.f32 %v1271, %v1371
        %v1433 = vmax.f32 %v1272, %v1355
        %v1434 = vmax.f32 %v1273, %v1388
        %v1435 = vmax.f32 %v1274, %v1372
        %v1436 = vmax.f32 %v1275, %v1356
        %v1437 = vrot.slane %v1389, 6
        %v1438 = vrot.slane %v1392, 6
        %v1439 = vrot.slane %v1395, 6
        %v1440 = vrot.slane %v1398, 6
        %v1441 = vrot.slane %v1401, 6
        %v1442 = vrot.slane %v1404, 6
        %v1443 = vrot.slane %v1407, 6
        %v1444 = vrot.slane %v1410, 6
        %v1445 = vrot.slane %v1413, 6
        %v1446 = vrot.slane %v1416, 6
        %v1447 = vrot.slane %v1419, 6
        %v1448 = vrot.slane %v1422, 6
        %v1449 = vrot.slane %v1425, 6
        %v1450 = vrot.slane %v1428, 6
        %v1451 = vrot.slane %v1431, 6
        %v1452 = vrot.slane %v1434, 6
        %v1453 = vrot.slane %v1390, 6
        %v1454 = vrot.slane %v1393, 6
        %v1455 = vrot.slane %v1396, 6
        %v1456 = vrot.slane %v1399, 6
        %v1457 = vrot.slane %v1402, 6
        %v1458 = vrot.slane %v1405, 6
        %v1459 = vrot.slane %v1408, 6
        %v1460 = vrot.slane %v1411, 6
        %v1461 = vrot.slane %v1414, 6
        %v1462 = vrot.slane %v1417, 6
        %v1463 = vrot.slane %v1420, 6
        %v1464 = vrot.slane %v1423, 6
        %v1465 = vrot.slane %v1426, 6
        %v1466 = vrot.slane %v1429, 6
        %v1467 = vrot.slane %v1432, 6
        %v1468 = vrot.slane %v1435, 6
        %v1469 = vrot.slane %v1391, 6
        %v1470 = vrot.slane %v1394, 6
        %v1471 = vrot.slane %v1397, 6
        %v1472 = vrot.slane %v1400, 6
        %v1473 = vrot.slane %v1403, 6
        %v1474 = vrot.slane %v1406, 6
        %v1475 = vrot.slane %v1409, 6
        %v1476 = vrot.slane %v1412, 6
        %v1477 = vrot.slane %v1415, 6
        %v1478 = vrot.slane %v1418, 6
        %v1479 = vrot.slane %v1421, 6
        %v1480 = vrot.slane %v1424, 6
        %v1481 = vrot.slane %v1427, 6
        %v1482 = vrot.slane %v1430, 6
        %v1483 = vrot.slane %v1433, 6
        %v1484 = vrot.slane %v1436, 6
        %vm1485 = vcmp.lt.s32.totalorder %v985, 2
        %v1486 = vsel %vm1485, %v1453, %v1469
        %v1487 = vsel %vm1485, %v1454, %v1470
        %v1488 = vsel %vm1485, %v1455, %v1471
        %v1489 = vsel %vm1485, %v1456, %v1472
        %v1490 = vsel %vm1485, %v1457, %v1473
        %v1491 = vsel %vm1485, %v1458, %v1474
        %v1492 = vsel %vm1485, %v1459, %v1475
        %v1493 = vsel %vm1485, %v1460, %v1476
        %v1494 = vsel %vm1485, %v1461, %v1477
        %v1495 = vsel %vm1485, %v1462, %v1478
        %v1496 = vsel %vm1485, %v1463, %v1479
        %v1497 = vsel %vm1485, %v1464, %v1480
        %v1498 = vsel %vm1485, %v1465, %v1481
        %v1499 = vsel %vm1485, %v1466, %v1482
        %v1500 = vsel %vm1485, %v1467, %v1483
        %v1501 = vsel %vm1485, %v1468, %v1484
        %v1502 = vsel %vm1485, %v1437, %v1453
        %v1503 = vsel %vm1485, %v1438, %v1454
        %v1504 = vsel %vm1485, %v1439, %v1455
        %v1505 = vsel %vm1485, %v1440, %v1456
        %v1506 = vsel %vm1485, %v1441, %v1457
        %v1507 = vsel %vm1485, %v1442, %v1458
        %v1508 = vsel %vm1485, %v1443, %v1459
        %v1509 = vsel %vm1485, %v1444, %v1460
        %v1510 = vsel %vm1485, %v1445, %v1461
        %v1511 = vsel %vm1485, %v1446, %v1462
        %v1512 = vsel %vm1485, %v1447, %v1463
        %v1513 = vsel %vm1485, %v1448, %v1464
        %v1514 = vsel %vm1485, %v1449, %v1465
        %v1515 = vsel %vm1485, %v1450, %v1466
        %v1516 = vsel %vm1485, %v1451, %v1467
        %v1517 = vsel %vm1485, %v1452, %v1468
        %v1518 = vpack.c.bf16 %v1486, %v1502
        %v1519 = vpack.c.bf16 %v1487, %v1503
        %v1520 = vpack.c.bf16 %v1488, %v1504
        %v1521 = vpack.c.bf16 %v1489, %v1505
        %v1522 = vpack.c.bf16 %v1490, %v1506
        %v1523 = vpack.c.bf16 %v1491, %v1507
        %v1524 = vpack.c.bf16 %v1492, %v1508
        %v1525 = vpack.c.bf16 %v1493, %v1509
        %v1526 = vpack.c.bf16 %v1494, %v1510
        %v1527 = vpack.c.bf16 %v1495, %v1511
        %v1528 = vpack.c.bf16 %v1496, %v1512
        %v1529 = vpack.c.bf16 %v1497, %v1513
        %v1530 = vpack.c.bf16 %v1498, %v1514
        %v1531 = vpack.c.bf16 %v1499, %v1515
        %v1532 = vpack.c.bf16 %v1500, %v1516
        %v1533 = vpack.c.bf16 %v1501, %v1517
        %s1534 = scalar_lea.vmem %s3, 64
        %v1535 = vld [vmem:[%s1534] sm:$0xf]
        %v1536 = vld [vmem:[%s1534 + $0x4] sm:$0xf]
        %v1537 = vld [vmem:[%s1534 + $0x8] sm:$0xf]
        %v1538 = vld [vmem:[%s1534 + $0xc] sm:$0xf]
        %v1539 = vld [vmem:[%s1534 + $0x10] sm:$0xf]
        %v1540 = vld [vmem:[%s1534 + $0x14] sm:$0xf]
        %v1541 = vld [vmem:[%s1534 + $0x18] sm:$0xf]
        %v1542 = vld [vmem:[%s1534 + $0x1c] sm:$0xf]
        %v1543 = vld [vmem:[%s1534 + $0x20] sm:$0xf]
        %v1544 = vld [vmem:[%s1534 + $0x24] sm:$0xf]
        %v1545 = vld [vmem:[%s1534 + $0x28] sm:$0xf]
        %v1546 = vld [vmem:[%s1534 + $0x2c] sm:$0xf]
        %v1547 = vld [vmem:[%s1534 + $0x30] sm:$0xf]
        %v1548 = vld [vmem:[%s1534 + $0x34] sm:$0xf]
        %v1549 = vld [vmem:[%s1534 + $0x38] sm:$0xf]
        %v1550 = vld [vmem:[%s1534 + $0x3c] sm:$0xf]
        %v1567 = vunpack.c.l.b16 %v1535
        %v1568 = vunpack.c.l.b16 %v1536
        %v1569 = vunpack.c.l.b16 %v1537
        %v1570 = vunpack.c.l.b16 %v1538
        %v1571 = vunpack.c.l.b16 %v1539
        %v1572 = vunpack.c.l.b16 %v1540
        %v1573 = vunpack.c.l.b16 %v1541
        %v1574 = vunpack.c.l.b16 %v1542
        %v1575 = vunpack.c.l.b16 %v1543
        %v1576 = vunpack.c.l.b16 %v1544
        %v1577 = vunpack.c.l.b16 %v1545
        %v1578 = vunpack.c.l.b16 %v1546
        %v1579 = vunpack.c.l.b16 %v1547
        %v1580 = vunpack.c.l.b16 %v1548
        %v1581 = vunpack.c.l.b16 %v1549
        %v1582 = vunpack.c.l.b16 %v1550
        %v1583 = vpack.c.b16 %v1568, %v1567
        %v1584 = vpack.c.b16 %v1570, %v1569
        %v1585 = vpack.c.b16 %v1572, %v1571
        %v1586 = vpack.c.b16 %v1574, %v1573
        %v1587 = vpack.c.b16 %v1576, %v1575
        %v1588 = vpack.c.b16 %v1578, %v1577
        %v1589 = vpack.c.b16 %v1580, %v1579
        %v1590 = vpack.c.b16 %v1582, %v1581
        %1599 = vmatprep.subr.bf16.mxu0 0
        %1600 = vmatpush1.bf16.msra.mxu0 %v1590
        %1601 = vmatprep.subr.bf16.mxu0 0
        %1602 = vmatpush1.bf16.msra.mxu0 %v1589
        %1603 = vmatprep.subr.bf16.mxu0 0
        %1604 = vmatpush1.bf16.msra.mxu0 %v1588
        %1605 = vmatprep.subr.bf16.mxu0 0
        %1606 = vmatpush1.bf16.msra.mxu0 %v1587
        %1607 = vmatprep.subr.bf16.mxu0 0
        %1608 = vmatpush1.bf16.msra.mxu0 %v1586
        %1609 = vmatprep.subr.bf16.mxu0 0
        %1610 = vmatpush1.bf16.msra.mxu0 %v1585
        %1611 = vmatprep.subr.bf16.mxu0 0
        %1612 = vmatpush1.bf16.msra.mxu0 %v1584
        %1613 = vmatprep.subr.bf16.mxu0 0
        %1614 = vmatpush1.bf16.msra.mxu0 %v1583
        %1615 = vmatprep.subr.bf16.mxu0 0
        %1616 = vmatpush2.bf16.msra.mxu0 0
        %1617 = vmatprep.subr.bf16.mxu0 0
        %1618 = vmatpush2.bf16.msra.mxu0 0
        %1619 = vmatprep.subr.bf16.mxu0 0
        %1620 = vmatpush2.bf16.msra.mxu0 0
        %1621 = vmatprep.subr.bf16.mxu0 0
        %1622 = vmatpush2.bf16.msra.mxu0 0
        %1623 = vmatprep.subr.bf16.mxu0 0
        %1624 = vmatpush2.bf16.msra.mxu0 0
        %1625 = vmatprep.subr.bf16.mxu0 0
        %1626 = vmatpush2.bf16.msra.mxu0 0
        %1627 = vmatprep.subr.bf16.mxu0 0
        %1628 = vmatpush2.bf16.msra.mxu0 0
        %1629 = vmatprep.subr.bf16.mxu0 0
        %1630 = vmatpush2.bf16.msra.mxu0 0
        %1631 = vmatprep.mubr.bf16.mxu0 0
        %1632 = vmatmul.mubr.bf16.gmra.mxu0 %v1518
        %v1633 = vpop.f32.mrf.mxu0
        %v1634 = vadd.f32 0.0, %v1633
        %v1635 = vpop.f32.mrf.mxu0
        %v1636 = vpop.f32.mrf.mxu0
        %v1637 = vadd.f32 0.0, %v1636
        %v1638 = vpop.f32.mrf.mxu0
        %1639 = vmatprep.mubr.bf16.mxu0 0
        %1640 = vmatmul.mubr.bf16.gmra.mxu0 %v1519
        %v1641 = vpop.f32.mrf.mxu0
        %v1642 = vadd.f32 0.0, %v1641
        %v1643 = vpop.f32.mrf.mxu0
        %v1644 = vpop.f32.mrf.mxu0
        %v1645 = vadd.f32 0.0, %v1644
        %v1646 = vpop.f32.mrf.mxu0
        %1647 = vmatprep.mubr.bf16.mxu0 0
        %1648 = vmatmul.mubr.bf16.gmra.mxu0 %v1520
        %v1649 = vpop.f32.mrf.mxu0
        %v1650 = vadd.f32 0.0, %v1649
        %v1651 = vpop.f32.mrf.mxu0
        %v1652 = vpop.f32.mrf.mxu0
        %v1653 = vadd.f32 0.0, %v1652
        %v1654 = vpop.f32.mrf.mxu0
        %1655 = vmatprep.mubr.bf16.mxu0 0
        %1656 = vmatmul.mubr.bf16.gmra.mxu0 %v1521
        %v1657 = vpop.f32.mrf.mxu0
        %v1658 = vadd.f32 0.0, %v1657
        %v1659 = vpop.f32.mrf.mxu0
        %v1660 = vpop.f32.mrf.mxu0
        %v1661 = vadd.f32 0.0, %v1660
        %v1662 = vpop.f32.mrf.mxu0
        %1663 = vmatprep.mubr.bf16.mxu0 0
        %1664 = vmatmul.mubr.bf16.gmra.mxu0 %v1522
        %v1665 = vpop.f32.mrf.mxu0
        %v1666 = vadd.f32 0.0, %v1665
        %v1667 = vpop.f32.mrf.mxu0
        %v1668 = vpop.f32.mrf.mxu0
        %v1669 = vadd.f32 0.0, %v1668
        %v1670 = vpop.f32.mrf.mxu0
        %1671 = vmatprep.mubr.bf16.mxu0 0
        %1672 = vmatmul.mubr.bf16.gmra.mxu0 %v1523
        %v1673 = vpop.f32.mrf.mxu0
        %v1674 = vadd.f32 0.0, %v1673
        %v1675 = vpop.f32.mrf.mxu0
        %v1676 = vpop.f32.mrf.mxu0
        %v1677 = vadd.f32 0.0, %v1676
        %v1678 = vpop.f32.mrf.mxu0
        %1679 = vmatprep.mubr.bf16.mxu0 0
        %1680 = vmatmul.mubr.bf16.gmra.mxu0 %v1524
        %v1681 = vpop.f32.mrf.mxu0
        %v1682 = vadd.f32 0.0, %v1681
        %v1683 = vpop.f32.mrf.mxu0
        %v1684 = vpop.f32.mrf.mxu0
        %v1685 = vadd.f32 0.0, %v1684
        %v1686 = vpop.f32.mrf.mxu0
        %1687 = vmatprep.mubr.bf16.mxu0 0
        %1688 = vmatmul.mubr.bf16.gmra.mxu0 %v1525
        %v1689 = vpop.f32.mrf.mxu0
        %v1690 = vadd.f32 0.0, %v1689
        %v1691 = vpop.f32.mrf.mxu0
        %v1692 = vpop.f32.mrf.mxu0
        %v1693 = vadd.f32 0.0, %v1692
        %v1694 = vpop.f32.mrf.mxu0
        %1695 = vmatprep.mubr.bf16.mxu0 0
        %1696 = vmatmul.mubr.bf16.gmra.mxu0 %v1526
        %v1697 = vpop.f32.mrf.mxu0
        %v1698 = vadd.f32 0.0, %v1697
        %v1699 = vpop.f32.mrf.mxu0
        %v1700 = vpop.f32.mrf.mxu0
        %v1701 = vadd.f32 0.0, %v1700
        %v1702 = vpop.f32.mrf.mxu0
        %1703 = vmatprep.mubr.bf16.mxu0 0
        %1704 = vmatmul.mubr.bf16.gmra.mxu0 %v1527
        %v1705 = vpop.f32.mrf.mxu0
        %v1706 = vadd.f32 0.0, %v1705
        %v1707 = vpop.f32.mrf.mxu0
        %v1708 = vpop.f32.mrf.mxu0
        %v1709 = vadd.f32 0.0, %v1708
        %v1710 = vpop.f32.mrf.mxu0
        %1711 = vmatprep.mubr.bf16.mxu0 0
        %1712 = vmatmul.mubr.bf16.gmra.mxu0 %v1528
        %v1713 = vpop.f32.mrf.mxu0
        %v1714 = vadd.f32 0.0, %v1713
        %v1715 = vpop.f32.mrf.mxu0
        %v1716 = vpop.f32.mrf.mxu0
        %v1717 = vadd.f32 0.0, %v1716
        %v1718 = vpop.f32.mrf.mxu0
        %1719 = vmatprep.mubr.bf16.mxu0 0
        %1720 = vmatmul.mubr.bf16.gmra.mxu0 %v1529
        %v1721 = vpop.f32.mrf.mxu0
        %v1722 = vadd.f32 0.0, %v1721
        %v1723 = vpop.f32.mrf.mxu0
        %v1724 = vpop.f32.mrf.mxu0
        %v1725 = vadd.f32 0.0, %v1724
        %v1726 = vpop.f32.mrf.mxu0
        %1727 = vmatprep.mubr.bf16.mxu0 0
        %1728 = vmatmul.mubr.bf16.gmra.mxu0 %v1530
        %v1729 = vpop.f32.mrf.mxu0
        %v1730 = vadd.f32 0.0, %v1729
        %v1731 = vpop.f32.mrf.mxu0
        %v1732 = vpop.f32.mrf.mxu0
        %v1733 = vadd.f32 0.0, %v1732
        %v1734 = vpop.f32.mrf.mxu0
        %1735 = vmatprep.mubr.bf16.mxu0 0
        %1736 = vmatmul.mubr.bf16.gmra.mxu0 %v1531
        %v1737 = vpop.f32.mrf.mxu0
        %v1738 = vadd.f32 0.0, %v1737
        %v1739 = vpop.f32.mrf.mxu0
        %v1740 = vpop.f32.mrf.mxu0
        %v1741 = vadd.f32 0.0, %v1740
        %v1742 = vpop.f32.mrf.mxu0
        %1743 = vmatprep.mubr.bf16.mxu0 0
        %1744 = vmatmul.mubr.bf16.gmra.mxu0 %v1532
        %v1745 = vpop.f32.mrf.mxu0
        %v1746 = vadd.f32 0.0, %v1745
        %v1747 = vpop.f32.mrf.mxu0
        %v1748 = vpop.f32.mrf.mxu0
        %v1749 = vadd.f32 0.0, %v1748
        %v1750 = vpop.f32.mrf.mxu0
        %1751 = vmatprep.mubr.bf16.mxu0 0
        %1752 = vmatmul.mubr.bf16.gmra.mxu0 %v1533
        %v1753 = vpop.f32.mrf.mxu0
        %v1754 = vadd.f32 0.0, %v1753
        %v1755 = vpop.f32.mrf.mxu0
        %v1756 = vpop.f32.mrf.mxu0
        %v1757 = vadd.f32 0.0, %v1756
        %v1758 = vpop.f32.mrf.mxu0
        %1759 = vdwg.mxu0
        %v1776 = vunpack.c.l.b16 %v592
        %v1777 = vunpack.c.l.b16 %v593
        %v1778 = vunpack.c.l.b16 %v594
        %v1779 = vunpack.c.l.b16 %v595
        %v1780 = vunpack.c.l.b16 %v596
        %v1781 = vunpack.c.l.b16 %v597
        %v1782 = vunpack.c.l.b16 %v598
        %v1783 = vunpack.c.l.b16 %v599
        %v1784 = vunpack.c.l.b16 %v600
        %v1785 = vunpack.c.l.b16 %v601
        %v1786 = vunpack.c.l.b16 %v602
        %v1787 = vunpack.c.l.b16 %v603
        %v1788 = vunpack.c.l.b16 %v604
        %v1789 = vunpack.c.l.b16 %v605
        %v1790 = vunpack.c.l.b16 %v606
        %v1791 = vunpack.c.l.b16 %v607
        %v1792 = vpack.c.b16 %v1777, %v1776
        %v1793 = vpack.c.b16 %v1779, %v1778
        %v1794 = vpack.c.b16 %v1781, %v1780
        %v1795 = vpack.c.b16 %v1783, %v1782
        %v1796 = vpack.c.b16 %v1785, %v1784
        %v1797 = vpack.c.b16 %v1787, %v1786
        %v1798 = vpack.c.b16 %v1789, %v1788
        %v1799 = vpack.c.b16 %v1791, %v1790
        %1808 = vmatprep.subr.bf16.mxu0 0
        %1809 = vmatpush1.bf16.msra.mxu0 %v1799
        %1810 = vmatprep.subr.bf16.mxu0 0
        %1811 = vmatpush1.bf16.msra.mxu0 %v1798
        %1812 = vmatprep.subr.bf16.mxu0 0
        %1813 = vmatpush1.bf16.msra.mxu0 %v1797
        %1814 = vmatprep.subr.bf16.mxu0 0
        %1815 = vmatpush1.bf16.msra.mxu0 %v1796
        %1816 = vmatprep.subr.bf16.mxu0 0
        %1817 = vmatpush1.bf16.msra.mxu0 %v1795
        %1818 = vmatprep.subr.bf16.mxu0 0
        %1819 = vmatpush1.bf16.msra.mxu0 %v1794
        %1820 = vmatprep.subr.bf16.mxu0 0
        %1821 = vmatpush1.bf16.msra.mxu0 %v1793
        %1822 = vmatprep.subr.bf16.mxu0 0
        %1823 = vmatpush1.bf16.msra.mxu0 %v1792
        %1824 = vmatprep.subr.bf16.mxu0 0
        %1825 = vmatpush2.bf16.msra.mxu0 0
        %1826 = vmatprep.subr.bf16.mxu0 0
        %1827 = vmatpush2.bf16.msra.mxu0 0
        %1828 = vmatprep.subr.bf16.mxu0 0
        %1829 = vmatpush2.bf16.msra.mxu0 0
        %1830 = vmatprep.subr.bf16.mxu0 0
        %1831 = vmatpush2.bf16.msra.mxu0 0
        %1832 = vmatprep.subr.bf16.mxu0 0
        %1833 = vmatpush2.bf16.msra.mxu0 0
        %1834 = vmatprep.subr.bf16.mxu0 0
        %1835 = vmatpush2.bf16.msra.mxu0 0
        %1836 = vmatprep.subr.bf16.mxu0 0
        %1837 = vmatpush2.bf16.msra.mxu0 0
        %1838 = vmatprep.subr.bf16.mxu0 0
        %1839 = vmatpush2.bf16.msra.mxu0 0
        %1840 = vmatprep.mubr.bf16.mxu0 0
        %1841 = vmatmul.mubr.bf16.gmra.mxu0 %v576
        %v1842 = vpop.f32.mrf.mxu0
        %v1843 = vadd.f32 %v1634, %v1842
        %v1844 = vpop.f32.mrf.mxu0
        %v1845 = vpop.f32.mrf.mxu0
        %v1846 = vadd.f32 %v1637, %v1845
        %v1847 = vpop.f32.mrf.mxu0
        %1848 = vmatprep.mubr.bf16.mxu0 0
        %1849 = vmatmul.mubr.bf16.gmra.mxu0 %v577
        %v1850 = vpop.f32.mrf.mxu0
        %v1851 = vadd.f32 %v1642, %v1850
        %v1852 = vpop.f32.mrf.mxu0
        %v1853 = vpop.f32.mrf.mxu0
        %v1854 = vadd.f32 %v1645, %v1853
        %v1855 = vpop.f32.mrf.mxu0
        %1856 = vmatprep.mubr.bf16.mxu0 0
        %1857 = vmatmul.mubr.bf16.gmra.mxu0 %v578
        %v1858 = vpop.f32.mrf.mxu0
        %v1859 = vadd.f32 %v1650, %v1858
        %v1860 = vpop.f32.mrf.mxu0
        %v1861 = vpop.f32.mrf.mxu0
        %v1862 = vadd.f32 %v1653, %v1861
        %v1863 = vpop.f32.mrf.mxu0
        %1864 = vmatprep.mubr.bf16.mxu0 0
        %1865 = vmatmul.mubr.bf16.gmra.mxu0 %v579
        %v1866 = vpop.f32.mrf.mxu0
        %v1867 = vadd.f32 %v1658, %v1866
        %v1868 = vpop.f32.mrf.mxu0
        %v1869 = vpop.f32.mrf.mxu0
        %v1870 = vadd.f32 %v1661, %v1869
        %v1871 = vpop.f32.mrf.mxu0
        %1872 = vmatprep.mubr.bf16.mxu0 0
        %1873 = vmatmul.mubr.bf16.gmra.mxu0 %v580
        %v1874 = vpop.f32.mrf.mxu0
        %v1875 = vadd.f32 %v1666, %v1874
        %v1876 = vpop.f32.mrf.mxu0
        %v1877 = vpop.f32.mrf.mxu0
        %v1878 = vadd.f32 %v1669, %v1877
        %v1879 = vpop.f32.mrf.mxu0
        %1880 = vmatprep.mubr.bf16.mxu0 0
        %1881 = vmatmul.mubr.bf16.gmra.mxu0 %v581
        %v1882 = vpop.f32.mrf.mxu0
        %v1883 = vadd.f32 %v1674, %v1882
        %v1884 = vpop.f32.mrf.mxu0
        %v1885 = vpop.f32.mrf.mxu0
        %v1886 = vadd.f32 %v1677, %v1885
        %v1887 = vpop.f32.mrf.mxu0
        %1888 = vmatprep.mubr.bf16.mxu0 0
        %1889 = vmatmul.mubr.bf16.gmra.mxu0 %v582
        %v1890 = vpop.f32.mrf.mxu0
        %v1891 = vadd.f32 %v1682, %v1890
        %v1892 = vpop.f32.mrf.mxu0
        %v1893 = vpop.f32.mrf.mxu0
        %v1894 = vadd.f32 %v1685, %v1893
        %v1895 = vpop.f32.mrf.mxu0
        %1896 = vmatprep.mubr.bf16.mxu0 0
        %1897 = vmatmul.mubr.bf16.gmra.mxu0 %v583
        %v1898 = vpop.f32.mrf.mxu0
        %v1899 = vadd.f32 %v1690, %v1898
        %v1900 = vpop.f32.mrf.mxu0
        %v1901 = vpop.f32.mrf.mxu0
        %v1902 = vadd.f32 %v1693, %v1901
        %v1903 = vpop.f32.mrf.mxu0
        %1904 = vmatprep.mubr.bf16.mxu0 0
        %1905 = vmatmul.mubr.bf16.gmra.mxu0 %v584
        %v1906 = vpop.f32.mrf.mxu0
        %v1907 = vadd.f32 %v1698, %v1906
        %v1908 = vpop.f32.mrf.mxu0
        %v1909 = vpop.f32.mrf.mxu0
        %v1910 = vadd.f32 %v1701, %v1909
        %v1911 = vpop.f32.mrf.mxu0
        %1912 = vmatprep.mubr.bf16.mxu0 0
        %1913 = vmatmul.mubr.bf16.gmra.mxu0 %v585
        %v1914 = vpop.f32.mrf.mxu0
        %v1915 = vadd.f32 %v1706, %v1914
        %v1916 = vpop.f32.mrf.mxu0
        %v1917 = vpop.f32.mrf.mxu0
        %v1918 = vadd.f32 %v1709, %v1917
        %v1919 = vpop.f32.mrf.mxu0
        %1920 = vmatprep.mubr.bf16.mxu0 0
        %1921 = vmatmul.mubr.bf16.gmra.mxu0 %v586
        %v1922 = vpop.f32.mrf.mxu0
        %v1923 = vadd.f32 %v1714, %v1922
        %v1924 = vpop.f32.mrf.mxu0
        %v1925 = vpop.f32.mrf.mxu0
        %v1926 = vadd.f32 %v1717, %v1925
        %v1927 = vpop.f32.mrf.mxu0
        %1928 = vmatprep.mubr.bf16.mxu0 0
        %1929 = vmatmul.mubr.bf16.gmra.mxu0 %v587
        %v1930 = vpop.f32.mrf.mxu0
        %v1931 = vadd.f32 %v1722, %v1930
        %v1932 = vpop.f32.mrf.mxu0
        %v1933 = vpop.f32.mrf.mxu0
        %v1934 = vadd.f32 %v1725, %v1933
        %v1935 = vpop.f32.mrf.mxu0
        %1936 = vmatprep.mubr.bf16.mxu0 0
        %1937 = vmatmul.mubr.bf16.gmra.mxu0 %v588
        %v1938 = vpop.f32.mrf.mxu0
        %v1939 = vadd.f32 %v1730, %v1938
        %v1940 = vpop.f32.mrf.mxu0
        %v1941 = vpop.f32.mrf.mxu0
        %v1942 = vadd.f32 %v1733, %v1941
        %v1943 = vpop.f32.mrf.mxu0
        %1944 = vmatprep.mubr.bf16.mxu0 0
        %1945 = vmatmul.mubr.bf16.gmra.mxu0 %v589
        %v1946 = vpop.f32.mrf.mxu0
        %v1947 = vadd.f32 %v1738, %v1946
        %v1948 = vpop.f32.mrf.mxu0
        %v1949 = vpop.f32.mrf.mxu0
        %v1950 = vadd.f32 %v1741, %v1949
        %v1951 = vpop.f32.mrf.mxu0
        %1952 = vmatprep.mubr.bf16.mxu0 0
        %1953 = vmatmul.mubr.bf16.gmra.mxu0 %v590
        %v1954 = vpop.f32.mrf.mxu0
        %v1955 = vadd.f32 %v1746, %v1954
        %v1956 = vpop.f32.mrf.mxu0
        %v1957 = vpop.f32.mrf.mxu0
        %v1958 = vadd.f32 %v1749, %v1957
        %v1959 = vpop.f32.mrf.mxu0
        %1960 = vmatprep.mubr.bf16.mxu0 0
        %1961 = vmatmul.mubr.bf16.gmra.mxu0 %v591
        %v1962 = vpop.f32.mrf.mxu0
        %v1963 = vadd.f32 %v1754, %v1962
        %v1964 = vpop.f32.mrf.mxu0
        %v1965 = vpop.f32.mrf.mxu0
        %v1966 = vadd.f32 %v1757, %v1965
        %v1967 = vpop.f32.mrf.mxu0
        %1968 = vdwg.mxu0
        %1969 = vst [vmem:[%s543 + $0x8] sm:$0xff] %v1502
        %1970 = vst [vmem:[%s543 + $0x10] sm:$0xff] %v1486
        %1971 = vst [vmem:[%s543 + $0x28] sm:$0xff] %v1503
        %1972 = vst [vmem:[%s543 + $0x30] sm:$0xff] %v1487
        %1973 = vst [vmem:[%s543 + $0x48] sm:$0xff] %v1504
        %1974 = vst [vmem:[%s543 + $0x50] sm:$0xff] %v1488
        %1975 = vst [vmem:[%s543 + $0x68] sm:$0xff] %v1505
        %1976 = vst [vmem:[%s543 + $0x70] sm:$0xff] %v1489
        %1977 = vst [vmem:[%s543 + $0x88] sm:$0xff] %v1506
        %1978 = vst [vmem:[%s543 + $0x90] sm:$0xff] %v1490
        %1979 = vst [vmem:[%s543 + $0xa8] sm:$0xff] %v1507
        %1980 = vst [vmem:[%s543 + $0xb0] sm:$0xff] %v1491
        %1981 = vst [vmem:[%s543 + $0xc8] sm:$0xff] %v1508
        %1982 = vst [vmem:[%s543 + $0xd0] sm:$0xff] %v1492
        %1983 = vst [vmem:[%s543 + $0xe8] sm:$0xff] %v1509
        %1984 = vst [vmem:[%s543 + $0xf0] sm:$0xff] %v1493
        %1985 = vst [vmem:[%s543 + $0x108] sm:$0xff] %v1510
        %1986 = vst [vmem:[%s543 + $0x110] sm:$0xff] %v1494
        %1987 = vst [vmem:[%s543 + $0x128] sm:$0xff] %v1511
        %1988 = vst [vmem:[%s543 + $0x130] sm:$0xff] %v1495
        %1989 = vst [vmem:[%s543 + $0x148] sm:$0xff] %v1512
        %1990 = vst [vmem:[%s543 + $0x150] sm:$0xff] %v1496
        %1991 = vst [vmem:[%s543 + $0x168] sm:$0xff] %v1513
        %1992 = vst [vmem:[%s543 + $0x170] sm:$0xff] %v1497
        %1993 = vst [vmem:[%s543 + $0x188] sm:$0xff] %v1514
        %1994 = vst [vmem:[%s543 + $0x190] sm:$0xff] %v1498
        %1995 = vst [vmem:[%s543 + $0x1a8] sm:$0xff] %v1515
        %1996 = vst [vmem:[%s543 + $0x1b0] sm:$0xff] %v1499
        %1997 = vst [vmem:[%s543 + $0x1c8] sm:$0xff] %v1516
        %1998 = vst [vmem:[%s543 + $0x1d0] sm:$0xff] %v1500
        %1999 = vst [vmem:[%s543 + $0x1e8] sm:$0xff] %v1517
        %2000 = vst [vmem:[%s543 + $0x1f0] sm:$0xff] %v1501
        %v2001 = vld [vmem:[#allocation2] sm:$0xff]
        %v2002 = vld [vmem:[#allocation2 + $0x8] sm:$0xff]
        %v2003 = vld [vmem:[#allocation2 + $0x10] sm:$0xff]
        %v2004 = vld [vmem:[#allocation2 + $0x18] sm:$0xff]
        %v2005 = vld [vmem:[#allocation2 + $0x20] sm:$0xff]
        %v2006 = vld [vmem:[#allocation2 + $0x28] sm:$0xff]
        %v2007 = vld [vmem:[#allocation2 + $0x30] sm:$0xff]
        %v2008 = vld [vmem:[#allocation2 + $0x38] sm:$0xff]
        %v2009 = vld [vmem:[#allocation2 + $0x40] sm:$0xff]
        %v2010 = vld [vmem:[#allocation2 + $0x48] sm:$0xff]
        %v2011 = vld [vmem:[#allocation2 + $0x50] sm:$0xff]
        %v2012 = vld [vmem:[#allocation2 + $0x58] sm:$0xff]
        %v2013 = vld [vmem:[#allocation2 + $0x60] sm:$0xff]
        %v2014 = vld [vmem:[#allocation2 + $0x68] sm:$0xff]
        %v2015 = vld [vmem:[#allocation2 + $0x70] sm:$0xff]
        %v2016 = vld [vmem:[#allocation2 + $0x78] sm:$0xff]
        %v2017 = vld [vmem:[#allocation2 + $0x80] sm:$0xff]
        %v2018 = vld [vmem:[#allocation2 + $0x88] sm:$0xff]
        %v2019 = vld [vmem:[#allocation2 + $0x90] sm:$0xff]
        %v2020 = vld [vmem:[#allocation2 + $0x98] sm:$0xff]
        %v2021 = vld [vmem:[#allocation2 + $0xa0] sm:$0xff]
        %v2022 = vld [vmem:[#allocation2 + $0xa8] sm:$0xff]
        %v2023 = vld [vmem:[#allocation2 + $0xb0] sm:$0xff]
        %v2024 = vld [vmem:[#allocation2 + $0xb8] sm:$0xff]
        %v2025 = vld [vmem:[#allocation2 + $0xc0] sm:$0xff]
        %v2026 = vld [vmem:[#allocation2 + $0xc8] sm:$0xff]
        %v2027 = vld [vmem:[#allocation2 + $0xd0] sm:$0xff]
        %v2028 = vld [vmem:[#allocation2 + $0xd8] sm:$0xff]
        %v2029 = vld [vmem:[#allocation2 + $0xe0] sm:$0xff]
        %v2030 = vld [vmem:[#allocation2 + $0xe8] sm:$0xff]
        %v2031 = vld [vmem:[#allocation2 + $0xf0] sm:$0xff]
        %v2032 = vld [vmem:[#allocation2 + $0xf8] sm:$0xff]
        %v2033 = vld [vmem:[#allocation2 + $0x100] sm:$0xff]
        %v2034 = vld [vmem:[#allocation2 + $0x108] sm:$0xff]
        %v2035 = vld [vmem:[#allocation2 + $0x110] sm:$0xff]
        %v2036 = vld [vmem:[#allocation2 + $0x118] sm:$0xff]
        %v2037 = vld [vmem:[#allocation2 + $0x120] sm:$0xff]
        %v2038 = vld [vmem:[#allocation2 + $0x128] sm:$0xff]
        %v2039 = vld [vmem:[#allocation2 + $0x130] sm:$0xff]
        %v2040 = vld [vmem:[#allocation2 + $0x138] sm:$0xff]
        %v2041 = vld [vmem:[#allocation2 + $0x140] sm:$0xff]
        %v2042 = vld [vmem:[#allocation2 + $0x148] sm:$0xff]
        %v2043 = vld [vmem:[#allocation2 + $0x150] sm:$0xff]
        %v2044 = vld [vmem:[#allocation2 + $0x158] sm:$0xff]
        %v2045 = vld [vmem:[#allocation2 + $0x160] sm:$0xff]
        %v2046 = vld [vmem:[#allocation2 + $0x168] sm:$0xff]
        %v2047 = vld [vmem:[#allocation2 + $0x170] sm:$0xff]
        %v2048 = vld [vmem:[#allocation2 + $0x178] sm:$0xff]
        %v2049 = vld [vmem:[#allocation2 + $0x180] sm:$0xff]
        %v2050 = vld [vmem:[#allocation2 + $0x188] sm:$0xff]
        %v2051 = vld [vmem:[#allocation2 + $0x190] sm:$0xff]
        %v2052 = vld [vmem:[#allocation2 + $0x198] sm:$0xff]
        %v2053 = vld [vmem:[#allocation2 + $0x1a0] sm:$0xff]
        %v2054 = vld [vmem:[#allocation2 + $0x1a8] sm:$0xff]
        %v2055 = vld [vmem:[#allocation2 + $0x1b0] sm:$0xff]
        %v2056 = vld [vmem:[#allocation2 + $0x1b8] sm:$0xff]
        %v2057 = vld [vmem:[#allocation2 + $0x1c0] sm:$0xff]
        %v2058 = vld [vmem:[#allocation2 + $0x1c8] sm:$0xff]
        %v2059 = vld [vmem:[#allocation2 + $0x1d0] sm:$0xff]
        %v2060 = vld [vmem:[#allocation2 + $0x1d8] sm:$0xff]
        %v2061 = vld [vmem:[#allocation2 + $0x1e0] sm:$0xff]
        %v2062 = vld [vmem:[#allocation2 + $0x1e8] sm:$0xff]
        %v2063 = vld [vmem:[#allocation2 + $0x1f0] sm:$0xff]
        %v2064 = vld [vmem:[#allocation2 + $0x1f8] sm:$0xff]
        %v2065 = vld [vmem:[#allocation2 + $0x200] sm:$0xff]
        %v2066 = vld [vmem:[#allocation2 + $0x208] sm:$0xff]
        %v2067 = vld [vmem:[#allocation2 + $0x210] sm:$0xff]
        %v2068 = vld [vmem:[#allocation2 + $0x218] sm:$0xff]
        %v2069 = vld [vmem:[#allocation2 + $0x220] sm:$0xff]
        %v2070 = vld [vmem:[#allocation2 + $0x228] sm:$0xff]
        %v2071 = vld [vmem:[#allocation2 + $0x230] sm:$0xff]
        %v2072 = vld [vmem:[#allocation2 + $0x238] sm:$0xff]
        %v2073 = vld [vmem:[#allocation2 + $0x240] sm:$0xff]
        %v2074 = vld [vmem:[#allocation2 + $0x248] sm:$0xff]
        %v2075 = vld [vmem:[#allocation2 + $0x250] sm:$0xff]
        %v2076 = vld [vmem:[#allocation2 + $0x258] sm:$0xff]
        %v2077 = vld [vmem:[#allocation2 + $0x260] sm:$0xff]
        %v2078 = vld [vmem:[#allocation2 + $0x268] sm:$0xff]
        %v2079 = vld [vmem:[#allocation2 + $0x270] sm:$0xff]
        %v2080 = vld [vmem:[#allocation2 + $0x278] sm:$0xff]
        %v2081 = vmax.f32 %v2001, %v2005
        %v2082 = vmax.f32 %v2002, %v2006
        %v2083 = vmax.f32 %v2003, %v2007
        %v2084 = vmax.f32 %v2004, %v2008
        %v2085 = vmax.f32 %v2005, %v2009
        %v2086 = vmax.f32 %v2006, %v2010
        %v2087 = vmax.f32 %v2007, %v2011
        %v2088 = vmax.f32 %v2008, %v2012
        %v2089 = vmax.f32 %v2009, %v2013
        %v2090 = vmax.f32 %v2010, %v2014
        %v2091 = vmax.f32 %v2011, %v2015
        %v2092 = vmax.f32 %v2012, %v2016
        %v2093 = vmax.f32 %v2013, %v2017
        %v2094 = vmax.f32 %v2014, %v2018
        %v2095 = vmax.f32 %v2015, %v2019
        %v2096 = vmax.f32 %v2016, %v2020
        %v2097 = vmax.f32 %v2017, %v2021
        %v2098 = vmax.f32 %v2018, %v2022
        %v2099 = vmax.f32 %v2019, %v2023
        %v2100 = vmax.f32 %v2020, %v2024
        %v2101 = vmax.f32 %v2021, %v2025
        %v2102 = vmax.f32 %v2022, %v2026
        %v2103 = vmax.f32 %v2023, %v2027
        %v2104 = vmax.f32 %v2024, %v2028
        %v2105 = vmax.f32 %v2025, %v2029
        %v2106 = vmax.f32 %v2026, %v2030
        %v2107 = vmax.f32 %v2027, %v2031
        %v2108 = vmax.f32 %v2028, %v2032
        %v2109 = vmax.f32 %v2029, %v2033
        %v2110 = vmax.f32 %v2030, %v2034
        %v2111 = vmax.f32 %v2031, %v2035
        %v2112 = vmax.f32 %v2032, %v2036
        %v2113 = vmax.f32 %v2033, %v2037
        %v2114 = vmax.f32 %v2034, %v2038
        %v2115 = vmax.f32 %v2035, %v2039
        %v2116 = vmax.f32 %v2036, %v2040
        %v2117 = vmax.f32 %v2037, %v2041
        %v2118 = vmax.f32 %v2038, %v2042
        %v2119 = vmax.f32 %v2039, %v2043
        %v2120 = vmax.f32 %v2040, %v2044
        %v2121 = vmax.f32 %v2041, %v2045
        %v2122 = vmax.f32 %v2042, %v2046
        %v2123 = vmax.f32 %v2043, %v2047
        %v2124 = vmax.f32 %v2044, %v2048
        %v2125 = vmax.f32 %v2045, %v2049
        %v2126 = vmax.f32 %v2046, %v2050
        %v2127 = vmax.f32 %v2047, %v2051
        %v2128 = vmax.f32 %v2048, %v2052
        %v2129 = vmax.f32 %v2049, %v2053
        %v2130 = vmax.f32 %v2050, %v2054
        %v2131 = vmax.f32 %v2051, %v2055
        %v2132 = vmax.f32 %v2052, %v2056
        %v2133 = vmax.f32 %v2053, %v2057
        %v2134 = vmax.f32 %v2054, %v2058
        %v2135 = vmax.f32 %v2055, %v2059
        %v2136 = vmax.f32 %v2056, %v2060
        %v2137 = vmax.f32 %v2057, %v2061
        %v2138 = vmax.f32 %v2058, %v2062
        %v2139 = vmax.f32 %v2059, %v2063
        %v2140 = vmax.f32 %v2060, %v2064
        %v2141 = vmax.f32 %v2061, %v2065
        %v2142 = vmax.f32 %v2062, %v2066
        %v2143 = vmax.f32 %v2063, %v2067
        %v2144 = vmax.f32 %v2064, %v2068
        %v2145 = vmax.f32 %v2065, %v2069
        %v2146 = vmax.f32 %v2066, %v2070
        %v2147 = vmax.f32 %v2067, %v2071
        %v2148 = vmax.f32 %v2068, %v2072
        %v2149 = vmax.f32 %v2069, %v2073
        %v2150 = vmax.f32 %v2070, %v2074
        %v2151 = vmax.f32 %v2071, %v2075
        %v2152 = vmax.f32 %v2072, %v2076
        %v2153 = vmax.f32 %v2081, %v2089
        %v2154 = vmax.f32 %v2082, %v2090
        %v2155 = vmax.f32 %v2083, %v2091
        %v2156 = vmax.f32 %v2084, %v2092
        %v2157 = vmax.f32 %v2085, %v2093
        %v2158 = vmax.f32 %v2086, %v2094
        %v2159 = vmax.f32 %v2087, %v2095
        %v2160 = vmax.f32 %v2088, %v2096
        %v2161 = vmax.f32 %v2089, %v2097
        %v2162 = vmax.f32 %v2090, %v2098
        %v2163 = vmax.f32 %v2091, %v2099
        %v2164 = vmax.f32 %v2092, %v2100
        %v2165 = vmax.f32 %v2093, %v2101
        %v2166 = vmax.f32 %v2094, %v2102
        %v2167 = vmax.f32 %v2095, %v2103
        %v2168 = vmax.f32 %v2096, %v2104
        %v2169 = vmax.f32 %v2097, %v2105
        %v2170 = vmax.f32 %v2098, %v2106
        %v2171 = vmax.f32 %v2099, %v2107
        %v2172 = vmax.f32 %v2100, %v2108
        %v2173 = vmax.f32 %v2101, %v2109
        %v2174 = vmax.f32 %v2102, %v2110
        %v2175 = vmax.f32 %v2103, %v2111
        %v2176 = vmax.f32 %v2104, %v2112
        %v2177 = vmax.f32 %v2105, %v2113
        %v2178 = vmax.f32 %v2106, %v2114
        %v2179 = vmax.f32 %v2107, %v2115
        %v2180 = vmax.f32 %v2108, %v2116
        %v2181 = vmax.f32 %v2109, %v2117
        %v2182 = vmax.f32 %v2110, %v2118
        %v2183 = vmax.f32 %v2111, %v2119
        %v2184 = vmax.f32 %v2112, %v2120
        %v2185 = vmax.f32 %v2113, %v2121
        %v2186 = vmax.f32 %v2114, %v2122
        %v2187 = vmax.f32 %v2115, %v2123
        %v2188 = vmax.f32 %v2116, %v2124
        %v2189 = vmax.f32 %v2117, %v2125
        %v2190 = vmax.f32 %v2118, %v2126
        %v2191 = vmax.f32 %v2119, %v2127
        %v2192 = vmax.f32 %v2120, %v2128
        %v2193 = vmax.f32 %v2121, %v2129
        %v2194 = vmax.f32 %v2122, %v2130
        %v2195 = vmax.f32 %v2123, %v2131
        %v2196 = vmax.f32 %v2124, %v2132
        %v2197 = vmax.f32 %v2125, %v2133
        %v2198 = vmax.f32 %v2126, %v2134
        %v2199 = vmax.f32 %v2127, %v2135
        %v2200 = vmax.f32 %v2128, %v2136
        %v2201 = vmax.f32 %v2129, %v2137
        %v2202 = vmax.f32 %v2130, %v2138
        %v2203 = vmax.f32 %v2131, %v2139
        %v2204 = vmax.f32 %v2132, %v2140
        %v2205 = vmax.f32 %v2133, %v2141
        %v2206 = vmax.f32 %v2134, %v2142
        %v2207 = vmax.f32 %v2135, %v2143
        %v2208 = vmax.f32 %v2136, %v2144
        %v2209 = vmax.f32 %v2137, %v2145
        %v2210 = vmax.f32 %v2138, %v2146
        %v2211 = vmax.f32 %v2139, %v2147
        %v2212 = vmax.f32 %v2140, %v2148
        %v2213 = vmax.f32 %v2141, %v2149
        %v2214 = vmax.f32 %v2142, %v2150
        %v2215 = vmax.f32 %v2143, %v2151
        %v2216 = vmax.f32 %v2144, %v2152
        %v2217 = vmax.f32 %v2153, %v2017
        %v2218 = vmax.f32 %v2154, %v2018
        %v2219 = vmax.f32 %v2155, %v2019
        %v2220 = vmax.f32 %v2156, %v2020
        %v2221 = vmax.f32 %v2157, %v2021
        %v2222 = vmax.f32 %v2158, %v2022
        %v2223 = vmax.f32 %v2159, %v2023
        %v2224 = vmax.f32 %v2160, %v2024
        %v2225 = vmax.f32 %v2161, %v2025
        %v2226 = vmax.f32 %v2162, %v2026
        %v2227 = vmax.f32 %v2163, %v2027
        %v2228 = vmax.f32 %v2164, %v2028
        %v2229 = vmax.f32 %v2165, %v2029
        %v2230 = vmax.f32 %v2166, %v2030
        %v2231 = vmax.f32 %v2167, %v2031
        %v2232 = vmax.f32 %v2168, %v2032
        %v2233 = vmax.f32 %v2169, %v2033
        %v2234 = vmax.f32 %v2170, %v2034
        %v2235 = vmax.f32 %v2171, %v2035
        %v2236 = vmax.f32 %v2172, %v2036
        %v2237 = vmax.f32 %v2173, %v2037
        %v2238 = vmax.f32 %v2174, %v2038
        %v2239 = vmax.f32 %v2175, %v2039
        %v2240 = vmax.f32 %v2176, %v2040
        %v2241 = vmax.f32 %v2177, %v2041
        %v2242 = vmax.f32 %v2178, %v2042
        %v2243 = vmax.f32 %v2179, %v2043
        %v2244 = vmax.f32 %v2180, %v2044
        %v2245 = vmax.f32 %v2181, %v2045
        %v2246 = vmax.f32 %v2182, %v2046
        %v2247 = vmax.f32 %v2183, %v2047
        %v2248 = vmax.f32 %v2184, %v2048
        %v2249 = vmax.f32 %v2185, %v2049
        %v2250 = vmax.f32 %v2186, %v2050
        %v2251 = vmax.f32 %v2187, %v2051
        %v2252 = vmax.f32 %v2188, %v2052
        %v2253 = vmax.f32 %v2189, %v2053
        %v2254 = vmax.f32 %v2190, %v2054
        %v2255 = vmax.f32 %v2191, %v2055
        %v2256 = vmax.f32 %v2192, %v2056
        %v2257 = vmax.f32 %v2193, %v2057
        %v2258 = vmax.f32 %v2194, %v2058
        %v2259 = vmax.f32 %v2195, %v2059
        %v2260 = vmax.f32 %v2196, %v2060
        %v2261 = vmax.f32 %v2197, %v2061
        %v2262 = vmax.f32 %v2198, %v2062
        %v2263 = vmax.f32 %v2199, %v2063
        %v2264 = vmax.f32 %v2200, %v2064
        %v2265 = vmax.f32 %v2201, %v2065
        %v2266 = vmax.f32 %v2202, %v2066
        %v2267 = vmax.f32 %v2203, %v2067
        %v2268 = vmax.f32 %v2204, %v2068
        %v2269 = vmax.f32 %v2205, %v2069
        %v2270 = vmax.f32 %v2206, %v2070
        %v2271 = vmax.f32 %v2207, %v2071
        %v2272 = vmax.f32 %v2208, %v2072
        %v2273 = vmax.f32 %v2209, %v2073
        %v2274 = vmax.f32 %v2210, %v2074
        %v2275 = vmax.f32 %v2211, %v2075
        %v2276 = vmax.f32 %v2212, %v2076
        %v2277 = vmax.f32 %v2213, %v2077
        %v2278 = vmax.f32 %v2214, %v2078
        %v2279 = vmax.f32 %v2215, %v2079
        %v2280 = vmax.f32 %v2216, %v2080
        %v2281 = vrot.slane %v2217, 1
        %v2282 = vrot.slane %v2221, 1
        %v2283 = vrot.slane %v2225, 1
        %v2284 = vrot.slane %v2229, 1
        %v2285 = vrot.slane %v2233, 1
        %v2286 = vrot.slane %v2237, 1
        %v2287 = vrot.slane %v2241, 1
        %v2288 = vrot.slane %v2245, 1
        %v2289 = vrot.slane %v2249, 1
        %v2290 = vrot.slane %v2253, 1
        %v2291 = vrot.slane %v2257, 1
        %v2292 = vrot.slane %v2261, 1
        %v2293 = vrot.slane %v2265, 1
        %v2294 = vrot.slane %v2269, 1
        %v2295 = vrot.slane %v2273, 1
        %v2296 = vrot.slane %v2277, 1
        %v2297 = vrot.slane %v2218, 1
        %v2298 = vrot.slane %v2222, 1
        %v2299 = vrot.slane %v2226, 1
        %v2300 = vrot.slane %v2230, 1
        %v2301 = vrot.slane %v2234, 1
        %v2302 = vrot.slane %v2238, 1
        %v2303 = vrot.slane %v2242, 1
        %v2304 = vrot.slane %v2246, 1
        %v2305 = vrot.slane %v2250, 1
        %v2306 = vrot.slane %v2254, 1
        %v2307 = vrot.slane %v2258, 1
        %v2308 = vrot.slane %v2262, 1
        %v2309 = vrot.slane %v2266, 1
        %v2310 = vrot.slane %v2270, 1
        %v2311 = vrot.slane %v2274, 1
        %v2312 = vrot.slane %v2278, 1
        %v2313 = vrot.slane %v2219, 1
        %v2314 = vrot.slane %v2223, 1
        %v2315 = vrot.slane %v2227, 1
        %v2316 = vrot.slane %v2231, 1
        %v2317 = vrot.slane %v2235, 1
        %v2318 = vrot.slane %v2239, 1
        %v2319 = vrot.slane %v2243, 1
        %v2320 = vrot.slane %v2247, 1
        %v2321 = vrot.slane %v2251, 1
        %v2322 = vrot.slane %v2255, 1
        %v2323 = vrot.slane %v2259, 1
        %v2324 = vrot.slane %v2263, 1
        %v2325 = vrot.slane %v2267, 1
        %v2326 = vrot.slane %v2271, 1
        %v2327 = vrot.slane %v2275, 1
        %v2328 = vrot.slane %v2279, 1
        %v2329 = vrot.slane %v2220, 1
        %v2330 = vrot.slane %v2224, 1
        %v2331 = vrot.slane %v2228, 1
        %v2332 = vrot.slane %v2232, 1
        %v2333 = vrot.slane %v2236, 1
        %v2334 = vrot.slane %v2240, 1
        %v2335 = vrot.slane %v2244, 1
        %v2336 = vrot.slane %v2248, 1
        %v2337 = vrot.slane %v2252, 1
        %v2338 = vrot.slane %v2256, 1
        %v2339 = vrot.slane %v2260, 1
        %v2340 = vrot.slane %v2264, 1
        %v2341 = vrot.slane %v2268, 1
        %v2342 = vrot.slane %v2272, 1
        %v2343 = vrot.slane %v2276, 1
        %v2344 = vrot.slane %v2280, 1
        %v2345 = vsel %vm986, %v2313, %v2329
        %v2346 = vsel %vm986, %v2314, %v2330
        %v2347 = vsel %vm986, %v2315, %v2331
        %v2348 = vsel %vm986, %v2316, %v2332
        %v2349 = vsel %vm986, %v2317, %v2333
        %v2350 = vsel %vm986, %v2318, %v2334
        %v2351 = vsel %vm986, %v2319, %v2335
        %v2352 = vsel %vm986, %v2320, %v2336
        %v2353 = vsel %vm986, %v2321, %v2337
        %v2354 = vsel %vm986, %v2322, %v2338
        %v2355 = vsel %vm986, %v2323, %v2339
        %v2356 = vsel %vm986, %v2324, %v2340
        %v2357 = vsel %vm986, %v2325, %v2341
        %v2358 = vsel %vm986, %v2326, %v2342
        %v2359 = vsel %vm986, %v2327, %v2343
        %v2360 = vsel %vm986, %v2328, %v2344
        %v2361 = vsel %vm986, %v2297, %v2313
        %v2362 = vsel %vm986, %v2298, %v2314
        %v2363 = vsel %vm986, %v2299, %v2315
        %v2364 = vsel %vm986, %v2300, %v2316
        %v2365 = vsel %vm986, %v2301, %v2317
        %v2366 = vsel %vm986, %v2302, %v2318
        %v2367 = vsel %vm986, %v2303, %v2319
        %v2368 = vsel %vm986, %v2304, %v2320
        %v2369 = vsel %vm986, %v2305, %v2321
        %v2370 = vsel %vm986, %v2306, %v2322
        %v2371 = vsel %vm986, %v2307, %v2323
        %v2372 = vsel %vm986, %v2308, %v2324
        %v2373 = vsel %vm986, %v2309, %v2325
        %v2374 = vsel %vm986, %v2310, %v2326
        %v2375 = vsel %vm986, %v2311, %v2327
        %v2376 = vsel %vm986, %v2312, %v2328
        %v2377 = vsel %vm986, %v2281, %v2297
        %v2378 = vsel %vm986, %v2282, %v2298
        %v2379 = vsel %vm986, %v2283, %v2299
        %v2380 = vsel %vm986, %v2284, %v2300
        %v2381 = vsel %vm986, %v2285, %v2301
        %v2382 = vsel %vm986, %v2286, %v2302
        %v2383 = vsel %vm986, %v2287, %v2303
        %v2384 = vsel %vm986, %v2288, %v2304
        %v2385 = vsel %vm986, %v2289, %v2305
        %v2386 = vsel %vm986, %v2290, %v2306
        %v2387 = vsel %vm986, %v2291, %v2307
        %v2388 = vsel %vm986, %v2292, %v2308
        %v2389 = vsel %vm986, %v2293, %v2309
        %v2390 = vsel %vm986, %v2294, %v2310
        %v2391 = vsel %vm986, %v2295, %v2311
        %v2392 = vsel %vm986, %v2296, %v2312
        %v2393 = vsel %vm986, %v2329, %v2281
        %v2394 = vsel %vm986, %v2330, %v2282
        %v2395 = vsel %vm986, %v2331, %v2283
        %v2396 = vsel %vm986, %v2332, %v2284
        %v2397 = vsel %vm986, %v2333, %v2285
        %v2398 = vsel %vm986, %v2334, %v2286
        %v2399 = vsel %vm986, %v2335, %v2287
        %v2400 = vsel %vm986, %v2336, %v2288
        %v2401 = vsel %vm986, %v2337, %v2289
        %v2402 = vsel %vm986, %v2338, %v2290
        %v2403 = vsel %vm986, %v2339, %v2291
        %v2404 = vsel %vm986, %v2340, %v2292
        %v2405 = vsel %vm986, %v2341, %v2293
        %v2406 = vsel %vm986, %v2342, %v2294
        %v2407 = vsel %vm986, %v2343, %v2295
        %v2408 = vsel %vm986, %v2344, %v2296
        %v2409 = vmax.f32 %v2217, %v2377
        %v2410 = vmax.f32 %v2218, %v2361
        %v2411 = vmax.f32 %v2219, %v2345
        %v2412 = vmax.f32 %v2220, %v2393
        %v2413 = vmax.f32 %v2221, %v2378
        %v2414 = vmax.f32 %v2222, %v2362
        %v2415 = vmax.f32 %v2223, %v2346
        %v2416 = vmax.f32 %v2224, %v2394
        %v2417 = vmax.f32 %v2225, %v2379
        %v2418 = vmax.f32 %v2226, %v2363
        %v2419 = vmax.f32 %v2227, %v2347
        %v2420 = vmax.f32 %v2228, %v2395
        %v2421 = vmax.f32 %v2229, %v2380
        %v2422 = vmax.f32 %v2230, %v2364
        %v2423 = vmax.f32 %v2231, %v2348
        %v2424 = vmax.f32 %v2232, %v2396
        %v2425 = vmax.f32 %v2233, %v2381
        %v2426 = vmax.f32 %v2234, %v2365
        %v2427 = vmax.f32 %v2235, %v2349
        %v2428 = vmax.f32 %v2236, %v2397
        %v2429 = vmax.f32 %v2237, %v2382
        %v2430 = vmax.f32 %v2238, %v2366
        %v2431 = vmax.f32 %v2239, %v2350
        %v2432 = vmax.f32 %v2240, %v2398
        %v2433 = vmax.f32 %v2241, %v2383
        %v2434 = vmax.f32 %v2242, %v2367
        %v2435 = vmax.f32 %v2243, %v2351
        %v2436 = vmax.f32 %v2244, %v2399
        %v2437 = vmax.f32 %v2245, %v2384
        %v2438 = vmax.f32 %v2246, %v2368
        %v2439 = vmax.f32 %v2247, %v2352
        %v2440 = vmax.f32 %v2248, %v2400
        %v2441 = vmax.f32 %v2249, %v2385
        %v2442 = vmax.f32 %v2250, %v2369
        %v2443 = vmax.f32 %v2251, %v2353
        %v2444 = vmax.f32 %v2252, %v2401
        %v2445 = vmax.f32 %v2253, %v2386
        %v2446 = vmax.f32 %v2254, %v2370
        %v2447 = vmax.f32 %v2255, %v2354
        %v2448 = vmax.f32 %v2256, %v2402
        %v2449 = vmax.f32 %v2257, %v2387
        %v2450 = vmax.f32 %v2258, %v2371
        %v2451 = vmax.f32 %v2259, %v2355
        %v2452 = vmax.f32 %v2260, %v2403
        %v2453 = vmax.f32 %v2261, %v2388
        %v2454 = vmax.f32 %v2262, %v2372
        %v2455 = vmax.f32 %v2263, %v2356
        %v2456 = vmax.f32 %v2264, %v2404
        %v2457 = vmax.f32 %v2265, %v2389
        %v2458 = vmax.f32 %v2266, %v2373
        %v2459 = vmax.f32 %v2267, %v2357
        %v2460 = vmax.f32 %v2268, %v2405
        %v2461 = vmax.f32 %v2269, %v2390
        %v2462 = vmax.f32 %v2270, %v2374
        %v2463 = vmax.f32 %v2271, %v2358
        %v2464 = vmax.f32 %v2272, %v2406
        %v2465 = vmax.f32 %v2273, %v2391
        %v2466 = vmax.f32 %v2274, %v2375
        %v2467 = vmax.f32 %v2275, %v2359
        %v2468 = vmax.f32 %v2276, %v2407
        %v2469 = vmax.f32 %v2277, %v2392
        %v2470 = vmax.f32 %v2278, %v2376
        %v2471 = vmax.f32 %v2279, %v2360
        %v2472 = vmax.f32 %v2280, %v2408
        %v2473 = vrot.slane %v2409, 2
        %v2474 = vrot.slane %v2413, 2
        %v2475 = vrot.slane %v2417, 2
        %v2476 = vrot.slane %v2421, 2
        %v2477 = vrot.slane %v2425, 2
        %v2478 = vrot.slane %v2429, 2
        %v2479 = vrot.slane %v2433, 2
        %v2480 = vrot.slane %v2437, 2
        %v2481 = vrot.slane %v2441, 2
        %v2482 = vrot.slane %v2445, 2
        %v2483 = vrot.slane %v2449, 2
        %v2484 = vrot.slane %v2453, 2
        %v2485 = vrot.slane %v2457, 2
        %v2486 = vrot.slane %v2461, 2
        %v2487 = vrot.slane %v2465, 2
        %v2488 = vrot.slane %v2469, 2
        %v2489 = vrot.slane %v2410, 2
        %v2490 = vrot.slane %v2414, 2
        %v2491 = vrot.slane %v2418, 2
        %v2492 = vrot.slane %v2422, 2
        %v2493 = vrot.slane %v2426, 2
        %v2494 = vrot.slane %v2430, 2
        %v2495 = vrot.slane %v2434, 2
        %v2496 = vrot.slane %v2438, 2
        %v2497 = vrot.slane %v2442, 2
        %v2498 = vrot.slane %v2446, 2
        %v2499 = vrot.slane %v2450, 2
        %v2500 = vrot.slane %v2454, 2
        %v2501 = vrot.slane %v2458, 2
        %v2502 = vrot.slane %v2462, 2
        %v2503 = vrot.slane %v2466, 2
        %v2504 = vrot.slane %v2470, 2
        %v2505 = vrot.slane %v2411, 2
        %v2506 = vrot.slane %v2415, 2
        %v2507 = vrot.slane %v2419, 2
        %v2508 = vrot.slane %v2423, 2
        %v2509 = vrot.slane %v2427, 2
        %v2510 = vrot.slane %v2431, 2
        %v2511 = vrot.slane %v2435, 2
        %v2512 = vrot.slane %v2439, 2
        %v2513 = vrot.slane %v2443, 2
        %v2514 = vrot.slane %v2447, 2
        %v2515 = vrot.slane %v2451, 2
        %v2516 = vrot.slane %v2455, 2
        %v2517 = vrot.slane %v2459, 2
        %v2518 = vrot.slane %v2463, 2
        %v2519 = vrot.slane %v2467, 2
        %v2520 = vrot.slane %v2471, 2
        %v2521 = vrot.slane %v2412, 2
        %v2522 = vrot.slane %v2416, 2
        %v2523 = vrot.slane %v2420, 2
        %v2524 = vrot.slane %v2424, 2
        %v2525 = vrot.slane %v2428, 2
        %v2526 = vrot.slane %v2432, 2
        %v2527 = vrot.slane %v2436, 2
        %v2528 = vrot.slane %v2440, 2
        %v2529 = vrot.slane %v2444, 2
        %v2530 = vrot.slane %v2448, 2
        %v2531 = vrot.slane %v2452, 2
        %v2532 = vrot.slane %v2456, 2
        %v2533 = vrot.slane %v2460, 2
        %v2534 = vrot.slane %v2464, 2
        %v2535 = vrot.slane %v2468, 2
        %v2536 = vrot.slane %v2472, 2
        %v2537 = vsel %vm1179, %v2505, %v2521
        %v2538 = vsel %vm1179, %v2506, %v2522
        %v2539 = vsel %vm1179, %v2507, %v2523
        %v2540 = vsel %vm1179, %v2508, %v2524
        %v2541 = vsel %vm1179, %v2509, %v2525
        %v2542 = vsel %vm1179, %v2510, %v2526
        %v2543 = vsel %vm1179, %v2511, %v2527
        %v2544 = vsel %vm1179, %v2512, %v2528
        %v2545 = vsel %vm1179, %v2513, %v2529
        %v2546 = vsel %vm1179, %v2514, %v2530
        %v2547 = vsel %vm1179, %v2515, %v2531
        %v2548 = vsel %vm1179, %v2516, %v2532
        %v2549 = vsel %vm1179, %v2517, %v2533
        %v2550 = vsel %vm1179, %v2518, %v2534
        %v2551 = vsel %vm1179, %v2519, %v2535
        %v2552 = vsel %vm1179, %v2520, %v2536
        %v2553 = vsel %vm1179, %v2489, %v2505
        %v2554 = vsel %vm1179, %v2490, %v2506
        %v2555 = vsel %vm1179, %v2491, %v2507
        %v2556 = vsel %vm1179, %v2492, %v2508
        %v2557 = vsel %vm1179, %v2493, %v2509
        %v2558 = vsel %vm1179, %v2494, %v2510
        %v2559 = vsel %vm1179, %v2495, %v2511
        %v2560 = vsel %vm1179, %v2496, %v2512
        %v2561 = vsel %vm1179, %v2497, %v2513
        %v2562 = vsel %vm1179, %v2498, %v2514
        %v2563 = vsel %vm1179, %v2499, %v2515
        %v2564 = vsel %vm1179, %v2500, %v2516
        %v2565 = vsel %vm1179, %v2501, %v2517
        %v2566 = vsel %vm1179, %v2502, %v2518
        %v2567 = vsel %vm1179, %v2503, %v2519
        %v2568 = vsel %vm1179, %v2504, %v2520
        %v2569 = vsel %vm1179, %v2473, %v2489
        %v2570 = vsel %vm1179, %v2474, %v2490
        %v2571 = vsel %vm1179, %v2475, %v2491
        %v2572 = vsel %vm1179, %v2476, %v2492
        %v2573 = vsel %vm1179, %v2477, %v2493
        %v2574 = vsel %vm1179, %v2478, %v2494
        %v2575 = vsel %vm1179, %v2479, %v2495
        %v2576 = vsel %vm1179, %v2480, %v2496
        %v2577 = vsel %vm1179, %v2481, %v2497
        %v2578 = vsel %vm1179, %v2482, %v2498
        %v2579 = vsel %vm1179, %v2483, %v2499
        %v2580 = vsel %vm1179, %v2484, %v2500
        %v2581 = vsel %vm1179, %v2485, %v2501
        %v2582 = vsel %vm1179, %v2486, %v2502
        %v2583 = vsel %vm1179, %v2487, %v2503
        %v2584 = vsel %vm1179, %v2488, %v2504
        %v2585 = vmax.f32 %v2409, %v2569
        %v2586 = vmax.f32 %v2410, %v2553
        %v2587 = vmax.f32 %v2411, %v2537
        %v2588 = vmax.f32 %v2413, %v2570
        %v2589 = vmax.f32 %v2414, %v2554
        %v2590 = vmax.f32 %v2415, %v2538
        %v2591 = vmax.f32 %v2417, %v2571
        %v2592 = vmax.f32 %v2418, %v2555
        %v2593 = vmax.f32 %v2419, %v2539
        %v2594 = vmax.f32 %v2421, %v2572
        %v2595 = vmax.f32 %v2422, %v2556
        %v2596 = vmax.f32 %v2423, %v2540
        %v2597 = vmax.f32 %v2425, %v2573
        %v2598 = vmax.f32 %v2426, %v2557
        %v2599 = vmax.f32 %v2427, %v2541
        %v2600 = vmax.f32 %v2429, %v2574
        %v2601 = vmax.f32 %v2430, %v2558
        %v2602 = vmax.f32 %v2431, %v2542
        %v2603 = vmax.f32 %v2433, %v2575
        %v2604 = vmax.f32 %v2434, %v2559
        %v2605 = vmax.f32 %v2435, %v2543
        %v2606 = vmax.f32 %v2437, %v2576
        %v2607 = vmax.f32 %v2438, %v2560
        %v2608 = vmax.f32 %v2439, %v2544
        %v2609 = vmax.f32 %v2441, %v2577
        %v2610 = vmax.f32 %v2442, %v2561
        %v2611 = vmax.f32 %v2443, %v2545
        %v2612 = vmax.f32 %v2445, %v2578
        %v2613 = vmax.f32 %v2446, %v2562
        %v2614 = vmax.f32 %v2447, %v2546
        %v2615 = vmax.f32 %v2449, %v2579
        %v2616 = vmax.f32 %v2450, %v2563
        %v2617 = vmax.f32 %v2451, %v2547
        %v2618 = vmax.f32 %v2453, %v2580
        %v2619 = vmax.f32 %v2454, %v2564
        %v2620 = vmax.f32 %v2455, %v2548
        %v2621 = vmax.f32 %v2457, %v2581
        %v2622 = vmax.f32 %v2458, %v2565
        %v2623 = vmax.f32 %v2459, %v2549
        %v2624 = vmax.f32 %v2461, %v2582
        %v2625 = vmax.f32 %v2462, %v2566
        %v2626 = vmax.f32 %v2463, %v2550
        %v2627 = vmax.f32 %v2465, %v2583
        %v2628 = vmax.f32 %v2466, %v2567
        %v2629 = vmax.f32 %v2467, %v2551
        %v2630 = vmax.f32 %v2469, %v2584
        %v2631 = vmax.f32 %v2470, %v2568
        %v2632 = vmax.f32 %v2471, %v2552
        %v2633 = vrot.slane %v2217, 4
        %v2634 = vrot.slane %v2221, 4
        %v2635 = vrot.slane %v2225, 4
        %v2636 = vrot.slane %v2229, 4
        %v2637 = vrot.slane %v2233, 4
        %v2638 = vrot.slane %v2237, 4
        %v2639 = vrot.slane %v2241, 4
        %v2640 = vrot.slane %v2245, 4
        %v2641 = vrot.slane %v2249, 4
        %v2642 = vrot.slane %v2253, 4
        %v2643 = vrot.slane %v2257, 4
        %v2644 = vrot.slane %v2261, 4
        %v2645 = vrot.slane %v2265, 4
        %v2646 = vrot.slane %v2269, 4
        %v2647 = vrot.slane %v2273, 4
        %v2648 = vrot.slane %v2277, 4
        %v2649 = vrot.slane %v2218, 4
        %v2650 = vrot.slane %v2222, 4
        %v2651 = vrot.slane %v2226, 4
        %v2652 = vrot.slane %v2230, 4
        %v2653 = vrot.slane %v2234, 4
        %v2654 = vrot.slane %v2238, 4
        %v2655 = vrot.slane %v2242, 4
        %v2656 = vrot.slane %v2246, 4
        %v2657 = vrot.slane %v2250, 4
        %v2658 = vrot.slane %v2254, 4
        %v2659 = vrot.slane %v2258, 4
        %v2660 = vrot.slane %v2262, 4
        %v2661 = vrot.slane %v2266, 4
        %v2662 = vrot.slane %v2270, 4
        %v2663 = vrot.slane %v2274, 4
        %v2664 = vrot.slane %v2278, 4
        %v2665 = vrot.slane %v2219, 4
        %v2666 = vrot.slane %v2223, 4
        %v2667 = vrot.slane %v2227, 4
        %v2668 = vrot.slane %v2231, 4
        %v2669 = vrot.slane %v2235, 4
        %v2670 = vrot.slane %v2239, 4
        %v2671 = vrot.slane %v2243, 4
        %v2672 = vrot.slane %v2247, 4
        %v2673 = vrot.slane %v2251, 4
        %v2674 = vrot.slane %v2255, 4
        %v2675 = vrot.slane %v2259, 4
        %v2676 = vrot.slane %v2263, 4
        %v2677 = vrot.slane %v2267, 4
        %v2678 = vrot.slane %v2271, 4
        %v2679 = vrot.slane %v2275, 4
        %v2680 = vrot.slane %v2279, 4
        %v2681 = vrot.slane %v2220, 4
        %v2682 = vrot.slane %v2224, 4
        %v2683 = vrot.slane %v2228, 4
        %v2684 = vrot.slane %v2232, 4
        %v2685 = vrot.slane %v2236, 4
        %v2686 = vrot.slane %v2240, 4
        %v2687 = vrot.slane %v2244, 4
        %v2688 = vrot.slane %v2248, 4
        %v2689 = vrot.slane %v2252, 4
        %v2690 = vrot.slane %v2256, 4
        %v2691 = vrot.slane %v2260, 4
        %v2692 = vrot.slane %v2264, 4
        %v2693 = vrot.slane %v2268, 4
        %v2694 = vrot.slane %v2272, 4
        %v2695 = vrot.slane %v2276, 4
        %v2696 = vrot.slane %v2280, 4
        %v2697 = vsel %vm1340, %v2665, %v2681
        %v2698 = vsel %vm1340, %v2666, %v2682
        %v2699 = vsel %vm1340, %v2667, %v2683
        %v2700 = vsel %vm1340, %v2668, %v2684
        %v2701 = vsel %vm1340, %v2669, %v2685
        %v2702 = vsel %vm1340, %v2670, %v2686
        %v2703 = vsel %vm1340, %v2671, %v2687
        %v2704 = vsel %vm1340, %v2672, %v2688
        %v2705 = vsel %vm1340, %v2673, %v2689
        %v2706 = vsel %vm1340, %v2674, %v2690
        %v2707 = vsel %vm1340, %v2675, %v2691
        %v2708 = vsel %vm1340, %v2676, %v2692
        %v2709 = vsel %vm1340, %v2677, %v2693
        %v2710 = vsel %vm1340, %v2678, %v2694
        %v2711 = vsel %vm1340, %v2679, %v2695
        %v2712 = vsel %vm1340, %v2680, %v2696
        %v2713 = vsel %vm1340, %v2649, %v2665
        %v2714 = vsel %vm1340, %v2650, %v2666
        %v2715 = vsel %vm1340, %v2651, %v2667
        %v2716 = vsel %vm1340, %v2652, %v2668
        %v2717 = vsel %vm1340, %v2653, %v2669
        %v2718 = vsel %vm1340, %v2654, %v2670
        %v2719 = vsel %vm1340, %v2655, %v2671
        %v2720 = vsel %vm1340, %v2656, %v2672
        %v2721 = vsel %vm1340, %v2657, %v2673
        %v2722 = vsel %vm1340, %v2658, %v2674
        %v2723 = vsel %vm1340, %v2659, %v2675
        %v2724 = vsel %vm1340, %v2660, %v2676
        %v2725 = vsel %vm1340, %v2661, %v2677
        %v2726 = vsel %vm1340, %v2662, %v2678
        %v2727 = vsel %vm1340, %v2663, %v2679
        %v2728 = vsel %vm1340, %v2664, %v2680
        %v2729 = vsel %vm1340, %v2633, %v2649
        %v2730 = vsel %vm1340, %v2634, %v2650
        %v2731 = vsel %vm1340, %v2635, %v2651
        %v2732 = vsel %vm1340, %v2636, %v2652
        %v2733 = vsel %vm1340, %v2637, %v2653
        %v2734 = vsel %vm1340, %v2638, %v2654
        %v2735 = vsel %vm1340, %v2639, %v2655
        %v2736 = vsel %vm1340, %v2640, %v2656
        %v2737 = vsel %vm1340, %v2641, %v2657
        %v2738 = vsel %vm1340, %v2642, %v2658
        %v2739 = vsel %vm1340, %v2643, %v2659
        %v2740 = vsel %vm1340, %v2644, %v2660
        %v2741 = vsel %vm1340, %v2645, %v2661
        %v2742 = vsel %vm1340, %v2646, %v2662
        %v2743 = vsel %vm1340, %v2647, %v2663
        %v2744 = vsel %vm1340, %v2648, %v2664
        %v2745 = vmax.f32 %v2585, %v2729
        %v2746 = vmax.f32 %v2586, %v2713
        %v2747 = vmax.f32 %v2587, %v2697
        %v2748 = vmax.f32 %v2588, %v2730
        %v2749 = vmax.f32 %v2589, %v2714
        %v2750 = vmax.f32 %v2590, %v2698
        %v2751 = vmax.f32 %v2591, %v2731
        %v2752 = vmax.f32 %v2592, %v2715
        %v2753 = vmax.f32 %v2593, %v2699
        %v2754 = vmax.f32 %v2594, %v2732
        %v2755 = vmax.f32 %v2595, %v2716
        %v2756 = vmax.f32 %v2596, %v2700
        %v2757 = vmax.f32 %v2597, %v2733
        %v2758 = vmax.f32 %v2598, %v2717
        %v2759 = vmax.f32 %v2599, %v2701
        %v2760 = vmax.f32 %v2600, %v2734
        %v2761 = vmax.f32 %v2601, %v2718
        %v2762 = vmax.f32 %v2602, %v2702
        %v2763 = vmax.f32 %v2603, %v2735
        %v2764 = vmax.f32 %v2604, %v2719
        %v2765 = vmax.f32 %v2605, %v2703
        %v2766 = vmax.f32 %v2606, %v2736
        %v2767 = vmax.f32 %v2607, %v2720
        %v2768 = vmax.f32 %v2608, %v2704
        %v2769 = vmax.f32 %v2609, %v2737
        %v2770 = vmax.f32 %v2610, %v2721
        %v2771 = vmax.f32 %v2611, %v2705
        %v2772 = vmax.f32 %v2612, %v2738
        %v2773 = vmax.f32 %v2613, %v2722
        %v2774 = vmax.f32 %v2614, %v2706
        %v2775 = vmax.f32 %v2615, %v2739
        %v2776 = vmax.f32 %v2616, %v2723
        %v2777 = vmax.f32 %v2617, %v2707
        %v2778 = vmax.f32 %v2618, %v2740
        %v2779 = vmax.f32 %v2619, %v2724
        %v2780 = vmax.f32 %v2620, %v2708
        %v2781 = vmax.f32 %v2621, %v2741
        %v2782 = vmax.f32 %v2622, %v2725
        %v2783 = vmax.f32 %v2623, %v2709
        %v2784 = vmax.f32 %v2624, %v2742
        %v2785 = vmax.f32 %v2625, %v2726
        %v2786 = vmax.f32 %v2626, %v2710
        %v2787 = vmax.f32 %v2627, %v2743
        %v2788 = vmax.f32 %v2628, %v2727
        %v2789 = vmax.f32 %v2629, %v2711
        %v2790 = vmax.f32 %v2630, %v2744
        %v2791 = vmax.f32 %v2631, %v2728
        %v2792 = vmax.f32 %v2632, %v2712
        %v2793 = vrot.slane %v2745, 6
        %v2794 = vrot.slane %v2748, 6
        %v2795 = vrot.slane %v2751, 6
        %v2796 = vrot.slane %v2754, 6
        %v2797 = vrot.slane %v2757, 6
        %v2798 = vrot.slane %v2760, 6
        %v2799 = vrot.slane %v2763, 6
        %v2800 = vrot.slane %v2766, 6
        %v2801 = vrot.slane %v2769, 6
        %v2802 = vrot.slane %v2772, 6
        %v2803 = vrot.slane %v2775, 6
        %v2804 = vrot.slane %v2778, 6
        %v2805 = vrot.slane %v2781, 6
        %v2806 = vrot.slane %v2784, 6
        %v2807 = vrot.slane %v2787, 6
        %v2808 = vrot.slane %v2790, 6
        %v2809 = vrot.slane %v2746, 6
        %v2810 = vrot.slane %v2749, 6
        %v2811 = vrot.slane %v2752, 6
        %v2812 = vrot.slane %v2755, 6
        %v2813 = vrot.slane %v2758, 6
        %v2814 = vrot.slane %v2761, 6
        %v2815 = vrot.slane %v2764, 6
        %v2816 = vrot.slane %v2767, 6
        %v2817 = vrot.slane %v2770, 6
        %v2818 = vrot.slane %v2773, 6
        %v2819 = vrot.slane %v2776, 6
        %v2820 = vrot.slane %v2779, 6
        %v2821 = vrot.slane %v2782, 6
        %v2822 = vrot.slane %v2785, 6
        %v2823 = vrot.slane %v2788, 6
        %v2824 = vrot.slane %v2791, 6
        %v2825 = vrot.slane %v2747, 6
        %v2826 = vrot.slane %v2750, 6
        %v2827 = vrot.slane %v2753, 6
        %v2828 = vrot.slane %v2756, 6
        %v2829 = vrot.slane %v2759, 6
        %v2830 = vrot.slane %v2762, 6
        %v2831 = vrot.slane %v2765, 6
        %v2832 = vrot.slane %v2768, 6
        %v2833 = vrot.slane %v2771, 6
        %v2834 = vrot.slane %v2774, 6
        %v2835 = vrot.slane %v2777, 6
        %v2836 = vrot.slane %v2780, 6
        %v2837 = vrot.slane %v2783, 6
        %v2838 = vrot.slane %v2786, 6
        %v2839 = vrot.slane %v2789, 6
        %v2840 = vrot.slane %v2792, 6
        %v2841 = vsel %vm1485, %v2809, %v2825
        %v2842 = vsel %vm1485, %v2810, %v2826
        %v2843 = vsel %vm1485, %v2811, %v2827
        %v2844 = vsel %vm1485, %v2812, %v2828
        %v2845 = vsel %vm1485, %v2813, %v2829
        %v2846 = vsel %vm1485, %v2814, %v2830
        %v2847 = vsel %vm1485, %v2815, %v2831
        %v2848 = vsel %vm1485, %v2816, %v2832
        %v2849 = vsel %vm1485, %v2817, %v2833
        %v2850 = vsel %vm1485, %v2818, %v2834
        %v2851 = vsel %vm1485, %v2819, %v2835
        %v2852 = vsel %vm1485, %v2820, %v2836
        %v2853 = vsel %vm1485, %v2821, %v2837
        %v2854 = vsel %vm1485, %v2822, %v2838
        %v2855 = vsel %vm1485, %v2823, %v2839
        %v2856 = vsel %vm1485, %v2824, %v2840
        %v2857 = vsel %vm1485, %v2793, %v2809
        %v2858 = vsel %vm1485, %v2794, %v2810
        %v2859 = vsel %vm1485, %v2795, %v2811
        %v2860 = vsel %vm1485, %v2796, %v2812
        %v2861 = vsel %vm1485, %v2797, %v2813
        %v2862 = vsel %vm1485, %v2798, %v2814
        %v2863 = vsel %vm1485, %v2799, %v2815
        %v2864 = vsel %vm1485, %v2800, %v2816
        %v2865 = vsel %vm1485, %v2801, %v2817
        %v2866 = vsel %vm1485, %v2802, %v2818
        %v2867 = vsel %vm1485, %v2803, %v2819
        %v2868 = vsel %vm1485, %v2804, %v2820
        %v2869 = vsel %vm1485, %v2805, %v2821
        %v2870 = vsel %vm1485, %v2806, %v2822
        %v2871 = vsel %vm1485, %v2807, %v2823
        %v2872 = vsel %vm1485, %v2808, %v2824
        %v2873 = vpack.c.bf16 %v2841, %v2857
        %v2874 = vpack.c.bf16 %v2842, %v2858
        %v2875 = vpack.c.bf16 %v2843, %v2859
        %v2876 = vpack.c.bf16 %v2844, %v2860
        %v2877 = vpack.c.bf16 %v2845, %v2861
        %v2878 = vpack.c.bf16 %v2846, %v2862
        %v2879 = vpack.c.bf16 %v2847, %v2863
        %v2880 = vpack.c.bf16 %v2848, %v2864
        %v2881 = vpack.c.bf16 %v2849, %v2865
        %v2882 = vpack.c.bf16 %v2850, %v2866
        %v2883 = vpack.c.bf16 %v2851, %v2867
        %v2884 = vpack.c.bf16 %v2852, %v2868
        %v2885 = vpack.c.bf16 %v2853, %v2869
        %v2886 = vpack.c.bf16 %v2854, %v2870
        %v2887 = vpack.c.bf16 %v2855, %v2871
        %v2888 = vpack.c.bf16 %v2856, %v2872
        %s2889 = scalar_lea.vmem %s3, 128
        %v2890 = vld [vmem:[%s2889] sm:$0xf]
        %v2891 = vld [vmem:[%s2889 + $0x4] sm:$0xf]
        %v2892 = vld [vmem:[%s2889 + $0x8] sm:$0xf]
        %v2893 = vld [vmem:[%s2889 + $0xc] sm:$0xf]
        %v2894 = vld [vmem:[%s2889 + $0x10] sm:$0xf]
        %v2895 = vld [vmem:[%s2889 + $0x14] sm:$0xf]
        %v2896 = vld [vmem:[%s2889 + $0x18] sm:$0xf]
        %v2897 = vld [vmem:[%s2889 + $0x1c] sm:$0xf]
        %v2898 = vld [vmem:[%s2889 + $0x20] sm:$0xf]
        %v2899 = vld [vmem:[%s2889 + $0x24] sm:$0xf]
        %v2900 = vld [vmem:[%s2889 + $0x28] sm:$0xf]
        %v2901 = vld [vmem:[%s2889 + $0x2c] sm:$0xf]
        %v2902 = vld [vmem:[%s2889 + $0x30] sm:$0xf]
        %v2903 = vld [vmem:[%s2889 + $0x34] sm:$0xf]
        %v2904 = vld [vmem:[%s2889 + $0x38] sm:$0xf]
        %v2905 = vld [vmem:[%s2889 + $0x3c] sm:$0xf]
        %v2922 = vunpack.c.l.b16 %v2890
        %v2923 = vunpack.c.l.b16 %v2891
        %v2924 = vunpack.c.l.b16 %v2892
        %v2925 = vunpack.c.l.b16 %v2893
        %v2926 = vunpack.c.l.b16 %v2894
        %v2927 = vunpack.c.l.b16 %v2895
        %v2928 = vunpack.c.l.b16 %v2896
        %v2929 = vunpack.c.l.b16 %v2897
        %v2930 = vunpack.c.l.b16 %v2898
        %v2931 = vunpack.c.l.b16 %v2899
        %v2932 = vunpack.c.l.b16 %v2900
        %v2933 = vunpack.c.l.b16 %v2901
        %v2934 = vunpack.c.l.b16 %v2902
        %v2935 = vunpack.c.l.b16 %v2903
        %v2936 = vunpack.c.l.b16 %v2904
        %v2937 = vunpack.c.l.b16 %v2905
        %v2938 = vpack.c.b16 %v2923, %v2922
        %v2939 = vpack.c.b16 %v2925, %v2924
        %v2940 = vpack.c.b16 %v2927, %v2926
        %v2941 = vpack.c.b16 %v2929, %v2928
        %v2942 = vpack.c.b16 %v2931, %v2930
        %v2943 = vpack.c.b16 %v2933, %v2932
        %v2944 = vpack.c.b16 %v2935, %v2934
        %v2945 = vpack.c.b16 %v2937, %v2936
        %2954 = vmatprep.subr.bf16.mxu0 0
        %2955 = vmatpush1.bf16.msra.mxu0 %v2945
        %2956 = vmatprep.subr.bf16.mxu0 0
        %2957 = vmatpush1.bf16.msra.mxu0 %v2944
        %2958 = vmatprep.subr.bf16.mxu0 0
        %2959 = vmatpush1.bf16.msra.mxu0 %v2943
        %2960 = vmatprep.subr.bf16.mxu0 0
        %2961 = vmatpush1.bf16.msra.mxu0 %v2942
        %2962 = vmatprep.subr.bf16.mxu0 0
        %2963 = vmatpush1.bf16.msra.mxu0 %v2941
        %2964 = vmatprep.subr.bf16.mxu0 0
        %2965 = vmatpush1.bf16.msra.mxu0 %v2940
        %2966 = vmatprep.subr.bf16.mxu0 0
        %2967 = vmatpush1.bf16.msra.mxu0 %v2939
        %2968 = vmatprep.subr.bf16.mxu0 0
        %2969 = vmatpush1.bf16.msra.mxu0 %v2938
        %2970 = vmatprep.subr.bf16.mxu0 0
        %2971 = vmatpush2.bf16.msra.mxu0 0
        %2972 = vmatprep.subr.bf16.mxu0 0
        %2973 = vmatpush2.bf16.msra.mxu0 0
        %2974 = vmatprep.subr.bf16.mxu0 0
        %2975 = vmatpush2.bf16.msra.mxu0 0
        %2976 = vmatprep.subr.bf16.mxu0 0
        %2977 = vmatpush2.bf16.msra.mxu0 0
        %2978 = vmatprep.subr.bf16.mxu0 0
        %2979 = vmatpush2.bf16.msra.mxu0 0
        %2980 = vmatprep.subr.bf16.mxu0 0
        %2981 = vmatpush2.bf16.msra.mxu0 0
        %2982 = vmatprep.subr.bf16.mxu0 0
        %2983 = vmatpush2.bf16.msra.mxu0 0
        %2984 = vmatprep.subr.bf16.mxu0 0
        %2985 = vmatpush2.bf16.msra.mxu0 0
        %2986 = vmatprep.mubr.bf16.mxu0 0
        %2987 = vmatmul.mubr.bf16.gmra.mxu0 %v2873
        %v2988 = vpop.f32.mrf.mxu0
        %v2989 = vadd.f32 0.0, %v2988
        %v2990 = vpop.f32.mrf.mxu0
        %v2991 = vpop.f32.mrf.mxu0
        %v2992 = vadd.f32 0.0, %v2991
        %v2993 = vpop.f32.mrf.mxu0
        %2994 = vmatprep.mubr.bf16.mxu0 0
        %2995 = vmatmul.mubr.bf16.gmra.mxu0 %v2874
        %v2996 = vpop.f32.mrf.mxu0
        %v2997 = vadd.f32 0.0, %v2996
        %v2998 = vpop.f32.mrf.mxu0
        %v2999 = vpop.f32.mrf.mxu0
        %v3000 = vadd.f32 0.0, %v2999
        %v3001 = vpop.f32.mrf.mxu0
        %3002 = vmatprep.mubr.bf16.mxu0 0
        %3003 = vmatmul.mubr.bf16.gmra.mxu0 %v2875
        %v3004 = vpop.f32.mrf.mxu0
        %v3005 = vadd.f32 0.0, %v3004
        %v3006 = vpop.f32.mrf.mxu0
        %v3007 = vpop.f32.mrf.mxu0
        %v3008 = vadd.f32 0.0, %v3007
        %v3009 = vpop.f32.mrf.mxu0
        %3010 = vmatprep.mubr.bf16.mxu0 0
        %3011 = vmatmul.mubr.bf16.gmra.mxu0 %v2876
        %v3012 = vpop.f32.mrf.mxu0
        %v3013 = vadd.f32 0.0, %v3012
        %v3014 = vpop.f32.mrf.mxu0
        %v3015 = vpop.f32.mrf.mxu0
        %v3016 = vadd.f32 0.0, %v3015
        %v3017 = vpop.f32.mrf.mxu0
        %3018 = vmatprep.mubr.bf16.mxu0 0
        %3019 = vmatmul.mubr.bf16.gmra.mxu0 %v2877
        %v3020 = vpop.f32.mrf.mxu0
        %v3021 = vadd.f32 0.0, %v3020
        %v3022 = vpop.f32.mrf.mxu0
        %v3023 = vpop.f32.mrf.mxu0
        %v3024 = vadd.f32 0.0, %v3023
        %v3025 = vpop.f32.mrf.mxu0
        %3026 = vmatprep.mubr.bf16.mxu0 0
        %3027 = vmatmul.mubr.bf16.gmra.mxu0 %v2878
        %v3028 = vpop.f32.mrf.mxu0
        %v3029 = vadd.f32 0.0, %v3028
        %v3030 = vpop.f32.mrf.mxu0
        %v3031 = vpop.f32.mrf.mxu0
        %v3032 = vadd.f32 0.0, %v3031
        %v3033 = vpop.f32.mrf.mxu0
        %3034 = vmatprep.mubr.bf16.mxu0 0
        %3035 = vmatmul.mubr.bf16.gmra.mxu0 %v2879
        %v3036 = vpop.f32.mrf.mxu0
        %v3037 = vadd.f32 0.0, %v3036
        %v3038 = vpop.f32.mrf.mxu0
        %v3039 = vpop.f32.mrf.mxu0
        %v3040 = vadd.f32 0.0, %v3039
        %v3041 = vpop.f32.mrf.mxu0
        %3042 = vmatprep.mubr.bf16.mxu0 0
        %3043 = vmatmul.mubr.bf16.gmra.mxu0 %v2880
        %v3044 = vpop.f32.mrf.mxu0
        %v3045 = vadd.f32 0.0, %v3044
        %v3046 = vpop.f32.mrf.mxu0
        %v3047 = vpop.f32.mrf.mxu0
        %v3048 = vadd.f32 0.0, %v3047
        %v3049 = vpop.f32.mrf.mxu0
        %3050 = vmatprep.mubr.bf16.mxu0 0
        %3051 = vmatmul.mubr.bf16.gmra.mxu0 %v2881
        %v3052 = vpop.f32.mrf.mxu0
        %v3053 = vadd.f32 0.0, %v3052
        %v3054 = vpop.f32.mrf.mxu0
        %v3055 = vpop.f32.mrf.mxu0
        %v3056 = vadd.f32 0.0, %v3055
        %v3057 = vpop.f32.mrf.mxu0
        %3058 = vmatprep.mubr.bf16.mxu0 0
        %3059 = vmatmul.mubr.bf16.gmra.mxu0 %v2882
        %v3060 = vpop.f32.mrf.mxu0
        %v3061 = vadd.f32 0.0, %v3060
        %v3062 = vpop.f32.mrf.mxu0
        %v3063 = vpop.f32.mrf.mxu0
        %v3064 = vadd.f32 0.0, %v3063
        %v3065 = vpop.f32.mrf.mxu0
        %3066 = vmatprep.mubr.bf16.mxu0 0
        %3067 = vmatmul.mubr.bf16.gmra.mxu0 %v2883
        %v3068 = vpop.f32.mrf.mxu0
        %v3069 = vadd.f32 0.0, %v3068
        %v3070 = vpop.f32.mrf.mxu0
        %v3071 = vpop.f32.mrf.mxu0
        %v3072 = vadd.f32 0.0, %v3071
        %v3073 = vpop.f32.mrf.mxu0
        %3074 = vmatprep.mubr.bf16.mxu0 0
        %3075 = vmatmul.mubr.bf16.gmra.mxu0 %v2884
        %v3076 = vpop.f32.mrf.mxu0
        %v3077 = vadd.f32 0.0, %v3076
        %v3078 = vpop.f32.mrf.mxu0
        %v3079 = vpop.f32.mrf.mxu0
        %v3080 = vadd.f32 0.0, %v3079
        %v3081 = vpop.f32.mrf.mxu0
        %3082 = vmatprep.mubr.bf16.mxu0 0
        %3083 = vmatmul.mubr.bf16.gmra.mxu0 %v2885
        %v3084 = vpop.f32.mrf.mxu0
        %v3085 = vadd.f32 0.0, %v3084
        %v3086 = vpop.f32.mrf.mxu0
        %v3087 = vpop.f32.mrf.mxu0
        %v3088 = vadd.f32 0.0, %v3087
        %v3089 = vpop.f32.mrf.mxu0
        %3090 = vmatprep.mubr.bf16.mxu0 0
        %3091 = vmatmul.mubr.bf16.gmra.mxu0 %v2886
        %v3092 = vpop.f32.mrf.mxu0
        %v3093 = vadd.f32 0.0, %v3092
        %v3094 = vpop.f32.mrf.mxu0
        %v3095 = vpop.f32.mrf.mxu0
        %v3096 = vadd.f32 0.0, %v3095
        %v3097 = vpop.f32.mrf.mxu0
        %3098 = vmatprep.mubr.bf16.mxu0 0
        %3099 = vmatmul.mubr.bf16.gmra.mxu0 %v2887
        %v3100 = vpop.f32.mrf.mxu0
        %v3101 = vadd.f32 0.0, %v3100
        %v3102 = vpop.f32.mrf.mxu0
        %v3103 = vpop.f32.mrf.mxu0
        %v3104 = vadd.f32 0.0, %v3103
        %v3105 = vpop.f32.mrf.mxu0
        %3106 = vmatprep.mubr.bf16.mxu0 0
        %3107 = vmatmul.mubr.bf16.gmra.mxu0 %v2888
        %v3108 = vpop.f32.mrf.mxu0
        %v3109 = vadd.f32 0.0, %v3108
        %v3110 = vpop.f32.mrf.mxu0
        %v3111 = vpop.f32.mrf.mxu0
        %v3112 = vadd.f32 0.0, %v3111
        %v3113 = vpop.f32.mrf.mxu0
        %3114 = vdwg.mxu0
        %v3115 = vadd.f32 %v1843, %v2989
        %v3116 = vadd.f32 %v1846, %v2992
        %v3117 = vadd.f32 %v1851, %v2997
        %v3118 = vadd.f32 %v1854, %v3000
        %v3119 = vadd.f32 %v1859, %v3005
        %v3120 = vadd.f32 %v1862, %v3008
        %v3121 = vadd.f32 %v1867, %v3013
        %v3122 = vadd.f32 %v1870, %v3016
        %v3123 = vadd.f32 %v1875, %v3021
        %v3124 = vadd.f32 %v1878, %v3024
        %v3125 = vadd.f32 %v1883, %v3029
        %v3126 = vadd.f32 %v1886, %v3032
        %v3127 = vadd.f32 %v1891, %v3037
        %v3128 = vadd.f32 %v1894, %v3040
        %v3129 = vadd.f32 %v1899, %v3045
        %v3130 = vadd.f32 %v1902, %v3048
        %v3131 = vadd.f32 %v1907, %v3053
        %v3132 = vadd.f32 %v1910, %v3056
        %v3133 = vadd.f32 %v1915, %v3061
        %v3134 = vadd.f32 %v1918, %v3064
        %v3135 = vadd.f32 %v1923, %v3069
        %v3136 = vadd.f32 %v1926, %v3072
        %v3137 = vadd.f32 %v1931, %v3077
        %v3138 = vadd.f32 %v1934, %v3080
        %v3139 = vadd.f32 %v1939, %v3085
        %v3140 = vadd.f32 %v1942, %v3088
        %v3141 = vadd.f32 %v1947, %v3093
        %v3142 = vadd.f32 %v1950, %v3096
        %v3143 = vadd.f32 %v1955, %v3101
        %v3144 = vadd.f32 %v1958, %v3104
        %v3145 = vadd.f32 %v1963, %v3109
        %v3146 = vadd.f32 %v1966, %v3112
        %3147 = vst [vmem:[%s543 + $0x8] sm:$0xff] %v2857
        %3148 = vst [vmem:[%s543 + $0x10] sm:$0xff] %v2841
        %3149 = vst [vmem:[%s543 + $0x28] sm:$0xff] %v2858
        %3150 = vst [vmem:[%s543 + $0x30] sm:$0xff] %v2842
        %3151 = vst [vmem:[%s543 + $0x48] sm:$0xff] %v2859
        %3152 = vst [vmem:[%s543 + $0x50] sm:$0xff] %v2843
        %3153 = vst [vmem:[%s543 + $0x68] sm:$0xff] %v2860
        %3154 = vst [vmem:[%s543 + $0x70] sm:$0xff] %v2844
        %3155 = vst [vmem:[%s543 + $0x88] sm:$0xff] %v2861
        %3156 = vst [vmem:[%s543 + $0x90] sm:$0xff] %v2845
        %3157 = vst [vmem:[%s543 + $0xa8] sm:$0xff] %v2862
        %3158 = vst [vmem:[%s543 + $0xb0] sm:$0xff] %v2846
        %3159 = vst [vmem:[%s543 + $0xc8] sm:$0xff] %v2863
        %3160 = vst [vmem:[%s543 + $0xd0] sm:$0xff] %v2847
        %3161 = vst [vmem:[%s543 + $0xe8] sm:$0xff] %v2864
        %3162 = vst [vmem:[%s543 + $0xf0] sm:$0xff] %v2848
        %3163 = vst [vmem:[%s543 + $0x108] sm:$0xff] %v2865
        %3164 = vst [vmem:[%s543 + $0x110] sm:$0xff] %v2849
        %3165 = vst [vmem:[%s543 + $0x128] sm:$0xff] %v2866
        %3166 = vst [vmem:[%s543 + $0x130] sm:$0xff] %v2850
        %3167 = vst [vmem:[%s543 + $0x148] sm:$0xff] %v2867
        %3168 = vst [vmem:[%s543 + $0x150] sm:$0xff] %v2851
        %3169 = vst [vmem:[%s543 + $0x168] sm:$0xff] %v2868
        %3170 = vst [vmem:[%s543 + $0x170] sm:$0xff] %v2852
        %3171 = vst [vmem:[%s543 + $0x188] sm:$0xff] %v2869
        %3172 = vst [vmem:[%s543 + $0x190] sm:$0xff] %v2853
        %3173 = vst [vmem:[%s543 + $0x1a8] sm:$0xff] %v2870
        %3174 = vst [vmem:[%s543 + $0x1b0] sm:$0xff] %v2854
        %3175 = vst [vmem:[%s543 + $0x1c8] sm:$0xff] %v2871
        %3176 = vst [vmem:[%s543 + $0x1d0] sm:$0xff] %v2855
        %3177 = vst [vmem:[%s543 + $0x1e8] sm:$0xff] %v2872
        %3178 = vst [vmem:[%s543 + $0x1f0] sm:$0xff] %v2856
        %v3179 = vld [vmem:[#allocation2] sm:$0xff]
        %v3180 = vld [vmem:[#allocation2 + $0x8] sm:$0xff]
        %v3181 = vld [vmem:[#allocation2 + $0x10] sm:$0xff]
        %v3182 = vld [vmem:[#allocation2 + $0x18] sm:$0xff]
        %v3183 = vld [vmem:[#allocation2 + $0x20] sm:$0xff]
        %v3184 = vld [vmem:[#allocation2 + $0x28] sm:$0xff]
        %v3185 = vld [vmem:[#allocation2 + $0x30] sm:$0xff]
        %v3186 = vld [vmem:[#allocation2 + $0x38] sm:$0xff]
        %v3187 = vld [vmem:[#allocation2 + $0x40] sm:$0xff]
        %v3188 = vld [vmem:[#allocation2 + $0x48] sm:$0xff]
        %v3189 = vld [vmem:[#allocation2 + $0x50] sm:$0xff]
        %v3190 = vld [vmem:[#allocation2 + $0x58] sm:$0xff]
        %v3191 = vld [vmem:[#allocation2 + $0x60] sm:$0xff]
        %v3192 = vld [vmem:[#allocation2 + $0x68] sm:$0xff]
        %v3193 = vld [vmem:[#allocation2 + $0x70] sm:$0xff]
        %v3194 = vld [vmem:[#allocation2 + $0x78] sm:$0xff]
        %v3195 = vld [vmem:[#allocation2 + $0x80] sm:$0xff]
        %v3196 = vld [vmem:[#allocation2 + $0x88] sm:$0xff]
        %v3197 = vld [vmem:[#allocation2 + $0x90] sm:$0xff]
        %v3198 = vld [vmem:[#allocation2 + $0x98] sm:$0xff]
        %v3199 = vld [vmem:[#allocation2 + $0xa0] sm:$0xff]
        %v3200 = vld [vmem:[#allocation2 + $0xa8] sm:$0xff]
        %v3201 = vld [vmem:[#allocation2 + $0xb0] sm:$0xff]
        %v3202 = vld [vmem:[#allocation2 + $0xb8] sm:$0xff]
        %v3203 = vld [vmem:[#allocation2 + $0xc0] sm:$0xff]
        %v3204 = vld [vmem:[#allocation2 + $0xc8] sm:$0xff]
        %v3205 = vld [vmem:[#allocation2 + $0xd0] sm:$0xff]
        %v3206 = vld [vmem:[#allocation2 + $0xd8] sm:$0xff]
        %v3207 = vld [vmem:[#allocation2 + $0xe0] sm:$0xff]
        %v3208 = vld [vmem:[#allocation2 + $0xe8] sm:$0xff]
        %v3209 = vld [vmem:[#allocation2 + $0xf0] sm:$0xff]
        %v3210 = vld [vmem:[#allocation2 + $0xf8] sm:$0xff]
        %v3211 = vld [vmem:[#allocation2 + $0x100] sm:$0xff]
        %v3212 = vld [vmem:[#allocation2 + $0x108] sm:$0xff]
        %v3213 = vld [vmem:[#allocation2 + $0x110] sm:$0xff]
        %v3214 = vld [vmem:[#allocation2 + $0x118] sm:$0xff]
        %v3215 = vld [vmem:[#allocation2 + $0x120] sm:$0xff]
        %v3216 = vld [vmem:[#allocation2 + $0x128] sm:$0xff]
        %v3217 = vld [vmem:[#allocation2 + $0x130] sm:$0xff]
        %v3218 = vld [vmem:[#allocation2 + $0x138] sm:$0xff]
        %v3219 = vld [vmem:[#allocation2 + $0x140] sm:$0xff]
        %v3220 = vld [vmem:[#allocation2 + $0x148] sm:$0xff]
        %v3221 = vld [vmem:[#allocation2 + $0x150] sm:$0xff]
        %v3222 = vld [vmem:[#allocation2 + $0x158] sm:$0xff]
        %v3223 = vld [vmem:[#allocation2 + $0x160] sm:$0xff]
        %v3224 = vld [vmem:[#allocation2 + $0x168] sm:$0xff]
        %v3225 = vld [vmem:[#allocation2 + $0x170] sm:$0xff]
        %v3226 = vld [vmem:[#allocation2 + $0x178] sm:$0xff]
        %v3227 = vld [vmem:[#allocation2 + $0x180] sm:$0xff]
        %v3228 = vld [vmem:[#allocation2 + $0x188] sm:$0xff]
        %v3229 = vld [vmem:[#allocation2 + $0x190] sm:$0xff]
        %v3230 = vld [vmem:[#allocation2 + $0x198] sm:$0xff]
        %v3231 = vld [vmem:[#allocation2 + $0x1a0] sm:$0xff]
        %v3232 = vld [vmem:[#allocation2 + $0x1a8] sm:$0xff]
        %v3233 = vld [vmem:[#allocation2 + $0x1b0] sm:$0xff]
        %v3234 = vld [vmem:[#allocation2 + $0x1b8] sm:$0xff]
        %v3235 = vld [vmem:[#allocation2 + $0x1c0] sm:$0xff]
        %v3236 = vld [vmem:[#allocation2 + $0x1c8] sm:$0xff]
        %v3237 = vld [vmem:[#allocation2 + $0x1d0] sm:$0xff]
        %v3238 = vld [vmem:[#allocation2 + $0x1d8] sm:$0xff]
        %v3239 = vld [vmem:[#allocation2 + $0x1e0] sm:$0xff]
        %v3240 = vld [vmem:[#allocation2 + $0x1e8] sm:$0xff]
        %v3241 = vld [vmem:[#allocation2 + $0x1f0] sm:$0xff]
        %v3242 = vld [vmem:[#allocation2 + $0x1f8] sm:$0xff]
        %v3243 = vld [vmem:[#allocation2 + $0x200] sm:$0xff]
        %v3244 = vld [vmem:[#allocation2 + $0x208] sm:$0xff]
        %v3245 = vld [vmem:[#allocation2 + $0x210] sm:$0xff]
        %v3246 = vld [vmem:[#allocation2 + $0x218] sm:$0xff]
        %v3247 = vld [vmem:[#allocation2 + $0x220] sm:$0xff]
        %v3248 = vld [vmem:[#allocation2 + $0x228] sm:$0xff]
        %v3249 = vld [vmem:[#allocation2 + $0x230] sm:$0xff]
        %v3250 = vld [vmem:[#allocation2 + $0x238] sm:$0xff]
        %v3251 = vld [vmem:[#allocation2 + $0x240] sm:$0xff]
        %v3252 = vld [vmem:[#allocation2 + $0x248] sm:$0xff]
        %v3253 = vld [vmem:[#allocation2 + $0x250] sm:$0xff]
        %v3254 = vld [vmem:[#allocation2 + $0x258] sm:$0xff]
        %v3255 = vld [vmem:[#allocation2 + $0x260] sm:$0xff]
        %v3256 = vld [vmem:[#allocation2 + $0x268] sm:$0xff]
        %v3257 = vld [vmem:[#allocation2 + $0x270] sm:$0xff]
        %v3258 = vld [vmem:[#allocation2 + $0x278] sm:$0xff]
        %v3259 = vmax.f32 %v3179, %v3183
        %v3260 = vmax.f32 %v3180, %v3184
        %v3261 = vmax.f32 %v3181, %v3185
        %v3262 = vmax.f32 %v3182, %v3186
        %v3263 = vmax.f32 %v3183, %v3187
        %v3264 = vmax.f32 %v3184, %v3188
        %v3265 = vmax.f32 %v3185, %v3189
        %v3266 = vmax.f32 %v3186, %v3190
        %v3267 = vmax.f32 %v3187, %v3191
        %v3268 = vmax.f32 %v3188, %v3192
        %v3269 = vmax.f32 %v3189, %v3193
        %v3270 = vmax.f32 %v3190, %v3194
        %v3271 = vmax.f32 %v3191, %v3195
        %v3272 = vmax.f32 %v3192, %v3196
        %v3273 = vmax.f32 %v3193, %v3197
        %v3274 = vmax.f32 %v3194, %v3198
        %v3275 = vmax.f32 %v3195, %v3199
        %v3276 = vmax.f32 %v3196, %v3200
        %v3277 = vmax.f32 %v3197, %v3201
        %v3278 = vmax.f32 %v3198, %v3202
        %v3279 = vmax.f32 %v3199, %v3203
        %v3280 = vmax.f32 %v3200, %v3204
        %v3281 = vmax.f32 %v3201, %v3205
        %v3282 = vmax.f32 %v3202, %v3206
        %v3283 = vmax.f32 %v3203, %v3207
        %v3284 = vmax.f32 %v3204, %v3208
        %v3285 = vmax.f32 %v3205, %v3209
        %v3286 = vmax.f32 %v3206, %v3210
        %v3287 = vmax.f32 %v3207, %v3211
        %v3288 = vmax.f32 %v3208, %v3212
        %v3289 = vmax.f32 %v3209, %v3213
        %v3290 = vmax.f32 %v3210, %v3214
        %v3291 = vmax.f32 %v3211, %v3215
        %v3292 = vmax.f32 %v3212, %v3216
        %v3293 = vmax.f32 %v3213, %v3217
        %v3294 = vmax.f32 %v3214, %v3218
        %v3295 = vmax.f32 %v3215, %v3219
        %v3296 = vmax.f32 %v3216, %v3220
        %v3297 = vmax.f32 %v3217, %v3221
        %v3298 = vmax.f32 %v3218, %v3222
        %v3299 = vmax.f32 %v3219, %v3223
        %v3300 = vmax.f32 %v3220, %v3224
        %v3301 = vmax.f32 %v3221, %v3225
        %v3302 = vmax.f32 %v3222, %v3226
        %v3303 = vmax.f32 %v3223, %v3227
        %v3304 = vmax.f32 %v3224, %v3228
        %v3305 = vmax.f32 %v3225, %v3229
        %v3306 = vmax.f32 %v3226, %v3230
        %v3307 = vmax.f32 %v3227, %v3231
        %v3308 = vmax.f32 %v3228, %v3232
        %v3309 = vmax.f32 %v3229, %v3233
        %v3310 = vmax.f32 %v3230, %v3234
        %v3311 = vmax.f32 %v3231, %v3235
        %v3312 = vmax.f32 %v3232, %v3236
        %v3313 = vmax.f32 %v3233, %v3237
        %v3314 = vmax.f32 %v3234, %v3238
        %v3315 = vmax.f32 %v3235, %v3239
        %v3316 = vmax.f32 %v3236, %v3240
        %v3317 = vmax.f32 %v3237, %v3241
        %v3318 = vmax.f32 %v3238, %v3242
        %v3319 = vmax.f32 %v3239, %v3243
        %v3320 = vmax.f32 %v3240, %v3244
        %v3321 = vmax.f32 %v3241, %v3245
        %v3322 = vmax.f32 %v3242, %v3246
        %v3323 = vmax.f32 %v3243, %v3247
        %v3324 = vmax.f32 %v3244, %v3248
        %v3325 = vmax.f32 %v3245, %v3249
        %v3326 = vmax.f32 %v3246, %v3250
        %v3327 = vmax.f32 %v3247, %v3251
        %v3328 = vmax.f32 %v3248, %v3252
        %v3329 = vmax.f32 %v3249, %v3253
        %v3330 = vmax.f32 %v3250, %v3254
        %v3331 = vmax.f32 %v3259, %v3267
        %v3332 = vmax.f32 %v3260, %v3268
        %v3333 = vmax.f32 %v3261, %v3269
        %v3334 = vmax.f32 %v3262, %v3270
        %v3335 = vmax.f32 %v3263, %v3271
        %v3336 = vmax.f32 %v3264, %v3272
        %v3337 = vmax.f32 %v3265, %v3273
        %v3338 = vmax.f32 %v3266, %v3274
        %v3339 = vmax.f32 %v3267, %v3275
        %v3340 = vmax.f32 %v3268, %v3276
        %v3341 = vmax.f32 %v3269, %v3277
        %v3342 = vmax.f32 %v3270, %v3278
        %v3343 = vmax.f32 %v3271, %v3279
        %v3344 = vmax.f32 %v3272, %v3280
        %v3345 = vmax.f32 %v3273, %v3281
        %v3346 = vmax.f32 %v3274, %v3282
        %v3347 = vmax.f32 %v3275, %v3283
        %v3348 = vmax.f32 %v3276, %v3284
        %v3349 = vmax.f32 %v3277, %v3285
        %v3350 = vmax.f32 %v3278, %v3286
        %v3351 = vmax.f32 %v3279, %v3287
        %v3352 = vmax.f32 %v3280, %v3288
        %v3353 = vmax.f32 %v3281, %v3289
        %v3354 = vmax.f32 %v3282, %v3290
        %v3355 = vmax.f32 %v3283, %v3291
        %v3356 = vmax.f32 %v3284, %v3292
        %v3357 = vmax.f32 %v3285, %v3293
        %v3358 = vmax.f32 %v3286, %v3294
        %v3359 = vmax.f32 %v3287, %v3295
        %v3360 = vmax.f32 %v3288, %v3296
        %v3361 = vmax.f32 %v3289, %v3297
        %v3362 = vmax.f32 %v3290, %v3298
        %v3363 = vmax.f32 %v3291, %v3299
        %v3364 = vmax.f32 %v3292, %v3300
        %v3365 = vmax.f32 %v3293, %v3301
        %v3366 = vmax.f32 %v3294, %v3302
        %v3367 = vmax.f32 %v3295, %v3303
        %v3368 = vmax.f32 %v3296, %v3304
        %v3369 = vmax.f32 %v3297, %v3305
        %v3370 = vmax.f32 %v3298, %v3306
        %v3371 = vmax.f32 %v3299, %v3307
        %v3372 = vmax.f32 %v3300, %v3308
        %v3373 = vmax.f32 %v3301, %v3309
        %v3374 = vmax.f32 %v3302, %v3310
        %v3375 = vmax.f32 %v3303, %v3311
        %v3376 = vmax.f32 %v3304, %v3312
        %v3377 = vmax.f32 %v3305, %v3313
        %v3378 = vmax.f32 %v3306, %v3314
        %v3379 = vmax.f32 %v3307, %v3315
        %v3380 = vmax.f32 %v3308, %v3316
        %v3381 = vmax.f32 %v3309, %v3317
        %v3382 = vmax.f32 %v3310, %v3318
        %v3383 = vmax.f32 %v3311, %v3319
        %v3384 = vmax.f32 %v3312, %v3320
        %v3385 = vmax.f32 %v3313, %v3321
        %v3386 = vmax.f32 %v3314, %v3322
        %v3387 = vmax.f32 %v3315, %v3323
        %v3388 = vmax.f32 %v3316, %v3324
        %v3389 = vmax.f32 %v3317, %v3325
        %v3390 = vmax.f32 %v3318, %v3326
        %v3391 = vmax.f32 %v3319, %v3327
        %v3392 = vmax.f32 %v3320, %v3328
        %v3393 = vmax.f32 %v3321, %v3329
        %v3394 = vmax.f32 %v3322, %v3330
        %v3395 = vmax.f32 %v3331, %v3195
        %v3396 = vmax.f32 %v3332, %v3196
        %v3397 = vmax.f32 %v3333, %v3197
        %v3398 = vmax.f32 %v3334, %v3198
        %v3399 = vmax.f32 %v3335, %v3199
        %v3400 = vmax.f32 %v3336, %v3200
        %v3401 = vmax.f32 %v3337, %v3201
        %v3402 = vmax.f32 %v3338, %v3202
        %v3403 = vmax.f32 %v3339, %v3203
        %v3404 = vmax.f32 %v3340, %v3204
        %v3405 = vmax.f32 %v3341, %v3205
        %v3406 = vmax.f32 %v3342, %v3206
        %v3407 = vmax.f32 %v3343, %v3207
        %v3408 = vmax.f32 %v3344, %v3208
        %v3409 = vmax.f32 %v3345, %v3209
        %v3410 = vmax.f32 %v3346, %v3210
        %v3411 = vmax.f32 %v3347, %v3211
        %v3412 = vmax.f32 %v3348, %v3212
        %v3413 = vmax.f32 %v3349, %v3213
        %v3414 = vmax.f32 %v3350, %v3214
        %v3415 = vmax.f32 %v3351, %v3215
        %v3416 = vmax.f32 %v3352, %v3216
        %v3417 = vmax.f32 %v3353, %v3217
        %v3418 = vmax.f32 %v3354, %v3218
        %v3419 = vmax.f32 %v3355, %v3219
        %v3420 = vmax.f32 %v3356, %v3220
        %v3421 = vmax.f32 %v3357, %v3221
        %v3422 = vmax.f32 %v3358, %v3222
        %v3423 = vmax.f32 %v3359, %v3223
        %v3424 = vmax.f32 %v3360, %v3224
        %v3425 = vmax.f32 %v3361, %v3225
        %v3426 = vmax.f32 %v3362, %v3226
        %v3427 = vmax.f32 %v3363, %v3227
        %v3428 = vmax.f32 %v3364, %v3228
        %v3429 = vmax.f32 %v3365, %v3229
        %v3430 = vmax.f32 %v3366, %v3230
        %v3431 = vmax.f32 %v3367, %v3231
        %v3432 = vmax.f32 %v3368, %v3232
        %v3433 = vmax.f32 %v3369, %v3233
        %v3434 = vmax.f32 %v3370, %v3234
        %v3435 = vmax.f32 %v3371, %v3235
        %v3436 = vmax.f32 %v3372, %v3236
        %v3437 = vmax.f32 %v3373, %v3237
        %v3438 = vmax.f32 %v3374, %v3238
        %v3439 = vmax.f32 %v3375, %v3239
        %v3440 = vmax.f32 %v3376, %v3240
        %v3441 = vmax.f32 %v3377, %v3241
        %v3442 = vmax.f32 %v3378, %v3242
        %v3443 = vmax.f32 %v3379, %v3243
        %v3444 = vmax.f32 %v3380, %v3244
        %v3445 = vmax.f32 %v3381, %v3245
        %v3446 = vmax.f32 %v3382, %v3246
        %v3447 = vmax.f32 %v3383, %v3247
        %v3448 = vmax.f32 %v3384, %v3248
        %v3449 = vmax.f32 %v3385, %v3249
        %v3450 = vmax.f32 %v3386, %v3250
        %v3451 = vmax.f32 %v3387, %v3251
        %v3452 = vmax.f32 %v3388, %v3252
        %v3453 = vmax.f32 %v3389, %v3253
        %v3454 = vmax.f32 %v3390, %v3254
        %v3455 = vmax.f32 %v3391, %v3255
        %v3456 = vmax.f32 %v3392, %v3256
        %v3457 = vmax.f32 %v3393, %v3257
        %v3458 = vmax.f32 %v3394, %v3258
        %v3459 = vrot.slane %v3395, 1
        %v3460 = vrot.slane %v3399, 1
        %v3461 = vrot.slane %v3403, 1
        %v3462 = vrot.slane %v3407, 1
        %v3463 = vrot.slane %v3411, 1
        %v3464 = vrot.slane %v3415, 1
        %v3465 = vrot.slane %v3419, 1
        %v3466 = vrot.slane %v3423, 1
        %v3467 = vrot.slane %v3427, 1
        %v3468 = vrot.slane %v3431, 1
        %v3469 = vrot.slane %v3435, 1
        %v3470 = vrot.slane %v3439, 1
        %v3471 = vrot.slane %v3443, 1
        %v3472 = vrot.slane %v3447, 1
        %v3473 = vrot.slane %v3451, 1
        %v3474 = vrot.slane %v3455, 1
        %v3475 = vrot.slane %v3396, 1
        %v3476 = vrot.slane %v3400, 1
        %v3477 = vrot.slane %v3404, 1
        %v3478 = vrot.slane %v3408, 1
        %v3479 = vrot.slane %v3412, 1
        %v3480 = vrot.slane %v3416, 1
        %v3481 = vrot.slane %v3420, 1
        %v3482 = vrot.slane %v3424, 1
        %v3483 = vrot.slane %v3428, 1
        %v3484 = vrot.slane %v3432, 1
        %v3485 = vrot.slane %v3436, 1
        %v3486 = vrot.slane %v3440, 1
        %v3487 = vrot.slane %v3444, 1
        %v3488 = vrot.slane %v3448, 1
        %v3489 = vrot.slane %v3452, 1
        %v3490 = vrot.slane %v3456, 1
        %v3491 = vrot.slane %v3397, 1
        %v3492 = vrot.slane %v3401, 1
        %v3493 = vrot.slane %v3405, 1
        %v3494 = vrot.slane %v3409, 1
        %v3495 = vrot.slane %v3413, 1
        %v3496 = vrot.slane %v3417, 1
        %v3497 = vrot.slane %v3421, 1
        %v3498 = vrot.slane %v3425, 1
        %v3499 = vrot.slane %v3429, 1
        %v3500 = vrot.slane %v3433, 1
        %v3501 = vrot.slane %v3437, 1
        %v3502 = vrot.slane %v3441, 1
        %v3503 = vrot.slane %v3445, 1
        %v3504 = vrot.slane %v3449, 1
        %v3505 = vrot.slane %v3453, 1
        %v3506 = vrot.slane %v3457, 1
        %v3507 = vrot.slane %v3398, 1
        %v3508 = vrot.slane %v3402, 1
        %v3509 = vrot.slane %v3406, 1
        %v3510 = vrot.slane %v3410, 1
        %v3511 = vrot.slane %v3414, 1
        %v3512 = vrot.slane %v3418, 1
        %v3513 = vrot.slane %v3422, 1
        %v3514 = vrot.slane %v3426, 1
        %v3515 = vrot.slane %v3430, 1
        %v3516 = vrot.slane %v3434, 1
        %v3517 = vrot.slane %v3438, 1
        %v3518 = vrot.slane %v3442, 1
        %v3519 = vrot.slane %v3446, 1
        %v3520 = vrot.slane %v3450, 1
        %v3521 = vrot.slane %v3454, 1
        %v3522 = vrot.slane %v3458, 1
        %v3523 = vsel %vm986, %v3491, %v3507
        %v3524 = vsel %vm986, %v3492, %v3508
        %v3525 = vsel %vm986, %v3493, %v3509
        %v3526 = vsel %vm986, %v3494, %v3510
        %v3527 = vsel %vm986, %v3495, %v3511
        %v3528 = vsel %vm986, %v3496, %v3512
        %v3529 = vsel %vm986, %v3497, %v3513
        %v3530 = vsel %vm986, %v3498, %v3514
        %v3531 = vsel %vm986, %v3499, %v3515
        %v3532 = vsel %vm986, %v3500, %v3516
        %v3533 = vsel %vm986, %v3501, %v3517
        %v3534 = vsel %vm986, %v3502, %v3518
        %v3535 = vsel %vm986, %v3503, %v3519
        %v3536 = vsel %vm986, %v3504, %v3520
        %v3537 = vsel %vm986, %v3505, %v3521
        %v3538 = vsel %vm986, %v3506, %v3522
        %v3539 = vsel %vm986, %v3475, %v3491
        %v3540 = vsel %vm986, %v3476, %v3492
        %v3541 = vsel %vm986, %v3477, %v3493
        %v3542 = vsel %vm986, %v3478, %v3494
        %v3543 = vsel %vm986, %v3479, %v3495
        %v3544 = vsel %vm986, %v3480, %v3496
        %v3545 = vsel %vm986, %v3481, %v3497
        %v3546 = vsel %vm986, %v3482, %v3498
        %v3547 = vsel %vm986, %v3483, %v3499
        %v3548 = vsel %vm986, %v3484, %v3500
        %v3549 = vsel %vm986, %v3485, %v3501
        %v3550 = vsel %vm986, %v3486, %v3502
        %v3551 = vsel %vm986, %v3487, %v3503
        %v3552 = vsel %vm986, %v3488, %v3504
        %v3553 = vsel %vm986, %v3489, %v3505
        %v3554 = vsel %vm986, %v3490, %v3506
        %v3555 = vsel %vm986, %v3459, %v3475
        %v3556 = vsel %vm986, %v3460, %v3476
        %v3557 = vsel %vm986, %v3461, %v3477
        %v3558 = vsel %vm986, %v3462, %v3478
        %v3559 = vsel %vm986, %v3463, %v3479
        %v3560 = vsel %vm986, %v3464, %v3480
        %v3561 = vsel %vm986, %v3465, %v3481
        %v3562 = vsel %vm986, %v3466, %v3482
        %v3563 = vsel %vm986, %v3467, %v3483
        %v3564 = vsel %vm986, %v3468, %v3484
        %v3565 = vsel %vm986, %v3469, %v3485
        %v3566 = vsel %vm986, %v3470, %v3486
        %v3567 = vsel %vm986, %v3471, %v3487
        %v3568 = vsel %vm986, %v3472, %v3488
        %v3569 = vsel %vm986, %v3473, %v3489
        %v3570 = vsel %vm986, %v3474, %v3490
        %v3571 = vsel %vm986, %v3507, %v3459
        %v3572 = vsel %vm986, %v3508, %v3460
        %v3573 = vsel %vm986, %v3509, %v3461
        %v3574 = vsel %vm986, %v3510, %v3462
        %v3575 = vsel %vm986, %v3511, %v3463
        %v3576 = vsel %vm986, %v3512, %v3464
        %v3577 = vsel %vm986, %v3513, %v3465
        %v3578 = vsel %vm986, %v3514, %v3466
        %v3579 = vsel %vm986, %v3515, %v3467
        %v3580 = vsel %vm986, %v3516, %v3468
        %v3581 = vsel %vm986, %v3517, %v3469
        %v3582 = vsel %vm986, %v3518, %v3470
        %v3583 = vsel %vm986, %v3519, %v3471
        %v3584 = vsel %vm986, %v3520, %v3472
        %v3585 = vsel %vm986, %v3521, %v3473
        %v3586 = vsel %vm986, %v3522, %v3474
        %v3587 = vmax.f32 %v3395, %v3555
        %v3588 = vmax.f32 %v3396, %v3539
        %v3589 = vmax.f32 %v3397, %v3523
        %v3590 = vmax.f32 %v3398, %v3571
        %v3591 = vmax.f32 %v3399, %v3556
        %v3592 = vmax.f32 %v3400, %v3540
        %v3593 = vmax.f32 %v3401, %v3524
        %v3594 = vmax.f32 %v3402, %v3572
        %v3595 = vmax.f32 %v3403, %v3557
        %v3596 = vmax.f32 %v3404, %v3541
        %v3597 = vmax.f32 %v3405, %v3525
        %v3598 = vmax.f32 %v3406, %v3573
        %v3599 = vmax.f32 %v3407, %v3558
        %v3600 = vmax.f32 %v3408, %v3542
        %v3601 = vmax.f32 %v3409, %v3526
        %v3602 = vmax.f32 %v3410, %v3574
        %v3603 = vmax.f32 %v3411, %v3559
        %v3604 = vmax.f32 %v3412, %v3543
        %v3605 = vmax.f32 %v3413, %v3527
        %v3606 = vmax.f32 %v3414, %v3575
        %v3607 = vmax.f32 %v3415, %v3560
        %v3608 = vmax.f32 %v3416, %v3544
        %v3609 = vmax.f32 %v3417, %v3528
        %v3610 = vmax.f32 %v3418, %v3576
        %v3611 = vmax.f32 %v3419, %v3561
        %v3612 = vmax.f32 %v3420, %v3545
        %v3613 = vmax.f32 %v3421, %v3529
        %v3614 = vmax.f32 %v3422, %v3577
        %v3615 = vmax.f32 %v3423, %v3562
        %v3616 = vmax.f32 %v3424, %v3546
        %v3617 = vmax.f32 %v3425, %v3530
        %v3618 = vmax.f32 %v3426, %v3578
        %v3619 = vmax.f32 %v3427, %v3563
        %v3620 = vmax.f32 %v3428, %v3547
        %v3621 = vmax.f32 %v3429, %v3531
        %v3622 = vmax.f32 %v3430, %v3579
        %v3623 = vmax.f32 %v3431, %v3564
        %v3624 = vmax.f32 %v3432, %v3548
        %v3625 = vmax.f32 %v3433, %v3532
        %v3626 = vmax.f32 %v3434, %v3580
        %v3627 = vmax.f32 %v3435, %v3565
        %v3628 = vmax.f32 %v3436, %v3549
        %v3629 = vmax.f32 %v3437, %v3533
        %v3630 = vmax.f32 %v3438, %v3581
        %v3631 = vmax.f32 %v3439, %v3566
        %v3632 = vmax.f32 %v3440, %v3550
        %v3633 = vmax.f32 %v3441, %v3534
        %v3634 = vmax.f32 %v3442, %v3582
        %v3635 = vmax.f32 %v3443, %v3567
        %v3636 = vmax.f32 %v3444, %v3551
        %v3637 = vmax.f32 %v3445, %v3535
        %v3638 = vmax.f32 %v3446, %v3583
        %v3639 = vmax.f32 %v3447, %v3568
        %v3640 = vmax.f32 %v3448, %v3552
        %v3641 = vmax.f32 %v3449, %v3536
        %v3642 = vmax.f32 %v3450, %v3584
        %v3643 = vmax.f32 %v3451, %v3569
        %v3644 = vmax.f32 %v3452, %v3553
        %v3645 = vmax.f32 %v3453, %v3537
        %v3646 = vmax.f32 %v3454, %v3585
        %v3647 = vmax.f32 %v3455, %v3570
        %v3648 = vmax.f32 %v3456, %v3554
        %v3649 = vmax.f32 %v3457, %v3538
        %v3650 = vmax.f32 %v3458, %v3586
        %v3651 = vrot.slane %v3587, 2
        %v3652 = vrot.slane %v3591, 2
        %v3653 = vrot.slane %v3595, 2
        %v3654 = vrot.slane %v3599, 2
        %v3655 = vrot.slane %v3603, 2
        %v3656 = vrot.slane %v3607, 2
        %v3657 = vrot.slane %v3611, 2
        %v3658 = vrot.slane %v3615, 2
        %v3659 = vrot.slane %v3619, 2
        %v3660 = vrot.slane %v3623, 2
        %v3661 = vrot.slane %v3627, 2
        %v3662 = vrot.slane %v3631, 2
        %v3663 = vrot.slane %v3635, 2
        %v3664 = vrot.slane %v3639, 2
        %v3665 = vrot.slane %v3643, 2
        %v3666 = vrot.slane %v3647, 2
        %v3667 = vrot.slane %v3588, 2
        %v3668 = vrot.slane %v3592, 2
        %v3669 = vrot.slane %v3596, 2
        %v3670 = vrot.slane %v3600, 2
        %v3671 = vrot.slane %v3604, 2
        %v3672 = vrot.slane %v3608, 2
        %v3673 = vrot.slane %v3612, 2
        %v3674 = vrot.slane %v3616, 2
        %v3675 = vrot.slane %v3620, 2
        %v3676 = vrot.slane %v3624, 2
        %v3677 = vrot.slane %v3628, 2
        %v3678 = vrot.slane %v3632, 2
        %v3679 = vrot.slane %v3636, 2
        %v3680 = vrot.slane %v3640, 2
        %v3681 = vrot.slane %v3644, 2
        %v3682 = vrot.slane %v3648, 2
        %v3683 = vrot.slane %v3589, 2
        %v3684 = vrot.slane %v3593, 2
        %v3685 = vrot.slane %v3597, 2
        %v3686 = vrot.slane %v3601, 2
        %v3687 = vrot.slane %v3605, 2
        %v3688 = vrot.slane %v3609, 2
        %v3689 = vrot.slane %v3613, 2
        %v3690 = vrot.slane %v3617, 2
        %v3691 = vrot.slane %v3621, 2
        %v3692 = vrot.slane %v3625, 2
        %v3693 = vrot.slane %v3629, 2
        %v3694 = vrot.slane %v3633, 2
        %v3695 = vrot.slane %v3637, 2
        %v3696 = vrot.slane %v3641, 2
        %v3697 = vrot.slane %v3645, 2
        %v3698 = vrot.slane %v3649, 2
        %v3699 = vrot.slane %v3590, 2
        %v3700 = vrot.slane %v3594, 2
        %v3701 = vrot.slane %v3598, 2
        %v3702 = vrot.slane %v3602, 2
        %v3703 = vrot.slane %v3606, 2
        %v3704 = vrot.slane %v3610, 2
        %v3705 = vrot.slane %v3614, 2
        %v3706 = vrot.slane %v3618, 2
        %v3707 = vrot.slane %v3622, 2
        %v3708 = vrot.slane %v3626, 2
        %v3709 = vrot.slane %v3630, 2
        %v3710 = vrot.slane %v3634, 2
        %v3711 = vrot.slane %v3638, 2
        %v3712 = vrot.slane %v3642, 2
        %v3713 = vrot.slane %v3646, 2
        %v3714 = vrot.slane %v3650, 2
        %v3715 = vsel %vm1179, %v3683, %v3699
        %v3716 = vsel %vm1179, %v3684, %v3700
        %v3717 = vsel %vm1179, %v3685, %v3701
        %v3718 = vsel %vm1179, %v3686, %v3702
        %v3719 = vsel %vm1179, %v3687, %v3703
        %v3720 = vsel %vm1179, %v3688, %v3704
        %v3721 = vsel %vm1179, %v3689, %v3705
        %v3722 = vsel %vm1179, %v3690, %v3706
        %v3723 = vsel %vm1179, %v3691, %v3707
        %v3724 = vsel %vm1179, %v3692, %v3708
        %v3725 = vsel %vm1179, %v3693, %v3709
        %v3726 = vsel %vm1179, %v3694, %v3710
        %v3727 = vsel %vm1179, %v3695, %v3711
        %v3728 = vsel %vm1179, %v3696, %v3712
        %v3729 = vsel %vm1179, %v3697, %v3713
        %v3730 = vsel %vm1179, %v3698, %v3714
        %v3731 = vsel %vm1179, %v3667, %v3683
        %v3732 = vsel %vm1179, %v3668, %v3684
        %v3733 = vsel %vm1179, %v3669, %v3685
        %v3734 = vsel %vm1179, %v3670, %v3686
        %v3735 = vsel %vm1179, %v3671, %v3687
        %v3736 = vsel %vm1179, %v3672, %v3688
        %v3737 = vsel %vm1179, %v3673, %v3689
        %v3738 = vsel %vm1179, %v3674, %v3690
        %v3739 = vsel %vm1179, %v3675, %v3691
        %v3740 = vsel %vm1179, %v3676, %v3692
        %v3741 = vsel %vm1179, %v3677, %v3693
        %v3742 = vsel %vm1179, %v3678, %v3694
        %v3743 = vsel %vm1179, %v3679, %v3695
        %v3744 = vsel %vm1179, %v3680, %v3696
        %v3745 = vsel %vm1179, %v3681, %v3697
        %v3746 = vsel %vm1179, %v3682, %v3698
        %v3747 = vsel %vm1179, %v3651, %v3667
        %v3748 = vsel %vm1179, %v3652, %v3668
        %v3749 = vsel %vm1179, %v3653, %v3669
        %v3750 = vsel %vm1179, %v3654, %v3670
        %v3751 = vsel %vm1179, %v3655, %v3671
        %v3752 = vsel %vm1179, %v3656, %v3672
        %v3753 = vsel %vm1179, %v3657, %v3673
        %v3754 = vsel %vm1179, %v3658, %v3674
        %v3755 = vsel %vm1179, %v3659, %v3675
        %v3756 = vsel %vm1179, %v3660, %v3676
        %v3757 = vsel %vm1179, %v3661, %v3677
        %v3758 = vsel %vm1179, %v3662, %v3678
        %v3759 = vsel %vm1179, %v3663, %v3679
        %v3760 = vsel %vm1179, %v3664, %v3680
        %v3761 = vsel %vm1179, %v3665, %v3681
        %v3762 = vsel %vm1179, %v3666, %v3682
        %v3763 = vmax.f32 %v3587, %v3747
        %v3764 = vmax.f32 %v3588, %v3731
        %v3765 = vmax.f32 %v3589, %v3715
        %v3766 = vmax.f32 %v3591, %v3748
        %v3767 = vmax.f32 %v3592, %v3732
        %v3768 = vmax.f32 %v3593, %v3716
        %v3769 = vmax.f32 %v3595, %v3749
        %v3770 = vmax.f32 %v3596, %v3733
        %v3771 = vmax.f32 %v3597, %v3717
        %v3772 = vmax.f32 %v3599, %v3750
        %v3773 = vmax.f32 %v3600, %v3734
        %v3774 = vmax.f32 %v3601, %v3718
        %v3775 = vmax.f32 %v3603, %v3751
        %v3776 = vmax.f32 %v3604, %v3735
        %v3777 = vmax.f32 %v3605, %v3719
        %v3778 = vmax.f32 %v3607, %v3752
        %v3779 = vmax.f32 %v3608, %v3736
        %v3780 = vmax.f32 %v3609, %v3720
        %v3781 = vmax.f32 %v3611, %v3753
        %v3782 = vmax.f32 %v3612, %v3737
        %v3783 = vmax.f32 %v3613, %v3721
        %v3784 = vmax.f32 %v3615, %v3754
        %v3785 = vmax.f32 %v3616, %v3738
        %v3786 = vmax.f32 %v3617, %v3722
        %v3787 = vmax.f32 %v3619, %v3755
        %v3788 = vmax.f32 %v3620, %v3739
        %v3789 = vmax.f32 %v3621, %v3723
        %v3790 = vmax.f32 %v3623, %v3756
        %v3791 = vmax.f32 %v3624, %v3740
        %v3792 = vmax.f32 %v3625, %v3724
        %v3793 = vmax.f32 %v3627, %v3757
        %v3794 = vmax.f32 %v3628, %v3741
        %v3795 = vmax.f32 %v3629, %v3725
        %v3796 = vmax.f32 %v3631, %v3758
        %v3797 = vmax.f32 %v3632, %v3742
        %v3798 = vmax.f32 %v3633, %v3726
        %v3799 = vmax.f32 %v3635, %v3759
        %v3800 = vmax.f32 %v3636, %v3743
        %v3801 = vmax.f32 %v3637, %v3727
        %v3802 = vmax.f32 %v3639, %v3760
        %v3803 = vmax.f32 %v3640, %v3744
        %v3804 = vmax.f32 %v3641, %v3728
        %v3805 = vmax.f32 %v3643, %v3761
        %v3806 = vmax.f32 %v3644, %v3745
        %v3807 = vmax.f32 %v3645, %v3729
        %v3808 = vmax.f32 %v3647, %v3762
        %v3809 = vmax.f32 %v3648, %v3746
        %v3810 = vmax.f32 %v3649, %v3730
        %v3811 = vrot.slane %v3395, 4
        %v3812 = vrot.slane %v3399, 4
        %v3813 = vrot.slane %v3403, 4
        %v3814 = vrot.slane %v3407, 4
        %v3815 = vrot.slane %v3411, 4
        %v3816 = vrot.slane %v3415, 4
        %v3817 = vrot.slane %v3419, 4
        %v3818 = vrot.slane %v3423, 4
        %v3819 = vrot.slane %v3427, 4
        %v3820 = vrot.slane %v3431, 4
        %v3821 = vrot.slane %v3435, 4
        %v3822 = vrot.slane %v3439, 4
        %v3823 = vrot.slane %v3443, 4
        %v3824 = vrot.slane %v3447, 4
        %v3825 = vrot.slane %v3451, 4
        %v3826 = vrot.slane %v3455, 4
        %v3827 = vrot.slane %v3396, 4
        %v3828 = vrot.slane %v3400, 4
        %v3829 = vrot.slane %v3404, 4
        %v3830 = vrot.slane %v3408, 4
        %v3831 = vrot.slane %v3412, 4
        %v3832 = vrot.slane %v3416, 4
        %v3833 = vrot.slane %v3420, 4
        %v3834 = vrot.slane %v3424, 4
        %v3835 = vrot.slane %v3428, 4
        %v3836 = vrot.slane %v3432, 4
        %v3837 = vrot.slane %v3436, 4
        %v3838 = vrot.slane %v3440, 4
        %v3839 = vrot.slane %v3444, 4
        %v3840 = vrot.slane %v3448, 4
        %v3841 = vrot.slane %v3452, 4
        %v3842 = vrot.slane %v3456, 4
        %v3843 = vrot.slane %v3397, 4
        %v3844 = vrot.slane %v3401, 4
        %v3845 = vrot.slane %v3405, 4
        %v3846 = vrot.slane %v3409, 4
        %v3847 = vrot.slane %v3413, 4
        %v3848 = vrot.slane %v3417, 4
        %v3849 = vrot.slane %v3421, 4
        %v3850 = vrot.slane %v3425, 4
        %v3851 = vrot.slane %v3429, 4
        %v3852 = vrot.slane %v3433, 4
        %v3853 = vrot.slane %v3437, 4
        %v3854 = vrot.slane %v3441, 4
        %v3855 = vrot.slane %v3445, 4
        %v3856 = vrot.slane %v3449, 4
        %v3857 = vrot.slane %v3453, 4
        %v3858 = vrot.slane %v3457, 4
        %v3859 = vrot.slane %v3398, 4
        %v3860 = vrot.slane %v3402, 4
        %v3861 = vrot.slane %v3406, 4
        %v3862 = vrot.slane %v3410, 4
        %v3863 = vrot.slane %v3414, 4
        %v3864 = vrot.slane %v3418, 4
        %v3865 = vrot.slane %v3422, 4
        %v3866 = vrot.slane %v3426, 4
        %v3867 = vrot.slane %v3430, 4
        %v3868 = vrot.slane %v3434, 4
        %v3869 = vrot.slane %v3438, 4
        %v3870 = vrot.slane %v3442, 4
        %v3871 = vrot.slane %v3446, 4
        %v3872 = vrot.slane %v3450, 4
        %v3873 = vrot.slane %v3454, 4
        %v3874 = vrot.slane %v3458, 4
        %v3875 = vsel %vm1340, %v3843, %v3859
        %v3876 = vsel %vm1340, %v3844, %v3860
        %v3877 = vsel %vm1340, %v3845, %v3861
        %v3878 = vsel %vm1340, %v3846, %v3862
        %v3879 = vsel %vm1340, %v3847, %v3863
        %v3880 = vsel %vm1340, %v3848, %v3864
        %v3881 = vsel %vm1340, %v3849, %v3865
        %v3882 = vsel %vm1340, %v3850, %v3866
        %v3883 = vsel %vm1340, %v3851, %v3867
        %v3884 = vsel %vm1340, %v3852, %v3868
        %v3885 = vsel %vm1340, %v3853, %v3869
        %v3886 = vsel %vm1340, %v3854, %v3870
        %v3887 = vsel %vm1340, %v3855, %v3871
        %v3888 = vsel %vm1340, %v3856, %v3872
        %v3889 = vsel %vm1340, %v3857, %v3873
        %v3890 = vsel %vm1340, %v3858, %v3874
        %v3891 = vsel %vm1340, %v3827, %v3843
        %v3892 = vsel %vm1340, %v3828, %v3844
        %v3893 = vsel %vm1340, %v3829, %v3845
        %v3894 = vsel %vm1340, %v3830, %v3846
        %v3895 = vsel %vm1340, %v3831, %v3847
        %v3896 = vsel %vm1340, %v3832, %v3848
        %v3897 = vsel %vm1340, %v3833, %v3849
        %v3898 = vsel %vm1340, %v3834, %v3850
        %v3899 = vsel %vm1340, %v3835, %v3851
        %v3900 = vsel %vm1340, %v3836, %v3852
        %v3901 = vsel %vm1340, %v3837, %v3853
        %v3902 = vsel %vm1340, %v3838, %v3854
        %v3903 = vsel %vm1340, %v3839, %v3855
        %v3904 = vsel %vm1340, %v3840, %v3856
        %v3905 = vsel %vm1340, %v3841, %v3857
        %v3906 = vsel %vm1340, %v3842, %v3858
        %v3907 = vsel %vm1340, %v3811, %v3827
        %v3908 = vsel %vm1340, %v3812, %v3828
        %v3909 = vsel %vm1340, %v3813, %v3829
        %v3910 = vsel %vm1340, %v3814, %v3830
        %v3911 = vsel %vm1340, %v3815, %v3831
        %v3912 = vsel %vm1340, %v3816, %v3832
        %v3913 = vsel %vm1340, %v3817, %v3833
        %v3914 = vsel %vm1340, %v3818, %v3834
        %v3915 = vsel %vm1340, %v3819, %v3835
        %v3916 = vsel %vm1340, %v3820, %v3836
        %v3917 = vsel %vm1340, %v3821, %v3837
        %v3918 = vsel %vm1340, %v3822, %v3838
        %v3919 = vsel %vm1340, %v3823, %v3839
        %v3920 = vsel %vm1340, %v3824, %v3840
        %v3921 = vsel %vm1340, %v3825, %v3841
        %v3922 = vsel %vm1340, %v3826, %v3842
        %v3923 = vmax.f32 %v3763, %v3907
        %v3924 = vmax.f32 %v3764, %v3891
        %v3925 = vmax.f32 %v3765, %v3875
        %v3926 = vmax.f32 %v3766, %v3908
        %v3927 = vmax.f32 %v3767, %v3892
        %v3928 = vmax.f32 %v3768, %v3876
        %v3929 = vmax.f32 %v3769, %v3909
        %v3930 = vmax.f32 %v3770, %v3893
        %v3931 = vmax.f32 %v3771, %v3877
        %v3932 = vmax.f32 %v3772, %v3910
        %v3933 = vmax.f32 %v3773, %v3894
        %v3934 = vmax.f32 %v3774, %v3878
        %v3935 = vmax.f32 %v3775, %v3911
        %v3936 = vmax.f32 %v3776, %v3895
        %v3937 = vmax.f32 %v3777, %v3879
        %v3938 = vmax.f32 %v3778, %v3912
        %v3939 = vmax.f32 %v3779, %v3896
        %v3940 = vmax.f32 %v3780, %v3880
        %v3941 = vmax.f32 %v3781, %v3913
        %v3942 = vmax.f32 %v3782, %v3897
        %v3943 = vmax.f32 %v3783, %v3881
        %v3944 = vmax.f32 %v3784, %v3914
        %v3945 = vmax.f32 %v3785, %v3898
        %v3946 = vmax.f32 %v3786, %v3882
        %v3947 = vmax.f32 %v3787, %v3915
        %v3948 = vmax.f32 %v3788, %v3899
        %v3949 = vmax.f32 %v3789, %v3883
        %v3950 = vmax.f32 %v3790, %v3916
        %v3951 = vmax.f32 %v3791, %v3900
        %v3952 = vmax.f32 %v3792, %v3884
        %v3953 = vmax.f32 %v3793, %v3917
        %v3954 = vmax.f32 %v3794, %v3901
        %v3955 = vmax.f32 %v3795, %v3885
        %v3956 = vmax.f32 %v3796, %v3918
        %v3957 = vmax.f32 %v3797, %v3902
        %v3958 = vmax.f32 %v3798, %v3886
        %v3959 = vmax.f32 %v3799, %v3919
        %v3960 = vmax.f32 %v3800, %v3903
        %v3961 = vmax.f32 %v3801, %v3887
        %v3962 = vmax.f32 %v3802, %v3920
        %v3963 = vmax.f32 %v3803, %v3904
        %v3964 = vmax.f32 %v3804, %v3888
        %v3965 = vmax.f32 %v3805, %v3921
        %v3966 = vmax.f32 %v3806, %v3905
        %v3967 = vmax.f32 %v3807, %v3889
        %v3968 = vmax.f32 %v3808, %v3922
        %v3969 = vmax.f32 %v3809, %v3906
        %v3970 = vmax.f32 %v3810, %v3890
        %v3971 = vrot.slane %v3923, 6
        %v3972 = vrot.slane %v3926, 6
        %v3973 = vrot.slane %v3929, 6
        %v3974 = vrot.slane %v3932, 6
        %v3975 = vrot.slane %v3935, 6
        %v3976 = vrot.slane %v3938, 6
        %v3977 = vrot.slane %v3941, 6
        %v3978 = vrot.slane %v3944, 6
        %v3979 = vrot.slane %v3947, 6
        %v3980 = vrot.slane %v3950, 6
        %v3981 = vrot.slane %v3953, 6
        %v3982 = vrot.slane %v3956, 6
        %v3983 = vrot.slane %v3959, 6
        %v3984 = vrot.slane %v3962, 6
        %v3985 = vrot.slane %v3965, 6
        %v3986 = vrot.slane %v3968, 6
        %v3987 = vrot.slane %v3924, 6
        %v3988 = vrot.slane %v3927, 6
        %v3989 = vrot.slane %v3930, 6
        %v3990 = vrot.slane %v3933, 6
        %v3991 = vrot.slane %v3936, 6
        %v3992 = vrot.slane %v3939, 6
        %v3993 = vrot.slane %v3942, 6
        %v3994 = vrot.slane %v3945, 6
        %v3995 = vrot.slane %v3948, 6
        %v3996 = vrot.slane %v3951, 6
        %v3997 = vrot.slane %v3954, 6
        %v3998 = vrot.slane %v3957, 6
        %v3999 = vrot.slane %v3960, 6
        %v4000 = vrot.slane %v3963, 6
        %v4001 = vrot.slane %v3966, 6
        %v4002 = vrot.slane %v3969, 6
        %v4003 = vrot.slane %v3925, 6
        %v4004 = vrot.slane %v3928, 6
        %v4005 = vrot.slane %v3931, 6
        %v4006 = vrot.slane %v3934, 6
        %v4007 = vrot.slane %v3937, 6
        %v4008 = vrot.slane %v3940, 6
        %v4009 = vrot.slane %v3943, 6
        %v4010 = vrot.slane %v3946, 6
        %v4011 = vrot.slane %v3949, 6
        %v4012 = vrot.slane %v3952, 6
        %v4013 = vrot.slane %v3955, 6
        %v4014 = vrot.slane %v3958, 6
        %v4015 = vrot.slane %v3961, 6
        %v4016 = vrot.slane %v3964, 6
        %v4017 = vrot.slane %v3967, 6
        %v4018 = vrot.slane %v3970, 6
        %v4019 = vsel %vm1485, %v3987, %v4003
        %v4020 = vsel %vm1485, %v3988, %v4004
        %v4021 = vsel %vm1485, %v3989, %v4005
        %v4022 = vsel %vm1485, %v3990, %v4006
        %v4023 = vsel %vm1485, %v3991, %v4007
        %v4024 = vsel %vm1485, %v3992, %v4008
        %v4025 = vsel %vm1485, %v3993, %v4009
        %v4026 = vsel %vm1485, %v3994, %v4010
        %v4027 = vsel %vm1485, %v3995, %v4011
        %v4028 = vsel %vm1485, %v3996, %v4012
        %v4029 = vsel %vm1485, %v3997, %v4013
        %v4030 = vsel %vm1485, %v3998, %v4014
        %v4031 = vsel %vm1485, %v3999, %v4015
        %v4032 = vsel %vm1485, %v4000, %v4016
        %v4033 = vsel %vm1485, %v4001, %v4017
        %v4034 = vsel %vm1485, %v4002, %v4018
        %v4035 = vsel %vm1485, %v3971, %v3987
        %v4036 = vsel %vm1485, %v3972, %v3988
        %v4037 = vsel %vm1485, %v3973, %v3989
        %v4038 = vsel %vm1485, %v3974, %v3990
        %v4039 = vsel %vm1485, %v3975, %v3991
        %v4040 = vsel %vm1485, %v3976, %v3992
        %v4041 = vsel %vm1485, %v3977, %v3993
        %v4042 = vsel %vm1485, %v3978, %v3994
        %v4043 = vsel %vm1485, %v3979, %v3995
        %v4044 = vsel %vm1485, %v3980, %v3996
        %v4045 = vsel %vm1485, %v3981, %v3997
        %v4046 = vsel %vm1485, %v3982, %v3998
        %v4047 = vsel %vm1485, %v3983, %v3999
        %v4048 = vsel %vm1485, %v3984, %v4000
        %v4049 = vsel %vm1485, %v3985, %v4001
        %v4050 = vsel %vm1485, %v3986, %v4002
        %v4051 = vpack.c.bf16 %v4019, %v4035
        %v4052 = vpack.c.bf16 %v4020, %v4036
        %v4053 = vpack.c.bf16 %v4021, %v4037
        %v4054 = vpack.c.bf16 %v4022, %v4038
        %v4055 = vpack.c.bf16 %v4023, %v4039
        %v4056 = vpack.c.bf16 %v4024, %v4040
        %v4057 = vpack.c.bf16 %v4025, %v4041
        %v4058 = vpack.c.bf16 %v4026, %v4042
        %v4059 = vpack.c.bf16 %v4027, %v4043
        %v4060 = vpack.c.bf16 %v4028, %v4044
        %v4061 = vpack.c.bf16 %v4029, %v4045
        %v4062 = vpack.c.bf16 %v4030, %v4046
        %v4063 = vpack.c.bf16 %v4031, %v4047
        %v4064 = vpack.c.bf16 %v4032, %v4048
        %v4065 = vpack.c.bf16 %v4033, %v4049
        %v4066 = vpack.c.bf16 %v4034, %v4050
        %s4067 = scalar_lea.vmem %s3, 192
        %v4068 = vld [vmem:[%s4067] sm:$0xf]
        %v4069 = vld [vmem:[%s4067 + $0x4] sm:$0xf]
        %v4070 = vld [vmem:[%s4067 + $0x8] sm:$0xf]
        %v4071 = vld [vmem:[%s4067 + $0xc] sm:$0xf]
        %v4072 = vld [vmem:[%s4067 + $0x10] sm:$0xf]
        %v4073 = vld [vmem:[%s4067 + $0x14] sm:$0xf]
        %v4074 = vld [vmem:[%s4067 + $0x18] sm:$0xf]
        %v4075 = vld [vmem:[%s4067 + $0x1c] sm:$0xf]
        %v4076 = vld [vmem:[%s4067 + $0x20] sm:$0xf]
        %v4077 = vld [vmem:[%s4067 + $0x24] sm:$0xf]
        %v4078 = vld [vmem:[%s4067 + $0x28] sm:$0xf]
        %v4079 = vld [vmem:[%s4067 + $0x2c] sm:$0xf]
        %v4080 = vld [vmem:[%s4067 + $0x30] sm:$0xf]
        %v4081 = vld [vmem:[%s4067 + $0x34] sm:$0xf]
        %v4082 = vld [vmem:[%s4067 + $0x38] sm:$0xf]
        %v4083 = vld [vmem:[%s4067 + $0x3c] sm:$0xf]
        %v4100 = vunpack.c.l.b16 %v4068
        %v4101 = vunpack.c.l.b16 %v4069
        %v4102 = vunpack.c.l.b16 %v4070
        %v4103 = vunpack.c.l.b16 %v4071
        %v4104 = vunpack.c.l.b16 %v4072
        %v4105 = vunpack.c.l.b16 %v4073
        %v4106 = vunpack.c.l.b16 %v4074
        %v4107 = vunpack.c.l.b16 %v4075
        %v4108 = vunpack.c.l.b16 %v4076
        %v4109 = vunpack.c.l.b16 %v4077
        %v4110 = vunpack.c.l.b16 %v4078
        %v4111 = vunpack.c.l.b16 %v4079
        %v4112 = vunpack.c.l.b16 %v4080
        %v4113 = vunpack.c.l.b16 %v4081
        %v4114 = vunpack.c.l.b16 %v4082
        %v4115 = vunpack.c.l.b16 %v4083
        %v4116 = vpack.c.b16 %v4101, %v4100
        %v4117 = vpack.c.b16 %v4103, %v4102
        %v4118 = vpack.c.b16 %v4105, %v4104
        %v4119 = vpack.c.b16 %v4107, %v4106
        %v4120 = vpack.c.b16 %v4109, %v4108
        %v4121 = vpack.c.b16 %v4111, %v4110
        %v4122 = vpack.c.b16 %v4113, %v4112
        %v4123 = vpack.c.b16 %v4115, %v4114
        %4132 = vmatprep.subr.bf16.mxu0 0
        %4133 = vmatpush1.bf16.msra.mxu0 %v4123
        %4134 = vmatprep.subr.bf16.mxu0 0
        %4135 = vmatpush1.bf16.msra.mxu0 %v4122
        %4136 = vmatprep.subr.bf16.mxu0 0
        %4137 = vmatpush1.bf16.msra.mxu0 %v4121
        %4138 = vmatprep.subr.bf16.mxu0 0
        %4139 = vmatpush1.bf16.msra.mxu0 %v4120
        %4140 = vmatprep.subr.bf16.mxu0 0
        %4141 = vmatpush1.bf16.msra.mxu0 %v4119
        %4142 = vmatprep.subr.bf16.mxu0 0
        %4143 = vmatpush1.bf16.msra.mxu0 %v4118
        %4144 = vmatprep.subr.bf16.mxu0 0
        %4145 = vmatpush1.bf16.msra.mxu0 %v4117
        %4146 = vmatprep.subr.bf16.mxu0 0
        %4147 = vmatpush1.bf16.msra.mxu0 %v4116
        %4148 = vmatprep.subr.bf16.mxu0 0
        %4149 = vmatpush2.bf16.msra.mxu0 0
        %4150 = vmatprep.subr.bf16.mxu0 0
        %4151 = vmatpush2.bf16.msra.mxu0 0
        %4152 = vmatprep.subr.bf16.mxu0 0
        %4153 = vmatpush2.bf16.msra.mxu0 0
        %4154 = vmatprep.subr.bf16.mxu0 0
        %4155 = vmatpush2.bf16.msra.mxu0 0
        %4156 = vmatprep.subr.bf16.mxu0 0
        %4157 = vmatpush2.bf16.msra.mxu0 0
        %4158 = vmatprep.subr.bf16.mxu0 0
        %4159 = vmatpush2.bf16.msra.mxu0 0
        %4160 = vmatprep.subr.bf16.mxu0 0
        %4161 = vmatpush2.bf16.msra.mxu0 0
        %4162 = vmatprep.subr.bf16.mxu0 0
        %4163 = vmatpush2.bf16.msra.mxu0 0
        %4164 = vmatprep.mubr.bf16.mxu0 0
        %4165 = vmatmul.mubr.bf16.gmra.mxu0 %v4051
        %v4166 = vpop.f32.mrf.mxu0
        %v4167 = vadd.f32 0.0, %v4166
        %v4168 = vpop.f32.mrf.mxu0
        %v4169 = vpop.f32.mrf.mxu0
        %v4170 = vadd.f32 0.0, %v4169
        %v4171 = vpop.f32.mrf.mxu0
        %4172 = vmatprep.mubr.bf16.mxu0 0
        %4173 = vmatmul.mubr.bf16.gmra.mxu0 %v4052
        %v4174 = vpop.f32.mrf.mxu0
        %v4175 = vadd.f32 0.0, %v4174
        %v4176 = vpop.f32.mrf.mxu0
        %v4177 = vpop.f32.mrf.mxu0
        %v4178 = vadd.f32 0.0, %v4177
        %v4179 = vpop.f32.mrf.mxu0
        %4180 = vmatprep.mubr.bf16.mxu0 0
        %4181 = vmatmul.mubr.bf16.gmra.mxu0 %v4053
        %v4182 = vpop.f32.mrf.mxu0
        %v4183 = vadd.f32 0.0, %v4182
        %v4184 = vpop.f32.mrf.mxu0
        %v4185 = vpop.f32.mrf.mxu0
        %v4186 = vadd.f32 0.0, %v4185
        %v4187 = vpop.f32.mrf.mxu0
        %4188 = vmatprep.mubr.bf16.mxu0 0
        %4189 = vmatmul.mubr.bf16.gmra.mxu0 %v4054
        %v4190 = vpop.f32.mrf.mxu0
        %v4191 = vadd.f32 0.0, %v4190
        %v4192 = vpop.f32.mrf.mxu0
        %v4193 = vpop.f32.mrf.mxu0
        %v4194 = vadd.f32 0.0, %v4193
        %v4195 = vpop.f32.mrf.mxu0
        %4196 = vmatprep.mubr.bf16.mxu0 0
        %4197 = vmatmul.mubr.bf16.gmra.mxu0 %v4055
        %v4198 = vpop.f32.mrf.mxu0
        %v4199 = vadd.f32 0.0, %v4198
        %v4200 = vpop.f32.mrf.mxu0
        %v4201 = vpop.f32.mrf.mxu0
        %v4202 = vadd.f32 0.0, %v4201
        %v4203 = vpop.f32.mrf.mxu0
        %4204 = vmatprep.mubr.bf16.mxu0 0
        %4205 = vmatmul.mubr.bf16.gmra.mxu0 %v4056
        %v4206 = vpop.f32.mrf.mxu0
        %v4207 = vadd.f32 0.0, %v4206
        %v4208 = vpop.f32.mrf.mxu0
        %v4209 = vpop.f32.mrf.mxu0
        %v4210 = vadd.f32 0.0, %v4209
        %v4211 = vpop.f32.mrf.mxu0
        %4212 = vmatprep.mubr.bf16.mxu0 0
        %4213 = vmatmul.mubr.bf16.gmra.mxu0 %v4057
        %v4214 = vpop.f32.mrf.mxu0
        %v4215 = vadd.f32 0.0, %v4214
        %v4216 = vpop.f32.mrf.mxu0
        %v4217 = vpop.f32.mrf.mxu0
        %v4218 = vadd.f32 0.0, %v4217
        %v4219 = vpop.f32.mrf.mxu0
        %4220 = vmatprep.mubr.bf16.mxu0 0
        %4221 = vmatmul.mubr.bf16.gmra.mxu0 %v4058
        %v4222 = vpop.f32.mrf.mxu0
        %v4223 = vadd.f32 0.0, %v4222
        %v4224 = vpop.f32.mrf.mxu0
        %v4225 = vpop.f32.mrf.mxu0
        %v4226 = vadd.f32 0.0, %v4225
        %v4227 = vpop.f32.mrf.mxu0
        %4228 = vmatprep.mubr.bf16.mxu0 0
        %4229 = vmatmul.mubr.bf16.gmra.mxu0 %v4059
        %v4230 = vpop.f32.mrf.mxu0
        %v4231 = vadd.f32 0.0, %v4230
        %v4232 = vpop.f32.mrf.mxu0
        %v4233 = vpop.f32.mrf.mxu0
        %v4234 = vadd.f32 0.0, %v4233
        %v4235 = vpop.f32.mrf.mxu0
        %4236 = vmatprep.mubr.bf16.mxu0 0
        %4237 = vmatmul.mubr.bf16.gmra.mxu0 %v4060
        %v4238 = vpop.f32.mrf.mxu0
        %v4239 = vadd.f32 0.0, %v4238
        %v4240 = vpop.f32.mrf.mxu0
        %v4241 = vpop.f32.mrf.mxu0
        %v4242 = vadd.f32 0.0, %v4241
        %v4243 = vpop.f32.mrf.mxu0
        %4244 = vmatprep.mubr.bf16.mxu0 0
        %4245 = vmatmul.mubr.bf16.gmra.mxu0 %v4061
        %v4246 = vpop.f32.mrf.mxu0
        %v4247 = vadd.f32 0.0, %v4246
        %v4248 = vpop.f32.mrf.mxu0
        %v4249 = vpop.f32.mrf.mxu0
        %v4250 = vadd.f32 0.0, %v4249
        %v4251 = vpop.f32.mrf.mxu0
        %4252 = vmatprep.mubr.bf16.mxu0 0
        %4253 = vmatmul.mubr.bf16.gmra.mxu0 %v4062
        %v4254 = vpop.f32.mrf.mxu0
        %v4255 = vadd.f32 0.0, %v4254
        %v4256 = vpop.f32.mrf.mxu0
        %v4257 = vpop.f32.mrf.mxu0
        %v4258 = vadd.f32 0.0, %v4257
        %v4259 = vpop.f32.mrf.mxu0
        %4260 = vmatprep.mubr.bf16.mxu0 0
        %4261 = vmatmul.mubr.bf16.gmra.mxu0 %v4063
        %v4262 = vpop.f32.mrf.mxu0
        %v4263 = vadd.f32 0.0, %v4262
        %v4264 = vpop.f32.mrf.mxu0
        %v4265 = vpop.f32.mrf.mxu0
        %v4266 = vadd.f32 0.0, %v4265
        %v4267 = vpop.f32.mrf.mxu0
        %4268 = vmatprep.mubr.bf16.mxu0 0
        %4269 = vmatmul.mubr.bf16.gmra.mxu0 %v4064
        %v4270 = vpop.f32.mrf.mxu0
        %v4271 = vadd.f32 0.0, %v4270
        %v4272 = vpop.f32.mrf.mxu0
        %v4273 = vpop.f32.mrf.mxu0
        %v4274 = vadd.f32 0.0, %v4273
        %v4275 = vpop.f32.mrf.mxu0
        %4276 = vmatprep.mubr.bf16.mxu0 0
        %4277 = vmatmul.mubr.bf16.gmra.mxu0 %v4065
        %v4278 = vpop.f32.mrf.mxu0
        %v4279 = vadd.f32 0.0, %v4278
        %v4280 = vpop.f32.mrf.mxu0
        %v4281 = vpop.f32.mrf.mxu0
        %v4282 = vadd.f32 0.0, %v4281
        %v4283 = vpop.f32.mrf.mxu0
        %4284 = vmatprep.mubr.bf16.mxu0 0
        %4285 = vmatmul.mubr.bf16.gmra.mxu0 %v4066
        %v4286 = vpop.f32.mrf.mxu0
        %v4287 = vadd.f32 0.0, %v4286
        %v4288 = vpop.f32.mrf.mxu0
        %v4289 = vpop.f32.mrf.mxu0
        %v4290 = vadd.f32 0.0, %v4289
        %v4291 = vpop.f32.mrf.mxu0
        %4292 = vdwg.mxu0
        %v4293 = vadd.f32 %v3115, %v4167
        %v4294 = vadd.f32 %v3116, %v4170
        %v4295 = vadd.f32 %v3117, %v4175
        %v4296 = vadd.f32 %v3118, %v4178
        %v4297 = vadd.f32 %v3119, %v4183
        %v4298 = vadd.f32 %v3120, %v4186
        %v4299 = vadd.f32 %v3121, %v4191
        %v4300 = vadd.f32 %v3122, %v4194
        %v4301 = vadd.f32 %v3123, %v4199
        %v4302 = vadd.f32 %v3124, %v4202
        %v4303 = vadd.f32 %v3125, %v4207
        %v4304 = vadd.f32 %v3126, %v4210
        %v4305 = vadd.f32 %v3127, %v4215
        %v4306 = vadd.f32 %v3128, %v4218
        %v4307 = vadd.f32 %v3129, %v4223
        %v4308 = vadd.f32 %v3130, %v4226
        %v4309 = vadd.f32 %v3131, %v4231
        %v4310 = vadd.f32 %v3132, %v4234
        %v4311 = vadd.f32 %v3133, %v4239
        %v4312 = vadd.f32 %v3134, %v4242
        %v4313 = vadd.f32 %v3135, %v4247
        %v4314 = vadd.f32 %v3136, %v4250
        %v4315 = vadd.f32 %v3137, %v4255
        %v4316 = vadd.f32 %v3138, %v4258
        %v4317 = vadd.f32 %v3139, %v4263
        %v4318 = vadd.f32 %v3140, %v4266
        %v4319 = vadd.f32 %v3141, %v4271
        %v4320 = vadd.f32 %v3142, %v4274
        %v4321 = vadd.f32 %v3143, %v4279
        %v4322 = vadd.f32 %v3144, %v4282
        %v4323 = vadd.f32 %v3145, %v4287
        %v4324 = vadd.f32 %v3146, %v4290
        %v4325 = vld [vmem:[%s4] sm:$0x1]
        %v4327 = vlaneseq
        %v4328 = vshrl.u32 %v4327, 7
        %v4329 = vsub.s32 0, %v4328
        %v4330 = vrot.slane %v4325, %v4329
        %v4332 = vadd.f32 %v4293, %v4330
        %v4333 = vadd.f32 %v4294, %v4330
        %v4334 = vadd.f32 %v4295, %v4330
        %v4335 = vadd.f32 %v4296, %v4330
        %v4336 = vadd.f32 %v4297, %v4330
        %v4337 = vadd.f32 %v4298, %v4330
        %v4338 = vadd.f32 %v4299, %v4330
        %v4339 = vadd.f32 %v4300, %v4330
        %v4340 = vadd.f32 %v4301, %v4330
        %v4341 = vadd.f32 %v4302, %v4330
        %v4342 = vadd.f32 %v4303, %v4330
        %v4343 = vadd.f32 %v4304, %v4330
        %v4344 = vadd.f32 %v4305, %v4330
        %v4345 = vadd.f32 %v4306, %v4330
        %v4346 = vadd.f32 %v4307, %v4330
        %v4347 = vadd.f32 %v4308, %v4330
        %v4348 = vadd.f32 %v4309, %v4330
        %v4349 = vadd.f32 %v4310, %v4330
        %v4350 = vadd.f32 %v4311, %v4330
        %v4351 = vadd.f32 %v4312, %v4330
        %v4352 = vadd.f32 %v4313, %v4330
        %v4353 = vadd.f32 %v4314, %v4330
        %v4354 = vadd.f32 %v4315, %v4330
        %v4355 = vadd.f32 %v4316, %v4330
        %v4356 = vadd.f32 %v4317, %v4330
        %v4357 = vadd.f32 %v4318, %v4330
        %v4358 = vadd.f32 %v4319, %v4330
        %v4359 = vadd.f32 %v4320, %v4330
        %v4360 = vadd.f32 %v4321, %v4330
        %v4361 = vadd.f32 %v4322, %v4330
        %v4362 = vadd.f32 %v4323, %v4330
        %v4363 = vadd.f32 %v4324, %v4330
        %v4364 = vmax.f32 %v4332, 0.0
        %v4365 = vmax.f32 %v4333, 0.0
        %v4366 = vmax.f32 %v4334, 0.0
        %v4367 = vmax.f32 %v4335, 0.0
        %v4368 = vmax.f32 %v4336, 0.0
        %v4369 = vmax.f32 %v4337, 0.0
        %v4370 = vmax.f32 %v4338, 0.0
        %v4371 = vmax.f32 %v4339, 0.0
        %v4372 = vmax.f32 %v4340, 0.0
        %v4373 = vmax.f32 %v4341, 0.0
        %v4374 = vmax.f32 %v4342, 0.0
        %v4375 = vmax.f32 %v4343, 0.0
        %v4376 = vmax.f32 %v4344, 0.0
        %v4377 = vmax.f32 %v4345, 0.0
        %v4378 = vmax.f32 %v4346, 0.0
        %v4379 = vmax.f32 %v4347, 0.0
        %v4380 = vmax.f32 %v4348, 0.0
        %v4381 = vmax.f32 %v4349, 0.0
        %v4382 = vmax.f32 %v4350, 0.0
        %v4383 = vmax.f32 %v4351, 0.0
        %v4384 = vmax.f32 %v4352, 0.0
        %v4385 = vmax.f32 %v4353, 0.0
        %v4386 = vmax.f32 %v4354, 0.0
        %v4387 = vmax.f32 %v4355, 0.0
        %v4388 = vmax.f32 %v4356, 0.0
        %v4389 = vmax.f32 %v4357, 0.0
        %v4390 = vmax.f32 %v4358, 0.0
        %v4391 = vmax.f32 %v4359, 0.0
        %v4392 = vmax.f32 %v4360, 0.0
        %v4393 = vmax.f32 %v4361, 0.0
        %v4394 = vmax.f32 %v4362, 0.0
        %v4395 = vmax.f32 %v4363, 0.0
        %4396 = vst [vmem:[%s217] sm:$0xff] %v4364
        %4397 = vst [vmem:[%s217 + $0x8] sm:$0xff] %v4365
        %4398 = vst [vmem:[%s217 + $0x10] sm:$0xff] %v4366
        %4399 = vst [vmem:[%s217 + $0x18] sm:$0xff] %v4367
        %4400 = vst [vmem:[%s217 + $0x20] sm:$0xff] %v4368
        %4401 = vst [vmem:[%s217 + $0x28] sm:$0xff] %v4369
        %4402 = vst [vmem:[%s217 + $0x30] sm:$0xff] %v4370
        %4403 = vst [vmem:[%s217 + $0x38] sm:$0xff] %v4371
        %4404 = vst [vmem:[%s217 + $0x40] sm:$0xff] %v4372
        %4405 = vst [vmem:[%s217 + $0x48] sm:$0xff] %v4373
        %4406 = vst [vmem:[%s217 + $0x50] sm:$0xff] %v4374
        %4407 = vst [vmem:[%s217 + $0x58] sm:$0xff] %v4375
        %4408 = vst [vmem:[%s217 + $0x60] sm:$0xff] %v4376
        %4409 = vst [vmem:[%s217 + $0x68] sm:$0xff] %v4377
        %4410 = vst [vmem:[%s217 + $0x70] sm:$0xff] %v4378
        %4411 = vst [vmem:[%s217 + $0x78] sm:$0xff] %v4379
        %4412 = vst [vmem:[%s217 + $0x80] sm:$0xff] %v4380
        %4413 = vst [vmem:[%s217 + $0x88] sm:$0xff] %v4381
        %4414 = vst [vmem:[%s217 + $0x90] sm:$0xff] %v4382
        %4415 = vst [vmem:[%s217 + $0x98] sm:$0xff] %v4383
        %4416 = vst [vmem:[%s217 + $0xa0] sm:$0xff] %v4384
        %4417 = vst [vmem:[%s217 + $0xa8] sm:$0xff] %v4385
        %4418 = vst [vmem:[%s217 + $0xb0] sm:$0xff] %v4386
        %4419 = vst [vmem:[%s217 + $0xb8] sm:$0xff] %v4387
        %4420 = vst [vmem:[%s217 + $0xc0] sm:$0xff] %v4388
        %4421 = vst [vmem:[%s217 + $0xc8] sm:$0xff] %v4389
        %4422 = vst [vmem:[%s217 + $0xd0] sm:$0xff] %v4390
        %4423 = vst [vmem:[%s217 + $0xd8] sm:$0xff] %v4391
        %4424 = vst [vmem:[%s217 + $0xe0] sm:$0xff] %v4392
        %4425 = vst [vmem:[%s217 + $0xe8] sm:$0xff] %v4393
        %4426 = vst [vmem:[%s217 + $0xf0] sm:$0xff] %v4394
        %4427 = vst [vmem:[%s217 + $0xf8] sm:$0xff] %v4395
        %s4428 = sand.u32 %s137, 1
        %s4429 = scalar_lea.sflag [#allocation4], %s4428
        %s4430 = sand.u32 %s137, 1
        %s4431 = smul.addr %s4430, 256
        %s4432 = scalar_lea.vmem [#allocation3], %s4431
        // Predicated region
        $region41: #{tpu_custom_call.1} parent=39 // pred_check
          %p4433 = pneg %p147
        $region42: #{tpu_custom_call.1} parent=39 // pred_check_branch
          %4435 = sbr.rel (%p4433) target = $region44
        $region43: #{tpu_custom_call.1} parent=39 // pred_region
          %s4437 = ssub.s32 4096, 4096
          %4438 = vsyncadd %s4429, %s4437
          %s4439 = smul.addr %s19, 32
          %s4440 = smul.addr %s4439, 128
          %s4441 = scalar_lea.hbm %s5, %s4440
          %s4442 = sshll.u32 %s4432, 4
          %s4443 = int_to_ptr.vmem [resolvable:$true] %s4442
          %4448 = dma.vmem_to_hbm [thread:$0]  %s4443, 4096, %s4441, %s4429, 128, 128, 8
        $region44: #{tpu_custom_call.1} parent=39 // pred_fallthru
          _
      $region40: #{tpu_custom_call.1} parent=5 // pred_fallthru
        _
      %p4449 = scmp.le.s32.totalorder 2, %s14
      // Predicated region
      $region45: #{tpu_custom_call.1} parent=5 // pred_check
        %p4450 = pneg %p4449
      $region46: #{tpu_custom_call.1} parent=5 // pred_check_branch
        %4452 = sbr.rel (%p4450) target = $region48
      $region47: #{tpu_custom_call.1} parent=5 // pred_region
        %s4453 = ssub.s32 %s14, 2
        // Predicated region
        $region49: #{tpu_custom_call.1} parent=47 // pred_check
          %p4454 = pneg %p153
        $region50: #{tpu_custom_call.1} parent=47 // pred_check_branch
          %4456 = sbr.rel (%p4454) target = $region52
        $region51: #{tpu_custom_call.1} parent=47 // pred_region
          %s4457 = sand.u32 %s138, 1
          %s4458 = scalar_lea.sflag [#allocation4], %s4457
          %s4459 = sand.u32 %s138, 1
          %s4460 = smul.addr %s4459, 256
          %s4461 = scalar_lea.vmem [#allocation3], %s4460
          %4462 = dma.done %s4458, 4096
        $region52: #{tpu_custom_call.1} parent=47 // pred_fallthru
          _
      $region48: #{tpu_custom_call.1} parent=5 // pred_fallthru
        _
    $region6: #{tpu_custom_call.1} parent=1 // loop_footer
      %s18 = sadd.s32 1, %s14
    $region7: #{tpu_custom_call.1} parent=1 // loop_footer_branch
      %13 = sbr.rel target = $region3
    $region8: #{tpu_custom_call.1} parent=1 // loop_exit
      _
    %4463 = vsyncpa [#allocation4], 1
    %s4464 = scalar_lea.sflag [#allocation4], 1
    %4465 = vsyncpa %s4464, 1

</llo_original>
